<compile_context>
chip_gen: v7x
topology: tpu7x:2x2x1
jax: 0.10.0
libtpu: 0.0.40
codegen_flags: <defaults>
</compile_context>

<pallas_src>
import functools

import jax
import jax.numpy as jnp
from jax.experimental import pallas as pl
from jax.experimental.pallas import tpu as pltpu


# -----------------------------------------------------------------------------
# Kernel
# -----------------------------------------------------------------------------
def _layernorm(x, w, b, eps=1e-5):
    mu = jnp.mean(x, axis=-1, keepdims=True)
    var = jnp.mean((x - mu) ** 2, axis=-1, keepdims=True)
    return (x - mu) * jax.lax.rsqrt(var + eps) * w + b


def spatial_attn_kernel(
    x_ref,        # fused: (TN, C, S) channel-major | plain: (TN, S, C) token-major
    pos_ref,      # (S, C)   positional embedding
    wqkv_ref,     # (C, 3C)  in_proj_weight^T (q columns pre-scaled by 1/sqrt(hd))
    bqkv_ref,     # (1, 3C)  in_proj_bias     (q part pre-scaled)
    wo_ref,       # (C, C)   out_proj.weight^T
    w1_ref,       # (C, 2C)  ffn[0].weight^T
    b1_ref,       # (1, 2C)  ffn[0].bias
    w2_ref,       # (2C, C)  ffn[2].weight^T
    vecs_ref,     # (6, C)   [out_proj.bias, ln1.w, ln1.b, ffn[2].bias, ln2.w, ln2.b]
    o_ref,        # fused: (1, TN, C*S) lane-dense | plain: (TN, S, C)
    *,
    num_heads,
    fused_layout,
):
    cdt = wqkv_ref.dtype                     # matmul-input dtype (f32 or bf16)

    if fused_layout:
        TN, C, S = x_ref.shape
        # channel-major frame -> token-major; XLU transpose (idle next to MXU).
        x_tok = jnp.transpose(x_ref[...], (0, 2, 1))        # (TN, S, C)
    else:
        TN, S, C = x_ref.shape
        x_tok = x_ref[...]
    hd = C // num_heads

    xp = (x_tok.astype(jnp.float32)
          + pos_ref[...].astype(jnp.float32)).reshape(TN * S, C)   # residual basis

    # --- fused QKV projection over the whole frame-block slab (one K=C matmul)
    qkv = jnp.dot(xp.astype(cdt), wqkv_ref[...],
                  preferred_element_type=jnp.float32) + bqkv_ref[...]
    qkv_c = qkv.astype(cdt)                  # single cast, hoisted out of head loop
    q = qkv_c[:, 0 * C:1 * C].reshape(TN, S, C)   # q already scaled via folded weights
    k = qkv_c[:, 1 * C:2 * C].reshape(TN, S, C)
    v = qkv_c[:, 2 * C:3 * C].reshape(TN, S, C)

    vecs = vecs_ref[...]
    bo, ln1w, ln1b = vecs[0:1], vecs[1:2], vecs[2:3]
    b2, ln2w, ln2b = vecs[3:4], vecs[4:5], vecs[5:6]

    # --- multi-head self-attention: per-head frame-batched softmax(QK^T)V,
    #     lane-concat of head outputs, then a SINGLE out_proj matmul with K=C.
    # TODO(synk): collapsing the head loop into one 4-D einsum pair
    # ('bqhd,bkhd->bhqk') requires multi-batch-dim dot_general lowering in Mosaic.
    head_outs = []
    for h in range(num_heads):
        sl = slice(h * hd, (h + 1) * hd)
        s = jnp.einsum("bqd,bkd->bqk", q[:, :, sl], k[:, :, sl],
                       preferred_element_type=jnp.float32)          # (TN, S, S)
        s = s - jnp.max(s, axis=-1, keepdims=True)
        p = jnp.exp(s)
        p = p * pl.reciprocal(jnp.sum(p, axis=-1, keepdims=True), approx=True)
        head_outs.append(
            jnp.einsum("bqk,bkd->bqd", p.astype(cdt), v[:, :, sl],
                       preferred_element_type=jnp.float32))          # (TN, S, hd)
    head_out = jnp.concatenate(head_outs, axis=-1).reshape(TN * S, C)
    attn = jnp.dot(head_out.astype(cdt), wo_ref[...],
                   preferred_element_type=jnp.float32) + bo

    # --- residual + LayerNorm 1 ---
    y1 = _layernorm(xp + attn, ln1w, ln1b)

    # --- FFN ---
    h1 = jnp.dot(y1.astype(cdt), w1_ref[...],
                 preferred_element_type=jnp.float32) + b1_ref[...]
    h1 = jnp.maximum(h1, 0.0)
    ff = jnp.dot(h1.astype(cdt), w2_ref[...],
                 preferred_element_type=jnp.float32) + b2

    # --- residual + LayerNorm 2 ---
    y2 = _layernorm(y1 + ff, ln2w, ln2b)

    if fused_layout:
        # back to channel-major + flatten: one lane-dense (TN, C*S) store
        # (C*S is a multiple of 128 for production sizes; 2048 in the self-test).
        y2_cs = jnp.transpose(y2.astype(o_ref.dtype).reshape(TN, S, C), (0, 2, 1))
        o_ref[...] = y2_cs.reshape(1, TN, C * S)
    else:
        o_ref[...] = y2.reshape(TN, S, C).astype(o_ref.dtype)


# -----------------------------------------------------------------------------
# Wrapper
# -----------------------------------------------------------------------------
def _choose_block_frames(N, S, C, vmem_budget_bytes=20 << 20):
    """Frames per grid step, sized from a VMEM budget (not a hard cap).

    Rough live f32 working set per frame: token slabs (~24 C-wide vectors worth)
    plus two (S,S) score buffers, plus double-buffered I/O blocks.  Prefer an
    even number of grid steps (v7x has 2 TensorCores), then >=2 steps, then the
    largest block that fits.
    """
    bytes_per_frame = 4 * S * (24 * C + 2 * S)
    max_tn = max(1, int(vmem_budget_bytes // bytes_per_frame))
    divs = [d for d in range(1, N + 1) if N % d == 0 and d <= max_tn] or [1]
    even = [d for d in divs if (N // d) >= 2 and (N // d) % 2 == 0]
    multi = [d for d in divs if (N // d) >= 2]
    if even:
        return max(even)
    if multi:
        return max(multi)
    return max(divs)


def _pallas_forward(x_prepped, weights, num_heads, TN, fused_layout, out_dtype):
    if fused_layout:
        N, C, S = x_prepped.shape
        x_spec = pl.BlockSpec((TN, C, S), lambda n: (n, 0, 0))
        out_shape = jax.ShapeDtypeStruct((N // TN, TN, C * S), out_dtype)
        out_spec = pl.BlockSpec((1, TN, C * S), lambda n: (n, 0, 0))
    else:
        N, S, C = x_prepped.shape
        x_spec = pl.BlockSpec((TN, S, C), lambda n: (n, 0, 0))
        out_shape = jax.ShapeDtypeStruct((N, S, C), out_dtype)
        out_spec = pl.BlockSpec((TN, S, C), lambda n: (n, 0, 0))

    def full_spec(a):
        nd = a.ndim
        return pl.BlockSpec(a.shape, lambda n, _nd=nd: (0,) * _nd)

    kernel = functools.partial(spatial_attn_kernel, num_heads=num_heads,
                               fused_layout=fused_layout)
    return pl.pallas_call(
        kernel,
        out_shape=out_shape,
        grid=(N // TN,),
        in_specs=[x_spec] + [full_spec(w) for w in weights],
        out_specs=out_spec,
        compiler_params=pltpu.CompilerParams(
            dimension_semantics=("parallel",),
            # 48 MiB: generous on v5e/v6e (128 MiB physical), still safe on
            # v7x (64 MiB physical); TN is budgeted to ~20 MiB above.
            vmem_limit_bytes=48 * 1024 * 1024,
        ),
    )(x_prepped, *weights)


def spatial_attention_block(x, params, num_heads, *, block_frames=None,
                            matmul_dtype=jnp.float32, fused_layout=True):
    """x: [B, T, C, H, W] -> [B, T, C, H, W]."""
    B, T, C, H, W = x.shape
    S = H * W
    N = B * T
    assert C % num_heads == 0
    hd = C // num_heads
    scale = 1.0 / float(hd) ** 0.5

    if block_frames is None:
        block_frames = _choose_block_frames(N, S, C)
    TN = block_frames
    assert N % TN == 0, (N, TN)

    # Fold the 1/sqrt(head_dim) q-scaling into the q rows of in_proj (free).
    w_in = params["in_proj_weight"].at[:C, :].multiply(scale)      # (3C, C)
    b_in = params["in_proj_bias"].at[:C].multiply(scale)           # (3C,)

    wqkv_t = w_in.T.astype(matmul_dtype)                           # (C, 3C)
    wo_t = params["out_proj_weight"].T.astype(matmul_dtype)        # (C, C)
    w1_t = params["ffn_w1"].T.astype(matmul_dtype)                 # (C, 2C)
    w2_t = params["ffn_w2"].T.astype(matmul_dtype)                 # (2C, C)

    pos = params["pos_embed"].astype(jnp.float32)                  # (S, C)
    bqkv = b_in[None, :].astype(jnp.float32)                       # (1, 3C)
    b1 = params["ffn_b1"][None, :].astype(jnp.float32)             # (1, 2C)
    vecs = jnp.stack(
        [params["out_proj_bias"], params["ln1_weight"], params["ln1_bias"],
         params["ffn_b2"], params["ln2_weight"], params["ln2_bias"]],
        axis=0,
    ).astype(jnp.float32)                                          # (6, C)

    weights = (pos, wqkv_t, bqkv, wo_t, w1_t, b1, w2_t, vecs)
    out_dtype = x.dtype

    if fused_layout:
        # Channel-major ingest: [B,T,C,H,W] -> [N,C,S] is a FREE reshape; the
        # S<->C transpose happens on-chip and the lane-dense output slab
        # reshapes for free back to [B,T,C,H,W] (no wrapper HBM passes).
        try:
            x_ncs = x.reshape(N, C, S)
            out = _pallas_forward(x_ncs, weights, num_heads, TN, True, out_dtype)
            out = jax.block_until_ready(out)
            return out.reshape(B, T, C, H, W)
        except Exception:
            # In-kernel relayout (batched transpose / lane-merge reshape) not
            # supported by this Mosaic build -> fall back to the known-good
            # wrapper-transposed layout below.
            pass

    x_tok = x.reshape(N, C, S).transpose(0, 2, 1)                  # (N, S, C)
    out = _pallas_forward(x_tok, weights, num_heads, TN, False, out_dtype)
    return out.transpose(0, 2, 1).reshape(B, T, C, H, W)


# -----------------------------------------------------------------------------
# Pure-JAX reference (mirrors torch.nn.MultiheadAttention / LayerNorm math)
# -----------------------------------------------------------------------------
def reference(x, params, num_heads):
    B, T, C, H, W = x.shape
    S = H * W
    N = B * T
    hd = C // num_heads
    xt = x.reshape(N, C, S).transpose(0, 2, 1)            # (N, S, C)
    xp = xt + params["pos_embed"][None]

    qkv = xp @ params["in_proj_weight"].T + params["in_proj_bias"]
    q, k, v = jnp.split(qkv, 3, axis=-1)

    def split_heads(a):  # (N, S, C) -> (N, nh, S, hd)
        return a.reshape(N, S, num_heads, hd).transpose(0, 2, 1, 3)

    qh, kh, vh = split_heads(q), split_heads(k), split_heads(v)
    s = jnp.einsum("nhqd,nhkd->nhqk", qh * (1.0 / hd ** 0.5), kh)
    p = jax.nn.softmax(s, axis=-1)
    o = jnp.einsum("nhqk,nhkd->nhqd", p, vh).transpose(0, 2, 1, 3).reshape(N, S, C)
    attn = o @ params["out_proj_weight"].T + params["out_proj_bias"]

    def ln(a, w, b, eps=1e-5):
        mu = jnp.mean(a, axis=-1, keepdims=True)
        var = jnp.mean((a - mu) ** 2, axis=-1, keepdims=True)
        return (a - mu) / jnp.sqrt(var + eps) * w + b

    y1 = ln(xp + attn, params["ln1_weight"], params["ln1_bias"])
    h1 = jax.nn.relu(y1 @ params["ffn_w1"].T + params["ffn_b1"])
    ff = h1 @ params["ffn_w2"].T + params["ffn_b2"]
    y2 = ln(y1 + ff, params["ln2_weight"], params["ln2_bias"])
    return y2.transpose(0, 2, 1).reshape(B, T, C, H, W)


# -----------------------------------------------------------------------------
# Main
# -----------------------------------------------------------------------------
if __name__ == "__main__":
    B, T, C, H, W = 2, 2, 32, 8, 8
    num_heads = 4
    S = H * W

    key = jax.random.PRNGKey(0)
    keys = jax.random.split(key, 8)

    params = {
        "pos_embed": jax.random.normal(keys[0], (S, C), jnp.float32) * 0.05,
        "in_proj_weight": jax.random.normal(keys[1], (3 * C, C), jnp.float32) * 0.05,
        "in_proj_bias": jnp.zeros((3 * C,), jnp.float32),
        "out_proj_weight": jax.random.normal(keys[2], (C, C), jnp.float32) * 0.05,
        "out_proj_bias": jnp.zeros((C,), jnp.float32),
        "ln1_weight": jnp.ones((C,), jnp.float32),
        "ln1_bias": jnp.zeros((C,), jnp.float32),
        "ffn_w1": jax.random.normal(keys[3], (2 * C, C), jnp.float32) * 0.05,
        "ffn_b1": jnp.zeros((2 * C,), jnp.float32),
        "ffn_w2": jax.random.normal(keys[4], (C, 2 * C), jnp.float32) * 0.05,
        "ffn_b2": jnp.zeros((C,), jnp.float32),
        "ln2_weight": jnp.ones((C,), jnp.float32),
        "ln2_bias": jnp.zeros((C,), jnp.float32),
    }

    x = jax.random.normal(keys[5], (B, T, C, H, W), jnp.float32)
    ref = jax.block_until_ready(reference(x, params, num_heads))

    # f32 matmul path: tight tolerance (loosened slightly for the approx/EUP
    # softmax reciprocal).
    out = jax.block_until_ready(spatial_attention_block(x, params, num_heads))
    assert out.shape == (B, T, C, H, W)
    assert jnp.allclose(out, ref, atol=5e-3, rtol=5e-3), float(jnp.max(jnp.abs(out - ref)))

    # bf16 matmul path (recommended production setting on v6e/v7x): looser
    # tolerance so regressions in cast placement aren't silent.
    out_bf16 = jax.block_until_ready(
        spatial_attention_block(x, params, num_heads, matmul_dtype=jnp.bfloat16))
    assert jnp.allclose(out_bf16, ref, atol=5e-2, rtol=5e-2), \
        float(jnp.max(jnp.abs(out_bf16 - ref)))

    print("KERNEL_OK")
</pallas_src>

<mosaic_0001>
module attributes {stable_mosaic.version = 11 : i64} {
  func.func @spatial_attn_kernel(%arg0: i32, %arg1: memref<2x32x64xf32, #tpu.memory_space<vmem>>, %arg2: memref<64x32xf32, #tpu.memory_space<vmem>>, %arg3: memref<32x96xf32, #tpu.memory_space<vmem>>, %arg4: memref<1x96xf32, #tpu.memory_space<vmem>>, %arg5: memref<32x32xf32, #tpu.memory_space<vmem>>, %arg6: memref<32x64xf32, #tpu.memory_space<vmem>>, %arg7: memref<1x64xf32, #tpu.memory_space<vmem>>, %arg8: memref<64x32xf32, #tpu.memory_space<vmem>>, %arg9: memref<6x32xf32, #tpu.memory_space<vmem>>, %arg10: memref<1x2x2048xf32, #tpu.memory_space<vmem>>) attributes {dimension_semantics = [#tpu.dimension_semantics<parallel>], iteration_bounds = array<i64: 2>, scalar_prefetch = 0 : i64, scratch_operands = 0 : i64, tpu.core_type = #tpu.core_type<tc>, window_params = [{transform_indices = @transform_0, window_bounds = array<i64: 2, 32, 64>}, {pipeline_mode = #tpu.pipeline_mode<synchronous>, transform_indices = @transform_1, window_bounds = array<i64: 64, 32>}, {pipeline_mode = #tpu.pipeline_mode<synchronous>, transform_indices = @transform_2, window_bounds = array<i64: 32, 96>}, {pipeline_mode = #tpu.pipeline_mode<synchronous>, transform_indices = @transform_3, window_bounds = array<i64: 1, 96>}, {pipeline_mode = #tpu.pipeline_mode<synchronous>, transform_indices = @transform_4, window_bounds = array<i64: 32, 32>}, {pipeline_mode = #tpu.pipeline_mode<synchronous>, transform_indices = @transform_5, window_bounds = array<i64: 32, 64>}, {pipeline_mode = #tpu.pipeline_mode<synchronous>, transform_indices = @transform_6, window_bounds = array<i64: 1, 64>}, {pipeline_mode = #tpu.pipeline_mode<synchronous>, transform_indices = @transform_7, window_bounds = array<i64: 64, 32>}, {pipeline_mode = #tpu.pipeline_mode<synchronous>, transform_indices = @transform_8, window_bounds = array<i64: 6, 32>}, {transform_indices = @transform_9, window_bounds = array<i64: 1, 2, 2048>}]} {
    %c0 = arith.constant 0 : index
    %c0_0 = arith.constant 0 : index
    %c0_1 = arith.constant 0 : index
    %0 = vector.load %arg1[%c0, %c0_0, %c0_1] : memref<2x32x64xf32, #tpu.memory_space<vmem>>, vector<2x32x64xf32>
    %1 = tpu.transpose %0, [0, 2, 1] : vector<2x32x64xf32> -> vector<2x64x32xf32>
    %c0_2 = arith.constant 0 : index
    %c0_3 = arith.constant 0 : index
    %2 = vector.load %arg2[%c0_2, %c0_3] : memref<64x32xf32, #tpu.memory_space<vmem>>, vector<64x32xf32>
    %3 = vector.shape_cast %2 : vector<64x32xf32> to vector<1x64x32xf32>
    %4 = vector.broadcast %3 : vector<1x64x32xf32> to vector<2x64x32xf32>
    %5 = arith.addf %1, %4 : vector<2x64x32xf32>
    %6 = vector.shape_cast %5 : vector<2x64x32xf32> to vector<128x32xf32>
    %c0_4 = arith.constant 0 : index
    %c0_5 = arith.constant 0 : index
    %7 = vector.load %arg3[%c0_4, %c0_5] : memref<32x96xf32, #tpu.memory_space<vmem>>, vector<32x96xf32>
    %cst = arith.constant dense<0.000000e+00> : vector<128x96xf32>
    %8 = tpu.matmul %6, %7, %cst {dimension_numbers = #tpu.dot_dimension_numbers<[1], [0], [0], [1], [0, 0, 1, 1], [], []>} : vector<128x32xf32>, vector<32x96xf32>, vector<128x96xf32> -> vector<128x96xf32>
    %c0_6 = arith.constant 0 : index
    %c0_7 = arith.constant 0 : index
    %9 = vector.load %arg4[%c0_6, %c0_7] : memref<1x96xf32, #tpu.memory_space<vmem>>, vector<1x96xf32>
    %10 = vector.broadcast %9 : vector<1x96xf32> to vector<128x96xf32>
    %11 = arith.addf %8, %10 : vector<128x96xf32>
    %12 = vector.extract_strided_slice %11 {offsets = [0, 0], sizes = [128, 32], strides = [1, 1]} : vector<128x96xf32> to vector<128x32xf32>
    %13 = vector.shape_cast %12 : vector<128x32xf32> to vector<2x64x32xf32>
    %14 = vector.extract_strided_slice %11 {offsets = [0, 32], sizes = [128, 32], strides = [1, 1]} : vector<128x96xf32> to vector<128x32xf32>
    %15 = vector.shape_cast %14 : vector<128x32xf32> to vector<2x64x32xf32>
    %16 = vector.extract_strided_slice %11 {offsets = [0, 64], sizes = [128, 32], strides = [1, 1]} : vector<128x96xf32> to vector<128x32xf32>
    %17 = vector.shape_cast %16 : vector<128x32xf32> to vector<2x64x32xf32>
    %c0_8 = arith.constant 0 : index
    %c0_9 = arith.constant 0 : index
    %18 = vector.load %arg9[%c0_8, %c0_9] : memref<6x32xf32, #tpu.memory_space<vmem>>, vector<6x32xf32>
    %19 = vector.extract_strided_slice %18 {offsets = [0, 0], sizes = [1, 32], strides = [1, 1]} : vector<6x32xf32> to vector<1x32xf32>
    %20 = vector.extract_strided_slice %18 {offsets = [1, 0], sizes = [1, 32], strides = [1, 1]} : vector<6x32xf32> to vector<1x32xf32>
    %21 = vector.extract_strided_slice %18 {offsets = [2, 0], sizes = [1, 32], strides = [1, 1]} : vector<6x32xf32> to vector<1x32xf32>
    %22 = vector.extract_strided_slice %18 {offsets = [3, 0], sizes = [1, 32], strides = [1, 1]} : vector<6x32xf32> to vector<1x32xf32>
    %23 = vector.extract_strided_slice %18 {offsets = [4, 0], sizes = [1, 32], strides = [1, 1]} : vector<6x32xf32> to vector<1x32xf32>
    %24 = vector.extract_strided_slice %18 {offsets = [5, 0], sizes = [1, 32], strides = [1, 1]} : vector<6x32xf32> to vector<1x32xf32>
    %25 = vector.extract_strided_slice %13 {offsets = [0, 0, 0], sizes = [2, 64, 8], strides = [1, 1, 1]} : vector<2x64x32xf32> to vector<2x64x8xf32>
    %26 = vector.extract_strided_slice %15 {offsets = [0, 0, 0], sizes = [2, 64, 8], strides = [1, 1, 1]} : vector<2x64x32xf32> to vector<2x64x8xf32>
    "tpu.trace_start"() <{level = 10 : i32, message = "bqd,bkd->bqk"}> : () -> ()
    %cst_10 = arith.constant dense<0.000000e+00> : vector<2x64x64xf32>
    %27 = tpu.matmul %25, %26, %cst_10 {dimension_numbers = #tpu.dot_dimension_numbers<[2], [2], [1], [1], [0, 0, 0, 1, 1, 1], [0], [0]>} : vector<2x64x8xf32>, vector<2x64x8xf32>, vector<2x64x64xf32> -> vector<2x64x64xf32>
    "tpu.trace_stop"() : () -> ()
    %cst_11 = arith.constant dense<0xFF800000> : vector<2x64xf32>
    %28 = vector.multi_reduction <maximumf>, %27, %cst_11 [2] : vector<2x64x64xf32> to vector<2x64xf32>
    %29 = vector.shape_cast %28 : vector<2x64xf32> to vector<2x64x1xf32>
    %30 = vector.broadcast %29 : vector<2x64x1xf32> to vector<2x64x64xf32>
    %31 = arith.subf %27, %30 : vector<2x64x64xf32>
    %32 = math.exp %31 : vector<2x64x64xf32>
    %cst_12 = arith.constant dense<0.000000e+00> : vector<2x64xf32>
    %33 = vector.multi_reduction <add>, %32, %cst_12 [2] : vector<2x64x64xf32> to vector<2x64xf32>
    %34 = vector.shape_cast %33 : vector<2x64xf32> to vector<2x64x1xf32>
    %35 = tpu.reciprocal %34 {approx = true} : vector<2x64x1xf32> -> vector<2x64x1xf32>
    %36 = vector.broadcast %35 : vector<2x64x1xf32> to vector<2x64x64xf32>
    %37 = arith.mulf %32, %36 : vector<2x64x64xf32>
    %38 = vector.extract_strided_slice %17 {offsets = [0, 0, 0], sizes = [2, 64, 8], strides = [1, 1, 1]} : vector<2x64x32xf32> to vector<2x64x8xf32>
    "tpu.trace_start"() <{level = 10 : i32, message = "bqk,bkd->bqd"}> : () -> ()
    %cst_13 = arith.constant dense<0.000000e+00> : vector<2x64x8xf32>
    %39 = tpu.matmul %37, %38, %cst_13 {dimension_numbers = #tpu.dot_dimension_numbers<[2], [1], [1], [2], [0, 0, 0, 1, 1, 2], [0], [0]>} : vector<2x64x64xf32>, vector<2x64x8xf32>, vector<2x64x8xf32> -> vector<2x64x8xf32>
    "tpu.trace_stop"() : () -> ()
    %40 = vector.extract_strided_slice %13 {offsets = [0, 0, 8], sizes = [2, 64, 8], strides = [1, 1, 1]} : vector<2x64x32xf32> to vector<2x64x8xf32>
    %41 = vector.extract_strided_slice %15 {offsets = [0, 0, 8], sizes = [2, 64, 8], strides = [1, 1, 1]} : vector<2x64x32xf32> to vector<2x64x8xf32>
    "tpu.trace_start"() <{level = 10 : i32, message = "bqd,bkd->bqk"}> : () -> ()
    %cst_14 = arith.constant dense<0.000000e+00> : vector<2x64x64xf32>
    %42 = tpu.matmul %40, %41, %cst_14 {dimension_numbers = #tpu.dot_dimension_numbers<[2], [2], [1], [1], [0, 0, 0, 1, 1, 1], [0], [0]>} : vector<2x64x8xf32>, vector<2x64x8xf32>, vector<2x64x64xf32> -> vector<2x64x64xf32>
    "tpu.trace_stop"() : () -> ()
    %cst_15 = arith.constant dense<0xFF800000> : vector<2x64xf32>
    %43 = vector.multi_reduction <maximumf>, %42, %cst_15 [2] : vector<2x64x64xf32> to vector<2x64xf32>
    %44 = vector.shape_cast %43 : vector<2x64xf32> to vector<2x64x1xf32>
    %45 = vector.broadcast %44 : vector<2x64x1xf32> to vector<2x64x64xf32>
    %46 = arith.subf %42, %45 : vector<2x64x64xf32>
    %47 = math.exp %46 : vector<2x64x64xf32>
    %cst_16 = arith.constant dense<0.000000e+00> : vector<2x64xf32>
    %48 = vector.multi_reduction <add>, %47, %cst_16 [2] : vector<2x64x64xf32> to vector<2x64xf32>
    %49 = vector.shape_cast %48 : vector<2x64xf32> to vector<2x64x1xf32>
    %50 = tpu.reciprocal %49 {approx = true} : vector<2x64x1xf32> -> vector<2x64x1xf32>
    %51 = vector.broadcast %50 : vector<2x64x1xf32> to vector<2x64x64xf32>
    %52 = arith.mulf %47, %51 : vector<2x64x64xf32>
    %53 = vector.extract_strided_slice %17 {offsets = [0, 0, 8], sizes = [2, 64, 8], strides = [1, 1, 1]} : vector<2x64x32xf32> to vector<2x64x8xf32>
    "tpu.trace_start"() <{level = 10 : i32, message = "bqk,bkd->bqd"}> : () -> ()
    %cst_17 = arith.constant dense<0.000000e+00> : vector<2x64x8xf32>
    %54 = tpu.matmul %52, %53, %cst_17 {dimension_numbers = #tpu.dot_dimension_numbers<[2], [1], [1], [2], [0, 0, 0, 1, 1, 2], [0], [0]>} : vector<2x64x64xf32>, vector<2x64x8xf32>, vector<2x64x8xf32> -> vector<2x64x8xf32>
    "tpu.trace_stop"() : () -> ()
    %55 = vector.extract_strided_slice %13 {offsets = [0, 0, 16], sizes = [2, 64, 8], strides = [1, 1, 1]} : vector<2x64x32xf32> to vector<2x64x8xf32>
    %56 = vector.extract_strided_slice %15 {offsets = [0, 0, 16], sizes = [2, 64, 8], strides = [1, 1, 1]} : vector<2x64x32xf32> to vector<2x64x8xf32>
    "tpu.trace_start"() <{level = 10 : i32, message = "bqd,bkd->bqk"}> : () -> ()
    %cst_18 = arith.constant dense<0.000000e+00> : vector<2x64x64xf32>
    %57 = tpu.matmul %55, %56, %cst_18 {dimension_numbers = #tpu.dot_dimension_numbers<[2], [2], [1], [1], [0, 0, 0, 1, 1, 1], [0], [0]>} : vector<2x64x8xf32>, vector<2x64x8xf32>, vector<2x64x64xf32> -> vector<2x64x64xf32>
    "tpu.trace_stop"() : () -> ()
    %cst_19 = arith.constant dense<0xFF800000> : vector<2x64xf32>
    %58 = vector.multi_reduction <maximumf>, %57, %cst_19 [2] : vector<2x64x64xf32> to vector<2x64xf32>
    %59 = vector.shape_cast %58 : vector<2x64xf32> to vector<2x64x1xf32>
    %60 = vector.broadcast %59 : vector<2x64x1xf32> to vector<2x64x64xf32>
    %61 = arith.subf %57, %60 : vector<2x64x64xf32>
    %62 = math.exp %61 : vector<2x64x64xf32>
    %cst_20 = arith.constant dense<0.000000e+00> : vector<2x64xf32>
    %63 = vector.multi_reduction <add>, %62, %cst_20 [2] : vector<2x64x64xf32> to vector<2x64xf32>
    %64 = vector.shape_cast %63 : vector<2x64xf32> to vector<2x64x1xf32>
    %65 = tpu.reciprocal %64 {approx = true} : vector<2x64x1xf32> -> vector<2x64x1xf32>
    %66 = vector.broadcast %65 : vector<2x64x1xf32> to vector<2x64x64xf32>
    %67 = arith.mulf %62, %66 : vector<2x64x64xf32>
    %68 = vector.extract_strided_slice %17 {offsets = [0, 0, 16], sizes = [2, 64, 8], strides = [1, 1, 1]} : vector<2x64x32xf32> to vector<2x64x8xf32>
    "tpu.trace_start"() <{level = 10 : i32, message = "bqk,bkd->bqd"}> : () -> ()
    %cst_21 = arith.constant dense<0.000000e+00> : vector<2x64x8xf32>
    %69 = tpu.matmul %67, %68, %cst_21 {dimension_numbers = #tpu.dot_dimension_numbers<[2], [1], [1], [2], [0, 0, 0, 1, 1, 2], [0], [0]>} : vector<2x64x64xf32>, vector<2x64x8xf32>, vector<2x64x8xf32> -> vector<2x64x8xf32>
    "tpu.trace_stop"() : () -> ()
    %70 = vector.extract_strided_slice %13 {offsets = [0, 0, 24], sizes = [2, 64, 8], strides = [1, 1, 1]} : vector<2x64x32xf32> to vector<2x64x8xf32>
    %71 = vector.extract_strided_slice %15 {offsets = [0, 0, 24], sizes = [2, 64, 8], strides = [1, 1, 1]} : vector<2x64x32xf32> to vector<2x64x8xf32>
    "tpu.trace_start"() <{level = 10 : i32, message = "bqd,bkd->bqk"}> : () -> ()
    %cst_22 = arith.constant dense<0.000000e+00> : vector<2x64x64xf32>
    %72 = tpu.matmul %70, %71, %cst_22 {dimension_numbers = #tpu.dot_dimension_numbers<[2], [2], [1], [1], [0, 0, 0, 1, 1, 1], [0], [0]>} : vector<2x64x8xf32>, vector<2x64x8xf32>, vector<2x64x64xf32> -> vector<2x64x64xf32>
    "tpu.trace_stop"() : () -> ()
    %cst_23 = arith.constant dense<0xFF800000> : vector<2x64xf32>
    %73 = vector.multi_reduction <maximumf>, %72, %cst_23 [2] : vector<2x64x64xf32> to vector<2x64xf32>
    %74 = vector.shape_cast %73 : vector<2x64xf32> to vector<2x64x1xf32>
    %75 = vector.broadcast %74 : vector<2x64x1xf32> to vector<2x64x64xf32>
    %76 = arith.subf %72, %75 : vector<2x64x64xf32>
    %77 = math.exp %76 : vector<2x64x64xf32>
    %cst_24 = arith.constant dense<0.000000e+00> : vector<2x64xf32>
    %78 = vector.multi_reduction <add>, %77, %cst_24 [2] : vector<2x64x64xf32> to vector<2x64xf32>
    %79 = vector.shape_cast %78 : vector<2x64xf32> to vector<2x64x1xf32>
    %80 = tpu.reciprocal %79 {approx = true} : vector<2x64x1xf32> -> vector<2x64x1xf32>
    %81 = vector.broadcast %80 : vector<2x64x1xf32> to vector<2x64x64xf32>
    %82 = arith.mulf %77, %81 : vector<2x64x64xf32>
    %83 = vector.extract_strided_slice %17 {offsets = [0, 0, 24], sizes = [2, 64, 8], strides = [1, 1, 1]} : vector<2x64x32xf32> to vector<2x64x8xf32>
    "tpu.trace_start"() <{level = 10 : i32, message = "bqk,bkd->bqd"}> : () -> ()
    %cst_25 = arith.constant dense<0.000000e+00> : vector<2x64x8xf32>
    %84 = tpu.matmul %82, %83, %cst_25 {dimension_numbers = #tpu.dot_dimension_numbers<[2], [1], [1], [2], [0, 0, 0, 1, 1, 2], [0], [0]>} : vector<2x64x64xf32>, vector<2x64x8xf32>, vector<2x64x8xf32> -> vector<2x64x8xf32>
    "tpu.trace_stop"() : () -> ()
    %85 = tpu.concatenate %39, %54, %69, %84 in 2 : vector<2x64x8xf32>, vector<2x64x8xf32>, vector<2x64x8xf32>, vector<2x64x8xf32> -> vector<2x64x32xf32>
    %86 = vector.shape_cast %85 : vector<2x64x32xf32> to vector<128x32xf32>
    %c0_26 = arith.constant 0 : index
    %c0_27 = arith.constant 0 : index
    %87 = vector.load %arg5[%c0_26, %c0_27] : memref<32x32xf32, #tpu.memory_space<vmem>>, vector<32x32xf32>
    %cst_28 = arith.constant dense<0.000000e+00> : vector<128x32xf32>
    %88 = tpu.matmul %86, %87, %cst_28 {dimension_numbers = #tpu.dot_dimension_numbers<[1], [0], [0], [1], [0, 0, 1, 1], [], []>} : vector<128x32xf32>, vector<32x32xf32>, vector<128x32xf32> -> vector<128x32xf32>
    %89 = vector.broadcast %19 : vector<1x32xf32> to vector<128x32xf32>
    %90 = arith.addf %88, %89 : vector<128x32xf32>
    %91 = arith.addf %6, %90 : vector<128x32xf32>
    %cst_29 = arith.constant dense<0.000000e+00> : vector<128xf32>
    %92 = vector.multi_reduction <add>, %91, %cst_29 [1] : vector<128x32xf32> to vector<128xf32>
    %93 = vector.shape_cast %92 : vector<128xf32> to vector<128x1xf32>
    %cst_30 = arith.constant 3.200000e+01 : f32
    %94 = vector.broadcast %cst_30 : f32 to vector<128x1xf32>
    %95 = arith.divf %93, %94 : vector<128x1xf32>
    %96 = vector.broadcast %95 : vector<128x1xf32> to vector<128x32xf32>
    %97 = arith.subf %91, %96 : vector<128x32xf32>
    %98 = arith.mulf %97, %97 : vector<128x32xf32>
    %cst_31 = arith.constant dense<0.000000e+00> : vector<128xf32>
    %99 = vector.multi_reduction <add>, %98, %cst_31 [1] : vector<128x32xf32> to vector<128xf32>
    %100 = vector.shape_cast %99 : vector<128xf32> to vector<128x1xf32>
    %cst_32 = arith.constant 3.200000e+01 : f32
    %101 = vector.broadcast %cst_32 : f32 to vector<128x1xf32>
    %102 = arith.divf %100, %101 : vector<128x1xf32>
    %103 = vector.broadcast %95 : vector<128x1xf32> to vector<128x32xf32>
    %104 = arith.subf %91, %103 : vector<128x32xf32>
    %cst_33 = arith.constant 9.99999974E-6 : f32
    %105 = vector.broadcast %cst_33 : f32 to vector<128x1xf32>
    %106 = arith.addf %102, %105 : vector<128x1xf32>
    %107 = math.rsqrt %106 : vector<128x1xf32>
    %108 = vector.broadcast %107 : vector<128x1xf32> to vector<128x32xf32>
    %109 = arith.mulf %104, %108 : vector<128x32xf32>
    %110 = vector.broadcast %20 : vector<1x32xf32> to vector<128x32xf32>
    %111 = arith.mulf %109, %110 : vector<128x32xf32>
    %112 = vector.broadcast %21 : vector<1x32xf32> to vector<128x32xf32>
    %113 = arith.addf %111, %112 : vector<128x32xf32>
    %c0_34 = arith.constant 0 : index
    %c0_35 = arith.constant 0 : index
    %114 = vector.load %arg6[%c0_34, %c0_35] : memref<32x64xf32, #tpu.memory_space<vmem>>, vector<32x64xf32>
    %cst_36 = arith.constant dense<0.000000e+00> : vector<128x64xf32>
    %115 = tpu.matmul %113, %114, %cst_36 {dimension_numbers = #tpu.dot_dimension_numbers<[1], [0], [0], [1], [0, 0, 1, 1], [], []>} : vector<128x32xf32>, vector<32x64xf32>, vector<128x64xf32> -> vector<128x64xf32>
    %c0_37 = arith.constant 0 : index
    %c0_38 = arith.constant 0 : index
    %116 = vector.load %arg7[%c0_37, %c0_38] : memref<1x64xf32, #tpu.memory_space<vmem>>, vector<1x64xf32>
    %117 = vector.broadcast %116 : vector<1x64xf32> to vector<128x64xf32>
    %118 = arith.addf %115, %117 : vector<128x64xf32>
    %cst_39 = arith.constant 0.000000e+00 : f32
    %119 = vector.broadcast %cst_39 : f32 to vector<128x64xf32>
    %120 = arith.maximumf %118, %119 : vector<128x64xf32>
    %c0_40 = arith.constant 0 : index
    %c0_41 = arith.constant 0 : index
    %121 = vector.load %arg8[%c0_40, %c0_41] : memref<64x32xf32, #tpu.memory_space<vmem>>, vector<64x32xf32>
    %cst_42 = arith.constant dense<0.000000e+00> : vector<128x32xf32>
    %122 = tpu.matmul %120, %121, %cst_42 {dimension_numbers = #tpu.dot_dimension_numbers<[1], [0], [0], [1], [0, 0, 1, 1], [], []>} : vector<128x64xf32>, vector<64x32xf32>, vector<128x32xf32> -> vector<128x32xf32>
    %123 = vector.broadcast %22 : vector<1x32xf32> to vector<128x32xf32>
    %124 = arith.addf %122, %123 : vector<128x32xf32>
    %125 = arith.addf %113, %124 : vector<128x32xf32>
    %cst_43 = arith.constant dense<0.000000e+00> : vector<128xf32>
    %126 = vector.multi_reduction <add>, %125, %cst_43 [1] : vector<128x32xf32> to vector<128xf32>
    %127 = vector.shape_cast %126 : vector<128xf32> to vector<128x1xf32>
    %cst_44 = arith.constant 3.200000e+01 : f32
    %128 = vector.broadcast %cst_44 : f32 to vector<128x1xf32>
    %129 = arith.divf %127, %128 : vector<128x1xf32>
    %130 = vector.broadcast %129 : vector<128x1xf32> to vector<128x32xf32>
    %131 = arith.subf %125, %130 : vector<128x32xf32>
    %132 = arith.mulf %131, %131 : vector<128x32xf32>
    %cst_45 = arith.constant dense<0.000000e+00> : vector<128xf32>
    %133 = vector.multi_reduction <add>, %132, %cst_45 [1] : vector<128x32xf32> to vector<128xf32>
    %134 = vector.shape_cast %133 : vector<128xf32> to vector<128x1xf32>
    %cst_46 = arith.constant 3.200000e+01 : f32
    %135 = vector.broadcast %cst_46 : f32 to vector<128x1xf32>
    %136 = arith.divf %134, %135 : vector<128x1xf32>
    %137 = vector.broadcast %129 : vector<128x1xf32> to vector<128x32xf32>
    %138 = arith.subf %125, %137 : vector<128x32xf32>
    %cst_47 = arith.constant 9.99999974E-6 : f32
    %139 = vector.broadcast %cst_47 : f32 to vector<128x1xf32>
    %140 = arith.addf %136, %139 : vector<128x1xf32>
    %141 = math.rsqrt %140 : vector<128x1xf32>
    %142 = vector.broadcast %141 : vector<128x1xf32> to vector<128x32xf32>
    %143 = arith.mulf %138, %142 : vector<128x32xf32>
    %144 = vector.broadcast %23 : vector<1x32xf32> to vector<128x32xf32>
    %145 = arith.mulf %143, %144 : vector<128x32xf32>
    %146 = vector.broadcast %24 : vector<1x32xf32> to vector<128x32xf32>
    %147 = arith.addf %145, %146 : vector<128x32xf32>
    %148 = vector.shape_cast %147 : vector<128x32xf32> to vector<2x64x32xf32>
    %149 = tpu.transpose %148, [0, 2, 1] : vector<2x64x32xf32> -> vector<2x32x64xf32>
    %150 = vector.shape_cast %149 : vector<2x32x64xf32> to vector<1x2x2048xf32>
    %c0_48 = arith.constant 0 : index
    %c0_49 = arith.constant 0 : index
    %c0_50 = arith.constant 0 : index
    %151 = vector.load %arg10[%c0_48, %c0_49, %c0_50] : memref<1x2x2048xf32, #tpu.memory_space<vmem>>, vector<1x2x2048xf32>
    tpu.vector_store %arg10[%c0_48, %c0_49, %c0_50], %150 {strides = array<i32>} : memref<1x2x2048xf32, #tpu.memory_space<vmem>>, vector<1x2x2048xf32>,
    return
  }
  func.func @transform_0(%arg0: i32) -> (i32, i32, i32) {
    %c0_i32 = arith.constant 0 : i32
    %c0_i32_0 = arith.constant 0 : i32
    %c0_i32_1 = arith.constant 0 : i32
    return %arg0, %c0_i32, %c0_i32_0 : i32, i32, i32
  }
  func.func @transform_1(%arg0: i32) -> (i32, i32) {
    %c0_i32 = arith.constant 0 : i32
    %c0_i32_0 = arith.constant 0 : i32
    %c0_i32_1 = arith.constant 0 : i32
    return %c0_i32, %c0_i32_0 : i32, i32
  }
  func.func @transform_2(%arg0: i32) -> (i32, i32) {
    %c0_i32 = arith.constant 0 : i32
    %c0_i32_0 = arith.constant 0 : i32
    %c0_i32_1 = arith.constant 0 : i32
    return %c0_i32, %c0_i32_0 : i32, i32
  }
  func.func @transform_3(%arg0: i32) -> (i32, i32) {
    %c0_i32 = arith.constant 0 : i32
    %c0_i32_0 = arith.constant 0 : i32
    %c0_i32_1 = arith.constant 0 : i32
    return %c0_i32, %c0_i32_0 : i32, i32
  }
  func.func @transform_4(%arg0: i32) -> (i32, i32) {
    %c0_i32 = arith.constant 0 : i32
    %c0_i32_0 = arith.constant 0 : i32
    %c0_i32_1 = arith.constant 0 : i32
    return %c0_i32, %c0_i32_0 : i32, i32
  }
  func.func @transform_5(%arg0: i32) -> (i32, i32) {
    %c0_i32 = arith.constant 0 : i32
    %c0_i32_0 = arith.constant 0 : i32
    %c0_i32_1 = arith.constant 0 : i32
    return %c0_i32, %c0_i32_0 : i32, i32
  }
  func.func @transform_6(%arg0: i32) -> (i32, i32) {
    %c0_i32 = arith.constant 0 : i32
    %c0_i32_0 = arith.constant 0 : i32
    %c0_i32_1 = arith.constant 0 : i32
    return %c0_i32, %c0_i32_0 : i32, i32
  }
  func.func @transform_7(%arg0: i32) -> (i32, i32) {
    %c0_i32 = arith.constant 0 : i32
    %c0_i32_0 = arith.constant 0 : i32
    %c0_i32_1 = arith.constant 0 : i32
    return %c0_i32, %c0_i32_0 : i32, i32
  }
  func.func @transform_8(%arg0: i32) -> (i32, i32) {
    %c0_i32 = arith.constant 0 : i32
    %c0_i32_0 = arith.constant 0 : i32
    %c0_i32_1 = arith.constant 0 : i32
    return %c0_i32, %c0_i32_0 : i32, i32
  }
  func.func @transform_9(%arg0: i32) -> (i32, i32, i32) {
    %c0_i32 = arith.constant 0 : i32
    %c0_i32_0 = arith.constant 0 : i32
    %c0_i32_1 = arith.constant 0 : i32
    return %arg0, %c0_i32, %c0_i32_0 : i32, i32, i32
  }
}

module attributes {stable_mosaic.version = 11 : i64} {
  func.func @spatial_attn_kernel(%arg0: i32, %arg1: memref<2x64x32xf32, #tpu.memory_space<vmem>>, %arg2: memref<64x32xf32, #tpu.memory_space<vmem>>, %arg3: memref<32x96xf32, #tpu.memory_space<vmem>>, %arg4: memref<1x96xf32, #tpu.memory_space<vmem>>, %arg5: memref<32x32xf32, #tpu.memory_space<vmem>>, %arg6: memref<32x64xf32, #tpu.memory_space<vmem>>, %arg7: memref<1x64xf32, #tpu.memory_space<vmem>>, %arg8: memref<64x32xf32, #tpu.memory_space<vmem>>, %arg9: memref<6x32xf32, #tpu.memory_space<vmem>>, %arg10: memref<2x64x32xf32, #tpu.memory_space<vmem>>) attributes {dimension_semantics = [#tpu.dimension_semantics<parallel>], iteration_bounds = array<i64: 2>, scalar_prefetch = 0 : i64, scratch_operands = 0 : i64, tpu.core_type = #tpu.core_type<tc>, window_params = [{transform_indices = @transform_0, window_bounds = array<i64: 2, 64, 32>}, {pipeline_mode = #tpu.pipeline_mode<synchronous>, transform_indices = @transform_1, window_bounds = array<i64: 64, 32>}, {pipeline_mode = #tpu.pipeline_mode<synchronous>, transform_indices = @transform_2, window_bounds = array<i64: 32, 96>}, {pipeline_mode = #tpu.pipeline_mode<synchronous>, transform_indices = @transform_3, window_bounds = array<i64: 1, 96>}, {pipeline_mode = #tpu.pipeline_mode<synchronous>, transform_indices = @transform_4, window_bounds = array<i64: 32, 32>}, {pipeline_mode = #tpu.pipeline_mode<synchronous>, transform_indices = @transform_5, window_bounds = array<i64: 32, 64>}, {pipeline_mode = #tpu.pipeline_mode<synchronous>, transform_indices = @transform_6, window_bounds = array<i64: 1, 64>}, {pipeline_mode = #tpu.pipeline_mode<synchronous>, transform_indices = @transform_7, window_bounds = array<i64: 64, 32>}, {pipeline_mode = #tpu.pipeline_mode<synchronous>, transform_indices = @transform_8, window_bounds = array<i64: 6, 32>}, {transform_indices = @transform_9, window_bounds = array<i64: 2, 64, 32>}]} {
    %c0 = arith.constant 0 : index
    %c0_0 = arith.constant 0 : index
    %c0_1 = arith.constant 0 : index
    %0 = vector.load %arg1[%c0, %c0_0, %c0_1] : memref<2x64x32xf32, #tpu.memory_space<vmem>>, vector<2x64x32xf32>
    %c0_2 = arith.constant 0 : index
    %c0_3 = arith.constant 0 : index
    %1 = vector.load %arg2[%c0_2, %c0_3] : memref<64x32xf32, #tpu.memory_space<vmem>>, vector<64x32xf32>
    %2 = vector.shape_cast %1 : vector<64x32xf32> to vector<1x64x32xf32>
    %3 = vector.broadcast %2 : vector<1x64x32xf32> to vector<2x64x32xf32>
    %4 = arith.addf %0, %3 : vector<2x64x32xf32>
    %5 = vector.shape_cast %4 : vector<2x64x32xf32> to vector<128x32xf32>
    %c0_4 = arith.constant 0 : index
    %c0_5 = arith.constant 0 : index
    %6 = vector.load %arg3[%c0_4, %c0_5] : memref<32x96xf32, #tpu.memory_space<vmem>>, vector<32x96xf32>
    %cst = arith.constant dense<0.000000e+00> : vector<128x96xf32>
    %7 = tpu.matmul %5, %6, %cst {dimension_numbers = #tpu.dot_dimension_numbers<[1], [0], [0], [1], [0, 0, 1, 1], [], []>} : vector<128x32xf32>, vector<32x96xf32>, vector<128x96xf32> -> vector<128x96xf32>
    %c0_6 = arith.constant 0 : index
    %c0_7 = arith.constant 0 : index
    %8 = vector.load %arg4[%c0_6, %c0_7] : memref<1x96xf32, #tpu.memory_space<vmem>>, vector<1x96xf32>
    %9 = vector.broadcast %8 : vector<1x96xf32> to vector<128x96xf32>
    %10 = arith.addf %7, %9 : vector<128x96xf32>
    %11 = vector.extract_strided_slice %10 {offsets = [0, 0], sizes = [128, 32], strides = [1, 1]} : vector<128x96xf32> to vector<128x32xf32>
    %12 = vector.shape_cast %11 : vector<128x32xf32> to vector<2x64x32xf32>
    %13 = vector.extract_strided_slice %10 {offsets = [0, 32], sizes = [128, 32], strides = [1, 1]} : vector<128x96xf32> to vector<128x32xf32>
    %14 = vector.shape_cast %13 : vector<128x32xf32> to vector<2x64x32xf32>
    %15 = vector.extract_strided_slice %10 {offsets = [0, 64], sizes = [128, 32], strides = [1, 1]} : vector<128x96xf32> to vector<128x32xf32>
    %16 = vector.shape_cast %15 : vector<128x32xf32> to vector<2x64x32xf32>
    %c0_8 = arith.constant 0 : index
    %c0_9 = arith.constant 0 : index
    %17 = vector.load %arg9[%c0_8, %c0_9] : memref<6x32xf32, #tpu.memory_space<vmem>>, vector<6x32xf32>
    %18 = vector.extract_strided_slice %17 {offsets = [0, 0], sizes = [1, 32], strides = [1, 1]} : vector<6x32xf32> to vector<1x32xf32>
    %19 = vector.extract_strided_slice %17 {offsets = [1, 0], sizes = [1, 32], strides = [1, 1]} : vector<6x32xf32> to vector<1x32xf32>
    %20 = vector.extract_strided_slice %17 {offsets = [2, 0], sizes = [1, 32], strides = [1, 1]} : vector<6x32xf32> to vector<1x32xf32>
    %21 = vector.extract_strided_slice %17 {offsets = [3, 0], sizes = [1, 32], strides = [1, 1]} : vector<6x32xf32> to vector<1x32xf32>
    %22 = vector.extract_strided_slice %17 {offsets = [4, 0], sizes = [1, 32], strides = [1, 1]} : vector<6x32xf32> to vector<1x32xf32>
    %23 = vector.extract_strided_slice %17 {offsets = [5, 0], sizes = [1, 32], strides = [1, 1]} : vector<6x32xf32> to vector<1x32xf32>
    %24 = vector.extract_strided_slice %12 {offsets = [0, 0, 0], sizes = [2, 64, 8], strides = [1, 1, 1]} : vector<2x64x32xf32> to vector<2x64x8xf32>
    %25 = vector.extract_strided_slice %14 {offsets = [0, 0, 0], sizes = [2, 64, 8], strides = [1, 1, 1]} : vector<2x64x32xf32> to vector<2x64x8xf32>
    "tpu.trace_start"() <{level = 10 : i32, message = "bqd,bkd->bqk"}> : () -> ()
    %cst_10 = arith.constant dense<0.000000e+00> : vector<2x64x64xf32>
    %26 = tpu.matmul %24, %25, %cst_10 {dimension_numbers = #tpu.dot_dimension_numbers<[2], [2], [1], [1], [0, 0, 0, 1, 1, 1], [0], [0]>} : vector<2x64x8xf32>, vector<2x64x8xf32>, vector<2x64x64xf32> -> vector<2x64x64xf32>
    "tpu.trace_stop"() : () -> ()
    %cst_11 = arith.constant dense<0xFF800000> : vector<2x64xf32>
    %27 = vector.multi_reduction <maximumf>, %26, %cst_11 [2] : vector<2x64x64xf32> to vector<2x64xf32>
    %28 = vector.shape_cast %27 : vector<2x64xf32> to vector<2x64x1xf32>
    %29 = vector.broadcast %28 : vector<2x64x1xf32> to vector<2x64x64xf32>
    %30 = arith.subf %26, %29 : vector<2x64x64xf32>
    %31 = math.exp %30 : vector<2x64x64xf32>
    %cst_12 = arith.constant dense<0.000000e+00> : vector<2x64xf32>
    %32 = vector.multi_reduction <add>, %31, %cst_12 [2] : vector<2x64x64xf32> to vector<2x64xf32>
    %33 = vector.shape_cast %32 : vector<2x64xf32> to vector<2x64x1xf32>
    %34 = tpu.reciprocal %33 {approx = true} : vector<2x64x1xf32> -> vector<2x64x1xf32>
    %35 = vector.broadcast %34 : vector<2x64x1xf32> to vector<2x64x64xf32>
    %36 = arith.mulf %31, %35 : vector<2x64x64xf32>
    %37 = vector.extract_strided_slice %16 {offsets = [0, 0, 0], sizes = [2, 64, 8], strides = [1, 1, 1]} : vector<2x64x32xf32> to vector<2x64x8xf32>
    "tpu.trace_start"() <{level = 10 : i32, message = "bqk,bkd->bqd"}> : () -> ()
    %cst_13 = arith.constant dense<0.000000e+00> : vector<2x64x8xf32>
    %38 = tpu.matmul %36, %37, %cst_13 {dimension_numbers = #tpu.dot_dimension_numbers<[2], [1], [1], [2], [0, 0, 0, 1, 1, 2], [0], [0]>} : vector<2x64x64xf32>, vector<2x64x8xf32>, vector<2x64x8xf32> -> vector<2x64x8xf32>
    "tpu.trace_stop"() : () -> ()
    %39 = vector.extract_strided_slice %12 {offsets = [0, 0, 8], sizes = [2, 64, 8], strides = [1, 1, 1]} : vector<2x64x32xf32> to vector<2x64x8xf32>
    %40 = vector.extract_strided_slice %14 {offsets = [0, 0, 8], sizes = [2, 64, 8], strides = [1, 1, 1]} : vector<2x64x32xf32> to vector<2x64x8xf32>
    "tpu.trace_start"() <{level = 10 : i32, message = "bqd,bkd->bqk"}> : () -> ()
    %cst_14 = arith.constant dense<0.000000e+00> : vector<2x64x64xf32>
    %41 = tpu.matmul %39, %40, %cst_14 {dimension_numbers = #tpu.dot_dimension_numbers<[2], [2], [1], [1], [0, 0, 0, 1, 1, 1], [0], [0]>} : vector<2x64x8xf32>, vector<2x64x8xf32>, vector<2x64x64xf32> -> vector<2x64x64xf32>
    "tpu.trace_stop"() : () -> ()
    %cst_15 = arith.constant dense<0xFF800000> : vector<2x64xf32>
    %42 = vector.multi_reduction <maximumf>, %41, %cst_15 [2] : vector<2x64x64xf32> to vector<2x64xf32>
    %43 = vector.shape_cast %42 : vector<2x64xf32> to vector<2x64x1xf32>
    %44 = vector.broadcast %43 : vector<2x64x1xf32> to vector<2x64x64xf32>
    %45 = arith.subf %41, %44 : vector<2x64x64xf32>
    %46 = math.exp %45 : vector<2x64x64xf32>
    %cst_16 = arith.constant dense<0.000000e+00> : vector<2x64xf32>
    %47 = vector.multi_reduction <add>, %46, %cst_16 [2] : vector<2x64x64xf32> to vector<2x64xf32>
    %48 = vector.shape_cast %47 : vector<2x64xf32> to vector<2x64x1xf32>
    %49 = tpu.reciprocal %48 {approx = true} : vector<2x64x1xf32> -> vector<2x64x1xf32>
    %50 = vector.broadcast %49 : vector<2x64x1xf32> to vector<2x64x64xf32>
    %51 = arith.mulf %46, %50 : vector<2x64x64xf32>
    %52 = vector.extract_strided_slice %16 {offsets = [0, 0, 8], sizes = [2, 64, 8], strides = [1, 1, 1]} : vector<2x64x32xf32> to vector<2x64x8xf32>
    "tpu.trace_start"() <{level = 10 : i32, message = "bqk,bkd->bqd"}> : () -> ()
    %cst_17 = arith.constant dense<0.000000e+00> : vector<2x64x8xf32>
    %53 = tpu.matmul %51, %52, %cst_17 {dimension_numbers = #tpu.dot_dimension_numbers<[2], [1], [1], [2], [0, 0, 0, 1, 1, 2], [0], [0]>} : vector<2x64x64xf32>, vector<2x64x8xf32>, vector<2x64x8xf32> -> vector<2x64x8xf32>
    "tpu.trace_stop"() : () -> ()
    %54 = vector.extract_strided_slice %12 {offsets = [0, 0, 16], sizes = [2, 64, 8], strides = [1, 1, 1]} : vector<2x64x32xf32> to vector<2x64x8xf32>
    %55 = vector.extract_strided_slice %14 {offsets = [0, 0, 16], sizes = [2, 64, 8], strides = [1, 1, 1]} : vector<2x64x32xf32> to vector<2x64x8xf32>
    "tpu.trace_start"() <{level = 10 : i32, message = "bqd,bkd->bqk"}> : () -> ()
    %cst_18 = arith.constant dense<0.000000e+00> : vector<2x64x64xf32>
    %56 = tpu.matmul %54, %55, %cst_18 {dimension_numbers = #tpu.dot_dimension_numbers<[2], [2], [1], [1], [0, 0, 0, 1, 1, 1], [0], [0]>} : vector<2x64x8xf32>, vector<2x64x8xf32>, vector<2x64x64xf32> -> vector<2x64x64xf32>
    "tpu.trace_stop"() : () -> ()
    %cst_19 = arith.constant dense<0xFF800000> : vector<2x64xf32>
    %57 = vector.multi_reduction <maximumf>, %56, %cst_19 [2] : vector<2x64x64xf32> to vector<2x64xf32>
    %58 = vector.shape_cast %57 : vector<2x64xf32> to vector<2x64x1xf32>
    %59 = vector.broadcast %58 : vector<2x64x1xf32> to vector<2x64x64xf32>
    %60 = arith.subf %56, %59 : vector<2x64x64xf32>
    %61 = math.exp %60 : vector<2x64x64xf32>
    %cst_20 = arith.constant dense<0.000000e+00> : vector<2x64xf32>
    %62 = vector.multi_reduction <add>, %61, %cst_20 [2] : vector<2x64x64xf32> to vector<2x64xf32>
    %63 = vector.shape_cast %62 : vector<2x64xf32> to vector<2x64x1xf32>
    %64 = tpu.reciprocal %63 {approx = true} : vector<2x64x1xf32> -> vector<2x64x1xf32>
    %65 = vector.broadcast %64 : vector<2x64x1xf32> to vector<2x64x64xf32>
    %66 = arith.mulf %61, %65 : vector<2x64x64xf32>
    %67 = vector.extract_strided_slice %16 {offsets = [0, 0, 16], sizes = [2, 64, 8], strides = [1, 1, 1]} : vector<2x64x32xf32> to vector<2x64x8xf32>
    "tpu.trace_start"() <{level = 10 : i32, message = "bqk,bkd->bqd"}> : () -> ()
    %cst_21 = arith.constant dense<0.000000e+00> : vector<2x64x8xf32>
    %68 = tpu.matmul %66, %67, %cst_21 {dimension_numbers = #tpu.dot_dimension_numbers<[2], [1], [1], [2], [0, 0, 0, 1, 1, 2], [0], [0]>} : vector<2x64x64xf32>, vector<2x64x8xf32>, vector<2x64x8xf32> -> vector<2x64x8xf32>
    "tpu.trace_stop"() : () -> ()
    %69 = vector.extract_strided_slice %12 {offsets = [0, 0, 24], sizes = [2, 64, 8], strides = [1, 1, 1]} : vector<2x64x32xf32> to vector<2x64x8xf32>
    %70 = vector.extract_strided_slice %14 {offsets = [0, 0, 24], sizes = [2, 64, 8], strides = [1, 1, 1]} : vector<2x64x32xf32> to vector<2x64x8xf32>
    "tpu.trace_start"() <{level = 10 : i32, message = "bqd,bkd->bqk"}> : () -> ()
    %cst_22 = arith.constant dense<0.000000e+00> : vector<2x64x64xf32>
    %71 = tpu.matmul %69, %70, %cst_22 {dimension_numbers = #tpu.dot_dimension_numbers<[2], [2], [1], [1], [0, 0, 0, 1, 1, 1], [0], [0]>} : vector<2x64x8xf32>, vector<2x64x8xf32>, vector<2x64x64xf32> -> vector<2x64x64xf32>
    "tpu.trace_stop"() : () -> ()
    %cst_23 = arith.constant dense<0xFF800000> : vector<2x64xf32>
    %72 = vector.multi_reduction <maximumf>, %71, %cst_23 [2] : vector<2x64x64xf32> to vector<2x64xf32>
    %73 = vector.shape_cast %72 : vector<2x64xf32> to vector<2x64x1xf32>
    %74 = vector.broadcast %73 : vector<2x64x1xf32> to vector<2x64x64xf32>
    %75 = arith.subf %71, %74 : vector<2x64x64xf32>
    %76 = math.exp %75 : vector<2x64x64xf32>
    %cst_24 = arith.constant dense<0.000000e+00> : vector<2x64xf32>
    %77 = vector.multi_reduction <add>, %76, %cst_24 [2] : vector<2x64x64xf32> to vector<2x64xf32>
    %78 = vector.shape_cast %77 : vector<2x64xf32> to vector<2x64x1xf32>
    %79 = tpu.reciprocal %78 {approx = true} : vector<2x64x1xf32> -> vector<2x64x1xf32>
    %80 = vector.broadcast %79 : vector<2x64x1xf32> to vector<2x64x64xf32>
    %81 = arith.mulf %76, %80 : vector<2x64x64xf32>
    %82 = vector.extract_strided_slice %16 {offsets = [0, 0, 24], sizes = [2, 64, 8], strides = [1, 1, 1]} : vector<2x64x32xf32> to vector<2x64x8xf32>
    "tpu.trace_start"() <{level = 10 : i32, message = "bqk,bkd->bqd"}> : () -> ()
    %cst_25 = arith.constant dense<0.000000e+00> : vector<2x64x8xf32>
    %83 = tpu.matmul %81, %82, %cst_25 {dimension_numbers = #tpu.dot_dimension_numbers<[2], [1], [1], [2], [0, 0, 0, 1, 1, 2], [0], [0]>} : vector<2x64x64xf32>, vector<2x64x8xf32>, vector<2x64x8xf32> -> vector<2x64x8xf32>
    "tpu.trace_stop"() : () -> ()
    %84 = tpu.concatenate %38, %53, %68, %83 in 2 : vector<2x64x8xf32>, vector<2x64x8xf32>, vector<2x64x8xf32>, vector<2x64x8xf32> -> vector<2x64x32xf32>
    %85 = vector.shape_cast %84 : vector<2x64x32xf32> to vector<128x32xf32>
    %c0_26 = arith.constant 0 : index
    %c0_27 = arith.constant 0 : index
    %86 = vector.load %arg5[%c0_26, %c0_27] : memref<32x32xf32, #tpu.memory_space<vmem>>, vector<32x32xf32>
    %cst_28 = arith.constant dense<0.000000e+00> : vector<128x32xf32>
    %87 = tpu.matmul %85, %86, %cst_28 {dimension_numbers = #tpu.dot_dimension_numbers<[1], [0], [0], [1], [0, 0, 1, 1], [], []>} : vector<128x32xf32>, vector<32x32xf32>, vector<128x32xf32> -> vector<128x32xf32>
    %88 = vector.broadcast %18 : vector<1x32xf32> to vector<128x32xf32>
    %89 = arith.addf %87, %88 : vector<128x32xf32>
    %90 = arith.addf %5, %89 : vector<128x32xf32>
    %cst_29 = arith.constant dense<0.000000e+00> : vector<128xf32>
    %91 = vector.multi_reduction <add>, %90, %cst_29 [1] : vector<128x32xf32> to vector<128xf32>
    %92 = vector.shape_cast %91 : vector<128xf32> to vector<128x1xf32>
    %cst_30 = arith.constant 3.200000e+01 : f32
    %93 = vector.broadcast %cst_30 : f32 to vector<128x1xf32>
    %94 = arith.divf %92, %93 : vector<128x1xf32>
    %95 = vector.broadcast %94 : vector<128x1xf32> to vector<128x32xf32>
    %96 = arith.subf %90, %95 : vector<128x32xf32>
    %97 = arith.mulf %96, %96 : vector<128x32xf32>
    %cst_31 = arith.constant dense<0.000000e+00> : vector<128xf32>
    %98 = vector.multi_reduction <add>, %97, %cst_31 [1] : vector<128x32xf32> to vector<128xf32>
    %99 = vector.shape_cast %98 : vector<128xf32> to vector<128x1xf32>
    %cst_32 = arith.constant 3.200000e+01 : f32
    %100 = vector.broadcast %cst_32 : f32 to vector<128x1xf32>
    %101 = arith.divf %99, %100 : vector<128x1xf32>
    %102 = vector.broadcast %94 : vector<128x1xf32> to vector<128x32xf32>
    %103 = arith.subf %90, %102 : vector<128x32xf32>
    %cst_33 = arith.constant 9.99999974E-6 : f32
    %104 = vector.broadcast %cst_33 : f32 to vector<128x1xf32>
    %105 = arith.addf %101, %104 : vector<128x1xf32>
    %106 = math.rsqrt %105 : vector<128x1xf32>
    %107 = vector.broadcast %106 : vector<128x1xf32> to vector<128x32xf32>
    %108 = arith.mulf %103, %107 : vector<128x32xf32>
    %109 = vector.broadcast %19 : vector<1x32xf32> to vector<128x32xf32>
    %110 = arith.mulf %108, %109 : vector<128x32xf32>
    %111 = vector.broadcast %20 : vector<1x32xf32> to vector<128x32xf32>
    %112 = arith.addf %110, %111 : vector<128x32xf32>
    %c0_34 = arith.constant 0 : index
    %c0_35 = arith.constant 0 : index
    %113 = vector.load %arg6[%c0_34, %c0_35] : memref<32x64xf32, #tpu.memory_space<vmem>>, vector<32x64xf32>
    %cst_36 = arith.constant dense<0.000000e+00> : vector<128x64xf32>
    %114 = tpu.matmul %112, %113, %cst_36 {dimension_numbers = #tpu.dot_dimension_numbers<[1], [0], [0], [1], [0, 0, 1, 1], [], []>} : vector<128x32xf32>, vector<32x64xf32>, vector<128x64xf32> -> vector<128x64xf32>
    %c0_37 = arith.constant 0 : index
    %c0_38 = arith.constant 0 : index
    %115 = vector.load %arg7[%c0_37, %c0_38] : memref<1x64xf32, #tpu.memory_space<vmem>>, vector<1x64xf32>
    %116 = vector.broadcast %115 : vector<1x64xf32> to vector<128x64xf32>
    %117 = arith.addf %114, %116 : vector<128x64xf32>
    %cst_39 = arith.constant 0.000000e+00 : f32
    %118 = vector.broadcast %cst_39 : f32 to vector<128x64xf32>
    %119 = arith.maximumf %117, %118 : vector<128x64xf32>
    %c0_40 = arith.constant 0 : index
    %c0_41 = arith.constant 0 : index
    %120 = vector.load %arg8[%c0_40, %c0_41] : memref<64x32xf32, #tpu.memory_space<vmem>>, vector<64x32xf32>
    %cst_42 = arith.constant dense<0.000000e+00> : vector<128x32xf32>
    %121 = tpu.matmul %119, %120, %cst_42 {dimension_numbers = #tpu.dot_dimension_numbers<[1], [0], [0], [1], [0, 0, 1, 1], [], []>} : vector<128x64xf32>, vector<64x32xf32>, vector<128x32xf32> -> vector<128x32xf32>
    %122 = vector.broadcast %21 : vector<1x32xf32> to vector<128x32xf32>
    %123 = arith.addf %121, %122 : vector<128x32xf32>
    %124 = arith.addf %112, %123 : vector<128x32xf32>
    %cst_43 = arith.constant dense<0.000000e+00> : vector<128xf32>
    %125 = vector.multi_reduction <add>, %124, %cst_43 [1] : vector<128x32xf32> to vector<128xf32>
    %126 = vector.shape_cast %125 : vector<128xf32> to vector<128x1xf32>
    %cst_44 = arith.constant 3.200000e+01 : f32
    %127 = vector.broadcast %cst_44 : f32 to vector<128x1xf32>
    %128 = arith.divf %126, %127 : vector<128x1xf32>
    %129 = vector.broadcast %128 : vector<128x1xf32> to vector<128x32xf32>
    %130 = arith.subf %124, %129 : vector<128x32xf32>
    %131 = arith.mulf %130, %130 : vector<128x32xf32>
    %cst_45 = arith.constant dense<0.000000e+00> : vector<128xf32>
    %132 = vector.multi_reduction <add>, %131, %cst_45 [1] : vector<128x32xf32> to vector<128xf32>
    %133 = vector.shape_cast %132 : vector<128xf32> to vector<128x1xf32>
    %cst_46 = arith.constant 3.200000e+01 : f32
    %134 = vector.broadcast %cst_46 : f32 to vector<128x1xf32>
    %135 = arith.divf %133, %134 : vector<128x1xf32>
    %136 = vector.broadcast %128 : vector<128x1xf32> to vector<128x32xf32>
    %137 = arith.subf %124, %136 : vector<128x32xf32>
    %cst_47 = arith.constant 9.99999974E-6 : f32
    %138 = vector.broadcast %cst_47 : f32 to vector<128x1xf32>
    %139 = arith.addf %135, %138 : vector<128x1xf32>
    %140 = math.rsqrt %139 : vector<128x1xf32>
    %141 = vector.broadcast %140 : vector<128x1xf32> to vector<128x32xf32>
    %142 = arith.mulf %137, %141 : vector<128x32xf32>
    %143 = vector.broadcast %22 : vector<1x32xf32> to vector<128x32xf32>
    %144 = arith.mulf %142, %143 : vector<128x32xf32>
    %145 = vector.broadcast %23 : vector<1x32xf32> to vector<128x32xf32>
    %146 = arith.addf %144, %145 : vector<128x32xf32>
    %147 = vector.shape_cast %146 : vector<128x32xf32> to vector<2x64x32xf32>
    %c0_48 = arith.constant 0 : index
    %c0_49 = arith.constant 0 : index
    %c0_50 = arith.constant 0 : index
    %148 = vector.load %arg10[%c0_48, %c0_49, %c0_50] : memref<2x64x32xf32, #tpu.memory_space<vmem>>, vector<2x64x32xf32>
    tpu.vector_store %arg10[%c0_48, %c0_49, %c0_50], %147 {strides = array<i32>} : memref<2x64x32xf32, #tpu.memory_space<vmem>>, vector<2x64x32xf32>,
    return
  }
  func.func @transform_0(%arg0: i32) -> (i32, i32, i32) {
    %c0_i32 = arith.constant 0 : i32
    %c0_i32_0 = arith.constant 0 : i32
    %c0_i32_1 = arith.constant 0 : i32
    return %arg0, %c0_i32, %c0_i32_0 : i32, i32, i32
  }
  func.func @transform_1(%arg0: i32) -> (i32, i32) {
    %c0_i32 = arith.constant 0 : i32
    %c0_i32_0 = arith.constant 0 : i32
    %c0_i32_1 = arith.constant 0 : i32
    return %c0_i32, %c0_i32_0 : i32, i32
  }
  func.func @transform_2(%arg0: i32) -> (i32, i32) {
    %c0_i32 = arith.constant 0 : i32
    %c0_i32_0 = arith.constant 0 : i32
    %c0_i32_1 = arith.constant 0 : i32
    return %c0_i32, %c0_i32_0 : i32, i32
  }
  func.func @transform_3(%arg0: i32) -> (i32, i32) {
    %c0_i32 = arith.constant 0 : i32
    %c0_i32_0 = arith.constant 0 : i32
    %c0_i32_1 = arith.constant 0 : i32
    return %c0_i32, %c0_i32_0 : i32, i32
  }
  func.func @transform_4(%arg0: i32) -> (i32, i32) {
    %c0_i32 = arith.constant 0 : i32
    %c0_i32_0 = arith.constant 0 : i32
    %c0_i32_1 = arith.constant 0 : i32
    return %c0_i32, %c0_i32_0 : i32, i32
  }
  func.func @transform_5(%arg0: i32) -> (i32, i32) {
    %c0_i32 = arith.constant 0 : i32
    %c0_i32_0 = arith.constant 0 : i32
    %c0_i32_1 = arith.constant 0 : i32
    return %c0_i32, %c0_i32_0 : i32, i32
  }
  func.func @transform_6(%arg0: i32) -> (i32, i32) {
    %c0_i32 = arith.constant 0 : i32
    %c0_i32_0 = arith.constant 0 : i32
    %c0_i32_1 = arith.constant 0 : i32
    return %c0_i32, %c0_i32_0 : i32, i32
  }
  func.func @transform_7(%arg0: i32) -> (i32, i32) {
    %c0_i32 = arith.constant 0 : i32
    %c0_i32_0 = arith.constant 0 : i32
    %c0_i32_1 = arith.constant 0 : i32
    return %c0_i32, %c0_i32_0 : i32, i32
  }
  func.func @transform_8(%arg0: i32) -> (i32, i32) {
    %c0_i32 = arith.constant 0 : i32
    %c0_i32_0 = arith.constant 0 : i32
    %c0_i32_1 = arith.constant 0 : i32
    return %c0_i32, %c0_i32_0 : i32, i32
  }
  func.func @transform_9(%arg0: i32) -> (i32, i32, i32) {
    %c0_i32 = arith.constant 0 : i32
    %c0_i32_0 = arith.constant 0 : i32
    %c0_i32_1 = arith.constant 0 : i32
    return %arg0, %c0_i32, %c0_i32_0 : i32, i32, i32
  }
}

</mosaic_0001>

<llo_original>
// kernel: tpu_custom_call.1
$region0: #{tpu_custom_call.1}
  #allocation0 [shape = 'u32[]', space=smem, size = 0x4, offset = 0x4, fixed_abs, tag = 'smem constant byte address 0x4 - core index']
  #allocation1 [shape = 'u32[144,128]{1,0:T(1,128)}', space=vmem, size = 0x12000, scoped, tag = 'internal scratch']
  %s0 = inlined_call_operand.vmem [shape: f32[4,32,64], index: 0, kind: input, shape index: {}]
  %s1 = inlined_call_operand.vmem [shape: f32[64,32], index: 1, kind: input, shape index: {}]
  %s2 = inlined_call_operand.vmem [shape: f32[32,96], index: 2, kind: input, shape index: {}]
  %s3 = inlined_call_operand.vmem [shape: f32[1,96], index: 3, kind: input, shape index: {}]
  %s4 = inlined_call_operand.hbm [shape: f32[32,32], index: 4, kind: input, shape index: {}]
  %s5 = inlined_call_operand.hbm [shape: f32[32,64], index: 5, kind: input, shape index: {}]
  %s6 = inlined_call_operand.vmem [shape: f32[1,64], index: 6, kind: input, shape index: {}]
  %s7 = inlined_call_operand.vmem [shape: f32[64,32], index: 7, kind: input, shape index: {}]
  %s8 = inlined_call_operand.vmem [shape: f32[6,32], index: 8, kind: input, shape index: {}]
  %s9 = inlined_call_operand.hbm [shape: f32[2,2,2048], index: 9, kind: output, shape index: {}]
  %s10 = sld [smem:[#allocation0]]
  $region77: #{tpu_custom_call.1} parent=0
    _
  %s12 = ssub.s32 1, %s10
  %s13 = scalar_select 0, %s12, %s10
  $region1: #{tpu_custom_call.1} parent=0
    #allocation2 [shape = 'u8[16384]{0}', space=vmem, size = 0x4000, scoped, tag = 'input window, operand 4, single buffered']
    #allocation3 [shape = 's32[2]{0}', space=sflag, size = 0x8, scoped, tag = 'scoped memory for tpu_custom_call.1']
    #allocation4 [shape = 's32[2]{0}', space=sflag, size = 0x8, scoped, tag = 'scoped memory for tpu_custom_call.1']
    #allocation5 [shape = 'u8[16384]{0}', space=vmem, size = 0x4000, scoped, tag = 'input window, operand 5, single buffered']
    #allocation6 [shape = 's32[1]{0}', space=sflag, size = 0x4, scoped, tag = 'scoped memory for tpu_custom_call.1']
    #allocation7 [shape = 'u8[32768]{0}', space=vmem, size = 0x8000, scoped, tag = 'output window, operand 0']
    %14 = vsyncpa [#allocation3], 0
    %15 = vsyncpa [#allocation6], 0
    %16 = vsyncpa [#allocation4], 0
    %s17 = scalar_lea.sflag [#allocation4], 1
    %18 = vsyncpa %s17, 0
    loop: start=0, step=1, limit=4
    $region2: #{tpu_custom_call.1} parent=1 // loop_pre_header
      _
    $region3: #{tpu_custom_call.1} parent=1 // loop_header
      %s20 = sphi 0, %s24
      %p21 = scmp.ge.s32.totalorder %s20, 4
      %s30 = sphi 0, %s32
      %s33 = sphi 0, %s30
      %s34 = sphi 0, %s33
      %s50 = sphi 0, %s34
      %s54 = sphi 0, %s54
      %s56 = sphi 0, %s54
      %s57 = sphi 0, %s56
      %s71 = sphi 0, %s57
      %s75 = sphi 0, %s75
      %s77 = sphi 0, %s75
      %s78 = sphi 0, %s77
      %s92 = sphi 0, %s78
      %s96 = sphi 0, %s96
      %s98 = sphi 0, %s96
      %s99 = sphi 0, %s98
      %s113 = sphi 0, %s99
      %s117 = sphi 0, %s117
      %s119 = sphi 0, %s117
      %s120 = sphi 0, %s119
      %s134 = sphi 0, %s120
      %s138 = sphi 0, %s138
      %s140 = sphi 0, %s138
      %s141 = sphi 0, %s140
      %s155 = sphi 0, %s141
      %s159 = sphi 0, %s159
      %s161 = sphi 0, %s159
      %s162 = sphi 0, %s161
      %s176 = sphi 0, %s162
      %s180 = sphi 0, %s180
      %s182 = sphi 0, %s180
      %s183 = sphi 0, %s182
      %s197 = sphi 0, %s183
      %s201 = sphi 0, %s201
      %s203 = sphi 0, %s201
      %s204 = sphi 0, %s203
      %s218 = sphi 0, %s204
      %s224 = sphi 0, %s226
      %s227 = sphi 0, %s224
      %s228 = sphi 0, %s227
      %s244 = sphi 0, %s228
    $region4: #{tpu_custom_call.1} parent=1 // loop_header_branch
      %23 = sbr.rel (%p21) target = $region8
    $region5: #{tpu_custom_call.1} parent=1 // loop_body
      %s25 = ssub.s32 %s20, 1
      %s26 = ssub.s32 %s20, 2
      %s27 = sadd.s32 %s20, 1
      %s28 = ssub.s32 %s20, %s27
      %p29 = scmp.eq.s32.totalorder %s28, 0
      %s31 = sadd.s32 %s30, 1
      %s32 = scalar_select %p29, %s30, %s31
      %p35 = pneg %p29
      %p36 = scmp.eq.s32.totalorder %s20, 1
      %p37 = por %p35, %p36
      %p38 = scmp.ne.s32.totalorder %s30, %s33
      %p39 = scmp.eq.s32.totalorder %s20, 0
      %p40 = por %p38, %p39
      %p41 = scmp.ne.s32.totalorder %s30, %s33
      %p42 = scmp.eq.s32.totalorder %s25, 1
      %p43 = por %p41, %p42
      %p44 = scmp.ne.s32.totalorder %s33, %s34
      %p45 = scmp.eq.s32.totalorder %s25, 0
      %p46 = por %p44, %p45
      %p47 = scmp.ne.s32.totalorder %s33, %s34
      %p48 = scmp.eq.s32.totalorder %s26, 1
      %p49 = por %p47, %p48
      %p51 = scmp.ne.s32.totalorder %s34, %s50
      %p52 = scmp.eq.s32.totalorder %s26, 0
      %p53 = por %p51, %p52
      %s55 = sadd.s32 %s54, 1
      %p58 = scmp.eq.s32.totalorder %s20, 1
      %p59 = scmp.ne.s32.totalorder %s54, %s56
      %p60 = scmp.eq.s32.totalorder %s20, 0
      %p61 = por %p59, %p60
      %p62 = scmp.ne.s32.totalorder %s54, %s56
      %p63 = scmp.eq.s32.totalorder %s25, 1
      %p64 = por %p62, %p63
      %p65 = scmp.ne.s32.totalorder %s56, %s57
      %p66 = scmp.eq.s32.totalorder %s25, 0
      %p67 = por %p65, %p66
      %p68 = scmp.ne.s32.totalorder %s56, %s57
      %p69 = scmp.eq.s32.totalorder %s26, 1
      %p70 = por %p68, %p69
      %p72 = scmp.ne.s32.totalorder %s57, %s71
      %p73 = scmp.eq.s32.totalorder %s26, 0
      %p74 = por %p72, %p73
      %s76 = sadd.s32 %s75, 1
      %p79 = scmp.eq.s32.totalorder %s20, 1
      %p80 = scmp.ne.s32.totalorder %s75, %s77
      %p81 = scmp.eq.s32.totalorder %s20, 0
      %p82 = por %p80, %p81
      %p83 = scmp.ne.s32.totalorder %s75, %s77
      %p84 = scmp.eq.s32.totalorder %s25, 1
      %p85 = por %p83, %p84
      %p86 = scmp.ne.s32.totalorder %s77, %s78
      %p87 = scmp.eq.s32.totalorder %s25, 0
      %p88 = por %p86, %p87
      %p89 = scmp.ne.s32.totalorder %s77, %s78
      %p90 = scmp.eq.s32.totalorder %s26, 1
      %p91 = por %p89, %p90
      %p93 = scmp.ne.s32.totalorder %s78, %s92
      %p94 = scmp.eq.s32.totalorder %s26, 0
      %p95 = por %p93, %p94
      %s97 = sadd.s32 %s96, 1
      %p100 = scmp.eq.s32.totalorder %s20, 1
      %p101 = scmp.ne.s32.totalorder %s96, %s98
      %p102 = scmp.eq.s32.totalorder %s20, 0
      %p103 = por %p101, %p102
      %p104 = scmp.ne.s32.totalorder %s96, %s98
      %p105 = scmp.eq.s32.totalorder %s25, 1
      %p106 = por %p104, %p105
      %p107 = scmp.ne.s32.totalorder %s98, %s99
      %p108 = scmp.eq.s32.totalorder %s25, 0
      %p109 = por %p107, %p108
      %p110 = scmp.ne.s32.totalorder %s98, %s99
      %p111 = scmp.eq.s32.totalorder %s26, 1
      %p112 = por %p110, %p111
      %p114 = scmp.ne.s32.totalorder %s99, %s113
      %p115 = scmp.eq.s32.totalorder %s26, 0
      %p116 = por %p114, %p115
      %s118 = sadd.s32 %s117, 1
      %p121 = scmp.eq.s32.totalorder %s20, 1
      %p122 = scmp.ne.s32.totalorder %s117, %s119
      %p123 = scmp.eq.s32.totalorder %s20, 0
      %p124 = por %p122, %p123
      %p125 = scmp.ne.s32.totalorder %s117, %s119
      %p126 = scmp.eq.s32.totalorder %s25, 1
      %p127 = por %p125, %p126
      %p128 = scmp.ne.s32.totalorder %s119, %s120
      %p129 = scmp.eq.s32.totalorder %s25, 0
      %p130 = por %p128, %p129
      %p131 = scmp.ne.s32.totalorder %s119, %s120
      %p132 = scmp.eq.s32.totalorder %s26, 1
      %p133 = por %p131, %p132
      %p135 = scmp.ne.s32.totalorder %s120, %s134
      %p136 = scmp.eq.s32.totalorder %s26, 0
      %p137 = por %p135, %p136
      %s139 = sadd.s32 %s138, 1
      %p142 = scmp.eq.s32.totalorder %s20, 1
      %p143 = scmp.ne.s32.totalorder %s138, %s140
      %p144 = scmp.eq.s32.totalorder %s20, 0
      %p145 = por %p143, %p144
      %p146 = scmp.ne.s32.totalorder %s138, %s140
      %p147 = scmp.eq.s32.totalorder %s25, 1
      %p148 = por %p146, %p147
      %p149 = scmp.ne.s32.totalorder %s140, %s141
      %p150 = scmp.eq.s32.totalorder %s25, 0
      %p151 = por %p149, %p150
      %p152 = scmp.ne.s32.totalorder %s140, %s141
      %p153 = scmp.eq.s32.totalorder %s26, 1
      %p154 = por %p152, %p153
      %p156 = scmp.ne.s32.totalorder %s141, %s155
      %p157 = scmp.eq.s32.totalorder %s26, 0
      %p158 = por %p156, %p157
      %s160 = sadd.s32 %s159, 1
      %p163 = scmp.eq.s32.totalorder %s20, 1
      %p164 = scmp.ne.s32.totalorder %s159, %s161
      %p165 = scmp.eq.s32.totalorder %s20, 0
      %p166 = por %p164, %p165
      %p167 = scmp.ne.s32.totalorder %s159, %s161
      %p168 = scmp.eq.s32.totalorder %s25, 1
      %p169 = por %p167, %p168
      %p170 = scmp.ne.s32.totalorder %s161, %s162
      %p171 = scmp.eq.s32.totalorder %s25, 0
      %p172 = por %p170, %p171
      %p173 = scmp.ne.s32.totalorder %s161, %s162
      %p174 = scmp.eq.s32.totalorder %s26, 1
      %p175 = por %p173, %p174
      %p177 = scmp.ne.s32.totalorder %s162, %s176
      %p178 = scmp.eq.s32.totalorder %s26, 0
      %p179 = por %p177, %p178
      %s181 = sadd.s32 %s180, 1
      %p184 = scmp.eq.s32.totalorder %s20, 1
      %p185 = scmp.ne.s32.totalorder %s180, %s182
      %p186 = scmp.eq.s32.totalorder %s20, 0
      %p187 = por %p185, %p186
      %p188 = scmp.ne.s32.totalorder %s180, %s182
      %p189 = scmp.eq.s32.totalorder %s25, 1
      %p190 = por %p188, %p189
      %p191 = scmp.ne.s32.totalorder %s182, %s183
      %p192 = scmp.eq.s32.totalorder %s25, 0
      %p193 = por %p191, %p192
      %p194 = scmp.ne.s32.totalorder %s182, %s183
      %p195 = scmp.eq.s32.totalorder %s26, 1
      %p196 = por %p194, %p195
      %p198 = scmp.ne.s32.totalorder %s183, %s197
      %p199 = scmp.eq.s32.totalorder %s26, 0
      %p200 = por %p198, %p199
      %s202 = sadd.s32 %s201, 1
      %p205 = scmp.eq.s32.totalorder %s20, 1
      %p206 = scmp.ne.s32.totalorder %s201, %s203
      %p207 = scmp.eq.s32.totalorder %s20, 0
      %p208 = por %p206, %p207
      %p209 = scmp.ne.s32.totalorder %s201, %s203
      %p210 = scmp.eq.s32.totalorder %s25, 1
      %p211 = por %p209, %p210
      %p212 = scmp.ne.s32.totalorder %s203, %s204
      %p213 = scmp.eq.s32.totalorder %s25, 0
      %p214 = por %p212, %p213
      %p215 = scmp.ne.s32.totalorder %s203, %s204
      %p216 = scmp.eq.s32.totalorder %s26, 1
      %p217 = por %p215, %p216
      %p219 = scmp.ne.s32.totalorder %s204, %s218
      %p220 = scmp.eq.s32.totalorder %s26, 0
      %p221 = por %p219, %p220
      %s222 = ssub.s32 %s20, %s27
      %p223 = scmp.eq.s32.totalorder %s222, 0
      %s225 = sadd.s32 %s224, 1
      %s226 = scalar_select %p223, %s224, %s225
      %p229 = pneg %p223
      %p230 = scmp.eq.s32.totalorder %s20, 1
      %p231 = por %p229, %p230
      %p232 = scmp.ne.s32.totalorder %s224, %s227
      %p233 = scmp.eq.s32.totalorder %s20, 0
      %p234 = por %p232, %p233
      %p235 = scmp.ne.s32.totalorder %s224, %s227
      %p236 = scmp.eq.s32.totalorder %s25, 1
      %p237 = por %p235, %p236
      %p238 = scmp.ne.s32.totalorder %s227, %s228
      %p239 = scmp.eq.s32.totalorder %s25, 0
      %p240 = por %p238, %p239
      %p241 = scmp.ne.s32.totalorder %s227, %s228
      %p242 = scmp.eq.s32.totalorder %s26, 1
      %p243 = por %p241, %p242
      %p245 = scmp.ne.s32.totalorder %s228, %s244
      %p246 = scmp.eq.s32.totalorder %s26, 0
      %p247 = por %p245, %p246
      %p248 = scmp.le.s32.totalorder 1, %s20
      %p249 = scmp.lt.s32.totalorder %s20, 3
      %p250 = pnand %p248, %p249
      %p251 = pneg %p250
      // Predicated region
      $region9: #{tpu_custom_call.1} parent=5 // pred_check
        _
      $region10: #{tpu_custom_call.1} parent=5 // pred_check_branch
        %253 = sbr.rel (%p250) target = $region12
      $region11: #{tpu_custom_call.1} parent=5 // pred_region
        %s254 = ssub.s32 %s20, 1
        // Predicated region
        $region13: #{tpu_custom_call.1} parent=11 // pred_check
          %p255 = pneg %p67
        $region14: #{tpu_custom_call.1} parent=11 // pred_check_branch
          %257 = sbr.rel (%p255) target = $region16
        $region15: #{tpu_custom_call.1} parent=11 // pred_region
          _
        $region16: #{tpu_custom_call.1} parent=11 // pred_fallthru
          _
        // Predicated region
        $region17: #{tpu_custom_call.1} parent=11 // pred_check
          %p258 = pneg %p88
        $region18: #{tpu_custom_call.1} parent=11 // pred_check_branch
          %260 = sbr.rel (%p258) target = $region20
        $region19: #{tpu_custom_call.1} parent=11 // pred_region
          _
        $region20: #{tpu_custom_call.1} parent=11 // pred_fallthru
          _
        // Predicated region
        $region21: #{tpu_custom_call.1} parent=11 // pred_check
          %p261 = pneg %p109
        $region22: #{tpu_custom_call.1} parent=11 // pred_check_branch
          %263 = sbr.rel (%p261) target = $region24
        $region23: #{tpu_custom_call.1} parent=11 // pred_region
          _
        $region24: #{tpu_custom_call.1} parent=11 // pred_fallthru
          _
        // Predicated region
        $region25: #{tpu_custom_call.1} parent=11 // pred_check
          %p264 = pneg %p130
        $region26: #{tpu_custom_call.1} parent=11 // pred_check_branch
          %266 = sbr.rel (%p264) target = $region28
        $region27: #{tpu_custom_call.1} parent=11 // pred_region
          %s268 = ssub.s32 512, 512
          %269 = vsyncadd [#allocation3], %s268
          %s270 = sshll.u32 [#allocation2], 4
          %s271 = int_to_ptr.vmem [resolvable:$true] %s270
          %276 = dma.hbm_to_vmem [thread:$0]  %s4, 512, %s271, [#allocation3], 128, 128, 8
        $region28: #{tpu_custom_call.1} parent=11 // pred_fallthru
          _
        // Predicated region
        $region29: #{tpu_custom_call.1} parent=11 // pred_check
          %p277 = pneg %p151
        $region30: #{tpu_custom_call.1} parent=11 // pred_check_branch
          %279 = sbr.rel (%p277) target = $region32
        $region31: #{tpu_custom_call.1} parent=11 // pred_region
          %s281 = ssub.s32 512, 512
          %282 = vsyncadd [#allocation6], %s281
          %s283 = sshll.u32 [#allocation5], 4
          %s284 = int_to_ptr.vmem [resolvable:$true] %s283
          %289 = dma.hbm_to_vmem [thread:$0]  %s5, 512, %s284, [#allocation6], 128, 128, 8
        $region32: #{tpu_custom_call.1} parent=11 // pred_fallthru
          _
        // Predicated region
        $region33: #{tpu_custom_call.1} parent=11 // pred_check
          %p290 = pneg %p172
        $region34: #{tpu_custom_call.1} parent=11 // pred_check_branch
          %292 = sbr.rel (%p290) target = $region36
        $region35: #{tpu_custom_call.1} parent=11 // pred_region
          _
        $region36: #{tpu_custom_call.1} parent=11 // pred_fallthru
          _
        // Predicated region
        $region37: #{tpu_custom_call.1} parent=11 // pred_check
          %p293 = pneg %p193
        $region38: #{tpu_custom_call.1} parent=11 // pred_check_branch
          %295 = sbr.rel (%p293) target = $region40
        $region39: #{tpu_custom_call.1} parent=11 // pred_region
          _
        $region40: #{tpu_custom_call.1} parent=11 // pred_fallthru
          _
        // Predicated region
        $region41: #{tpu_custom_call.1} parent=11 // pred_check
          %p296 = pneg %p214
        $region42: #{tpu_custom_call.1} parent=11 // pred_check_branch
          %298 = sbr.rel (%p296) target = $region44
        $region43: #{tpu_custom_call.1} parent=11 // pred_region
          _
        $region44: #{tpu_custom_call.1} parent=11 // pred_fallthru
          _
      $region12: #{tpu_custom_call.1} parent=5 // pred_fallthru
        _
      %p299 = scmp.lt.s32.totalorder %s20, 2
      // Predicated region
      $region45: #{tpu_custom_call.1} parent=5 // pred_check
        %p300 = pneg %p299
      $region46: #{tpu_custom_call.1} parent=5 // pred_check_branch
        %302 = sbr.rel (%p300) target = $region48
      $region47: #{tpu_custom_call.1} parent=5 // pred_region
        // Predicated region
        $region49: #{tpu_custom_call.1} parent=47 // pred_check
          %p303 = pneg %p40
        $region50: #{tpu_custom_call.1} parent=47 // pred_check_branch
          %305 = sbr.rel (%p303) target = $region52
        $region51: #{tpu_custom_call.1} parent=47 // pred_region
          %s306 = smul.u32 2, %s20
          %p307 = scmp.lt.s32.totalorder %s306, 3
          %s308 = scalar_select %p307, %s306, 3
          %s309 = smul.addr %s308, 4
          %s310 = smul.addr %s309, 8
          %s311 = scalar_lea.vmem %s0, %s310
          %s312 = smul.u32 2, %s20
        $region52: #{tpu_custom_call.1} parent=47 // pred_fallthru
          _
      $region48: #{tpu_custom_call.1} parent=5 // pred_fallthru
        _
      %p313 = scmp.le.s32.totalorder 1, %s20
      %p314 = scmp.lt.s32.totalorder %s20, 3
      %p315 = pnand %p313, %p314
      %p316 = pneg %p315
      // Predicated region
      $region53: #{tpu_custom_call.1} parent=5 // pred_check
        _
      $region54: #{tpu_custom_call.1} parent=5 // pred_check_branch
        %318 = sbr.rel (%p315) target = $region56
      $region55: #{tpu_custom_call.1} parent=5 // pred_region
        %s319 = ssub.s32 %s20, 1
        // Predicated region
        $region57: #{tpu_custom_call.1} parent=55 // pred_check
          %p320 = pneg %p130
        $region58: #{tpu_custom_call.1} parent=55 // pred_check_branch
          %322 = sbr.rel (%p320) target = $region60
        $region59: #{tpu_custom_call.1} parent=55 // pred_region
          %323 = dma.done [#allocation3], 512
        $region60: #{tpu_custom_call.1} parent=55 // pred_fallthru
          _
        // Predicated region
        $region61: #{tpu_custom_call.1} parent=55 // pred_check
          %p324 = pneg %p151
        $region62: #{tpu_custom_call.1} parent=55 // pred_check_branch
          %326 = sbr.rel (%p324) target = $region64
        $region63: #{tpu_custom_call.1} parent=55 // pred_region
          %327 = dma.done [#allocation6], 512
        $region64: #{tpu_custom_call.1} parent=55 // pred_fallthru
          _
        %s328 = smul.u32 2, %s25
        %p329 = scmp.lt.s32.totalorder %s328, 3
        %s330 = scalar_select %p329, %s328, 3
        %s331 = smul.addr %s330, 4
        %s332 = smul.addr %s331, 8
        %s333 = scalar_lea.vmem %s0, %s332
        %p334 = pneg %p46
        %p335 = pneg %p43
        %p336 = pneg %p67
        %p337 = pneg %p64
        %p338 = pneg %p88
        %p339 = pneg %p85
        %p340 = pneg %p109
        %p341 = pneg %p106
        %p342 = pneg %p130
        %p343 = pneg %p127
        %p344 = pneg %p151
        %p345 = pneg %p148
        %p346 = pneg %p172
        %p347 = pneg %p169
        %p348 = pneg %p193
        %p349 = pneg %p190
        %p350 = pneg %p214
        %p351 = pneg %p211
        %p352 = pneg %p240
        %p353 = pneg %p237
        %s354 = sand.u32 %s227, 1
        %s355 = scalar_lea.sflag [#allocation4], %s354
        %s356 = sand.u32 %s227, 1
        %s357 = smul.addr %s356, 32
        %s358 = scalar_lea.vmem [#allocation7], %s357
        %s359 = smul.u32 2, %s25
        %p360 = scmp.lt.s32.totalorder %s359, 3
        %s361 = scalar_select %p360, %s359, 3
        %s362 = smul.addr %s361, 4
        %s363 = smul.addr %s362, 8
        %s364 = scalar_lea.vmem %s0, %s363
        %s365 = smul.u32 2, %s25
        %v366 = vld [vmem:[%s364] sm:$0xff]
        %v367 = vld [vmem:[%s364 + $0x8] sm:$0xff]
        %v368 = vld [vmem:[%s364 + $0x10] sm:$0xff]
        %v369 = vld [vmem:[%s364 + $0x18] sm:$0xff]
        %v370 = vld [vmem:[%s364 + $0x20] sm:$0xff]
        %v371 = vld [vmem:[%s364 + $0x28] sm:$0xff]
        %v372 = vld [vmem:[%s364 + $0x30] sm:$0xff]
        %v373 = vld [vmem:[%s364 + $0x38] sm:$0xff]
        %374 = vxpose.xlu0.b32.start [1/16] %v366, 128
        %375 = vxpose.xlu0.b32.cont [2/16] %v367, 128
        %376 = vxpose.xlu0.b32.cont [3/16] %v368, 128
        %377 = vxpose.xlu0.b32.cont [4/16] %v369, 128
        %378 = vxpose.xlu0.b32.cont [5/16] 0.0, 128
        %379 = vxpose.xlu0.b32.cont [6/16] 0.0, 128
        %380 = vxpose.xlu0.b32.cont [7/16] 0.0, 128
        %381 = vxpose.xlu0.b32.cont [8/16] 0.0, 128
        %382 = vxpose.xlu0.b32.cont [9/16] 0.0, 128
        %383 = vxpose.xlu0.b32.cont [10/16] 0.0, 128
        %384 = vxpose.xlu0.b32.cont [11/16] 0.0, 128
        %385 = vxpose.xlu0.b32.cont [12/16] 0.0, 128
        %386 = vxpose.xlu0.b32.cont [13/16] 0.0, 128
        %387 = vxpose.xlu0.b32.cont [14/16] 0.0, 128
        %388 = vxpose.xlu0.b32.cont [15/16] 0.0, 128
        %389 = vxpose.xlu0.b32.end [16/16] 0.0, 128
        %v390 = vpop.trf.xlu0
        %v391 = vpop.trf.xlu0
        %v392 = vpop.trf.xlu0
        %v393 = vpop.trf.xlu0
        %v394 = vpop.trf.xlu0
        %v395 = vpop.trf.xlu0
        %v396 = vpop.trf.xlu0
        %v397 = vpop.trf.xlu0
        %v398 = vpop.trf.xlu0
        %v399 = vpop.trf.xlu0
        %v400 = vpop.trf.xlu0
        %v401 = vpop.trf.xlu0
        %v402 = vpop.trf.xlu0
        %v403 = vpop.trf.xlu0
        %v404 = vpop.trf.xlu0
        %v405 = vpop.trf.xlu0
        %406 = vxpose.xlu0.b32.start [1/16] %v370, 128
        %407 = vxpose.xlu0.b32.cont [2/16] %v371, 128
        %408 = vxpose.xlu0.b32.cont [3/16] %v372, 128
        %409 = vxpose.xlu0.b32.cont [4/16] %v373, 128
        %410 = vxpose.xlu0.b32.cont [5/16] 0.0, 128
        %411 = vxpose.xlu0.b32.cont [6/16] 0.0, 128
        %412 = vxpose.xlu0.b32.cont [7/16] 0.0, 128
        %413 = vxpose.xlu0.b32.cont [8/16] 0.0, 128
        %414 = vxpose.xlu0.b32.cont [9/16] 0.0, 128
        %415 = vxpose.xlu0.b32.cont [10/16] 0.0, 128
        %416 = vxpose.xlu0.b32.cont [11/16] 0.0, 128
        %417 = vxpose.xlu0.b32.cont [12/16] 0.0, 128
        %418 = vxpose.xlu0.b32.cont [13/16] 0.0, 128
        %419 = vxpose.xlu0.b32.cont [14/16] 0.0, 128
        %420 = vxpose.xlu0.b32.cont [15/16] 0.0, 128
        %421 = vxpose.xlu0.b32.end [16/16] 0.0, 128
        %v422 = vpop.trf.xlu0
        %v423 = vpop.trf.xlu0
        %v424 = vpop.trf.xlu0
        %v425 = vpop.trf.xlu0
        %v426 = vpop.trf.xlu0
        %v427 = vpop.trf.xlu0
        %v428 = vpop.trf.xlu0
        %v429 = vpop.trf.xlu0
        %v430 = vpop.trf.xlu0
        %v431 = vpop.trf.xlu0
        %v432 = vpop.trf.xlu0
        %v433 = vpop.trf.xlu0
        %v434 = vpop.trf.xlu0
        %v435 = vpop.trf.xlu0
        %v436 = vpop.trf.xlu0
        %v437 = vpop.trf.xlu0
        %v438 = vld [vmem:[%s1] sm:$0xff]
        %v439 = vld [vmem:[%s1 + $0x8] sm:$0xff]
        %v440 = vld [vmem:[%s1 + $0x10] sm:$0xff]
        %v441 = vld [vmem:[%s1 + $0x18] sm:$0xff]
        %v442 = vld [vmem:[%s1 + $0x20] sm:$0xff]
        %v443 = vld [vmem:[%s1 + $0x28] sm:$0xff]
        %v444 = vld [vmem:[%s1 + $0x30] sm:$0xff]
        %v445 = vld [vmem:[%s1 + $0x38] sm:$0xff]
        %v446 = vadd.f32 %v390, %v438
        %v447 = vadd.f32 %v391, %v439
        %v448 = vadd.f32 %v392, %v440
        %v449 = vadd.f32 %v393, %v441
        %v450 = vadd.f32 %v394, %v442
        %v451 = vadd.f32 %v395, %v443
        %v452 = vadd.f32 %v396, %v444
        %v453 = vadd.f32 %v397, %v445
        %v454 = vadd.f32 %v422, %v438
        %v455 = vadd.f32 %v423, %v439
        %v456 = vadd.f32 %v424, %v440
        %v457 = vadd.f32 %v425, %v441
        %v458 = vadd.f32 %v426, %v442
        %v459 = vadd.f32 %v427, %v443
        %v460 = vadd.f32 %v428, %v444
        %v461 = vadd.f32 %v429, %v445
        %v462 = vld [vmem:[%s2] sm:$0xff]
        %v463 = vld [vmem:[%s2 + $0x8] sm:$0xff]
        %v464 = vld [vmem:[%s2 + $0x10] sm:$0xff]
        %v465 = vld [vmem:[%s2 + $0x18] sm:$0xff]
        %v466 = vld [vmem:[%s3] sm:$0x1]
        %v468 = vlaneseq
        %v469 = vshrl.u32 %v468, 7
        %v470 = vsub.s32 0, %v469
        %v471 = vrot.slane %v466, %v470
        %vm473 = vcmask 261120
        %v475 = vsel %vm473, %v446, 0
        %v478 = vsel %vm473, %v447, 0
        %v481 = vsel %vm473, %v448, 0
        %v484 = vsel %vm473, %v449, 0
        %v487 = vsel %vm473, %v450, 0
        %v490 = vsel %vm473, %v451, 0
        %v493 = vsel %vm473, %v452, 0
        %v496 = vsel %vm473, %v453, 0
        %v499 = vsel %vm473, %v454, 0
        %v502 = vsel %vm473, %v455, 0
        %v505 = vsel %vm473, %v456, 0
        %v508 = vsel %vm473, %v457, 0
        %v511 = vsel %vm473, %v458, 0
        %v514 = vsel %vm473, %v459, 0
        %v517 = vsel %vm473, %v460, 0
        %v520 = vsel %vm473, %v461, 0
        %522 = vmatprep.subr.mxu0 0.0
        %523 = vmatpush1.msra.mxu0 %v462
        %524 = vmatprep.subr.mxu0 0.0
        %525 = vmatpush1.msra.mxu0 %v463
        %526 = vmatprep.subr.mxu0 0.0
        %527 = vmatpush1.msra.mxu0 %v464
        %528 = vmatprep.subr.mxu0 0.0
        %529 = vmatpush1.msra.mxu0 %v465
        %530 = vmatprep.subr.mxu0 0.0
        %531 = vmatpush1.msra.mxu0 0.0
        %532 = vmatprep.subr.mxu0 0.0
        %533 = vmatpush1.msra.mxu0 0.0
        %534 = vmatprep.subr.mxu0 0.0
        %535 = vmatpush1.msra.mxu0 0.0
        %536 = vmatprep.subr.mxu0 0.0
        %537 = vmatpush1.msra.mxu0 0.0
        %538 = vmatprep.subr.mxu0 0.0
        %539 = vmatpush1.msra.mxu0 0.0
        %540 = vmatprep.subr.mxu0 0.0
        %541 = vmatpush1.msra.mxu0 0.0
        %542 = vmatprep.subr.mxu0 0.0
        %543 = vmatpush1.msra.mxu0 0.0
        %544 = vmatprep.subr.mxu0 0.0
        %545 = vmatpush1.msra.mxu0 0.0
        %546 = vmatprep.subr.mxu0 0.0
        %547 = vmatpush1.msra.mxu0 0.0
        %548 = vmatprep.subr.mxu0 0.0
        %549 = vmatpush1.msra.mxu0 0.0
        %550 = vmatprep.subr.mxu0 0.0
        %551 = vmatpush1.msra.mxu0 0.0
        %552 = vmatprep.subr.mxu0 0.0
        %553 = vmatpush1.msra.mxu0 0.0
        %554 = vmatprep.subr.mxu0 0.0
        %555 = vmatpush1.msra.mxu0 0.0
        %556 = vmatprep.subr.mxu0 0.0
        %557 = vmatpush1.msra.mxu0 0.0
        %558 = vmatprep.subr.mxu0 0.0
        %559 = vmatpush1.msra.mxu0 0.0
        %560 = vmatprep.subr.mxu0 0.0
        %561 = vmatpush1.msra.mxu0 0.0
        %562 = vmatprep.subr.mxu0 0.0
        %563 = vmatpush1.msra.mxu0 0.0
        %564 = vmatprep.subr.mxu0 0.0
        %565 = vmatpush1.msra.mxu0 0.0
        %566 = vmatprep.subr.mxu0 0.0
        %567 = vmatpush1.msra.mxu0 0.0
        %568 = vmatprep.subr.mxu0 0.0
        %569 = vmatpush1.msra.mxu0 0.0
        %570 = vmatprep.subr.mxu0 0.0
        %571 = vmatpush1.msra.mxu0 0.0
        %572 = vmatprep.subr.mxu0 0.0
        %573 = vmatpush1.msra.mxu0 0.0
        %574 = vmatprep.subr.mxu0 0.0
        %575 = vmatpush1.msra.mxu0 0.0
        %576 = vmatprep.subr.mxu0 0.0
        %577 = vmatpush1.msra.mxu0 0.0
        %578 = vmatprep.subr.mxu0 0.0
        %579 = vmatpush1.msra.mxu0 0.0
        %580 = vmatprep.subr.mxu0 0.0
        %581 = vmatpush1.msra.mxu0 0.0
        %582 = vmatprep.subr.mxu0 0.0
        %583 = vmatpush1.msra.mxu0 0.0
        %584 = vmatprep.subr.mxu0 0.0
        %585 = vmatpush1.msra.mxu0 0.0
        %586 = vmatprep.mubr.f32.mxu0 0.0
        %587 = vmatmul.mubr.f32.gmra.mrb[0].mxu0 %v475
        %v588 = vpop.f32.mrb[0].mxu0
        %v589 = vadd.f32 %v471, %v588
        %v590 = vpop.f32.mrb[0].mxu0
        %591 = vmatprep.mubr.f32.mxu0 0.0
        %592 = vmatmul.mubr.f32.gmra.mrb[0].mxu0 %v478
        %v593 = vpop.f32.mrb[0].mxu0
        %v594 = vadd.f32 %v471, %v593
        %v595 = vpop.f32.mrb[0].mxu0
        %596 = vmatprep.mubr.f32.mxu0 0.0
        %597 = vmatmul.mubr.f32.gmra.mrb[0].mxu0 %v481
        %v598 = vpop.f32.mrb[0].mxu0
        %v599 = vadd.f32 %v471, %v598
        %v600 = vpop.f32.mrb[0].mxu0
        %601 = vmatprep.mubr.f32.mxu0 0.0
        %602 = vmatmul.mubr.f32.gmra.mrb[0].mxu0 %v484
        %v603 = vpop.f32.mrb[0].mxu0
        %v604 = vadd.f32 %v471, %v603
        %v605 = vpop.f32.mrb[0].mxu0
        %606 = vmatprep.mubr.f32.mxu0 0.0
        %607 = vmatmul.mubr.f32.gmra.mrb[0].mxu0 %v487
        %v608 = vpop.f32.mrb[0].mxu0
        %v609 = vadd.f32 %v471, %v608
        %v610 = vpop.f32.mrb[0].mxu0
        %611 = vmatprep.mubr.f32.mxu0 0.0
        %612 = vmatmul.mubr.f32.gmra.mrb[0].mxu0 %v490
        %v613 = vpop.f32.mrb[0].mxu0
        %v614 = vadd.f32 %v471, %v613
        %v615 = vpop.f32.mrb[0].mxu0
        %616 = vmatprep.mubr.f32.mxu0 0.0
        %617 = vmatmul.mubr.f32.gmra.mrb[0].mxu0 %v493
        %v618 = vpop.f32.mrb[0].mxu0
        %v619 = vadd.f32 %v471, %v618
        %v620 = vpop.f32.mrb[0].mxu0
        %621 = vmatprep.mubr.f32.mxu0 0.0
        %622 = vmatmul.mubr.f32.gmra.mrb[0].mxu0 %v496
        %v623 = vpop.f32.mrb[0].mxu0
        %v624 = vadd.f32 %v471, %v623
        %v625 = vpop.f32.mrb[0].mxu0
        %626 = vmatprep.mubr.f32.mxu0 0.0
        %627 = vmatmul.mubr.f32.gmra.mrb[0].mxu0 %v499
        %v628 = vpop.f32.mrb[0].mxu0
        %v629 = vadd.f32 %v471, %v628
        %v630 = vpop.f32.mrb[0].mxu0
        %631 = vmatprep.mubr.f32.mxu0 0.0
        %632 = vmatmul.mubr.f32.gmra.mrb[0].mxu0 %v502
        %v633 = vpop.f32.mrb[0].mxu0
        %v634 = vadd.f32 %v471, %v633
        %v635 = vpop.f32.mrb[0].mxu0
        %636 = vmatprep.mubr.f32.mxu0 0.0
        %637 = vmatmul.mubr.f32.gmra.mrb[0].mxu0 %v505
        %v638 = vpop.f32.mrb[0].mxu0
        %v639 = vadd.f32 %v471, %v638
        %v640 = vpop.f32.mrb[0].mxu0
        %641 = vmatprep.mubr.f32.mxu0 0.0
        %642 = vmatmul.mubr.f32.gmra.mrb[0].mxu0 %v508
        %v643 = vpop.f32.mrb[0].mxu0
        %v644 = vadd.f32 %v471, %v643
        %v645 = vpop.f32.mrb[0].mxu0
        %646 = vmatprep.mubr.f32.mxu0 0.0
        %647 = vmatmul.mubr.f32.gmra.mrb[0].mxu0 %v511
        %v648 = vpop.f32.mrb[0].mxu0
        %v649 = vadd.f32 %v471, %v648
        %v650 = vpop.f32.mrb[0].mxu0
        %651 = vmatprep.mubr.f32.mxu0 0.0
        %652 = vmatmul.mubr.f32.gmra.mrb[0].mxu0 %v514
        %v653 = vpop.f32.mrb[0].mxu0
        %v654 = vadd.f32 %v471, %v653
        %v655 = vpop.f32.mrb[0].mxu0
        %656 = vmatprep.mubr.f32.mxu0 0.0
        %657 = vmatmul.mubr.f32.gmra.mrb[0].mxu0 %v517
        %v658 = vpop.f32.mrb[0].mxu0
        %v659 = vadd.f32 %v471, %v658
        %v660 = vpop.f32.mrb[0].mxu0
        %661 = vmatprep.mubr.f32.mxu0 0.0
        %662 = vmatmul.mubr.f32.gmra.mrb[0].mxu0 %v520
        %v663 = vpop.f32.mrb[0].mxu0
        %v664 = vadd.f32 %v471, %v663
        %v665 = vpop.f32.mrb[0].mxu0
        %666 = vdwg.mxu0
        %v667 = vld [vmem:[%s8] sm:$0x3f]
        %676 = vrot.lane.b32.xlu0 %v589, 96
        %v677 = vpop.permute.xlu0 %676
        %678 = vrot.lane.b32.xlu0 %v594, 96
        %v679 = vpop.permute.xlu0 %678
        %680 = vrot.lane.b32.xlu0 %v599, 96
        %v681 = vpop.permute.xlu0 %680
        %682 = vrot.lane.b32.xlu0 %v604, 96
        %v683 = vpop.permute.xlu0 %682
        %684 = vrot.lane.b32.xlu0 %v609, 96
        %v685 = vpop.permute.xlu0 %684
        %686 = vrot.lane.b32.xlu0 %v614, 96
        %v687 = vpop.permute.xlu0 %686
        %688 = vrot.lane.b32.xlu0 %v619, 96
        %v689 = vpop.permute.xlu0 %688
        %690 = vrot.lane.b32.xlu0 %v624, 96
        %v691 = vpop.permute.xlu0 %690
        %vm692 = vcmask 64512
        %v693 = vsel %vm692, %v589, 0
        %v695 = vsel %vm692, %v594, 0
        %v697 = vsel %vm692, %v599, 0
        %v699 = vsel %vm692, %v604, 0
        %v701 = vsel %vm692, %v609, 0
        %v703 = vsel %vm692, %v614, 0
        %v705 = vsel %vm692, %v619, 0
        %v707 = vsel %vm692, %v624, 0
        %v709 = vsel %vm692, %v677, 0
        %v711 = vsel %vm692, %v679, 0
        %v713 = vsel %vm692, %v681, 0
        %v715 = vsel %vm692, %v683, 0
        %v717 = vsel %vm692, %v685, 0
        %v719 = vsel %vm692, %v687, 0
        %v721 = vsel %vm692, %v689, 0
        %v723 = vsel %vm692, %v691, 0
        %725 = vmatprep.subr.mxu0 0.0
        %726 = vmatpush1.xpose.msra.mxu0 %v709
        %727 = vmatprep.subr.mxu0 0.0
        %728 = vmatpush1.xpose.msra.mxu0 %v711
        %729 = vmatprep.subr.mxu0 0.0
        %730 = vmatpush1.xpose.msra.mxu0 %v713
        %731 = vmatprep.subr.mxu0 0.0
        %732 = vmatpush1.xpose.msra.mxu0 %v715
        %733 = vmatprep.subr.mxu0 0.0
        %734 = vmatpush1.xpose.msra.mxu0 %v717
        %735 = vmatprep.subr.mxu0 0.0
        %736 = vmatpush1.xpose.msra.mxu0 %v719
        %737 = vmatprep.subr.mxu0 0.0
        %738 = vmatpush1.xpose.msra.mxu0 %v721
        %739 = vmatprep.subr.mxu0 0.0
        %740 = vmatpush1.xpose.msra.mxu0 %v723
        %741 = vmatprep.subr.mxu0 0.0
        %742 = vmatpush1.xpose.msra.mxu0 0.0
        %743 = vmatprep.subr.mxu0 0.0
        %744 = vmatpush1.xpose.msra.mxu0 0.0
        %745 = vmatprep.subr.mxu0 0.0
        %746 = vmatpush1.xpose.msra.mxu0 0.0
        %747 = vmatprep.subr.mxu0 0.0
        %748 = vmatpush1.xpose.msra.mxu0 0.0
        %749 = vmatprep.subr.mxu0 0.0
        %750 = vmatpush1.xpose.msra.mxu0 0.0
        %751 = vmatprep.subr.mxu0 0.0
        %752 = vmatpush1.xpose.msra.mxu0 0.0
        %753 = vmatprep.subr.mxu0 0.0
        %754 = vmatpush1.xpose.msra.mxu0 0.0
        %755 = vmatprep.subr.mxu0 0.0
        %756 = vmatpush1.xpose.msra.mxu0 0.0
        %757 = vmatprep.subr.mxu0 0.0
        %758 = vmatpush1.xpose.msra.mxu0 0.0
        %759 = vmatprep.subr.mxu0 0.0
        %760 = vmatpush1.xpose.msra.mxu0 0.0
        %761 = vmatprep.subr.mxu0 0.0
        %762 = vmatpush1.xpose.msra.mxu0 0.0
        %763 = vmatprep.subr.mxu0 0.0
        %764 = vmatpush1.xpose.msra.mxu0 0.0
        %765 = vmatprep.subr.mxu0 0.0
        %766 = vmatpush1.xpose.msra.mxu0 0.0
        %767 = vmatprep.subr.mxu0 0.0
        %768 = vmatpush1.xpose.msra.mxu0 0.0
        %769 = vmatprep.subr.mxu0 0.0
        %770 = vmatpush1.xpose.msra.mxu0 0.0
        %771 = vmatprep.subr.mxu0 0.0
        %772 = vmatpush1.xpose.msra.mxu0 0.0
        %773 = vmatprep.subr.mxu0 0.0
        %774 = vmatpush1.xpose.msra.mxu0 0.0
        %775 = vmatprep.subr.mxu0 0.0
        %776 = vmatpush1.xpose.msra.mxu0 0.0
        %777 = vmatprep.subr.mxu0 0.0
        %778 = vmatpush1.xpose.msra.mxu0 0.0
        %779 = vmatprep.subr.mxu0 0.0
        %780 = vmatpush1.xpose.msra.mxu0 0.0
        %781 = vmatprep.subr.mxu0 0.0
        %782 = vmatpush1.xpose.msra.mxu0 0.0
        %783 = vmatprep.subr.mxu0 0.0
        %784 = vmatpush1.xpose.msra.mxu0 0.0
        %785 = vmatprep.subr.mxu0 0.0
        %786 = vmatpush1.xpose.msra.mxu0 0.0
        %787 = vmatprep.subr.mxu0 0.0
        %788 = vmatpush1.xpose.msra.mxu0 0.0
        %789 = vmatprep.mubr.f32.mxu0 0.0
        %790 = vmatmul.mubr.f32.gmra.mrb[0].mxu0 %v693
        %v791 = vpop.f32.mrb[0].mxu0
        %v792 = vadd.f32 0.0, %v791
        %v793 = vpop.f32.mrb[0].mxu0
        %794 = vmatprep.mubr.f32.mxu0 0.0
        %795 = vmatmul.mubr.f32.gmra.mrb[0].mxu0 %v695
        %v796 = vpop.f32.mrb[0].mxu0
        %v797 = vadd.f32 0.0, %v796
        %v798 = vpop.f32.mrb[0].mxu0
        %799 = vmatprep.mubr.f32.mxu0 0.0
        %800 = vmatmul.mubr.f32.gmra.mrb[0].mxu0 %v697
        %v801 = vpop.f32.mrb[0].mxu0
        %v802 = vadd.f32 0.0, %v801
        %v803 = vpop.f32.mrb[0].mxu0
        %804 = vmatprep.mubr.f32.mxu0 0.0
        %805 = vmatmul.mubr.f32.gmra.mrb[0].mxu0 %v699
        %v806 = vpop.f32.mrb[0].mxu0
        %v807 = vadd.f32 0.0, %v806
        %v808 = vpop.f32.mrb[0].mxu0
        %809 = vmatprep.mubr.f32.mxu0 0.0
        %810 = vmatmul.mubr.f32.gmra.mrb[0].mxu0 %v701
        %v811 = vpop.f32.mrb[0].mxu0
        %v812 = vadd.f32 0.0, %v811
        %v813 = vpop.f32.mrb[0].mxu0
        %814 = vmatprep.mubr.f32.mxu0 0.0
        %815 = vmatmul.mubr.f32.gmra.mrb[0].mxu0 %v703
        %v816 = vpop.f32.mrb[0].mxu0
        %v817 = vadd.f32 0.0, %v816
        %v818 = vpop.f32.mrb[0].mxu0
        %819 = vmatprep.mubr.f32.mxu0 0.0
        %820 = vmatmul.mubr.f32.gmra.mrb[0].mxu0 %v705
        %v821 = vpop.f32.mrb[0].mxu0
        %v822 = vadd.f32 0.0, %v821
        %v823 = vpop.f32.mrb[0].mxu0
        %824 = vmatprep.mubr.f32.mxu0 0.0
        %825 = vmatmul.mubr.f32.gmra.mrb[0].mxu0 %v707
        %v826 = vpop.f32.mrb[0].mxu0
        %v827 = vadd.f32 0.0, %v826
        %v828 = vpop.f32.mrb[0].mxu0
        %829 = vdwg.mxu0
        %838 = vrot.lane.b32.xlu0 %v629, 96
        %v839 = vpop.permute.xlu0 %838
        %840 = vrot.lane.b32.xlu0 %v634, 96
        %v841 = vpop.permute.xlu0 %840
        %842 = vrot.lane.b32.xlu0 %v639, 96
        %v843 = vpop.permute.xlu0 %842
        %844 = vrot.lane.b32.xlu0 %v644, 96
        %v845 = vpop.permute.xlu0 %844
        %846 = vrot.lane.b32.xlu0 %v649, 96
        %v847 = vpop.permute.xlu0 %846
        %848 = vrot.lane.b32.xlu0 %v654, 96
        %v849 = vpop.permute.xlu0 %848
        %850 = vrot.lane.b32.xlu0 %v659, 96
        %v851 = vpop.permute.xlu0 %850
        %852 = vrot.lane.b32.xlu0 %v664, 96
        %v853 = vpop.permute.xlu0 %852
        %v854 = vsel %vm692, %v629, 0
        %v856 = vsel %vm692, %v634, 0
        %v858 = vsel %vm692, %v639, 0
        %v860 = vsel %vm692, %v644, 0
        %v862 = vsel %vm692, %v649, 0
        %v864 = vsel %vm692, %v654, 0
        %v866 = vsel %vm692, %v659, 0
        %v868 = vsel %vm692, %v664, 0
        %v870 = vsel %vm692, %v839, 0
        %v872 = vsel %vm692, %v841, 0
        %v874 = vsel %vm692, %v843, 0
        %v876 = vsel %vm692, %v845, 0
        %v878 = vsel %vm692, %v847, 0
        %v880 = vsel %vm692, %v849, 0
        %v882 = vsel %vm692, %v851, 0
        %v884 = vsel %vm692, %v853, 0
        %886 = vmatprep.subr.mxu0 0.0
        %887 = vmatpush1.xpose.msra.mxu0 %v870
        %888 = vmatprep.subr.mxu0 0.0
        %889 = vmatpush1.xpose.msra.mxu0 %v872
        %890 = vmatprep.subr.mxu0 0.0
        %891 = vmatpush1.xpose.msra.mxu0 %v874
        %892 = vmatprep.subr.mxu0 0.0
        %893 = vmatpush1.xpose.msra.mxu0 %v876
        %894 = vmatprep.subr.mxu0 0.0
        %895 = vmatpush1.xpose.msra.mxu0 %v878
        %896 = vmatprep.subr.mxu0 0.0
        %897 = vmatpush1.xpose.msra.mxu0 %v880
        %898 = vmatprep.subr.mxu0 0.0
        %899 = vmatpush1.xpose.msra.mxu0 %v882
        %900 = vmatprep.subr.mxu0 0.0
        %901 = vmatpush1.xpose.msra.mxu0 %v884
        %902 = vmatprep.subr.mxu0 0.0
        %903 = vmatpush1.xpose.msra.mxu0 0.0
        %904 = vmatprep.subr.mxu0 0.0
        %905 = vmatpush1.xpose.msra.mxu0 0.0
        %906 = vmatprep.subr.mxu0 0.0
        %907 = vmatpush1.xpose.msra.mxu0 0.0
        %908 = vmatprep.subr.mxu0 0.0
        %909 = vmatpush1.xpose.msra.mxu0 0.0
        %910 = vmatprep.subr.mxu0 0.0
        %911 = vmatpush1.xpose.msra.mxu0 0.0
        %912 = vmatprep.subr.mxu0 0.0
        %913 = vmatpush1.xpose.msra.mxu0 0.0
        %914 = vmatprep.subr.mxu0 0.0
        %915 = vmatpush1.xpose.msra.mxu0 0.0
        %916 = vmatprep.subr.mxu0 0.0
        %917 = vmatpush1.xpose.msra.mxu0 0.0
        %918 = vmatprep.subr.mxu0 0.0
        %919 = vmatpush1.xpose.msra.mxu0 0.0
        %920 = vmatprep.subr.mxu0 0.0
        %921 = vmatpush1.xpose.msra.mxu0 0.0
        %922 = vmatprep.subr.mxu0 0.0
        %923 = vmatpush1.xpose.msra.mxu0 0.0
        %924 = vmatprep.subr.mxu0 0.0
        %925 = vmatpush1.xpose.msra.mxu0 0.0
        %926 = vmatprep.subr.mxu0 0.0
        %927 = vmatpush1.xpose.msra.mxu0 0.0
        %928 = vmatprep.subr.mxu0 0.0
        %929 = vmatpush1.xpose.msra.mxu0 0.0
        %930 = vmatprep.subr.mxu0 0.0
        %931 = vmatpush1.xpose.msra.mxu0 0.0
        %932 = vmatprep.subr.mxu0 0.0
        %933 = vmatpush1.xpose.msra.mxu0 0.0
        %934 = vmatprep.subr.mxu0 0.0
        %935 = vmatpush1.xpose.msra.mxu0 0.0
        %936 = vmatprep.subr.mxu0 0.0
        %937 = vmatpush1.xpose.msra.mxu0 0.0
        %938 = vmatprep.subr.mxu0 0.0
        %939 = vmatpush1.xpose.msra.mxu0 0.0
        %940 = vmatprep.subr.mxu0 0.0
        %941 = vmatpush1.xpose.msra.mxu0 0.0
        %942 = vmatprep.subr.mxu0 0.0
        %943 = vmatpush1.xpose.msra.mxu0 0.0
        %944 = vmatprep.subr.mxu0 0.0
        %945 = vmatpush1.xpose.msra.mxu0 0.0
        %946 = vmatprep.subr.mxu0 0.0
        %947 = vmatpush1.xpose.msra.mxu0 0.0
        %948 = vmatprep.subr.mxu0 0.0
        %949 = vmatpush1.xpose.msra.mxu0 0.0
        %950 = vmatprep.mubr.f32.mxu0 0.0
        %951 = vmatmul.mubr.f32.gmra.mrb[0].mxu0 %v854
        %v952 = vpop.f32.mrb[0].mxu0
        %v953 = vadd.f32 0.0, %v952
        %v954 = vpop.f32.mrb[0].mxu0
        %955 = vmatprep.mubr.f32.mxu0 0.0
        %956 = vmatmul.mubr.f32.gmra.mrb[0].mxu0 %v856
        %v957 = vpop.f32.mrb[0].mxu0
        %v958 = vadd.f32 0.0, %v957
        %v959 = vpop.f32.mrb[0].mxu0
        %960 = vmatprep.mubr.f32.mxu0 0.0
        %961 = vmatmul.mubr.f32.gmra.mrb[0].mxu0 %v858
        %v962 = vpop.f32.mrb[0].mxu0
        %v963 = vadd.f32 0.0, %v962
        %v964 = vpop.f32.mrb[0].mxu0
        %965 = vmatprep.mubr.f32.mxu0 0.0
        %966 = vmatmul.mubr.f32.gmra.mrb[0].mxu0 %v860
        %v967 = vpop.f32.mrb[0].mxu0
        %v968 = vadd.f32 0.0, %v967
        %v969 = vpop.f32.mrb[0].mxu0
        %970 = vmatprep.mubr.f32.mxu0 0.0
        %971 = vmatmul.mubr.f32.gmra.mrb[0].mxu0 %v862
        %v972 = vpop.f32.mrb[0].mxu0
        %v973 = vadd.f32 0.0, %v972
        %v974 = vpop.f32.mrb[0].mxu0
        %975 = vmatprep.mubr.f32.mxu0 0.0
        %976 = vmatmul.mubr.f32.gmra.mrb[0].mxu0 %v864
        %v977 = vpop.f32.mrb[0].mxu0
        %v978 = vadd.f32 0.0, %v977
        %v979 = vpop.f32.mrb[0].mxu0
        %980 = vmatprep.mubr.f32.mxu0 0.0
        %981 = vmatmul.mubr.f32.gmra.mrb[0].mxu0 %v866
        %v982 = vpop.f32.mrb[0].mxu0
        %v983 = vadd.f32 0.0, %v982
        %v984 = vpop.f32.mrb[0].mxu0
        %985 = vmatprep.mubr.f32.mxu0 0.0
        %986 = vmatmul.mubr.f32.gmra.mrb[0].mxu0 %v868
        %v987 = vpop.f32.mrb[0].mxu0
        %v988 = vadd.f32 0.0, %v987
        %v989 = vpop.f32.mrb[0].mxu0
        %990 = vdwg.mxu0
        %vm991 = vcmask 523264
        %v992 = vsel %vm991, %v792, -inf
        %993 = vmax.xlane.f32.xlu0 %v992
        %v994 = vpop.xlane.xlu0 %993
        %v995 = vsel %vm991, %v797, -inf
        %996 = vmax.xlane.f32.xlu0 %v995
        %v997 = vpop.xlane.xlu0 %996
        %v998 = vsel %vm991, %v802, -inf
        %999 = vmax.xlane.f32.xlu0 %v998
        %v1000 = vpop.xlane.xlu0 %999
        %v1001 = vsel %vm991, %v807, -inf
        %1002 = vmax.xlane.f32.xlu0 %v1001
        %v1003 = vpop.xlane.xlu0 %1002
        %v1004 = vsel %vm991, %v812, -inf
        %1005 = vmax.xlane.f32.xlu0 %v1004
        %v1006 = vpop.xlane.xlu0 %1005
        %v1007 = vsel %vm991, %v817, -inf
        %1008 = vmax.xlane.f32.xlu0 %v1007
        %v1009 = vpop.xlane.xlu0 %1008
        %v1010 = vsel %vm991, %v822, -inf
        %1011 = vmax.xlane.f32.xlu0 %v1010
        %v1012 = vpop.xlane.xlu0 %1011
        %v1013 = vsel %vm991, %v827, -inf
        %1014 = vmax.xlane.f32.xlu0 %v1013
        %v1015 = vpop.xlane.xlu0 %1014
        %v1016 = vsel %vm991, %v953, -inf
        %1017 = vmax.xlane.f32.xlu0 %v1016
        %v1018 = vpop.xlane.xlu0 %1017
        %v1019 = vsel %vm991, %v958, -inf
        %1020 = vmax.xlane.f32.xlu0 %v1019
        %v1021 = vpop.xlane.xlu0 %1020
        %v1022 = vsel %vm991, %v963, -inf
        %1023 = vmax.xlane.f32.xlu0 %v1022
        %v1024 = vpop.xlane.xlu0 %1023
        %v1025 = vsel %vm991, %v968, -inf
        %1026 = vmax.xlane.f32.xlu0 %v1025
        %v1027 = vpop.xlane.xlu0 %1026
        %v1028 = vsel %vm991, %v973, -inf
        %1029 = vmax.xlane.f32.xlu0 %v1028
        %v1030 = vpop.xlane.xlu0 %1029
        %v1031 = vsel %vm991, %v978, -inf
        %1032 = vmax.xlane.f32.xlu0 %v1031
        %v1033 = vpop.xlane.xlu0 %1032
        %v1034 = vsel %vm991, %v983, -inf
        %1035 = vmax.xlane.f32.xlu0 %v1034
        %v1036 = vpop.xlane.xlu0 %1035
        %v1037 = vsel %vm991, %v988, -inf
        %1038 = vmax.xlane.f32.xlu0 %v1037
        %v1039 = vpop.xlane.xlu0 %1038
        %v1040 = vsub.f32 %v792, %v994
        %v1041 = vsub.f32 %v797, %v997
        %v1042 = vsub.f32 %v802, %v1000
        %v1043 = vsub.f32 %v807, %v1003
        %v1044 = vsub.f32 %v812, %v1006
        %v1045 = vsub.f32 %v817, %v1009
        %v1046 = vsub.f32 %v822, %v1012
        %v1047 = vsub.f32 %v827, %v1015
        %v1048 = vsub.f32 %v953, %v1018
        %v1049 = vsub.f32 %v958, %v1021
        %v1050 = vsub.f32 %v963, %v1024
        %v1051 = vsub.f32 %v968, %v1027
        %v1052 = vsub.f32 %v973, %v1030
        %v1053 = vsub.f32 %v978, %v1033
        %v1054 = vsub.f32 %v983, %v1036
        %v1055 = vsub.f32 %v988, %v1039
        %v1056 = vmul.f32 %v1040, 1.442695
        %v1057 = vpow.pop %v1056
        %v1058 = vmul.f32 %v1041, 1.442695
        %v1059 = vpow.pop %v1058
        %v1060 = vmul.f32 %v1042, 1.442695
        %v1061 = vpow.pop %v1060
        %v1062 = vmul.f32 %v1043, 1.442695
        %v1063 = vpow.pop %v1062
        %v1064 = vmul.f32 %v1044, 1.442695
        %v1065 = vpow.pop %v1064
        %v1066 = vmul.f32 %v1045, 1.442695
        %v1067 = vpow.pop %v1066
        %v1068 = vmul.f32 %v1046, 1.442695
        %v1069 = vpow.pop %v1068
        %v1070 = vmul.f32 %v1047, 1.442695
        %v1071 = vpow.pop %v1070
        %v1072 = vmul.f32 %v1048, 1.442695
        %v1073 = vpow.pop %v1072
        %v1074 = vmul.f32 %v1049, 1.442695
        %v1075 = vpow.pop %v1074
        %v1076 = vmul.f32 %v1050, 1.442695
        %v1077 = vpow.pop %v1076
        %v1078 = vmul.f32 %v1051, 1.442695
        %v1079 = vpow.pop %v1078
        %v1080 = vmul.f32 %v1052, 1.442695
        %v1081 = vpow.pop %v1080
        %v1082 = vmul.f32 %v1053, 1.442695
        %v1083 = vpow.pop %v1082
        %v1084 = vmul.f32 %v1054, 1.442695
        %v1085 = vpow.pop %v1084
        %v1086 = vmul.f32 %v1055, 1.442695
        %v1087 = vpow.pop %v1086
        %v1088 = vsel %vm991, %v1057, 0.0
        %1089 = vadd.xlane.f32.xlu0 %v1088
        %v1090 = vpop.xlane.xlu0 %1089
        %v1091 = vsel %vm991, %v1059, 0.0
        %1092 = vadd.xlane.f32.xlu0 %v1091
        %v1093 = vpop.xlane.xlu0 %1092
        %v1094 = vsel %vm991, %v1061, 0.0
        %1095 = vadd.xlane.f32.xlu0 %v1094
        %v1096 = vpop.xlane.xlu0 %1095
        %v1097 = vsel %vm991, %v1063, 0.0
        %1098 = vadd.xlane.f32.xlu0 %v1097
        %v1099 = vpop.xlane.xlu0 %1098
        %v1100 = vsel %vm991, %v1065, 0.0
        %1101 = vadd.xlane.f32.xlu0 %v1100
        %v1102 = vpop.xlane.xlu0 %1101
        %v1103 = vsel %vm991, %v1067, 0.0
        %1104 = vadd.xlane.f32.xlu0 %v1103
        %v1105 = vpop.xlane.xlu0 %1104
        %v1106 = vsel %vm991, %v1069, 0.0
        %1107 = vadd.xlane.f32.xlu0 %v1106
        %v1108 = vpop.xlane.xlu0 %1107
        %v1109 = vsel %vm991, %v1071, 0.0
        %1110 = vadd.xlane.f32.xlu0 %v1109
        %v1111 = vpop.xlane.xlu0 %1110
        %v1112 = vsel %vm991, %v1073, 0.0
        %1113 = vadd.xlane.f32.xlu0 %v1112
        %v1114 = vpop.xlane.xlu0 %1113
        %v1115 = vsel %vm991, %v1075, 0.0
        %1116 = vadd.xlane.f32.xlu0 %v1115
        %v1117 = vpop.xlane.xlu0 %1116
        %v1118 = vsel %vm991, %v1077, 0.0
        %1119 = vadd.xlane.f32.xlu0 %v1118
        %v1120 = vpop.xlane.xlu0 %1119
        %v1121 = vsel %vm991, %v1079, 0.0
        %1122 = vadd.xlane.f32.xlu0 %v1121
        %v1123 = vpop.xlane.xlu0 %1122
        %v1124 = vsel %vm991, %v1081, 0.0
        %1125 = vadd.xlane.f32.xlu0 %v1124
        %v1126 = vpop.xlane.xlu0 %1125
        %v1127 = vsel %vm991, %v1083, 0.0
        %1128 = vadd.xlane.f32.xlu0 %v1127
        %v1129 = vpop.xlane.xlu0 %1128
        %v1130 = vsel %vm991, %v1085, 0.0
        %1131 = vadd.xlane.f32.xlu0 %v1130
        %v1132 = vpop.xlane.xlu0 %1131
        %v1133 = vsel %vm991, %v1087, 0.0
        %1134 = vadd.xlane.f32.xlu0 %v1133
        %v1135 = vpop.xlane.xlu0 %1134
        %v1136 = vrcp.pop %v1090
        %v1137 = vrcp.pop %v1093
        %v1138 = vrcp.pop %v1096
        %v1139 = vrcp.pop %v1099
        %v1140 = vrcp.pop %v1102
        %v1141 = vrcp.pop %v1105
        %v1142 = vrcp.pop %v1108
        %v1143 = vrcp.pop %v1111
        %v1144 = vrcp.pop %v1114
        %v1145 = vrcp.pop %v1117
        %v1146 = vrcp.pop %v1120
        %v1147 = vrcp.pop %v1123
        %v1148 = vrcp.pop %v1126
        %v1149 = vrcp.pop %v1129
        %v1150 = vrcp.pop %v1132
        %v1151 = vrcp.pop %v1135
        %v1152 = vmul.f32 %v1057, %v1136
        %v1153 = vmul.f32 %v1059, %v1137
        %v1154 = vmul.f32 %v1061, %v1138
        %v1155 = vmul.f32 %v1063, %v1139
        %v1156 = vmul.f32 %v1065, %v1140
        %v1157 = vmul.f32 %v1067, %v1141
        %v1158 = vmul.f32 %v1069, %v1142
        %v1159 = vmul.f32 %v1071, %v1143
        %v1160 = vmul.f32 %v1073, %v1144
        %v1161 = vmul.f32 %v1075, %v1145
        %v1162 = vmul.f32 %v1077, %v1146
        %v1163 = vmul.f32 %v1079, %v1147
        %v1164 = vmul.f32 %v1081, %v1148
        %v1165 = vmul.f32 %v1083, %v1149
        %v1166 = vmul.f32 %v1085, %v1150
        %v1167 = vmul.f32 %v1087, %v1151
        %1168 = vrot.lane.b32.xlu0 %v589, 64
        %v1169 = vpop.permute.xlu0 %1168
        %1170 = vrot.lane.b32.xlu0 %v594, 64
        %v1171 = vpop.permute.xlu0 %1170
        %1172 = vrot.lane.b32.xlu0 %v599, 64
        %v1173 = vpop.permute.xlu0 %1172
        %1174 = vrot.lane.b32.xlu0 %v604, 64
        %v1175 = vpop.permute.xlu0 %1174
        %1176 = vrot.lane.b32.xlu0 %v609, 64
        %v1177 = vpop.permute.xlu0 %1176
        %1178 = vrot.lane.b32.xlu0 %v614, 64
        %v1179 = vpop.permute.xlu0 %1178
        %1180 = vrot.lane.b32.xlu0 %v619, 64
        %v1181 = vpop.permute.xlu0 %1180
        %1182 = vrot.lane.b32.xlu0 %v624, 64
        %v1183 = vpop.permute.xlu0 %1182
        %v1193 = vsel %vm991, %v1152, 0
        %v1196 = vsel %vm991, %v1153, 0
        %v1199 = vsel %vm991, %v1154, 0
        %v1202 = vsel %vm991, %v1155, 0
        %v1205 = vsel %vm991, %v1156, 0
        %v1208 = vsel %vm991, %v1157, 0
        %v1211 = vsel %vm991, %v1158, 0
        %v1214 = vsel %vm991, %v1159, 0
        %1216 = vmatprep.subr.mxu0 0.0
        %1217 = vmatpush1.msra.mxu0 %v1169
        %1218 = vmatprep.subr.mxu0 0.0
        %1219 = vmatpush1.msra.mxu0 %v1171
        %1220 = vmatprep.subr.mxu0 0.0
        %1221 = vmatpush1.msra.mxu0 %v1173
        %1222 = vmatprep.subr.mxu0 0.0
        %1223 = vmatpush1.msra.mxu0 %v1175
        %1224 = vmatprep.subr.mxu0 0.0
        %1225 = vmatpush1.msra.mxu0 %v1177
        %1226 = vmatprep.subr.mxu0 0.0
        %1227 = vmatpush1.msra.mxu0 %v1179
        %1228 = vmatprep.subr.mxu0 0.0
        %1229 = vmatpush1.msra.mxu0 %v1181
        %1230 = vmatprep.subr.mxu0 0.0
        %1231 = vmatpush1.msra.mxu0 %v1183
        %1232 = vmatprep.subr.mxu0 0.0
        %1233 = vmatpush1.msra.mxu0 0.0
        %1234 = vmatprep.subr.mxu0 0.0
        %1235 = vmatpush1.msra.mxu0 0.0
        %1236 = vmatprep.subr.mxu0 0.0
        %1237 = vmatpush1.msra.mxu0 0.0
        %1238 = vmatprep.subr.mxu0 0.0
        %1239 = vmatpush1.msra.mxu0 0.0
        %1240 = vmatprep.subr.mxu0 0.0
        %1241 = vmatpush1.msra.mxu0 0.0
        %1242 = vmatprep.subr.mxu0 0.0
        %1243 = vmatpush1.msra.mxu0 0.0
        %1244 = vmatprep.subr.mxu0 0.0
        %1245 = vmatpush1.msra.mxu0 0.0
        %1246 = vmatprep.subr.mxu0 0.0
        %1247 = vmatpush1.msra.mxu0 0.0
        %1248 = vmatprep.subr.mxu0 0.0
        %1249 = vmatpush1.msra.mxu0 0.0
        %1250 = vmatprep.subr.mxu0 0.0
        %1251 = vmatpush1.msra.mxu0 0.0
        %1252 = vmatprep.subr.mxu0 0.0
        %1253 = vmatpush1.msra.mxu0 0.0
        %1254 = vmatprep.subr.mxu0 0.0
        %1255 = vmatpush1.msra.mxu0 0.0
        %1256 = vmatprep.subr.mxu0 0.0
        %1257 = vmatpush1.msra.mxu0 0.0
        %1258 = vmatprep.subr.mxu0 0.0
        %1259 = vmatpush1.msra.mxu0 0.0
        %1260 = vmatprep.subr.mxu0 0.0
        %1261 = vmatpush1.msra.mxu0 0.0
        %1262 = vmatprep.subr.mxu0 0.0
        %1263 = vmatpush1.msra.mxu0 0.0
        %1264 = vmatprep.subr.mxu0 0.0
        %1265 = vmatpush1.msra.mxu0 0.0
        %1266 = vmatprep.subr.mxu0 0.0
        %1267 = vmatpush1.msra.mxu0 0.0
        %1268 = vmatprep.subr.mxu0 0.0
        %1269 = vmatpush1.msra.mxu0 0.0
        %1270 = vmatprep.subr.mxu0 0.0
        %1271 = vmatpush1.msra.mxu0 0.0
        %1272 = vmatprep.subr.mxu0 0.0
        %1273 = vmatpush1.msra.mxu0 0.0
        %1274 = vmatprep.subr.mxu0 0.0
        %1275 = vmatpush1.msra.mxu0 0.0
        %1276 = vmatprep.subr.mxu0 0.0
        %1277 = vmatpush1.msra.mxu0 0.0
        %1278 = vmatprep.subr.mxu0 0.0
        %1279 = vmatpush1.msra.mxu0 0.0
        %1280 = vmatprep.mubr.f32.mxu0 0.0
        %1281 = vmatmul.mubr.f32.gmra.mrb[0].mxu0 %v1193
        %v1282 = vpop.f32.mrb[0].mxu0
        %v1283 = vadd.f32 0.0, %v1282
        %v1284 = vpop.f32.mrb[0].mxu0
        %1285 = vmatprep.mubr.f32.mxu0 0.0
        %1286 = vmatmul.mubr.f32.gmra.mrb[0].mxu0 %v1196
        %v1287 = vpop.f32.mrb[0].mxu0
        %v1288 = vadd.f32 0.0, %v1287
        %v1289 = vpop.f32.mrb[0].mxu0
        %1290 = vmatprep.mubr.f32.mxu0 0.0
        %1291 = vmatmul.mubr.f32.gmra.mrb[0].mxu0 %v1199
        %v1292 = vpop.f32.mrb[0].mxu0
        %v1293 = vadd.f32 0.0, %v1292
        %v1294 = vpop.f32.mrb[0].mxu0
        %1295 = vmatprep.mubr.f32.mxu0 0.0
        %1296 = vmatmul.mubr.f32.gmra.mrb[0].mxu0 %v1202
        %v1297 = vpop.f32.mrb[0].mxu0
        %v1298 = vadd.f32 0.0, %v1297
        %v1299 = vpop.f32.mrb[0].mxu0
        %1300 = vmatprep.mubr.f32.mxu0 0.0
        %1301 = vmatmul.mubr.f32.gmra.mrb[0].mxu0 %v1205
        %v1302 = vpop.f32.mrb[0].mxu0
        %v1303 = vadd.f32 0.0, %v1302
        %v1304 = vpop.f32.mrb[0].mxu0
        %1305 = vmatprep.mubr.f32.mxu0 0.0
        %1306 = vmatmul.mubr.f32.gmra.mrb[0].mxu0 %v1208
        %v1307 = vpop.f32.mrb[0].mxu0
        %v1308 = vadd.f32 0.0, %v1307
        %v1309 = vpop.f32.mrb[0].mxu0
        %1310 = vmatprep.mubr.f32.mxu0 0.0
        %1311 = vmatmul.mubr.f32.gmra.mrb[0].mxu0 %v1211
        %v1312 = vpop.f32.mrb[0].mxu0
        %v1313 = vadd.f32 0.0, %v1312
        %v1314 = vpop.f32.mrb[0].mxu0
        %1315 = vmatprep.mubr.f32.mxu0 0.0
        %1316 = vmatmul.mubr.f32.gmra.mrb[0].mxu0 %v1214
        %v1317 = vpop.f32.mrb[0].mxu0
        %v1318 = vadd.f32 0.0, %v1317
        %v1319 = vpop.f32.mrb[0].mxu0
        %1320 = vdwg.mxu0
        %1321 = vrot.lane.b32.xlu0 %v629, 64
        %v1322 = vpop.permute.xlu0 %1321
        %1323 = vrot.lane.b32.xlu0 %v634, 64
        %v1324 = vpop.permute.xlu0 %1323
        %1325 = vrot.lane.b32.xlu0 %v639, 64
        %v1326 = vpop.permute.xlu0 %1325
        %1327 = vrot.lane.b32.xlu0 %v644, 64
        %v1328 = vpop.permute.xlu0 %1327
        %1329 = vrot.lane.b32.xlu0 %v649, 64
        %v1330 = vpop.permute.xlu0 %1329
        %1331 = vrot.lane.b32.xlu0 %v654, 64
        %v1332 = vpop.permute.xlu0 %1331
        %1333 = vrot.lane.b32.xlu0 %v659, 64
        %v1334 = vpop.permute.xlu0 %1333
        %1335 = vrot.lane.b32.xlu0 %v664, 64
        %v1336 = vpop.permute.xlu0 %1335
        %v1346 = vsel %vm991, %v1160, 0
        %v1349 = vsel %vm991, %v1161, 0
        %v1352 = vsel %vm991, %v1162, 0
        %v1355 = vsel %vm991, %v1163, 0
        %v1358 = vsel %vm991, %v1164, 0
        %v1361 = vsel %vm991, %v1165, 0
        %v1364 = vsel %vm991, %v1166, 0
        %v1367 = vsel %vm991, %v1167, 0
        %1369 = vmatprep.subr.mxu0 0.0
        %1370 = vmatpush1.msra.mxu0 %v1322
        %1371 = vmatprep.subr.mxu0 0.0
        %1372 = vmatpush1.msra.mxu0 %v1324
        %1373 = vmatprep.subr.mxu0 0.0
        %1374 = vmatpush1.msra.mxu0 %v1326
        %1375 = vmatprep.subr.mxu0 0.0
        %1376 = vmatpush1.msra.mxu0 %v1328
        %1377 = vmatprep.subr.mxu0 0.0
        %1378 = vmatpush1.msra.mxu0 %v1330
        %1379 = vmatprep.subr.mxu0 0.0
        %1380 = vmatpush1.msra.mxu0 %v1332
        %1381 = vmatprep.subr.mxu0 0.0
        %1382 = vmatpush1.msra.mxu0 %v1334
        %1383 = vmatprep.subr.mxu0 0.0
        %1384 = vmatpush1.msra.mxu0 %v1336
        %1385 = vmatprep.subr.mxu0 0.0
        %1386 = vmatpush1.msra.mxu0 0.0
        %1387 = vmatprep.subr.mxu0 0.0
        %1388 = vmatpush1.msra.mxu0 0.0
        %1389 = vmatprep.subr.mxu0 0.0
        %1390 = vmatpush1.msra.mxu0 0.0
        %1391 = vmatprep.subr.mxu0 0.0
        %1392 = vmatpush1.msra.mxu0 0.0
        %1393 = vmatprep.subr.mxu0 0.0
        %1394 = vmatpush1.msra.mxu0 0.0
        %1395 = vmatprep.subr.mxu0 0.0
        %1396 = vmatpush1.msra.mxu0 0.0
        %1397 = vmatprep.subr.mxu0 0.0
        %1398 = vmatpush1.msra.mxu0 0.0
        %1399 = vmatprep.subr.mxu0 0.0
        %1400 = vmatpush1.msra.mxu0 0.0
        %1401 = vmatprep.subr.mxu0 0.0
        %1402 = vmatpush1.msra.mxu0 0.0
        %1403 = vmatprep.subr.mxu0 0.0
        %1404 = vmatpush1.msra.mxu0 0.0
        %1405 = vmatprep.subr.mxu0 0.0
        %1406 = vmatpush1.msra.mxu0 0.0
        %1407 = vmatprep.subr.mxu0 0.0
        %1408 = vmatpush1.msra.mxu0 0.0
        %1409 = vmatprep.subr.mxu0 0.0
        %1410 = vmatpush1.msra.mxu0 0.0
        %1411 = vmatprep.subr.mxu0 0.0
        %1412 = vmatpush1.msra.mxu0 0.0
        %1413 = vmatprep.subr.mxu0 0.0
        %1414 = vmatpush1.msra.mxu0 0.0
        %1415 = vmatprep.subr.mxu0 0.0
        %1416 = vmatpush1.msra.mxu0 0.0
        %1417 = vmatprep.subr.mxu0 0.0
        %1418 = vmatpush1.msra.mxu0 0.0
        %1419 = vmatprep.subr.mxu0 0.0
        %1420 = vmatpush1.msra.mxu0 0.0
        %1421 = vmatprep.subr.mxu0 0.0
        %1422 = vmatpush1.msra.mxu0 0.0
        %1423 = vmatprep.subr.mxu0 0.0
        %1424 = vmatpush1.msra.mxu0 0.0
        %1425 = vmatprep.subr.mxu0 0.0
        %1426 = vmatpush1.msra.mxu0 0.0
        %1427 = vmatprep.subr.mxu0 0.0
        %1428 = vmatpush1.msra.mxu0 0.0
        %1429 = vmatprep.subr.mxu0 0.0
        %1430 = vmatpush1.msra.mxu0 0.0
        %1431 = vmatprep.subr.mxu0 0.0
        %1432 = vmatpush1.msra.mxu0 0.0
        %1433 = vmatprep.mubr.f32.mxu0 0.0
        %1434 = vmatmul.mubr.f32.gmra.mrb[0].mxu0 %v1346
        %v1435 = vpop.f32.mrb[0].mxu0
        %v1436 = vadd.f32 0.0, %v1435
        %v1437 = vpop.f32.mrb[0].mxu0
        %1438 = vmatprep.mubr.f32.mxu0 0.0
        %1439 = vmatmul.mubr.f32.gmra.mrb[0].mxu0 %v1349
        %v1440 = vpop.f32.mrb[0].mxu0
        %v1441 = vadd.f32 0.0, %v1440
        %v1442 = vpop.f32.mrb[0].mxu0
        %1443 = vmatprep.mubr.f32.mxu0 0.0
        %1444 = vmatmul.mubr.f32.gmra.mrb[0].mxu0 %v1352
        %v1445 = vpop.f32.mrb[0].mxu0
        %v1446 = vadd.f32 0.0, %v1445
        %v1447 = vpop.f32.mrb[0].mxu0
        %1448 = vmatprep.mubr.f32.mxu0 0.0
        %1449 = vmatmul.mubr.f32.gmra.mrb[0].mxu0 %v1355
        %v1450 = vpop.f32.mrb[0].mxu0
        %v1451 = vadd.f32 0.0, %v1450
        %v1452 = vpop.f32.mrb[0].mxu0
        %1453 = vmatprep.mubr.f32.mxu0 0.0
        %1454 = vmatmul.mubr.f32.gmra.mrb[0].mxu0 %v1358
        %v1455 = vpop.f32.mrb[0].mxu0
        %v1456 = vadd.f32 0.0, %v1455
        %v1457 = vpop.f32.mrb[0].mxu0
        %1458 = vmatprep.mubr.f32.mxu0 0.0
        %1459 = vmatmul.mubr.f32.gmra.mrb[0].mxu0 %v1361
        %v1460 = vpop.f32.mrb[0].mxu0
        %v1461 = vadd.f32 0.0, %v1460
        %v1462 = vpop.f32.mrb[0].mxu0
        %1463 = vmatprep.mubr.f32.mxu0 0.0
        %1464 = vmatmul.mubr.f32.gmra.mrb[0].mxu0 %v1364
        %v1465 = vpop.f32.mrb[0].mxu0
        %v1466 = vadd.f32 0.0, %v1465
        %v1467 = vpop.f32.mrb[0].mxu0
        %1468 = vmatprep.mubr.f32.mxu0 0.0
        %1469 = vmatmul.mubr.f32.gmra.mrb[0].mxu0 %v1367
        %v1470 = vpop.f32.mrb[0].mxu0
        %v1471 = vadd.f32 0.0, %v1470
        %v1472 = vpop.f32.mrb[0].mxu0
        %1473 = vdwg.mxu0
        %1474 = vrot.lane.b32.xlu0 %v589, 120
        %v1475 = vpop.permute.xlu0 %1474
        %1476 = vrot.lane.b32.xlu0 %v594, 120
        %v1477 = vpop.permute.xlu0 %1476
        %1478 = vrot.lane.b32.xlu0 %v599, 120
        %v1479 = vpop.permute.xlu0 %1478
        %1480 = vrot.lane.b32.xlu0 %v604, 120
        %v1481 = vpop.permute.xlu0 %1480
        %1482 = vrot.lane.b32.xlu0 %v609, 120
        %v1483 = vpop.permute.xlu0 %1482
        %1484 = vrot.lane.b32.xlu0 %v614, 120
        %v1485 = vpop.permute.xlu0 %1484
        %1486 = vrot.lane.b32.xlu0 %v619, 120
        %v1487 = vpop.permute.xlu0 %1486
        %1488 = vrot.lane.b32.xlu0 %v624, 120
        %v1489 = vpop.permute.xlu0 %1488
        %1490 = vrot.lane.b32.xlu0 %v589, 88
        %v1491 = vpop.permute.xlu0 %1490
        %1492 = vrot.lane.b32.xlu0 %v594, 88
        %v1493 = vpop.permute.xlu0 %1492
        %1494 = vrot.lane.b32.xlu0 %v599, 88
        %v1495 = vpop.permute.xlu0 %1494
        %1496 = vrot.lane.b32.xlu0 %v604, 88
        %v1497 = vpop.permute.xlu0 %1496
        %1498 = vrot.lane.b32.xlu0 %v609, 88
        %v1499 = vpop.permute.xlu0 %1498
        %1500 = vrot.lane.b32.xlu0 %v614, 88
        %v1501 = vpop.permute.xlu0 %1500
        %1502 = vrot.lane.b32.xlu0 %v619, 88
        %v1503 = vpop.permute.xlu0 %1502
        %1504 = vrot.lane.b32.xlu0 %v624, 88
        %v1505 = vpop.permute.xlu0 %1504
        %v1506 = vsel %vm692, %v1475, 0
        %v1508 = vsel %vm692, %v1477, 0
        %v1510 = vsel %vm692, %v1479, 0
        %v1512 = vsel %vm692, %v1481, 0
        %v1514 = vsel %vm692, %v1483, 0
        %v1516 = vsel %vm692, %v1485, 0
        %v1518 = vsel %vm692, %v1487, 0
        %v1520 = vsel %vm692, %v1489, 0
        %v1522 = vsel %vm692, %v1491, 0
        %v1524 = vsel %vm692, %v1493, 0
        %v1526 = vsel %vm692, %v1495, 0
        %v1528 = vsel %vm692, %v1497, 0
        %v1530 = vsel %vm692, %v1499, 0
        %v1532 = vsel %vm692, %v1501, 0
        %v1534 = vsel %vm692, %v1503, 0
        %v1536 = vsel %vm692, %v1505, 0
        %1538 = vmatprep.subr.mxu0 0.0
        %1539 = vmatpush1.xpose.msra.mxu0 %v1522
        %1540 = vmatprep.subr.mxu0 0.0
        %1541 = vmatpush1.xpose.msra.mxu0 %v1524
        %1542 = vmatprep.subr.mxu0 0.0
        %1543 = vmatpush1.xpose.msra.mxu0 %v1526
        %1544 = vmatprep.subr.mxu0 0.0
        %1545 = vmatpush1.xpose.msra.mxu0 %v1528
        %1546 = vmatprep.subr.mxu0 0.0
        %1547 = vmatpush1.xpose.msra.mxu0 %v1530
        %1548 = vmatprep.subr.mxu0 0.0
        %1549 = vmatpush1.xpose.msra.mxu0 %v1532
        %1550 = vmatprep.subr.mxu0 0.0
        %1551 = vmatpush1.xpose.msra.mxu0 %v1534
        %1552 = vmatprep.subr.mxu0 0.0
        %1553 = vmatpush1.xpose.msra.mxu0 %v1536
        %1554 = vmatprep.subr.mxu0 0.0
        %1555 = vmatpush1.xpose.msra.mxu0 0.0
        %1556 = vmatprep.subr.mxu0 0.0
        %1557 = vmatpush1.xpose.msra.mxu0 0.0
        %1558 = vmatprep.subr.mxu0 0.0
        %1559 = vmatpush1.xpose.msra.mxu0 0.0
        %1560 = vmatprep.subr.mxu0 0.0
        %1561 = vmatpush1.xpose.msra.mxu0 0.0
        %1562 = vmatprep.subr.mxu0 0.0
        %1563 = vmatpush1.xpose.msra.mxu0 0.0
        %1564 = vmatprep.subr.mxu0 0.0
        %1565 = vmatpush1.xpose.msra.mxu0 0.0
        %1566 = vmatprep.subr.mxu0 0.0
        %1567 = vmatpush1.xpose.msra.mxu0 0.0
        %1568 = vmatprep.subr.mxu0 0.0
        %1569 = vmatpush1.xpose.msra.mxu0 0.0
        %1570 = vmatprep.subr.mxu0 0.0
        %1571 = vmatpush1.xpose.msra.mxu0 0.0
        %1572 = vmatprep.subr.mxu0 0.0
        %1573 = vmatpush1.xpose.msra.mxu0 0.0
        %1574 = vmatprep.subr.mxu0 0.0
        %1575 = vmatpush1.xpose.msra.mxu0 0.0
        %1576 = vmatprep.subr.mxu0 0.0
        %1577 = vmatpush1.xpose.msra.mxu0 0.0
        %1578 = vmatprep.subr.mxu0 0.0
        %1579 = vmatpush1.xpose.msra.mxu0 0.0
        %1580 = vmatprep.subr.mxu0 0.0
        %1581 = vmatpush1.xpose.msra.mxu0 0.0
        %1582 = vmatprep.subr.mxu0 0.0
        %1583 = vmatpush1.xpose.msra.mxu0 0.0
        %1584 = vmatprep.subr.mxu0 0.0
        %1585 = vmatpush1.xpose.msra.mxu0 0.0
        %1586 = vmatprep.subr.mxu0 0.0
        %1587 = vmatpush1.xpose.msra.mxu0 0.0
        %1588 = vmatprep.subr.mxu0 0.0
        %1589 = vmatpush1.xpose.msra.mxu0 0.0
        %1590 = vmatprep.subr.mxu0 0.0
        %1591 = vmatpush1.xpose.msra.mxu0 0.0
        %1592 = vmatprep.subr.mxu0 0.0
        %1593 = vmatpush1.xpose.msra.mxu0 0.0
        %1594 = vmatprep.subr.mxu0 0.0
        %1595 = vmatpush1.xpose.msra.mxu0 0.0
        %1596 = vmatprep.subr.mxu0 0.0
        %1597 = vmatpush1.xpose.msra.mxu0 0.0
        %1598 = vmatprep.subr.mxu0 0.0
        %1599 = vmatpush1.xpose.msra.mxu0 0.0
        %1600 = vmatprep.subr.mxu0 0.0
        %1601 = vmatpush1.xpose.msra.mxu0 0.0
        %1602 = vmatprep.mubr.f32.mxu0 0.0
        %1603 = vmatmul.mubr.f32.gmra.mrb[0].mxu0 %v1506
        %v1604 = vpop.f32.mrb[0].mxu0
        %v1605 = vadd.f32 0.0, %v1604
        %v1606 = vpop.f32.mrb[0].mxu0
        %1607 = vmatprep.mubr.f32.mxu0 0.0
        %1608 = vmatmul.mubr.f32.gmra.mrb[0].mxu0 %v1508
        %v1609 = vpop.f32.mrb[0].mxu0
        %v1610 = vadd.f32 0.0, %v1609
        %v1611 = vpop.f32.mrb[0].mxu0
        %1612 = vmatprep.mubr.f32.mxu0 0.0
        %1613 = vmatmul.mubr.f32.gmra.mrb[0].mxu0 %v1510
        %v1614 = vpop.f32.mrb[0].mxu0
        %v1615 = vadd.f32 0.0, %v1614
        %v1616 = vpop.f32.mrb[0].mxu0
        %1617 = vmatprep.mubr.f32.mxu0 0.0
        %1618 = vmatmul.mubr.f32.gmra.mrb[0].mxu0 %v1512
        %v1619 = vpop.f32.mrb[0].mxu0
        %v1620 = vadd.f32 0.0, %v1619
        %v1621 = vpop.f32.mrb[0].mxu0
        %1622 = vmatprep.mubr.f32.mxu0 0.0
        %1623 = vmatmul.mubr.f32.gmra.mrb[0].mxu0 %v1514
        %v1624 = vpop.f32.mrb[0].mxu0
        %v1625 = vadd.f32 0.0, %v1624
        %v1626 = vpop.f32.mrb[0].mxu0
        %1627 = vmatprep.mubr.f32.mxu0 0.0
        %1628 = vmatmul.mubr.f32.gmra.mrb[0].mxu0 %v1516
        %v1629 = vpop.f32.mrb[0].mxu0
        %v1630 = vadd.f32 0.0, %v1629
        %v1631 = vpop.f32.mrb[0].mxu0
        %1632 = vmatprep.mubr.f32.mxu0 0.0
        %1633 = vmatmul.mubr.f32.gmra.mrb[0].mxu0 %v1518
        %v1634 = vpop.f32.mrb[0].mxu0
        %v1635 = vadd.f32 0.0, %v1634
        %v1636 = vpop.f32.mrb[0].mxu0
        %1637 = vmatprep.mubr.f32.mxu0 0.0
        %1638 = vmatmul.mubr.f32.gmra.mrb[0].mxu0 %v1520
        %v1639 = vpop.f32.mrb[0].mxu0
        %v1640 = vadd.f32 0.0, %v1639
        %v1641 = vpop.f32.mrb[0].mxu0
        %1642 = vdwg.mxu0
        %1643 = vrot.lane.b32.xlu0 %v629, 120
        %v1644 = vpop.permute.xlu0 %1643
        %1645 = vrot.lane.b32.xlu0 %v634, 120
        %v1646 = vpop.permute.xlu0 %1645
        %1647 = vrot.lane.b32.xlu0 %v639, 120
        %v1648 = vpop.permute.xlu0 %1647
        %1649 = vrot.lane.b32.xlu0 %v644, 120
        %v1650 = vpop.permute.xlu0 %1649
        %1651 = vrot.lane.b32.xlu0 %v649, 120
        %v1652 = vpop.permute.xlu0 %1651
        %1653 = vrot.lane.b32.xlu0 %v654, 120
        %v1654 = vpop.permute.xlu0 %1653
        %1655 = vrot.lane.b32.xlu0 %v659, 120
        %v1656 = vpop.permute.xlu0 %1655
        %1657 = vrot.lane.b32.xlu0 %v664, 120
        %v1658 = vpop.permute.xlu0 %1657
        %1659 = vrot.lane.b32.xlu0 %v629, 88
        %v1660 = vpop.permute.xlu0 %1659
        %1661 = vrot.lane.b32.xlu0 %v634, 88
        %v1662 = vpop.permute.xlu0 %1661
        %1663 = vrot.lane.b32.xlu0 %v639, 88
        %v1664 = vpop.permute.xlu0 %1663
        %1665 = vrot.lane.b32.xlu0 %v644, 88
        %v1666 = vpop.permute.xlu0 %1665
        %1667 = vrot.lane.b32.xlu0 %v649, 88
        %v1668 = vpop.permute.xlu0 %1667
        %1669 = vrot.lane.b32.xlu0 %v654, 88
        %v1670 = vpop.permute.xlu0 %1669
        %1671 = vrot.lane.b32.xlu0 %v659, 88
        %v1672 = vpop.permute.xlu0 %1671
        %1673 = vrot.lane.b32.xlu0 %v664, 88
        %v1674 = vpop.permute.xlu0 %1673
        %v1675 = vsel %vm692, %v1644, 0
        %v1677 = vsel %vm692, %v1646, 0
        %v1679 = vsel %vm692, %v1648, 0
        %v1681 = vsel %vm692, %v1650, 0
        %v1683 = vsel %vm692, %v1652, 0
        %v1685 = vsel %vm692, %v1654, 0
        %v1687 = vsel %vm692, %v1656, 0
        %v1689 = vsel %vm692, %v1658, 0
        %v1691 = vsel %vm692, %v1660, 0
        %v1693 = vsel %vm692, %v1662, 0
        %v1695 = vsel %vm692, %v1664, 0
        %v1697 = vsel %vm692, %v1666, 0
        %v1699 = vsel %vm692, %v1668, 0
        %v1701 = vsel %vm692, %v1670, 0
        %v1703 = vsel %vm692, %v1672, 0
        %v1705 = vsel %vm692, %v1674, 0
        %1707 = vmatprep.subr.mxu0 0.0
        %1708 = vmatpush1.xpose.msra.mxu0 %v1691
        %1709 = vmatprep.subr.mxu0 0.0
        %1710 = vmatpush1.xpose.msra.mxu0 %v1693
        %1711 = vmatprep.subr.mxu0 0.0
        %1712 = vmatpush1.xpose.msra.mxu0 %v1695
        %1713 = vmatprep.subr.mxu0 0.0
        %1714 = vmatpush1.xpose.msra.mxu0 %v1697
        %1715 = vmatprep.subr.mxu0 0.0
        %1716 = vmatpush1.xpose.msra.mxu0 %v1699
        %1717 = vmatprep.subr.mxu0 0.0
        %1718 = vmatpush1.xpose.msra.mxu0 %v1701
        %1719 = vmatprep.subr.mxu0 0.0
        %1720 = vmatpush1.xpose.msra.mxu0 %v1703
        %1721 = vmatprep.subr.mxu0 0.0
        %1722 = vmatpush1.xpose.msra.mxu0 %v1705
        %1723 = vmatprep.subr.mxu0 0.0
        %1724 = vmatpush1.xpose.msra.mxu0 0.0
        %1725 = vmatprep.subr.mxu0 0.0
        %1726 = vmatpush1.xpose.msra.mxu0 0.0
        %1727 = vmatprep.subr.mxu0 0.0
        %1728 = vmatpush1.xpose.msra.mxu0 0.0
        %1729 = vmatprep.subr.mxu0 0.0
        %1730 = vmatpush1.xpose.msra.mxu0 0.0
        %1731 = vmatprep.subr.mxu0 0.0
        %1732 = vmatpush1.xpose.msra.mxu0 0.0
        %1733 = vmatprep.subr.mxu0 0.0
        %1734 = vmatpush1.xpose.msra.mxu0 0.0
        %1735 = vmatprep.subr.mxu0 0.0
        %1736 = vmatpush1.xpose.msra.mxu0 0.0
        %1737 = vmatprep.subr.mxu0 0.0
        %1738 = vmatpush1.xpose.msra.mxu0 0.0
        %1739 = vmatprep.subr.mxu0 0.0
        %1740 = vmatpush1.xpose.msra.mxu0 0.0
        %1741 = vmatprep.subr.mxu0 0.0
        %1742 = vmatpush1.xpose.msra.mxu0 0.0
        %1743 = vmatprep.subr.mxu0 0.0
        %1744 = vmatpush1.xpose.msra.mxu0 0.0
        %1745 = vmatprep.subr.mxu0 0.0
        %1746 = vmatpush1.xpose.msra.mxu0 0.0
        %1747 = vmatprep.subr.mxu0 0.0
        %1748 = vmatpush1.xpose.msra.mxu0 0.0
        %1749 = vmatprep.subr.mxu0 0.0
        %1750 = vmatpush1.xpose.msra.mxu0 0.0
        %1751 = vmatprep.subr.mxu0 0.0
        %1752 = vmatpush1.xpose.msra.mxu0 0.0
        %1753 = vmatprep.subr.mxu0 0.0
        %1754 = vmatpush1.xpose.msra.mxu0 0.0
        %1755 = vmatprep.subr.mxu0 0.0
        %1756 = vmatpush1.xpose.msra.mxu0 0.0
        %1757 = vmatprep.subr.mxu0 0.0
        %1758 = vmatpush1.xpose.msra.mxu0 0.0
        %1759 = vmatprep.subr.mxu0 0.0
        %1760 = vmatpush1.xpose.msra.mxu0 0.0
        %1761 = vmatprep.subr.mxu0 0.0
        %1762 = vmatpush1.xpose.msra.mxu0 0.0
        %1763 = vmatprep.subr.mxu0 0.0
        %1764 = vmatpush1.xpose.msra.mxu0 0.0
        %1765 = vmatprep.subr.mxu0 0.0
        %1766 = vmatpush1.xpose.msra.mxu0 0.0
        %1767 = vmatprep.subr.mxu0 0.0
        %1768 = vmatpush1.xpose.msra.mxu0 0.0
        %1769 = vmatprep.subr.mxu0 0.0
        %1770 = vmatpush1.xpose.msra.mxu0 0.0
        %1771 = vmatprep.mubr.f32.mxu0 0.0
        %1772 = vmatmul.mubr.f32.gmra.mrb[0].mxu0 %v1675
        %v1773 = vpop.f32.mrb[0].mxu0
        %v1774 = vadd.f32 0.0, %v1773
        %v1775 = vpop.f32.mrb[0].mxu0
        %1776 = vmatprep.mubr.f32.mxu0 0.0
        %1777 = vmatmul.mubr.f32.gmra.mrb[0].mxu0 %v1677
        %v1778 = vpop.f32.mrb[0].mxu0
        %v1779 = vadd.f32 0.0, %v1778
        %v1780 = vpop.f32.mrb[0].mxu0
        %1781 = vmatprep.mubr.f32.mxu0 0.0
        %1782 = vmatmul.mubr.f32.gmra.mrb[0].mxu0 %v1679
        %v1783 = vpop.f32.mrb[0].mxu0
        %v1784 = vadd.f32 0.0, %v1783
        %v1785 = vpop.f32.mrb[0].mxu0
        %1786 = vmatprep.mubr.f32.mxu0 0.0
        %1787 = vmatmul.mubr.f32.gmra.mrb[0].mxu0 %v1681
        %v1788 = vpop.f32.mrb[0].mxu0
        %v1789 = vadd.f32 0.0, %v1788
        %v1790 = vpop.f32.mrb[0].mxu0
        %1791 = vmatprep.mubr.f32.mxu0 0.0
        %1792 = vmatmul.mubr.f32.gmra.mrb[0].mxu0 %v1683
        %v1793 = vpop.f32.mrb[0].mxu0
        %v1794 = vadd.f32 0.0, %v1793
        %v1795 = vpop.f32.mrb[0].mxu0
        %1796 = vmatprep.mubr.f32.mxu0 0.0
        %1797 = vmatmul.mubr.f32.gmra.mrb[0].mxu0 %v1685
        %v1798 = vpop.f32.mrb[0].mxu0
        %v1799 = vadd.f32 0.0, %v1798
        %v1800 = vpop.f32.mrb[0].mxu0
        %1801 = vmatprep.mubr.f32.mxu0 0.0
        %1802 = vmatmul.mubr.f32.gmra.mrb[0].mxu0 %v1687
        %v1803 = vpop.f32.mrb[0].mxu0
        %v1804 = vadd.f32 0.0, %v1803
        %v1805 = vpop.f32.mrb[0].mxu0
        %1806 = vmatprep.mubr.f32.mxu0 0.0
        %1807 = vmatmul.mubr.f32.gmra.mrb[0].mxu0 %v1689
        %v1808 = vpop.f32.mrb[0].mxu0
        %v1809 = vadd.f32 0.0, %v1808
        %v1810 = vpop.f32.mrb[0].mxu0
        %1811 = vdwg.mxu0
        %v1812 = vsel %vm991, %v1605, -inf
        %1813 = vmax.xlane.f32.xlu0 %v1812
        %v1814 = vpop.xlane.xlu0 %1813
        %v1815 = vsel %vm991, %v1610, -inf
        %1816 = vmax.xlane.f32.xlu0 %v1815
        %v1817 = vpop.xlane.xlu0 %1816
        %v1818 = vsel %vm991, %v1615, -inf
        %1819 = vmax.xlane.f32.xlu0 %v1818
        %v1820 = vpop.xlane.xlu0 %1819
        %v1821 = vsel %vm991, %v1620, -inf
        %1822 = vmax.xlane.f32.xlu0 %v1821
        %v1823 = vpop.xlane.xlu0 %1822
        %v1824 = vsel %vm991, %v1625, -inf
        %1825 = vmax.xlane.f32.xlu0 %v1824
        %v1826 = vpop.xlane.xlu0 %1825
        %v1827 = vsel %vm991, %v1630, -inf
        %1828 = vmax.xlane.f32.xlu0 %v1827
        %v1829 = vpop.xlane.xlu0 %1828
        %v1830 = vsel %vm991, %v1635, -inf
        %1831 = vmax.xlane.f32.xlu0 %v1830
        %v1832 = vpop.xlane.xlu0 %1831
        %v1833 = vsel %vm991, %v1640, -inf
        %1834 = vmax.xlane.f32.xlu0 %v1833
        %v1835 = vpop.xlane.xlu0 %1834
        %v1836 = vsel %vm991, %v1774, -inf
        %1837 = vmax.xlane.f32.xlu0 %v1836
        %v1838 = vpop.xlane.xlu0 %1837
        %v1839 = vsel %vm991, %v1779, -inf
        %1840 = vmax.xlane.f32.xlu0 %v1839
        %v1841 = vpop.xlane.xlu0 %1840
        %v1842 = vsel %vm991, %v1784, -inf
        %1843 = vmax.xlane.f32.xlu0 %v1842
        %v1844 = vpop.xlane.xlu0 %1843
        %v1845 = vsel %vm991, %v1789, -inf
        %1846 = vmax.xlane.f32.xlu0 %v1845
        %v1847 = vpop.xlane.xlu0 %1846
        %v1848 = vsel %vm991, %v1794, -inf
        %1849 = vmax.xlane.f32.xlu0 %v1848
        %v1850 = vpop.xlane.xlu0 %1849
        %v1851 = vsel %vm991, %v1799, -inf
        %1852 = vmax.xlane.f32.xlu0 %v1851
        %v1853 = vpop.xlane.xlu0 %1852
        %v1854 = vsel %vm991, %v1804, -inf
        %1855 = vmax.xlane.f32.xlu0 %v1854
        %v1856 = vpop.xlane.xlu0 %1855
        %v1857 = vsel %vm991, %v1809, -inf
        %1858 = vmax.xlane.f32.xlu0 %v1857
        %v1859 = vpop.xlane.xlu0 %1858
        %v1860 = vsub.f32 %v1605, %v1814
        %v1861 = vsub.f32 %v1610, %v1817
        %v1862 = vsub.f32 %v1615, %v1820
        %v1863 = vsub.f32 %v1620, %v1823
        %v1864 = vsub.f32 %v1625, %v1826
        %v1865 = vsub.f32 %v1630, %v1829
        %v1866 = vsub.f32 %v1635, %v1832
        %v1867 = vsub.f32 %v1640, %v1835
        %v1868 = vsub.f32 %v1774, %v1838
        %v1869 = vsub.f32 %v1779, %v1841
        %v1870 = vsub.f32 %v1784, %v1844
        %v1871 = vsub.f32 %v1789, %v1847
        %v1872 = vsub.f32 %v1794, %v1850
        %v1873 = vsub.f32 %v1799, %v1853
        %v1874 = vsub.f32 %v1804, %v1856
        %v1875 = vsub.f32 %v1809, %v1859
        %v1876 = vmul.f32 %v1860, 1.442695
        %v1877 = vpow.pop %v1876
        %v1878 = vmul.f32 %v1861, 1.442695
        %v1879 = vpow.pop %v1878
        %v1880 = vmul.f32 %v1862, 1.442695
        %v1881 = vpow.pop %v1880
        %v1882 = vmul.f32 %v1863, 1.442695
        %v1883 = vpow.pop %v1882
        %v1884 = vmul.f32 %v1864, 1.442695
        %v1885 = vpow.pop %v1884
        %v1886 = vmul.f32 %v1865, 1.442695
        %v1887 = vpow.pop %v1886
        %v1888 = vmul.f32 %v1866, 1.442695
        %v1889 = vpow.pop %v1888
        %v1890 = vmul.f32 %v1867, 1.442695
        %v1891 = vpow.pop %v1890
        %v1892 = vmul.f32 %v1868, 1.442695
        %v1893 = vpow.pop %v1892
        %v1894 = vmul.f32 %v1869, 1.442695
        %v1895 = vpow.pop %v1894
        %v1896 = vmul.f32 %v1870, 1.442695
        %v1897 = vpow.pop %v1896
        %v1898 = vmul.f32 %v1871, 1.442695
        %v1899 = vpow.pop %v1898
        %v1900 = vmul.f32 %v1872, 1.442695
        %v1901 = vpow.pop %v1900
        %v1902 = vmul.f32 %v1873, 1.442695
        %v1903 = vpow.pop %v1902
        %v1904 = vmul.f32 %v1874, 1.442695
        %v1905 = vpow.pop %v1904
        %v1906 = vmul.f32 %v1875, 1.442695
        %v1907 = vpow.pop %v1906
        %v1908 = vsel %vm991, %v1877, 0.0
        %1909 = vadd.xlane.f32.xlu0 %v1908
        %v1910 = vpop.xlane.xlu0 %1909
        %v1911 = vsel %vm991, %v1879, 0.0
        %1912 = vadd.xlane.f32.xlu0 %v1911
        %v1913 = vpop.xlane.xlu0 %1912
        %v1914 = vsel %vm991, %v1881, 0.0
        %1915 = vadd.xlane.f32.xlu0 %v1914
        %v1916 = vpop.xlane.xlu0 %1915
        %v1917 = vsel %vm991, %v1883, 0.0
        %1918 = vadd.xlane.f32.xlu0 %v1917
        %v1919 = vpop.xlane.xlu0 %1918
        %v1920 = vsel %vm991, %v1885, 0.0
        %1921 = vadd.xlane.f32.xlu0 %v1920
        %v1922 = vpop.xlane.xlu0 %1921
        %v1923 = vsel %vm991, %v1887, 0.0
        %1924 = vadd.xlane.f32.xlu0 %v1923
        %v1925 = vpop.xlane.xlu0 %1924
        %v1926 = vsel %vm991, %v1889, 0.0
        %1927 = vadd.xlane.f32.xlu0 %v1926
        %v1928 = vpop.xlane.xlu0 %1927
        %v1929 = vsel %vm991, %v1891, 0.0
        %1930 = vadd.xlane.f32.xlu0 %v1929
        %v1931 = vpop.xlane.xlu0 %1930
        %v1932 = vsel %vm991, %v1893, 0.0
        %1933 = vadd.xlane.f32.xlu0 %v1932
        %v1934 = vpop.xlane.xlu0 %1933
        %v1935 = vsel %vm991, %v1895, 0.0
        %1936 = vadd.xlane.f32.xlu0 %v1935
        %v1937 = vpop.xlane.xlu0 %1936
        %v1938 = vsel %vm991, %v1897, 0.0
        %1939 = vadd.xlane.f32.xlu0 %v1938
        %v1940 = vpop.xlane.xlu0 %1939
        %v1941 = vsel %vm991, %v1899, 0.0
        %1942 = vadd.xlane.f32.xlu0 %v1941
        %v1943 = vpop.xlane.xlu0 %1942
        %v1944 = vsel %vm991, %v1901, 0.0
        %1945 = vadd.xlane.f32.xlu0 %v1944
        %v1946 = vpop.xlane.xlu0 %1945
        %v1947 = vsel %vm991, %v1903, 0.0
        %1948 = vadd.xlane.f32.xlu0 %v1947
        %v1949 = vpop.xlane.xlu0 %1948
        %v1950 = vsel %vm991, %v1905, 0.0
        %1951 = vadd.xlane.f32.xlu0 %v1950
        %v1952 = vpop.xlane.xlu0 %1951
        %v1953 = vsel %vm991, %v1907, 0.0
        %1954 = vadd.xlane.f32.xlu0 %v1953
        %v1955 = vpop.xlane.xlu0 %1954
        %v1956 = vrcp.pop %v1910
        %v1957 = vrcp.pop %v1913
        %v1958 = vrcp.pop %v1916
        %v1959 = vrcp.pop %v1919
        %v1960 = vrcp.pop %v1922
        %v1961 = vrcp.pop %v1925
        %v1962 = vrcp.pop %v1928
        %v1963 = vrcp.pop %v1931
        %v1964 = vrcp.pop %v1934
        %v1965 = vrcp.pop %v1937
        %v1966 = vrcp.pop %v1940
        %v1967 = vrcp.pop %v1943
        %v1968 = vrcp.pop %v1946
        %v1969 = vrcp.pop %v1949
        %v1970 = vrcp.pop %v1952
        %v1971 = vrcp.pop %v1955
        %v1972 = vmul.f32 %v1877, %v1956
        %v1973 = vmul.f32 %v1879, %v1957
        %v1974 = vmul.f32 %v1881, %v1958
        %v1975 = vmul.f32 %v1883, %v1959
        %v1976 = vmul.f32 %v1885, %v1960
        %v1977 = vmul.f32 %v1887, %v1961
        %v1978 = vmul.f32 %v1889, %v1962
        %v1979 = vmul.f32 %v1891, %v1963
        %v1980 = vmul.f32 %v1893, %v1964
        %v1981 = vmul.f32 %v1895, %v1965
        %v1982 = vmul.f32 %v1897, %v1966
        %v1983 = vmul.f32 %v1899, %v1967
        %v1984 = vmul.f32 %v1901, %v1968
        %v1985 = vmul.f32 %v1903, %v1969
        %v1986 = vmul.f32 %v1905, %v1970
        %v1987 = vmul.f32 %v1907, %v1971
        %1988 = vrot.lane.b32.xlu0 %v589, 56
        %v1989 = vpop.permute.xlu0 %1988
        %1990 = vrot.lane.b32.xlu0 %v594, 56
        %v1991 = vpop.permute.xlu0 %1990
        %1992 = vrot.lane.b32.xlu0 %v599, 56
        %v1993 = vpop.permute.xlu0 %1992
        %1994 = vrot.lane.b32.xlu0 %v604, 56
        %v1995 = vpop.permute.xlu0 %1994
        %1996 = vrot.lane.b32.xlu0 %v609, 56
        %v1997 = vpop.permute.xlu0 %1996
        %1998 = vrot.lane.b32.xlu0 %v614, 56
        %v1999 = vpop.permute.xlu0 %1998
        %2000 = vrot.lane.b32.xlu0 %v619, 56
        %v2001 = vpop.permute.xlu0 %2000
        %2002 = vrot.lane.b32.xlu0 %v624, 56
        %v2003 = vpop.permute.xlu0 %2002
        %v2013 = vsel %vm991, %v1972, 0
        %v2016 = vsel %vm991, %v1973, 0
        %v2019 = vsel %vm991, %v1974, 0
        %v2022 = vsel %vm991, %v1975, 0
        %v2025 = vsel %vm991, %v1976, 0
        %v2028 = vsel %vm991, %v1977, 0
        %v2031 = vsel %vm991, %v1978, 0
        %v2034 = vsel %vm991, %v1979, 0
        %2036 = vmatprep.subr.mxu0 0.0
        %2037 = vmatpush1.msra.mxu0 %v1989
        %2038 = vmatprep.subr.mxu0 0.0
        %2039 = vmatpush1.msra.mxu0 %v1991
        %2040 = vmatprep.subr.mxu0 0.0
        %2041 = vmatpush1.msra.mxu0 %v1993
        %2042 = vmatprep.subr.mxu0 0.0
        %2043 = vmatpush1.msra.mxu0 %v1995
        %2044 = vmatprep.subr.mxu0 0.0
        %2045 = vmatpush1.msra.mxu0 %v1997
        %2046 = vmatprep.subr.mxu0 0.0
        %2047 = vmatpush1.msra.mxu0 %v1999
        %2048 = vmatprep.subr.mxu0 0.0
        %2049 = vmatpush1.msra.mxu0 %v2001
        %2050 = vmatprep.subr.mxu0 0.0
        %2051 = vmatpush1.msra.mxu0 %v2003
        %2052 = vmatprep.subr.mxu0 0.0
        %2053 = vmatpush1.msra.mxu0 0.0
        %2054 = vmatprep.subr.mxu0 0.0
        %2055 = vmatpush1.msra.mxu0 0.0
        %2056 = vmatprep.subr.mxu0 0.0
        %2057 = vmatpush1.msra.mxu0 0.0
        %2058 = vmatprep.subr.mxu0 0.0
        %2059 = vmatpush1.msra.mxu0 0.0
        %2060 = vmatprep.subr.mxu0 0.0
        %2061 = vmatpush1.msra.mxu0 0.0
        %2062 = vmatprep.subr.mxu0 0.0
        %2063 = vmatpush1.msra.mxu0 0.0
        %2064 = vmatprep.subr.mxu0 0.0
        %2065 = vmatpush1.msra.mxu0 0.0
        %2066 = vmatprep.subr.mxu0 0.0
        %2067 = vmatpush1.msra.mxu0 0.0
        %2068 = vmatprep.subr.mxu0 0.0
        %2069 = vmatpush1.msra.mxu0 0.0
        %2070 = vmatprep.subr.mxu0 0.0
        %2071 = vmatpush1.msra.mxu0 0.0
        %2072 = vmatprep.subr.mxu0 0.0
        %2073 = vmatpush1.msra.mxu0 0.0
        %2074 = vmatprep.subr.mxu0 0.0
        %2075 = vmatpush1.msra.mxu0 0.0
        %2076 = vmatprep.subr.mxu0 0.0
        %2077 = vmatpush1.msra.mxu0 0.0
        %2078 = vmatprep.subr.mxu0 0.0
        %2079 = vmatpush1.msra.mxu0 0.0
        %2080 = vmatprep.subr.mxu0 0.0
        %2081 = vmatpush1.msra.mxu0 0.0
        %2082 = vmatprep.subr.mxu0 0.0
        %2083 = vmatpush1.msra.mxu0 0.0
        %2084 = vmatprep.subr.mxu0 0.0
        %2085 = vmatpush1.msra.mxu0 0.0
        %2086 = vmatprep.subr.mxu0 0.0
        %2087 = vmatpush1.msra.mxu0 0.0
        %2088 = vmatprep.subr.mxu0 0.0
        %2089 = vmatpush1.msra.mxu0 0.0
        %2090 = vmatprep.subr.mxu0 0.0
        %2091 = vmatpush1.msra.mxu0 0.0
        %2092 = vmatprep.subr.mxu0 0.0
        %2093 = vmatpush1.msra.mxu0 0.0
        %2094 = vmatprep.subr.mxu0 0.0
        %2095 = vmatpush1.msra.mxu0 0.0
        %2096 = vmatprep.subr.mxu0 0.0
        %2097 = vmatpush1.msra.mxu0 0.0
        %2098 = vmatprep.subr.mxu0 0.0
        %2099 = vmatpush1.msra.mxu0 0.0
        %2100 = vmatprep.mubr.f32.mxu0 0.0
        %2101 = vmatmul.mubr.f32.gmra.mrb[0].mxu0 %v2013
        %v2102 = vpop.f32.mrb[0].mxu0
        %v2103 = vadd.f32 0.0, %v2102
        %v2104 = vpop.f32.mrb[0].mxu0
        %2105 = vmatprep.mubr.f32.mxu0 0.0
        %2106 = vmatmul.mubr.f32.gmra.mrb[0].mxu0 %v2016
        %v2107 = vpop.f32.mrb[0].mxu0
        %v2108 = vadd.f32 0.0, %v2107
        %v2109 = vpop.f32.mrb[0].mxu0
        %2110 = vmatprep.mubr.f32.mxu0 0.0
        %2111 = vmatmul.mubr.f32.gmra.mrb[0].mxu0 %v2019
        %v2112 = vpop.f32.mrb[0].mxu0
        %v2113 = vadd.f32 0.0, %v2112
        %v2114 = vpop.f32.mrb[0].mxu0
        %2115 = vmatprep.mubr.f32.mxu0 0.0
        %2116 = vmatmul.mubr.f32.gmra.mrb[0].mxu0 %v2022
        %v2117 = vpop.f32.mrb[0].mxu0
        %v2118 = vadd.f32 0.0, %v2117
        %v2119 = vpop.f32.mrb[0].mxu0
        %2120 = vmatprep.mubr.f32.mxu0 0.0
        %2121 = vmatmul.mubr.f32.gmra.mrb[0].mxu0 %v2025
        %v2122 = vpop.f32.mrb[0].mxu0
        %v2123 = vadd.f32 0.0, %v2122
        %v2124 = vpop.f32.mrb[0].mxu0
        %2125 = vmatprep.mubr.f32.mxu0 0.0
        %2126 = vmatmul.mubr.f32.gmra.mrb[0].mxu0 %v2028
        %v2127 = vpop.f32.mrb[0].mxu0
        %v2128 = vadd.f32 0.0, %v2127
        %v2129 = vpop.f32.mrb[0].mxu0
        %2130 = vmatprep.mubr.f32.mxu0 0.0
        %2131 = vmatmul.mubr.f32.gmra.mrb[0].mxu0 %v2031
        %v2132 = vpop.f32.mrb[0].mxu0
        %v2133 = vadd.f32 0.0, %v2132
        %v2134 = vpop.f32.mrb[0].mxu0
        %2135 = vmatprep.mubr.f32.mxu0 0.0
        %2136 = vmatmul.mubr.f32.gmra.mrb[0].mxu0 %v2034
        %v2137 = vpop.f32.mrb[0].mxu0
        %v2138 = vadd.f32 0.0, %v2137
        %v2139 = vpop.f32.mrb[0].mxu0
        %2140 = vdwg.mxu0
        %2141 = vrot.lane.b32.xlu0 %v629, 56
        %v2142 = vpop.permute.xlu0 %2141
        %2143 = vrot.lane.b32.xlu0 %v634, 56
        %v2144 = vpop.permute.xlu0 %2143
        %2145 = vrot.lane.b32.xlu0 %v639, 56
        %v2146 = vpop.permute.xlu0 %2145
        %2147 = vrot.lane.b32.xlu0 %v644, 56
        %v2148 = vpop.permute.xlu0 %2147
        %2149 = vrot.lane.b32.xlu0 %v649, 56
        %v2150 = vpop.permute.xlu0 %2149
        %2151 = vrot.lane.b32.xlu0 %v654, 56
        %v2152 = vpop.permute.xlu0 %2151
        %2153 = vrot.lane.b32.xlu0 %v659, 56
        %v2154 = vpop.permute.xlu0 %2153
        %2155 = vrot.lane.b32.xlu0 %v664, 56
        %v2156 = vpop.permute.xlu0 %2155
        %v2166 = vsel %vm991, %v1980, 0
        %v2169 = vsel %vm991, %v1981, 0
        %v2172 = vsel %vm991, %v1982, 0
        %v2175 = vsel %vm991, %v1983, 0
        %v2178 = vsel %vm991, %v1984, 0
        %v2181 = vsel %vm991, %v1985, 0
        %v2184 = vsel %vm991, %v1986, 0
        %v2187 = vsel %vm991, %v1987, 0
        %2189 = vmatprep.subr.mxu0 0.0
        %2190 = vmatpush1.msra.mxu0 %v2142
        %2191 = vmatprep.subr.mxu0 0.0
        %2192 = vmatpush1.msra.mxu0 %v2144
        %2193 = vmatprep.subr.mxu0 0.0
        %2194 = vmatpush1.msra.mxu0 %v2146
        %2195 = vmatprep.subr.mxu0 0.0
        %2196 = vmatpush1.msra.mxu0 %v2148
        %2197 = vmatprep.subr.mxu0 0.0
        %2198 = vmatpush1.msra.mxu0 %v2150
        %2199 = vmatprep.subr.mxu0 0.0
        %2200 = vmatpush1.msra.mxu0 %v2152
        %2201 = vmatprep.subr.mxu0 0.0
        %2202 = vmatpush1.msra.mxu0 %v2154
        %2203 = vmatprep.subr.mxu0 0.0
        %2204 = vmatpush1.msra.mxu0 %v2156
        %2205 = vmatprep.subr.mxu0 0.0
        %2206 = vmatpush1.msra.mxu0 0.0
        %2207 = vmatprep.subr.mxu0 0.0
        %2208 = vmatpush1.msra.mxu0 0.0
        %2209 = vmatprep.subr.mxu0 0.0
        %2210 = vmatpush1.msra.mxu0 0.0
        %2211 = vmatprep.subr.mxu0 0.0
        %2212 = vmatpush1.msra.mxu0 0.0
        %2213 = vmatprep.subr.mxu0 0.0
        %2214 = vmatpush1.msra.mxu0 0.0
        %2215 = vmatprep.subr.mxu0 0.0
        %2216 = vmatpush1.msra.mxu0 0.0
        %2217 = vmatprep.subr.mxu0 0.0
        %2218 = vmatpush1.msra.mxu0 0.0
        %2219 = vmatprep.subr.mxu0 0.0
        %2220 = vmatpush1.msra.mxu0 0.0
        %2221 = vmatprep.subr.mxu0 0.0
        %2222 = vmatpush1.msra.mxu0 0.0
        %2223 = vmatprep.subr.mxu0 0.0
        %2224 = vmatpush1.msra.mxu0 0.0
        %2225 = vmatprep.subr.mxu0 0.0
        %2226 = vmatpush1.msra.mxu0 0.0
        %2227 = vmatprep.subr.mxu0 0.0
        %2228 = vmatpush1.msra.mxu0 0.0
        %2229 = vmatprep.subr.mxu0 0.0
        %2230 = vmatpush1.msra.mxu0 0.0
        %2231 = vmatprep.subr.mxu0 0.0
        %2232 = vmatpush1.msra.mxu0 0.0
        %2233 = vmatprep.subr.mxu0 0.0
        %2234 = vmatpush1.msra.mxu0 0.0
        %2235 = vmatprep.subr.mxu0 0.0
        %2236 = vmatpush1.msra.mxu0 0.0
        %2237 = vmatprep.subr.mxu0 0.0
        %2238 = vmatpush1.msra.mxu0 0.0
        %2239 = vmatprep.subr.mxu0 0.0
        %2240 = vmatpush1.msra.mxu0 0.0
        %2241 = vmatprep.subr.mxu0 0.0
        %2242 = vmatpush1.msra.mxu0 0.0
        %2243 = vmatprep.subr.mxu0 0.0
        %2244 = vmatpush1.msra.mxu0 0.0
        %2245 = vmatprep.subr.mxu0 0.0
        %2246 = vmatpush1.msra.mxu0 0.0
        %2247 = vmatprep.subr.mxu0 0.0
        %2248 = vmatpush1.msra.mxu0 0.0
        %2249 = vmatprep.subr.mxu0 0.0
        %2250 = vmatpush1.msra.mxu0 0.0
        %2251 = vmatprep.subr.mxu0 0.0
        %2252 = vmatpush1.msra.mxu0 0.0
        %2253 = vmatprep.mubr.f32.mxu0 0.0
        %2254 = vmatmul.mubr.f32.gmra.mrb[0].mxu0 %v2166
        %v2255 = vpop.f32.mrb[0].mxu0
        %v2256 = vadd.f32 0.0, %v2255
        %v2257 = vpop.f32.mrb[0].mxu0
        %2258 = vmatprep.mubr.f32.mxu0 0.0
        %2259 = vmatmul.mubr.f32.gmra.mrb[0].mxu0 %v2169
        %v2260 = vpop.f32.mrb[0].mxu0
        %v2261 = vadd.f32 0.0, %v2260
        %v2262 = vpop.f32.mrb[0].mxu0
        %2263 = vmatprep.mubr.f32.mxu0 0.0
        %2264 = vmatmul.mubr.f32.gmra.mrb[0].mxu0 %v2172
        %v2265 = vpop.f32.mrb[0].mxu0
        %v2266 = vadd.f32 0.0, %v2265
        %v2267 = vpop.f32.mrb[0].mxu0
        %2268 = vmatprep.mubr.f32.mxu0 0.0
        %2269 = vmatmul.mubr.f32.gmra.mrb[0].mxu0 %v2175
        %v2270 = vpop.f32.mrb[0].mxu0
        %v2271 = vadd.f32 0.0, %v2270
        %v2272 = vpop.f32.mrb[0].mxu0
        %2273 = vmatprep.mubr.f32.mxu0 0.0
        %2274 = vmatmul.mubr.f32.gmra.mrb[0].mxu0 %v2178
        %v2275 = vpop.f32.mrb[0].mxu0
        %v2276 = vadd.f32 0.0, %v2275
        %v2277 = vpop.f32.mrb[0].mxu0
        %2278 = vmatprep.mubr.f32.mxu0 0.0
        %2279 = vmatmul.mubr.f32.gmra.mrb[0].mxu0 %v2181
        %v2280 = vpop.f32.mrb[0].mxu0
        %v2281 = vadd.f32 0.0, %v2280
        %v2282 = vpop.f32.mrb[0].mxu0
        %2283 = vmatprep.mubr.f32.mxu0 0.0
        %2284 = vmatmul.mubr.f32.gmra.mrb[0].mxu0 %v2184
        %v2285 = vpop.f32.mrb[0].mxu0
        %v2286 = vadd.f32 0.0, %v2285
        %v2287 = vpop.f32.mrb[0].mxu0
        %2288 = vmatprep.mubr.f32.mxu0 0.0
        %2289 = vmatmul.mubr.f32.gmra.mrb[0].mxu0 %v2187
        %v2290 = vpop.f32.mrb[0].mxu0
        %v2291 = vadd.f32 0.0, %v2290
        %v2292 = vpop.f32.mrb[0].mxu0
        %2293 = vdwg.mxu0
        %2294 = vrot.lane.b32.xlu0 %v589, 112
        %v2295 = vpop.permute.xlu0 %2294
        %2296 = vrot.lane.b32.xlu0 %v594, 112
        %v2297 = vpop.permute.xlu0 %2296
        %2298 = vrot.lane.b32.xlu0 %v599, 112
        %v2299 = vpop.permute.xlu0 %2298
        %2300 = vrot.lane.b32.xlu0 %v604, 112
        %v2301 = vpop.permute.xlu0 %2300
        %2302 = vrot.lane.b32.xlu0 %v609, 112
        %v2303 = vpop.permute.xlu0 %2302
        %2304 = vrot.lane.b32.xlu0 %v614, 112
        %v2305 = vpop.permute.xlu0 %2304
        %2306 = vrot.lane.b32.xlu0 %v619, 112
        %v2307 = vpop.permute.xlu0 %2306
        %2308 = vrot.lane.b32.xlu0 %v624, 112
        %v2309 = vpop.permute.xlu0 %2308
        %2310 = vrot.lane.b32.xlu0 %v589, 80
        %v2311 = vpop.permute.xlu0 %2310
        %2312 = vrot.lane.b32.xlu0 %v594, 80
        %v2313 = vpop.permute.xlu0 %2312
        %2314 = vrot.lane.b32.xlu0 %v599, 80
        %v2315 = vpop.permute.xlu0 %2314
        %2316 = vrot.lane.b32.xlu0 %v604, 80
        %v2317 = vpop.permute.xlu0 %2316
        %2318 = vrot.lane.b32.xlu0 %v609, 80
        %v2319 = vpop.permute.xlu0 %2318
        %2320 = vrot.lane.b32.xlu0 %v614, 80
        %v2321 = vpop.permute.xlu0 %2320
        %2322 = vrot.lane.b32.xlu0 %v619, 80
        %v2323 = vpop.permute.xlu0 %2322
        %2324 = vrot.lane.b32.xlu0 %v624, 80
        %v2325 = vpop.permute.xlu0 %2324
        %v2326 = vsel %vm692, %v2295, 0
        %v2328 = vsel %vm692, %v2297, 0
        %v2330 = vsel %vm692, %v2299, 0
        %v2332 = vsel %vm692, %v2301, 0
        %v2334 = vsel %vm692, %v2303, 0
        %v2336 = vsel %vm692, %v2305, 0
        %v2338 = vsel %vm692, %v2307, 0
        %v2340 = vsel %vm692, %v2309, 0
        %v2342 = vsel %vm692, %v2311, 0
        %v2344 = vsel %vm692, %v2313, 0
        %v2346 = vsel %vm692, %v2315, 0
        %v2348 = vsel %vm692, %v2317, 0
        %v2350 = vsel %vm692, %v2319, 0
        %v2352 = vsel %vm692, %v2321, 0
        %v2354 = vsel %vm692, %v2323, 0
        %v2356 = vsel %vm692, %v2325, 0
        %2358 = vmatprep.subr.mxu0 0.0
        %2359 = vmatpush1.xpose.msra.mxu0 %v2342
        %2360 = vmatprep.subr.mxu0 0.0
        %2361 = vmatpush1.xpose.msra.mxu0 %v2344
        %2362 = vmatprep.subr.mxu0 0.0
        %2363 = vmatpush1.xpose.msra.mxu0 %v2346
        %2364 = vmatprep.subr.mxu0 0.0
        %2365 = vmatpush1.xpose.msra.mxu0 %v2348
        %2366 = vmatprep.subr.mxu0 0.0
        %2367 = vmatpush1.xpose.msra.mxu0 %v2350
        %2368 = vmatprep.subr.mxu0 0.0
        %2369 = vmatpush1.xpose.msra.mxu0 %v2352
        %2370 = vmatprep.subr.mxu0 0.0
        %2371 = vmatpush1.xpose.msra.mxu0 %v2354
        %2372 = vmatprep.subr.mxu0 0.0
        %2373 = vmatpush1.xpose.msra.mxu0 %v2356
        %2374 = vmatprep.subr.mxu0 0.0
        %2375 = vmatpush1.xpose.msra.mxu0 0.0
        %2376 = vmatprep.subr.mxu0 0.0
        %2377 = vmatpush1.xpose.msra.mxu0 0.0
        %2378 = vmatprep.subr.mxu0 0.0
        %2379 = vmatpush1.xpose.msra.mxu0 0.0
        %2380 = vmatprep.subr.mxu0 0.0
        %2381 = vmatpush1.xpose.msra.mxu0 0.0
        %2382 = vmatprep.subr.mxu0 0.0
        %2383 = vmatpush1.xpose.msra.mxu0 0.0
        %2384 = vmatprep.subr.mxu0 0.0
        %2385 = vmatpush1.xpose.msra.mxu0 0.0
        %2386 = vmatprep.subr.mxu0 0.0
        %2387 = vmatpush1.xpose.msra.mxu0 0.0
        %2388 = vmatprep.subr.mxu0 0.0
        %2389 = vmatpush1.xpose.msra.mxu0 0.0
        %2390 = vmatprep.subr.mxu0 0.0
        %2391 = vmatpush1.xpose.msra.mxu0 0.0
        %2392 = vmatprep.subr.mxu0 0.0
        %2393 = vmatpush1.xpose.msra.mxu0 0.0
        %2394 = vmatprep.subr.mxu0 0.0
        %2395 = vmatpush1.xpose.msra.mxu0 0.0
        %2396 = vmatprep.subr.mxu0 0.0
        %2397 = vmatpush1.xpose.msra.mxu0 0.0
        %2398 = vmatprep.subr.mxu0 0.0
        %2399 = vmatpush1.xpose.msra.mxu0 0.0
        %2400 = vmatprep.subr.mxu0 0.0
        %2401 = vmatpush1.xpose.msra.mxu0 0.0
        %2402 = vmatprep.subr.mxu0 0.0
        %2403 = vmatpush1.xpose.msra.mxu0 0.0
        %2404 = vmatprep.subr.mxu0 0.0
        %2405 = vmatpush1.xpose.msra.mxu0 0.0
        %2406 = vmatprep.subr.mxu0 0.0
        %2407 = vmatpush1.xpose.msra.mxu0 0.0
        %2408 = vmatprep.subr.mxu0 0.0
        %2409 = vmatpush1.xpose.msra.mxu0 0.0
        %2410 = vmatprep.subr.mxu0 0.0
        %2411 = vmatpush1.xpose.msra.mxu0 0.0
        %2412 = vmatprep.subr.mxu0 0.0
        %2413 = vmatpush1.xpose.msra.mxu0 0.0
        %2414 = vmatprep.subr.mxu0 0.0
        %2415 = vmatpush1.xpose.msra.mxu0 0.0
        %2416 = vmatprep.subr.mxu0 0.0
        %2417 = vmatpush1.xpose.msra.mxu0 0.0
        %2418 = vmatprep.subr.mxu0 0.0
        %2419 = vmatpush1.xpose.msra.mxu0 0.0
        %2420 = vmatprep.subr.mxu0 0.0
        %2421 = vmatpush1.xpose.msra.mxu0 0.0
        %2422 = vmatprep.mubr.f32.mxu0 0.0
        %2423 = vmatmul.mubr.f32.gmra.mrb[0].mxu0 %v2326
        %v2424 = vpop.f32.mrb[0].mxu0
        %v2425 = vadd.f32 0.0, %v2424
        %v2426 = vpop.f32.mrb[0].mxu0
        %2427 = vmatprep.mubr.f32.mxu0 0.0
        %2428 = vmatmul.mubr.f32.gmra.mrb[0].mxu0 %v2328
        %v2429 = vpop.f32.mrb[0].mxu0
        %v2430 = vadd.f32 0.0, %v2429
        %v2431 = vpop.f32.mrb[0].mxu0
        %2432 = vmatprep.mubr.f32.mxu0 0.0
        %2433 = vmatmul.mubr.f32.gmra.mrb[0].mxu0 %v2330
        %v2434 = vpop.f32.mrb[0].mxu0
        %v2435 = vadd.f32 0.0, %v2434
        %v2436 = vpop.f32.mrb[0].mxu0
        %2437 = vmatprep.mubr.f32.mxu0 0.0
        %2438 = vmatmul.mubr.f32.gmra.mrb[0].mxu0 %v2332
        %v2439 = vpop.f32.mrb[0].mxu0
        %v2440 = vadd.f32 0.0, %v2439
        %v2441 = vpop.f32.mrb[0].mxu0
        %2442 = vmatprep.mubr.f32.mxu0 0.0
        %2443 = vmatmul.mubr.f32.gmra.mrb[0].mxu0 %v2334
        %v2444 = vpop.f32.mrb[0].mxu0
        %v2445 = vadd.f32 0.0, %v2444
        %v2446 = vpop.f32.mrb[0].mxu0
        %2447 = vmatprep.mubr.f32.mxu0 0.0
        %2448 = vmatmul.mubr.f32.gmra.mrb[0].mxu0 %v2336
        %v2449 = vpop.f32.mrb[0].mxu0
        %v2450 = vadd.f32 0.0, %v2449
        %v2451 = vpop.f32.mrb[0].mxu0
        %2452 = vmatprep.mubr.f32.mxu0 0.0
        %2453 = vmatmul.mubr.f32.gmra.mrb[0].mxu0 %v2338
        %v2454 = vpop.f32.mrb[0].mxu0
        %v2455 = vadd.f32 0.0, %v2454
        %v2456 = vpop.f32.mrb[0].mxu0
        %2457 = vmatprep.mubr.f32.mxu0 0.0
        %2458 = vmatmul.mubr.f32.gmra.mrb[0].mxu0 %v2340
        %v2459 = vpop.f32.mrb[0].mxu0
        %v2460 = vadd.f32 0.0, %v2459
        %v2461 = vpop.f32.mrb[0].mxu0
        %2462 = vdwg.mxu0
        %2463 = vrot.lane.b32.xlu0 %v629, 112
        %v2464 = vpop.permute.xlu0 %2463
        %2465 = vrot.lane.b32.xlu0 %v634, 112
        %v2466 = vpop.permute.xlu0 %2465
        %2467 = vrot.lane.b32.xlu0 %v639, 112
        %v2468 = vpop.permute.xlu0 %2467
        %2469 = vrot.lane.b32.xlu0 %v644, 112
        %v2470 = vpop.permute.xlu0 %2469
        %2471 = vrot.lane.b32.xlu0 %v649, 112
        %v2472 = vpop.permute.xlu0 %2471
        %2473 = vrot.lane.b32.xlu0 %v654, 112
        %v2474 = vpop.permute.xlu0 %2473
        %2475 = vrot.lane.b32.xlu0 %v659, 112
        %v2476 = vpop.permute.xlu0 %2475
        %2477 = vrot.lane.b32.xlu0 %v664, 112
        %v2478 = vpop.permute.xlu0 %2477
        %2479 = vrot.lane.b32.xlu0 %v629, 80
        %v2480 = vpop.permute.xlu0 %2479
        %2481 = vrot.lane.b32.xlu0 %v634, 80
        %v2482 = vpop.permute.xlu0 %2481
        %2483 = vrot.lane.b32.xlu0 %v639, 80
        %v2484 = vpop.permute.xlu0 %2483
        %2485 = vrot.lane.b32.xlu0 %v644, 80
        %v2486 = vpop.permute.xlu0 %2485
        %2487 = vrot.lane.b32.xlu0 %v649, 80
        %v2488 = vpop.permute.xlu0 %2487
        %2489 = vrot.lane.b32.xlu0 %v654, 80
        %v2490 = vpop.permute.xlu0 %2489
        %2491 = vrot.lane.b32.xlu0 %v659, 80
        %v2492 = vpop.permute.xlu0 %2491
        %2493 = vrot.lane.b32.xlu0 %v664, 80
        %v2494 = vpop.permute.xlu0 %2493
        %v2495 = vsel %vm692, %v2464, 0
        %v2497 = vsel %vm692, %v2466, 0
        %v2499 = vsel %vm692, %v2468, 0
        %v2501 = vsel %vm692, %v2470, 0
        %v2503 = vsel %vm692, %v2472, 0
        %v2505 = vsel %vm692, %v2474, 0
        %v2507 = vsel %vm692, %v2476, 0
        %v2509 = vsel %vm692, %v2478, 0
        %v2511 = vsel %vm692, %v2480, 0
        %v2513 = vsel %vm692, %v2482, 0
        %v2515 = vsel %vm692, %v2484, 0
        %v2517 = vsel %vm692, %v2486, 0
        %v2519 = vsel %vm692, %v2488, 0
        %v2521 = vsel %vm692, %v2490, 0
        %v2523 = vsel %vm692, %v2492, 0
        %v2525 = vsel %vm692, %v2494, 0
        %2527 = vmatprep.subr.mxu0 0.0
        %2528 = vmatpush1.xpose.msra.mxu0 %v2511
        %2529 = vmatprep.subr.mxu0 0.0
        %2530 = vmatpush1.xpose.msra.mxu0 %v2513
        %2531 = vmatprep.subr.mxu0 0.0
        %2532 = vmatpush1.xpose.msra.mxu0 %v2515
        %2533 = vmatprep.subr.mxu0 0.0
        %2534 = vmatpush1.xpose.msra.mxu0 %v2517
        %2535 = vmatprep.subr.mxu0 0.0
        %2536 = vmatpush1.xpose.msra.mxu0 %v2519
        %2537 = vmatprep.subr.mxu0 0.0
        %2538 = vmatpush1.xpose.msra.mxu0 %v2521
        %2539 = vmatprep.subr.mxu0 0.0
        %2540 = vmatpush1.xpose.msra.mxu0 %v2523
        %2541 = vmatprep.subr.mxu0 0.0
        %2542 = vmatpush1.xpose.msra.mxu0 %v2525
        %2543 = vmatprep.subr.mxu0 0.0
        %2544 = vmatpush1.xpose.msra.mxu0 0.0
        %2545 = vmatprep.subr.mxu0 0.0
        %2546 = vmatpush1.xpose.msra.mxu0 0.0
        %2547 = vmatprep.subr.mxu0 0.0
        %2548 = vmatpush1.xpose.msra.mxu0 0.0
        %2549 = vmatprep.subr.mxu0 0.0
        %2550 = vmatpush1.xpose.msra.mxu0 0.0
        %2551 = vmatprep.subr.mxu0 0.0
        %2552 = vmatpush1.xpose.msra.mxu0 0.0
        %2553 = vmatprep.subr.mxu0 0.0
        %2554 = vmatpush1.xpose.msra.mxu0 0.0
        %2555 = vmatprep.subr.mxu0 0.0
        %2556 = vmatpush1.xpose.msra.mxu0 0.0
        %2557 = vmatprep.subr.mxu0 0.0
        %2558 = vmatpush1.xpose.msra.mxu0 0.0
        %2559 = vmatprep.subr.mxu0 0.0
        %2560 = vmatpush1.xpose.msra.mxu0 0.0
        %2561 = vmatprep.subr.mxu0 0.0
        %2562 = vmatpush1.xpose.msra.mxu0 0.0
        %2563 = vmatprep.subr.mxu0 0.0
        %2564 = vmatpush1.xpose.msra.mxu0 0.0
        %2565 = vmatprep.subr.mxu0 0.0
        %2566 = vmatpush1.xpose.msra.mxu0 0.0
        %2567 = vmatprep.subr.mxu0 0.0
        %2568 = vmatpush1.xpose.msra.mxu0 0.0
        %2569 = vmatprep.subr.mxu0 0.0
        %2570 = vmatpush1.xpose.msra.mxu0 0.0
        %2571 = vmatprep.subr.mxu0 0.0
        %2572 = vmatpush1.xpose.msra.mxu0 0.0
        %2573 = vmatprep.subr.mxu0 0.0
        %2574 = vmatpush1.xpose.msra.mxu0 0.0
        %2575 = vmatprep.subr.mxu0 0.0
        %2576 = vmatpush1.xpose.msra.mxu0 0.0
        %2577 = vmatprep.subr.mxu0 0.0
        %2578 = vmatpush1.xpose.msra.mxu0 0.0
        %2579 = vmatprep.subr.mxu0 0.0
        %2580 = vmatpush1.xpose.msra.mxu0 0.0
        %2581 = vmatprep.subr.mxu0 0.0
        %2582 = vmatpush1.xpose.msra.mxu0 0.0
        %2583 = vmatprep.subr.mxu0 0.0
        %2584 = vmatpush1.xpose.msra.mxu0 0.0
        %2585 = vmatprep.subr.mxu0 0.0
        %2586 = vmatpush1.xpose.msra.mxu0 0.0
        %2587 = vmatprep.subr.mxu0 0.0
        %2588 = vmatpush1.xpose.msra.mxu0 0.0
        %2589 = vmatprep.subr.mxu0 0.0
        %2590 = vmatpush1.xpose.msra.mxu0 0.0
        %2591 = vmatprep.mubr.f32.mxu0 0.0
        %2592 = vmatmul.mubr.f32.gmra.mrb[0].mxu0 %v2495
        %v2593 = vpop.f32.mrb[0].mxu0
        %v2594 = vadd.f32 0.0, %v2593
        %v2595 = vpop.f32.mrb[0].mxu0
        %2596 = vmatprep.mubr.f32.mxu0 0.0
        %2597 = vmatmul.mubr.f32.gmra.mrb[0].mxu0 %v2497
        %v2598 = vpop.f32.mrb[0].mxu0
        %v2599 = vadd.f32 0.0, %v2598
        %v2600 = vpop.f32.mrb[0].mxu0
        %2601 = vmatprep.mubr.f32.mxu0 0.0
        %2602 = vmatmul.mubr.f32.gmra.mrb[0].mxu0 %v2499
        %v2603 = vpop.f32.mrb[0].mxu0
        %v2604 = vadd.f32 0.0, %v2603
        %v2605 = vpop.f32.mrb[0].mxu0
        %2606 = vmatprep.mubr.f32.mxu0 0.0
        %2607 = vmatmul.mubr.f32.gmra.mrb[0].mxu0 %v2501
        %v2608 = vpop.f32.mrb[0].mxu0
        %v2609 = vadd.f32 0.0, %v2608
        %v2610 = vpop.f32.mrb[0].mxu0
        %2611 = vmatprep.mubr.f32.mxu0 0.0
        %2612 = vmatmul.mubr.f32.gmra.mrb[0].mxu0 %v2503
        %v2613 = vpop.f32.mrb[0].mxu0
        %v2614 = vadd.f32 0.0, %v2613
        %v2615 = vpop.f32.mrb[0].mxu0
        %2616 = vmatprep.mubr.f32.mxu0 0.0
        %2617 = vmatmul.mubr.f32.gmra.mrb[0].mxu0 %v2505
        %v2618 = vpop.f32.mrb[0].mxu0
        %v2619 = vadd.f32 0.0, %v2618
        %v2620 = vpop.f32.mrb[0].mxu0
        %2621 = vmatprep.mubr.f32.mxu0 0.0
        %2622 = vmatmul.mubr.f32.gmra.mrb[0].mxu0 %v2507
        %v2623 = vpop.f32.mrb[0].mxu0
        %v2624 = vadd.f32 0.0, %v2623
        %v2625 = vpop.f32.mrb[0].mxu0
        %2626 = vmatprep.mubr.f32.mxu0 0.0
        %2627 = vmatmul.mubr.f32.gmra.mrb[0].mxu0 %v2509
        %v2628 = vpop.f32.mrb[0].mxu0
        %v2629 = vadd.f32 0.0, %v2628
        %v2630 = vpop.f32.mrb[0].mxu0
        %2631 = vdwg.mxu0
        %v2632 = vsel %vm991, %v2425, -inf
        %2633 = vmax.xlane.f32.xlu0 %v2632
        %v2634 = vpop.xlane.xlu0 %2633
        %v2635 = vsel %vm991, %v2430, -inf
        %2636 = vmax.xlane.f32.xlu0 %v2635
        %v2637 = vpop.xlane.xlu0 %2636
        %v2638 = vsel %vm991, %v2435, -inf
        %2639 = vmax.xlane.f32.xlu0 %v2638
        %v2640 = vpop.xlane.xlu0 %2639
        %v2641 = vsel %vm991, %v2440, -inf
        %2642 = vmax.xlane.f32.xlu0 %v2641
        %v2643 = vpop.xlane.xlu0 %2642
        %v2644 = vsel %vm991, %v2445, -inf
        %2645 = vmax.xlane.f32.xlu0 %v2644
        %v2646 = vpop.xlane.xlu0 %2645
        %v2647 = vsel %vm991, %v2450, -inf
        %2648 = vmax.xlane.f32.xlu0 %v2647
        %v2649 = vpop.xlane.xlu0 %2648
        %v2650 = vsel %vm991, %v2455, -inf
        %2651 = vmax.xlane.f32.xlu0 %v2650
        %v2652 = vpop.xlane.xlu0 %2651
        %v2653 = vsel %vm991, %v2460, -inf
        %2654 = vmax.xlane.f32.xlu0 %v2653
        %v2655 = vpop.xlane.xlu0 %2654
        %v2656 = vsel %vm991, %v2594, -inf
        %2657 = vmax.xlane.f32.xlu0 %v2656
        %v2658 = vpop.xlane.xlu0 %2657
        %v2659 = vsel %vm991, %v2599, -inf
        %2660 = vmax.xlane.f32.xlu0 %v2659
        %v2661 = vpop.xlane.xlu0 %2660
        %v2662 = vsel %vm991, %v2604, -inf
        %2663 = vmax.xlane.f32.xlu0 %v2662
        %v2664 = vpop.xlane.xlu0 %2663
        %v2665 = vsel %vm991, %v2609, -inf
        %2666 = vmax.xlane.f32.xlu0 %v2665
        %v2667 = vpop.xlane.xlu0 %2666
        %v2668 = vsel %vm991, %v2614, -inf
        %2669 = vmax.xlane.f32.xlu0 %v2668
        %v2670 = vpop.xlane.xlu0 %2669
        %v2671 = vsel %vm991, %v2619, -inf
        %2672 = vmax.xlane.f32.xlu0 %v2671
        %v2673 = vpop.xlane.xlu0 %2672
        %v2674 = vsel %vm991, %v2624, -inf
        %2675 = vmax.xlane.f32.xlu0 %v2674
        %v2676 = vpop.xlane.xlu0 %2675
        %v2677 = vsel %vm991, %v2629, -inf
        %2678 = vmax.xlane.f32.xlu0 %v2677
        %v2679 = vpop.xlane.xlu0 %2678
        %v2680 = vsub.f32 %v2425, %v2634
        %v2681 = vsub.f32 %v2430, %v2637
        %v2682 = vsub.f32 %v2435, %v2640
        %v2683 = vsub.f32 %v2440, %v2643
        %v2684 = vsub.f32 %v2445, %v2646
        %v2685 = vsub.f32 %v2450, %v2649
        %v2686 = vsub.f32 %v2455, %v2652
        %v2687 = vsub.f32 %v2460, %v2655
        %v2688 = vsub.f32 %v2594, %v2658
        %v2689 = vsub.f32 %v2599, %v2661
        %v2690 = vsub.f32 %v2604, %v2664
        %v2691 = vsub.f32 %v2609, %v2667
        %v2692 = vsub.f32 %v2614, %v2670
        %v2693 = vsub.f32 %v2619, %v2673
        %v2694 = vsub.f32 %v2624, %v2676
        %v2695 = vsub.f32 %v2629, %v2679
        %v2696 = vmul.f32 %v2680, 1.442695
        %v2697 = vpow.pop %v2696
        %v2698 = vmul.f32 %v2681, 1.442695
        %v2699 = vpow.pop %v2698
        %v2700 = vmul.f32 %v2682, 1.442695
        %v2701 = vpow.pop %v2700
        %v2702 = vmul.f32 %v2683, 1.442695
        %v2703 = vpow.pop %v2702
        %v2704 = vmul.f32 %v2684, 1.442695
        %v2705 = vpow.pop %v2704
        %v2706 = vmul.f32 %v2685, 1.442695
        %v2707 = vpow.pop %v2706
        %v2708 = vmul.f32 %v2686, 1.442695
        %v2709 = vpow.pop %v2708
        %v2710 = vmul.f32 %v2687, 1.442695
        %v2711 = vpow.pop %v2710
        %v2712 = vmul.f32 %v2688, 1.442695
        %v2713 = vpow.pop %v2712
        %v2714 = vmul.f32 %v2689, 1.442695
        %v2715 = vpow.pop %v2714
        %v2716 = vmul.f32 %v2690, 1.442695
        %v2717 = vpow.pop %v2716
        %v2718 = vmul.f32 %v2691, 1.442695
        %v2719 = vpow.pop %v2718
        %v2720 = vmul.f32 %v2692, 1.442695
        %v2721 = vpow.pop %v2720
        %v2722 = vmul.f32 %v2693, 1.442695
        %v2723 = vpow.pop %v2722
        %v2724 = vmul.f32 %v2694, 1.442695
        %v2725 = vpow.pop %v2724
        %v2726 = vmul.f32 %v2695, 1.442695
        %v2727 = vpow.pop %v2726
        %v2728 = vsel %vm991, %v2697, 0.0
        %2729 = vadd.xlane.f32.xlu0 %v2728
        %v2730 = vpop.xlane.xlu0 %2729
        %v2731 = vsel %vm991, %v2699, 0.0
        %2732 = vadd.xlane.f32.xlu0 %v2731
        %v2733 = vpop.xlane.xlu0 %2732
        %v2734 = vsel %vm991, %v2701, 0.0
        %2735 = vadd.xlane.f32.xlu0 %v2734
        %v2736 = vpop.xlane.xlu0 %2735
        %v2737 = vsel %vm991, %v2703, 0.0
        %2738 = vadd.xlane.f32.xlu0 %v2737
        %v2739 = vpop.xlane.xlu0 %2738
        %v2740 = vsel %vm991, %v2705, 0.0
        %2741 = vadd.xlane.f32.xlu0 %v2740
        %v2742 = vpop.xlane.xlu0 %2741
        %v2743 = vsel %vm991, %v2707, 0.0
        %2744 = vadd.xlane.f32.xlu0 %v2743
        %v2745 = vpop.xlane.xlu0 %2744
        %v2746 = vsel %vm991, %v2709, 0.0
        %2747 = vadd.xlane.f32.xlu0 %v2746
        %v2748 = vpop.xlane.xlu0 %2747
        %v2749 = vsel %vm991, %v2711, 0.0
        %2750 = vadd.xlane.f32.xlu0 %v2749
        %v2751 = vpop.xlane.xlu0 %2750
        %v2752 = vsel %vm991, %v2713, 0.0
        %2753 = vadd.xlane.f32.xlu0 %v2752
        %v2754 = vpop.xlane.xlu0 %2753
        %v2755 = vsel %vm991, %v2715, 0.0
        %2756 = vadd.xlane.f32.xlu0 %v2755
        %v2757 = vpop.xlane.xlu0 %2756
        %v2758 = vsel %vm991, %v2717, 0.0
        %2759 = vadd.xlane.f32.xlu0 %v2758
        %v2760 = vpop.xlane.xlu0 %2759
        %v2761 = vsel %vm991, %v2719, 0.0
        %2762 = vadd.xlane.f32.xlu0 %v2761
        %v2763 = vpop.xlane.xlu0 %2762
        %v2764 = vsel %vm991, %v2721, 0.0
        %2765 = vadd.xlane.f32.xlu0 %v2764
        %v2766 = vpop.xlane.xlu0 %2765
        %v2767 = vsel %vm991, %v2723, 0.0
        %2768 = vadd.xlane.f32.xlu0 %v2767
        %v2769 = vpop.xlane.xlu0 %2768
        %v2770 = vsel %vm991, %v2725, 0.0
        %2771 = vadd.xlane.f32.xlu0 %v2770
        %v2772 = vpop.xlane.xlu0 %2771
        %v2773 = vsel %vm991, %v2727, 0.0
        %2774 = vadd.xlane.f32.xlu0 %v2773
        %v2775 = vpop.xlane.xlu0 %2774
        %v2776 = vrcp.pop %v2730
        %v2777 = vrcp.pop %v2733
        %v2778 = vrcp.pop %v2736
        %v2779 = vrcp.pop %v2739
        %v2780 = vrcp.pop %v2742
        %v2781 = vrcp.pop %v2745
        %v2782 = vrcp.pop %v2748
        %v2783 = vrcp.pop %v2751
        %v2784 = vrcp.pop %v2754
        %v2785 = vrcp.pop %v2757
        %v2786 = vrcp.pop %v2760
        %v2787 = vrcp.pop %v2763
        %v2788 = vrcp.pop %v2766
        %v2789 = vrcp.pop %v2769
        %v2790 = vrcp.pop %v2772
        %v2791 = vrcp.pop %v2775
        %v2792 = vmul.f32 %v2697, %v2776
        %v2793 = vmul.f32 %v2699, %v2777
        %v2794 = vmul.f32 %v2701, %v2778
        %v2795 = vmul.f32 %v2703, %v2779
        %v2796 = vmul.f32 %v2705, %v2780
        %v2797 = vmul.f32 %v2707, %v2781
        %v2798 = vmul.f32 %v2709, %v2782
        %v2799 = vmul.f32 %v2711, %v2783
        %v2800 = vmul.f32 %v2713, %v2784
        %v2801 = vmul.f32 %v2715, %v2785
        %v2802 = vmul.f32 %v2717, %v2786
        %v2803 = vmul.f32 %v2719, %v2787
        %v2804 = vmul.f32 %v2721, %v2788
        %v2805 = vmul.f32 %v2723, %v2789
        %v2806 = vmul.f32 %v2725, %v2790
        %v2807 = vmul.f32 %v2727, %v2791
        %2808 = vrot.lane.b32.xlu0 %v589, 48
        %v2809 = vpop.permute.xlu0 %2808
        %2810 = vrot.lane.b32.xlu0 %v594, 48
        %v2811 = vpop.permute.xlu0 %2810
        %2812 = vrot.lane.b32.xlu0 %v599, 48
        %v2813 = vpop.permute.xlu0 %2812
        %2814 = vrot.lane.b32.xlu0 %v604, 48
        %v2815 = vpop.permute.xlu0 %2814
        %2816 = vrot.lane.b32.xlu0 %v609, 48
        %v2817 = vpop.permute.xlu0 %2816
        %2818 = vrot.lane.b32.xlu0 %v614, 48
        %v2819 = vpop.permute.xlu0 %2818
        %2820 = vrot.lane.b32.xlu0 %v619, 48
        %v2821 = vpop.permute.xlu0 %2820
        %2822 = vrot.lane.b32.xlu0 %v624, 48
        %v2823 = vpop.permute.xlu0 %2822
        %v2833 = vsel %vm991, %v2792, 0
        %v2836 = vsel %vm991, %v2793, 0
        %v2839 = vsel %vm991, %v2794, 0
        %v2842 = vsel %vm991, %v2795, 0
        %v2845 = vsel %vm991, %v2796, 0
        %v2848 = vsel %vm991, %v2797, 0
        %v2851 = vsel %vm991, %v2798, 0
        %v2854 = vsel %vm991, %v2799, 0
        %2856 = vmatprep.subr.mxu0 0.0
        %2857 = vmatpush1.msra.mxu0 %v2809
        %2858 = vmatprep.subr.mxu0 0.0
        %2859 = vmatpush1.msra.mxu0 %v2811
        %2860 = vmatprep.subr.mxu0 0.0
        %2861 = vmatpush1.msra.mxu0 %v2813
        %2862 = vmatprep.subr.mxu0 0.0
        %2863 = vmatpush1.msra.mxu0 %v2815
        %2864 = vmatprep.subr.mxu0 0.0
        %2865 = vmatpush1.msra.mxu0 %v2817
        %2866 = vmatprep.subr.mxu0 0.0
        %2867 = vmatpush1.msra.mxu0 %v2819
        %2868 = vmatprep.subr.mxu0 0.0
        %2869 = vmatpush1.msra.mxu0 %v2821
        %2870 = vmatprep.subr.mxu0 0.0
        %2871 = vmatpush1.msra.mxu0 %v2823
        %2872 = vmatprep.subr.mxu0 0.0
        %2873 = vmatpush1.msra.mxu0 0.0
        %2874 = vmatprep.subr.mxu0 0.0
        %2875 = vmatpush1.msra.mxu0 0.0
        %2876 = vmatprep.subr.mxu0 0.0
        %2877 = vmatpush1.msra.mxu0 0.0
        %2878 = vmatprep.subr.mxu0 0.0
        %2879 = vmatpush1.msra.mxu0 0.0
        %2880 = vmatprep.subr.mxu0 0.0
        %2881 = vmatpush1.msra.mxu0 0.0
        %2882 = vmatprep.subr.mxu0 0.0
        %2883 = vmatpush1.msra.mxu0 0.0
        %2884 = vmatprep.subr.mxu0 0.0
        %2885 = vmatpush1.msra.mxu0 0.0
        %2886 = vmatprep.subr.mxu0 0.0
        %2887 = vmatpush1.msra.mxu0 0.0
        %2888 = vmatprep.subr.mxu0 0.0
        %2889 = vmatpush1.msra.mxu0 0.0
        %2890 = vmatprep.subr.mxu0 0.0
        %2891 = vmatpush1.msra.mxu0 0.0
        %2892 = vmatprep.subr.mxu0 0.0
        %2893 = vmatpush1.msra.mxu0 0.0
        %2894 = vmatprep.subr.mxu0 0.0
        %2895 = vmatpush1.msra.mxu0 0.0
        %2896 = vmatprep.subr.mxu0 0.0
        %2897 = vmatpush1.msra.mxu0 0.0
        %2898 = vmatprep.subr.mxu0 0.0
        %2899 = vmatpush1.msra.mxu0 0.0
        %2900 = vmatprep.subr.mxu0 0.0
        %2901 = vmatpush1.msra.mxu0 0.0
        %2902 = vmatprep.subr.mxu0 0.0
        %2903 = vmatpush1.msra.mxu0 0.0
        %2904 = vmatprep.subr.mxu0 0.0
        %2905 = vmatpush1.msra.mxu0 0.0
        %2906 = vmatprep.subr.mxu0 0.0
        %2907 = vmatpush1.msra.mxu0 0.0
        %2908 = vmatprep.subr.mxu0 0.0
        %2909 = vmatpush1.msra.mxu0 0.0
        %2910 = vmatprep.subr.mxu0 0.0
        %2911 = vmatpush1.msra.mxu0 0.0
        %2912 = vmatprep.subr.mxu0 0.0
        %2913 = vmatpush1.msra.mxu0 0.0
        %2914 = vmatprep.subr.mxu0 0.0
        %2915 = vmatpush1.msra.mxu0 0.0
        %2916 = vmatprep.subr.mxu0 0.0
        %2917 = vmatpush1.msra.mxu0 0.0
        %2918 = vmatprep.subr.mxu0 0.0
        %2919 = vmatpush1.msra.mxu0 0.0
        %2920 = vmatprep.mubr.f32.mxu0 0.0
        %2921 = vmatmul.mubr.f32.gmra.mrb[0].mxu0 %v2833
        %v2922 = vpop.f32.mrb[0].mxu0
        %v2923 = vadd.f32 0.0, %v2922
        %v2924 = vpop.f32.mrb[0].mxu0
        %2925 = vmatprep.mubr.f32.mxu0 0.0
        %2926 = vmatmul.mubr.f32.gmra.mrb[0].mxu0 %v2836
        %v2927 = vpop.f32.mrb[0].mxu0
        %v2928 = vadd.f32 0.0, %v2927
        %v2929 = vpop.f32.mrb[0].mxu0
        %2930 = vmatprep.mubr.f32.mxu0 0.0
        %2931 = vmatmul.mubr.f32.gmra.mrb[0].mxu0 %v2839
        %v2932 = vpop.f32.mrb[0].mxu0
        %v2933 = vadd.f32 0.0, %v2932
        %v2934 = vpop.f32.mrb[0].mxu0
        %2935 = vmatprep.mubr.f32.mxu0 0.0
        %2936 = vmatmul.mubr.f32.gmra.mrb[0].mxu0 %v2842
        %v2937 = vpop.f32.mrb[0].mxu0
        %v2938 = vadd.f32 0.0, %v2937
        %v2939 = vpop.f32.mrb[0].mxu0
        %2940 = vmatprep.mubr.f32.mxu0 0.0
        %2941 = vmatmul.mubr.f32.gmra.mrb[0].mxu0 %v2845
        %v2942 = vpop.f32.mrb[0].mxu0
        %v2943 = vadd.f32 0.0, %v2942
        %v2944 = vpop.f32.mrb[0].mxu0
        %2945 = vmatprep.mubr.f32.mxu0 0.0
        %2946 = vmatmul.mubr.f32.gmra.mrb[0].mxu0 %v2848
        %v2947 = vpop.f32.mrb[0].mxu0
        %v2948 = vadd.f32 0.0, %v2947
        %v2949 = vpop.f32.mrb[0].mxu0
        %2950 = vmatprep.mubr.f32.mxu0 0.0
        %2951 = vmatmul.mubr.f32.gmra.mrb[0].mxu0 %v2851
        %v2952 = vpop.f32.mrb[0].mxu0
        %v2953 = vadd.f32 0.0, %v2952
        %v2954 = vpop.f32.mrb[0].mxu0
        %2955 = vmatprep.mubr.f32.mxu0 0.0
        %2956 = vmatmul.mubr.f32.gmra.mrb[0].mxu0 %v2854
        %v2957 = vpop.f32.mrb[0].mxu0
        %v2958 = vadd.f32 0.0, %v2957
        %v2959 = vpop.f32.mrb[0].mxu0
        %2960 = vdwg.mxu0
        %2961 = vrot.lane.b32.xlu0 %v629, 48
        %v2962 = vpop.permute.xlu0 %2961
        %2963 = vrot.lane.b32.xlu0 %v634, 48
        %v2964 = vpop.permute.xlu0 %2963
        %2965 = vrot.lane.b32.xlu0 %v639, 48
        %v2966 = vpop.permute.xlu0 %2965
        %2967 = vrot.lane.b32.xlu0 %v644, 48
        %v2968 = vpop.permute.xlu0 %2967
        %2969 = vrot.lane.b32.xlu0 %v649, 48
        %v2970 = vpop.permute.xlu0 %2969
        %2971 = vrot.lane.b32.xlu0 %v654, 48
        %v2972 = vpop.permute.xlu0 %2971
        %2973 = vrot.lane.b32.xlu0 %v659, 48
        %v2974 = vpop.permute.xlu0 %2973
        %2975 = vrot.lane.b32.xlu0 %v664, 48
        %v2976 = vpop.permute.xlu0 %2975
        %v2986 = vsel %vm991, %v2800, 0
        %v2989 = vsel %vm991, %v2801, 0
        %v2992 = vsel %vm991, %v2802, 0
        %v2995 = vsel %vm991, %v2803, 0
        %v2998 = vsel %vm991, %v2804, 0
        %v3001 = vsel %vm991, %v2805, 0
        %v3004 = vsel %vm991, %v2806, 0
        %v3007 = vsel %vm991, %v2807, 0
        %3009 = vmatprep.subr.mxu0 0.0
        %3010 = vmatpush1.msra.mxu0 %v2962
        %3011 = vmatprep.subr.mxu0 0.0
        %3012 = vmatpush1.msra.mxu0 %v2964
        %3013 = vmatprep.subr.mxu0 0.0
        %3014 = vmatpush1.msra.mxu0 %v2966
        %3015 = vmatprep.subr.mxu0 0.0
        %3016 = vmatpush1.msra.mxu0 %v2968
        %3017 = vmatprep.subr.mxu0 0.0
        %3018 = vmatpush1.msra.mxu0 %v2970
        %3019 = vmatprep.subr.mxu0 0.0
        %3020 = vmatpush1.msra.mxu0 %v2972
        %3021 = vmatprep.subr.mxu0 0.0
        %3022 = vmatpush1.msra.mxu0 %v2974
        %3023 = vmatprep.subr.mxu0 0.0
        %3024 = vmatpush1.msra.mxu0 %v2976
        %3025 = vmatprep.subr.mxu0 0.0
        %3026 = vmatpush1.msra.mxu0 0.0
        %3027 = vmatprep.subr.mxu0 0.0
        %3028 = vmatpush1.msra.mxu0 0.0
        %3029 = vmatprep.subr.mxu0 0.0
        %3030 = vmatpush1.msra.mxu0 0.0
        %3031 = vmatprep.subr.mxu0 0.0
        %3032 = vmatpush1.msra.mxu0 0.0
        %3033 = vmatprep.subr.mxu0 0.0
        %3034 = vmatpush1.msra.mxu0 0.0
        %3035 = vmatprep.subr.mxu0 0.0
        %3036 = vmatpush1.msra.mxu0 0.0
        %3037 = vmatprep.subr.mxu0 0.0
        %3038 = vmatpush1.msra.mxu0 0.0
        %3039 = vmatprep.subr.mxu0 0.0
        %3040 = vmatpush1.msra.mxu0 0.0
        %3041 = vmatprep.subr.mxu0 0.0
        %3042 = vmatpush1.msra.mxu0 0.0
        %3043 = vmatprep.subr.mxu0 0.0
        %3044 = vmatpush1.msra.mxu0 0.0
        %3045 = vmatprep.subr.mxu0 0.0
        %3046 = vmatpush1.msra.mxu0 0.0
        %3047 = vmatprep.subr.mxu0 0.0
        %3048 = vmatpush1.msra.mxu0 0.0
        %3049 = vmatprep.subr.mxu0 0.0
        %3050 = vmatpush1.msra.mxu0 0.0
        %3051 = vmatprep.subr.mxu0 0.0
        %3052 = vmatpush1.msra.mxu0 0.0
        %3053 = vmatprep.subr.mxu0 0.0
        %3054 = vmatpush1.msra.mxu0 0.0
        %3055 = vmatprep.subr.mxu0 0.0
        %3056 = vmatpush1.msra.mxu0 0.0
        %3057 = vmatprep.subr.mxu0 0.0
        %3058 = vmatpush1.msra.mxu0 0.0
        %3059 = vmatprep.subr.mxu0 0.0
        %3060 = vmatpush1.msra.mxu0 0.0
        %3061 = vmatprep.subr.mxu0 0.0
        %3062 = vmatpush1.msra.mxu0 0.0
        %3063 = vmatprep.subr.mxu0 0.0
        %3064 = vmatpush1.msra.mxu0 0.0
        %3065 = vmatprep.subr.mxu0 0.0
        %3066 = vmatpush1.msra.mxu0 0.0
        %3067 = vmatprep.subr.mxu0 0.0
        %3068 = vmatpush1.msra.mxu0 0.0
        %3069 = vmatprep.subr.mxu0 0.0
        %3070 = vmatpush1.msra.mxu0 0.0
        %3071 = vmatprep.subr.mxu0 0.0
        %3072 = vmatpush1.msra.mxu0 0.0
        %3073 = vmatprep.mubr.f32.mxu0 0.0
        %3074 = vmatmul.mubr.f32.gmra.mrb[0].mxu0 %v2986
        %v3075 = vpop.f32.mrb[0].mxu0
        %v3076 = vadd.f32 0.0, %v3075
        %v3077 = vpop.f32.mrb[0].mxu0
        %3078 = vmatprep.mubr.f32.mxu0 0.0
        %3079 = vmatmul.mubr.f32.gmra.mrb[0].mxu0 %v2989
        %v3080 = vpop.f32.mrb[0].mxu0
        %v3081 = vadd.f32 0.0, %v3080
        %v3082 = vpop.f32.mrb[0].mxu0
        %3083 = vmatprep.mubr.f32.mxu0 0.0
        %3084 = vmatmul.mubr.f32.gmra.mrb[0].mxu0 %v2992
        %v3085 = vpop.f32.mrb[0].mxu0
        %v3086 = vadd.f32 0.0, %v3085
        %v3087 = vpop.f32.mrb[0].mxu0
        %3088 = vmatprep.mubr.f32.mxu0 0.0
        %3089 = vmatmul.mubr.f32.gmra.mrb[0].mxu0 %v2995
        %v3090 = vpop.f32.mrb[0].mxu0
        %v3091 = vadd.f32 0.0, %v3090
        %v3092 = vpop.f32.mrb[0].mxu0
        %3093 = vmatprep.mubr.f32.mxu0 0.0
        %3094 = vmatmul.mubr.f32.gmra.mrb[0].mxu0 %v2998
        %v3095 = vpop.f32.mrb[0].mxu0
        %v3096 = vadd.f32 0.0, %v3095
        %v3097 = vpop.f32.mrb[0].mxu0
        %3098 = vmatprep.mubr.f32.mxu0 0.0
        %3099 = vmatmul.mubr.f32.gmra.mrb[0].mxu0 %v3001
        %v3100 = vpop.f32.mrb[0].mxu0
        %v3101 = vadd.f32 0.0, %v3100
        %v3102 = vpop.f32.mrb[0].mxu0
        %3103 = vmatprep.mubr.f32.mxu0 0.0
        %3104 = vmatmul.mubr.f32.gmra.mrb[0].mxu0 %v3004
        %v3105 = vpop.f32.mrb[0].mxu0
        %v3106 = vadd.f32 0.0, %v3105
        %v3107 = vpop.f32.mrb[0].mxu0
        %3108 = vmatprep.mubr.f32.mxu0 0.0
        %3109 = vmatmul.mubr.f32.gmra.mrb[0].mxu0 %v3007
        %v3110 = vpop.f32.mrb[0].mxu0
        %v3111 = vadd.f32 0.0, %v3110
        %v3112 = vpop.f32.mrb[0].mxu0
        %3113 = vdwg.mxu0
        %3114 = vrot.lane.b32.xlu0 %v589, 104
        %v3115 = vpop.permute.xlu0 %3114
        %3116 = vrot.lane.b32.xlu0 %v594, 104
        %v3117 = vpop.permute.xlu0 %3116
        %3118 = vrot.lane.b32.xlu0 %v599, 104
        %v3119 = vpop.permute.xlu0 %3118
        %3120 = vrot.lane.b32.xlu0 %v604, 104
        %v3121 = vpop.permute.xlu0 %3120
        %3122 = vrot.lane.b32.xlu0 %v609, 104
        %v3123 = vpop.permute.xlu0 %3122
        %3124 = vrot.lane.b32.xlu0 %v614, 104
        %v3125 = vpop.permute.xlu0 %3124
        %3126 = vrot.lane.b32.xlu0 %v619, 104
        %v3127 = vpop.permute.xlu0 %3126
        %3128 = vrot.lane.b32.xlu0 %v624, 104
        %v3129 = vpop.permute.xlu0 %3128
        %3130 = vrot.lane.b32.xlu0 %v589, 72
        %v3131 = vpop.permute.xlu0 %3130
        %3132 = vrot.lane.b32.xlu0 %v594, 72
        %v3133 = vpop.permute.xlu0 %3132
        %3134 = vrot.lane.b32.xlu0 %v599, 72
        %v3135 = vpop.permute.xlu0 %3134
        %3136 = vrot.lane.b32.xlu0 %v604, 72
        %v3137 = vpop.permute.xlu0 %3136
        %3138 = vrot.lane.b32.xlu0 %v609, 72
        %v3139 = vpop.permute.xlu0 %3138
        %3140 = vrot.lane.b32.xlu0 %v614, 72
        %v3141 = vpop.permute.xlu0 %3140
        %3142 = vrot.lane.b32.xlu0 %v619, 72
        %v3143 = vpop.permute.xlu0 %3142
        %3144 = vrot.lane.b32.xlu0 %v624, 72
        %v3145 = vpop.permute.xlu0 %3144
        %v3146 = vsel %vm692, %v3115, 0
        %v3148 = vsel %vm692, %v3117, 0
        %v3150 = vsel %vm692, %v3119, 0
        %v3152 = vsel %vm692, %v3121, 0
        %v3154 = vsel %vm692, %v3123, 0
        %v3156 = vsel %vm692, %v3125, 0
        %v3158 = vsel %vm692, %v3127, 0
        %v3160 = vsel %vm692, %v3129, 0
        %v3162 = vsel %vm692, %v3131, 0
        %v3164 = vsel %vm692, %v3133, 0
        %v3166 = vsel %vm692, %v3135, 0
        %v3168 = vsel %vm692, %v3137, 0
        %v3170 = vsel %vm692, %v3139, 0
        %v3172 = vsel %vm692, %v3141, 0
        %v3174 = vsel %vm692, %v3143, 0
        %v3176 = vsel %vm692, %v3145, 0
        %3178 = vmatprep.subr.mxu0 0.0
        %3179 = vmatpush1.xpose.msra.mxu0 %v3162
        %3180 = vmatprep.subr.mxu0 0.0
        %3181 = vmatpush1.xpose.msra.mxu0 %v3164
        %3182 = vmatprep.subr.mxu0 0.0
        %3183 = vmatpush1.xpose.msra.mxu0 %v3166
        %3184 = vmatprep.subr.mxu0 0.0
        %3185 = vmatpush1.xpose.msra.mxu0 %v3168
        %3186 = vmatprep.subr.mxu0 0.0
        %3187 = vmatpush1.xpose.msra.mxu0 %v3170
        %3188 = vmatprep.subr.mxu0 0.0
        %3189 = vmatpush1.xpose.msra.mxu0 %v3172
        %3190 = vmatprep.subr.mxu0 0.0
        %3191 = vmatpush1.xpose.msra.mxu0 %v3174
        %3192 = vmatprep.subr.mxu0 0.0
        %3193 = vmatpush1.xpose.msra.mxu0 %v3176
        %3194 = vmatprep.subr.mxu0 0.0
        %3195 = vmatpush1.xpose.msra.mxu0 0.0
        %3196 = vmatprep.subr.mxu0 0.0
        %3197 = vmatpush1.xpose.msra.mxu0 0.0
        %3198 = vmatprep.subr.mxu0 0.0
        %3199 = vmatpush1.xpose.msra.mxu0 0.0
        %3200 = vmatprep.subr.mxu0 0.0
        %3201 = vmatpush1.xpose.msra.mxu0 0.0
        %3202 = vmatprep.subr.mxu0 0.0
        %3203 = vmatpush1.xpose.msra.mxu0 0.0
        %3204 = vmatprep.subr.mxu0 0.0
        %3205 = vmatpush1.xpose.msra.mxu0 0.0
        %3206 = vmatprep.subr.mxu0 0.0
        %3207 = vmatpush1.xpose.msra.mxu0 0.0
        %3208 = vmatprep.subr.mxu0 0.0
        %3209 = vmatpush1.xpose.msra.mxu0 0.0
        %3210 = vmatprep.subr.mxu0 0.0
        %3211 = vmatpush1.xpose.msra.mxu0 0.0
        %3212 = vmatprep.subr.mxu0 0.0
        %3213 = vmatpush1.xpose.msra.mxu0 0.0
        %3214 = vmatprep.subr.mxu0 0.0
        %3215 = vmatpush1.xpose.msra.mxu0 0.0
        %3216 = vmatprep.subr.mxu0 0.0
        %3217 = vmatpush1.xpose.msra.mxu0 0.0
        %3218 = vmatprep.subr.mxu0 0.0
        %3219 = vmatpush1.xpose.msra.mxu0 0.0
        %3220 = vmatprep.subr.mxu0 0.0
        %3221 = vmatpush1.xpose.msra.mxu0 0.0
        %3222 = vmatprep.subr.mxu0 0.0
        %3223 = vmatpush1.xpose.msra.mxu0 0.0
        %3224 = vmatprep.subr.mxu0 0.0
        %3225 = vmatpush1.xpose.msra.mxu0 0.0
        %3226 = vmatprep.subr.mxu0 0.0
        %3227 = vmatpush1.xpose.msra.mxu0 0.0
        %3228 = vmatprep.subr.mxu0 0.0
        %3229 = vmatpush1.xpose.msra.mxu0 0.0
        %3230 = vmatprep.subr.mxu0 0.0
        %3231 = vmatpush1.xpose.msra.mxu0 0.0
        %3232 = vmatprep.subr.mxu0 0.0
        %3233 = vmatpush1.xpose.msra.mxu0 0.0
        %3234 = vmatprep.subr.mxu0 0.0
        %3235 = vmatpush1.xpose.msra.mxu0 0.0
        %3236 = vmatprep.subr.mxu0 0.0
        %3237 = vmatpush1.xpose.msra.mxu0 0.0
        %3238 = vmatprep.subr.mxu0 0.0
        %3239 = vmatpush1.xpose.msra.mxu0 0.0
        %3240 = vmatprep.subr.mxu0 0.0
        %3241 = vmatpush1.xpose.msra.mxu0 0.0
        %3242 = vmatprep.mubr.f32.mxu0 0.0
        %3243 = vmatmul.mubr.f32.gmra.mrb[0].mxu0 %v3146
        %v3244 = vpop.f32.mrb[0].mxu0
        %v3245 = vadd.f32 0.0, %v3244
        %v3246 = vpop.f32.mrb[0].mxu0
        %3247 = vmatprep.mubr.f32.mxu0 0.0
        %3248 = vmatmul.mubr.f32.gmra.mrb[0].mxu0 %v3148
        %v3249 = vpop.f32.mrb[0].mxu0
        %v3250 = vadd.f32 0.0, %v3249
        %v3251 = vpop.f32.mrb[0].mxu0
        %3252 = vmatprep.mubr.f32.mxu0 0.0
        %3253 = vmatmul.mubr.f32.gmra.mrb[0].mxu0 %v3150
        %v3254 = vpop.f32.mrb[0].mxu0
        %v3255 = vadd.f32 0.0, %v3254
        %v3256 = vpop.f32.mrb[0].mxu0
        %3257 = vmatprep.mubr.f32.mxu0 0.0
        %3258 = vmatmul.mubr.f32.gmra.mrb[0].mxu0 %v3152
        %v3259 = vpop.f32.mrb[0].mxu0
        %v3260 = vadd.f32 0.0, %v3259
        %v3261 = vpop.f32.mrb[0].mxu0
        %3262 = vmatprep.mubr.f32.mxu0 0.0
        %3263 = vmatmul.mubr.f32.gmra.mrb[0].mxu0 %v3154
        %v3264 = vpop.f32.mrb[0].mxu0
        %v3265 = vadd.f32 0.0, %v3264
        %v3266 = vpop.f32.mrb[0].mxu0
        %3267 = vmatprep.mubr.f32.mxu0 0.0
        %3268 = vmatmul.mubr.f32.gmra.mrb[0].mxu0 %v3156
        %v3269 = vpop.f32.mrb[0].mxu0
        %v3270 = vadd.f32 0.0, %v3269
        %v3271 = vpop.f32.mrb[0].mxu0
        %3272 = vmatprep.mubr.f32.mxu0 0.0
        %3273 = vmatmul.mubr.f32.gmra.mrb[0].mxu0 %v3158
        %v3274 = vpop.f32.mrb[0].mxu0
        %v3275 = vadd.f32 0.0, %v3274
        %v3276 = vpop.f32.mrb[0].mxu0
        %3277 = vmatprep.mubr.f32.mxu0 0.0
        %3278 = vmatmul.mubr.f32.gmra.mrb[0].mxu0 %v3160
        %v3279 = vpop.f32.mrb[0].mxu0
        %v3280 = vadd.f32 0.0, %v3279
        %v3281 = vpop.f32.mrb[0].mxu0
        %3282 = vdwg.mxu0
        %3283 = vrot.lane.b32.xlu0 %v629, 104
        %v3284 = vpop.permute.xlu0 %3283
        %3285 = vrot.lane.b32.xlu0 %v634, 104
        %v3286 = vpop.permute.xlu0 %3285
        %3287 = vrot.lane.b32.xlu0 %v639, 104
        %v3288 = vpop.permute.xlu0 %3287
        %3289 = vrot.lane.b32.xlu0 %v644, 104
        %v3290 = vpop.permute.xlu0 %3289
        %3291 = vrot.lane.b32.xlu0 %v649, 104
        %v3292 = vpop.permute.xlu0 %3291
        %3293 = vrot.lane.b32.xlu0 %v654, 104
        %v3294 = vpop.permute.xlu0 %3293
        %3295 = vrot.lane.b32.xlu0 %v659, 104
        %v3296 = vpop.permute.xlu0 %3295
        %3297 = vrot.lane.b32.xlu0 %v664, 104
        %v3298 = vpop.permute.xlu0 %3297
        %3299 = vrot.lane.b32.xlu0 %v629, 72
        %v3300 = vpop.permute.xlu0 %3299
        %3301 = vrot.lane.b32.xlu0 %v634, 72
        %v3302 = vpop.permute.xlu0 %3301
        %3303 = vrot.lane.b32.xlu0 %v639, 72
        %v3304 = vpop.permute.xlu0 %3303
        %3305 = vrot.lane.b32.xlu0 %v644, 72
        %v3306 = vpop.permute.xlu0 %3305
        %3307 = vrot.lane.b32.xlu0 %v649, 72
        %v3308 = vpop.permute.xlu0 %3307
        %3309 = vrot.lane.b32.xlu0 %v654, 72
        %v3310 = vpop.permute.xlu0 %3309
        %3311 = vrot.lane.b32.xlu0 %v659, 72
        %v3312 = vpop.permute.xlu0 %3311
        %3313 = vrot.lane.b32.xlu0 %v664, 72
        %v3314 = vpop.permute.xlu0 %3313
        %v3315 = vsel %vm692, %v3284, 0
        %v3317 = vsel %vm692, %v3286, 0
        %v3319 = vsel %vm692, %v3288, 0
        %v3321 = vsel %vm692, %v3290, 0
        %v3323 = vsel %vm692, %v3292, 0
        %v3325 = vsel %vm692, %v3294, 0
        %v3327 = vsel %vm692, %v3296, 0
        %v3329 = vsel %vm692, %v3298, 0
        %v3331 = vsel %vm692, %v3300, 0
        %v3333 = vsel %vm692, %v3302, 0
        %v3335 = vsel %vm692, %v3304, 0
        %v3337 = vsel %vm692, %v3306, 0
        %v3339 = vsel %vm692, %v3308, 0
        %v3341 = vsel %vm692, %v3310, 0
        %v3343 = vsel %vm692, %v3312, 0
        %v3345 = vsel %vm692, %v3314, 0
        %3347 = vmatprep.subr.mxu0 0.0
        %3348 = vmatpush1.xpose.msra.mxu0 %v3331
        %3349 = vmatprep.subr.mxu0 0.0
        %3350 = vmatpush1.xpose.msra.mxu0 %v3333
        %3351 = vmatprep.subr.mxu0 0.0
        %3352 = vmatpush1.xpose.msra.mxu0 %v3335
        %3353 = vmatprep.subr.mxu0 0.0
        %3354 = vmatpush1.xpose.msra.mxu0 %v3337
        %3355 = vmatprep.subr.mxu0 0.0
        %3356 = vmatpush1.xpose.msra.mxu0 %v3339
        %3357 = vmatprep.subr.mxu0 0.0
        %3358 = vmatpush1.xpose.msra.mxu0 %v3341
        %3359 = vmatprep.subr.mxu0 0.0
        %3360 = vmatpush1.xpose.msra.mxu0 %v3343
        %3361 = vmatprep.subr.mxu0 0.0
        %3362 = vmatpush1.xpose.msra.mxu0 %v3345
        %3363 = vmatprep.subr.mxu0 0.0
        %3364 = vmatpush1.xpose.msra.mxu0 0.0
        %3365 = vmatprep.subr.mxu0 0.0
        %3366 = vmatpush1.xpose.msra.mxu0 0.0
        %3367 = vmatprep.subr.mxu0 0.0
        %3368 = vmatpush1.xpose.msra.mxu0 0.0
        %3369 = vmatprep.subr.mxu0 0.0
        %3370 = vmatpush1.xpose.msra.mxu0 0.0
        %3371 = vmatprep.subr.mxu0 0.0
        %3372 = vmatpush1.xpose.msra.mxu0 0.0
        %3373 = vmatprep.subr.mxu0 0.0
        %3374 = vmatpush1.xpose.msra.mxu0 0.0
        %3375 = vmatprep.subr.mxu0 0.0
        %3376 = vmatpush1.xpose.msra.mxu0 0.0
        %3377 = vmatprep.subr.mxu0 0.0
        %3378 = vmatpush1.xpose.msra.mxu0 0.0
        %3379 = vmatprep.subr.mxu0 0.0
        %3380 = vmatpush1.xpose.msra.mxu0 0.0
        %3381 = vmatprep.subr.mxu0 0.0
        %3382 = vmatpush1.xpose.msra.mxu0 0.0
        %3383 = vmatprep.subr.mxu0 0.0
        %3384 = vmatpush1.xpose.msra.mxu0 0.0
        %3385 = vmatprep.subr.mxu0 0.0
        %3386 = vmatpush1.xpose.msra.mxu0 0.0
        %3387 = vmatprep.subr.mxu0 0.0
        %3388 = vmatpush1.xpose.msra.mxu0 0.0
        %3389 = vmatprep.subr.mxu0 0.0
        %3390 = vmatpush1.xpose.msra.mxu0 0.0
        %3391 = vmatprep.subr.mxu0 0.0
        %3392 = vmatpush1.xpose.msra.mxu0 0.0
        %3393 = vmatprep.subr.mxu0 0.0
        %3394 = vmatpush1.xpose.msra.mxu0 0.0
        %3395 = vmatprep.subr.mxu0 0.0
        %3396 = vmatpush1.xpose.msra.mxu0 0.0
        %3397 = vmatprep.subr.mxu0 0.0
        %3398 = vmatpush1.xpose.msra.mxu0 0.0
        %3399 = vmatprep.subr.mxu0 0.0
        %3400 = vmatpush1.xpose.msra.mxu0 0.0
        %3401 = vmatprep.subr.mxu0 0.0
        %3402 = vmatpush1.xpose.msra.mxu0 0.0
        %3403 = vmatprep.subr.mxu0 0.0
        %3404 = vmatpush1.xpose.msra.mxu0 0.0
        %3405 = vmatprep.subr.mxu0 0.0
        %3406 = vmatpush1.xpose.msra.mxu0 0.0
        %3407 = vmatprep.subr.mxu0 0.0
        %3408 = vmatpush1.xpose.msra.mxu0 0.0
        %3409 = vmatprep.subr.mxu0 0.0
        %3410 = vmatpush1.xpose.msra.mxu0 0.0
        %3411 = vmatprep.mubr.f32.mxu0 0.0
        %3412 = vmatmul.mubr.f32.gmra.mrb[0].mxu0 %v3315
        %v3413 = vpop.f32.mrb[0].mxu0
        %v3414 = vadd.f32 0.0, %v3413
        %v3415 = vpop.f32.mrb[0].mxu0
        %3416 = vmatprep.mubr.f32.mxu0 0.0
        %3417 = vmatmul.mubr.f32.gmra.mrb[0].mxu0 %v3317
        %v3418 = vpop.f32.mrb[0].mxu0
        %v3419 = vadd.f32 0.0, %v3418
        %v3420 = vpop.f32.mrb[0].mxu0
        %3421 = vmatprep.mubr.f32.mxu0 0.0
        %3422 = vmatmul.mubr.f32.gmra.mrb[0].mxu0 %v3319
        %v3423 = vpop.f32.mrb[0].mxu0
        %v3424 = vadd.f32 0.0, %v3423
        %v3425 = vpop.f32.mrb[0].mxu0
        %3426 = vmatprep.mubr.f32.mxu0 0.0
        %3427 = vmatmul.mubr.f32.gmra.mrb[0].mxu0 %v3321
        %v3428 = vpop.f32.mrb[0].mxu0
        %v3429 = vadd.f32 0.0, %v3428
        %v3430 = vpop.f32.mrb[0].mxu0
        %3431 = vmatprep.mubr.f32.mxu0 0.0
        %3432 = vmatmul.mubr.f32.gmra.mrb[0].mxu0 %v3323
        %v3433 = vpop.f32.mrb[0].mxu0
        %v3434 = vadd.f32 0.0, %v3433
        %v3435 = vpop.f32.mrb[0].mxu0
        %3436 = vmatprep.mubr.f32.mxu0 0.0
        %3437 = vmatmul.mubr.f32.gmra.mrb[0].mxu0 %v3325
        %v3438 = vpop.f32.mrb[0].mxu0
        %v3439 = vadd.f32 0.0, %v3438
        %v3440 = vpop.f32.mrb[0].mxu0
        %3441 = vmatprep.mubr.f32.mxu0 0.0
        %3442 = vmatmul.mubr.f32.gmra.mrb[0].mxu0 %v3327
        %v3443 = vpop.f32.mrb[0].mxu0
        %v3444 = vadd.f32 0.0, %v3443
        %v3445 = vpop.f32.mrb[0].mxu0
        %3446 = vmatprep.mubr.f32.mxu0 0.0
        %3447 = vmatmul.mubr.f32.gmra.mrb[0].mxu0 %v3329
        %v3448 = vpop.f32.mrb[0].mxu0
        %v3449 = vadd.f32 0.0, %v3448
        %v3450 = vpop.f32.mrb[0].mxu0
        %3451 = vdwg.mxu0
        %v3452 = vsel %vm991, %v3245, -inf
        %3453 = vmax.xlane.f32.xlu0 %v3452
        %v3454 = vpop.xlane.xlu0 %3453
        %v3455 = vsel %vm991, %v3250, -inf
        %3456 = vmax.xlane.f32.xlu0 %v3455
        %v3457 = vpop.xlane.xlu0 %3456
        %v3458 = vsel %vm991, %v3255, -inf
        %3459 = vmax.xlane.f32.xlu0 %v3458
        %v3460 = vpop.xlane.xlu0 %3459
        %v3461 = vsel %vm991, %v3260, -inf
        %3462 = vmax.xlane.f32.xlu0 %v3461
        %v3463 = vpop.xlane.xlu0 %3462
        %v3464 = vsel %vm991, %v3265, -inf
        %3465 = vmax.xlane.f32.xlu0 %v3464
        %v3466 = vpop.xlane.xlu0 %3465
        %v3467 = vsel %vm991, %v3270, -inf
        %3468 = vmax.xlane.f32.xlu0 %v3467
        %v3469 = vpop.xlane.xlu0 %3468
        %v3470 = vsel %vm991, %v3275, -inf
        %3471 = vmax.xlane.f32.xlu0 %v3470
        %v3472 = vpop.xlane.xlu0 %3471
        %v3473 = vsel %vm991, %v3280, -inf
        %3474 = vmax.xlane.f32.xlu0 %v3473
        %v3475 = vpop.xlane.xlu0 %3474
        %v3476 = vsel %vm991, %v3414, -inf
        %3477 = vmax.xlane.f32.xlu0 %v3476
        %v3478 = vpop.xlane.xlu0 %3477
        %v3479 = vsel %vm991, %v3419, -inf
        %3480 = vmax.xlane.f32.xlu0 %v3479
        %v3481 = vpop.xlane.xlu0 %3480
        %v3482 = vsel %vm991, %v3424, -inf
        %3483 = vmax.xlane.f32.xlu0 %v3482
        %v3484 = vpop.xlane.xlu0 %3483
        %v3485 = vsel %vm991, %v3429, -inf
        %3486 = vmax.xlane.f32.xlu0 %v3485
        %v3487 = vpop.xlane.xlu0 %3486
        %v3488 = vsel %vm991, %v3434, -inf
        %3489 = vmax.xlane.f32.xlu0 %v3488
        %v3490 = vpop.xlane.xlu0 %3489
        %v3491 = vsel %vm991, %v3439, -inf
        %3492 = vmax.xlane.f32.xlu0 %v3491
        %v3493 = vpop.xlane.xlu0 %3492
        %v3494 = vsel %vm991, %v3444, -inf
        %3495 = vmax.xlane.f32.xlu0 %v3494
        %v3496 = vpop.xlane.xlu0 %3495
        %v3497 = vsel %vm991, %v3449, -inf
        %3498 = vmax.xlane.f32.xlu0 %v3497
        %v3499 = vpop.xlane.xlu0 %3498
        %v3500 = vsub.f32 %v3245, %v3454
        %v3501 = vsub.f32 %v3250, %v3457
        %v3502 = vsub.f32 %v3255, %v3460
        %v3503 = vsub.f32 %v3260, %v3463
        %v3504 = vsub.f32 %v3265, %v3466
        %v3505 = vsub.f32 %v3270, %v3469
        %v3506 = vsub.f32 %v3275, %v3472
        %v3507 = vsub.f32 %v3280, %v3475
        %v3508 = vsub.f32 %v3414, %v3478
        %v3509 = vsub.f32 %v3419, %v3481
        %v3510 = vsub.f32 %v3424, %v3484
        %v3511 = vsub.f32 %v3429, %v3487
        %v3512 = vsub.f32 %v3434, %v3490
        %v3513 = vsub.f32 %v3439, %v3493
        %v3514 = vsub.f32 %v3444, %v3496
        %v3515 = vsub.f32 %v3449, %v3499
        %v3516 = vmul.f32 %v3500, 1.442695
        %v3517 = vpow.pop %v3516
        %v3518 = vmul.f32 %v3501, 1.442695
        %v3519 = vpow.pop %v3518
        %v3520 = vmul.f32 %v3502, 1.442695
        %v3521 = vpow.pop %v3520
        %v3522 = vmul.f32 %v3503, 1.442695
        %v3523 = vpow.pop %v3522
        %v3524 = vmul.f32 %v3504, 1.442695
        %v3525 = vpow.pop %v3524
        %v3526 = vmul.f32 %v3505, 1.442695
        %v3527 = vpow.pop %v3526
        %v3528 = vmul.f32 %v3506, 1.442695
        %v3529 = vpow.pop %v3528
        %v3530 = vmul.f32 %v3507, 1.442695
        %v3531 = vpow.pop %v3530
        %v3532 = vmul.f32 %v3508, 1.442695
        %v3533 = vpow.pop %v3532
        %v3534 = vmul.f32 %v3509, 1.442695
        %v3535 = vpow.pop %v3534
        %v3536 = vmul.f32 %v3510, 1.442695
        %v3537 = vpow.pop %v3536
        %v3538 = vmul.f32 %v3511, 1.442695
        %v3539 = vpow.pop %v3538
        %v3540 = vmul.f32 %v3512, 1.442695
        %v3541 = vpow.pop %v3540
        %v3542 = vmul.f32 %v3513, 1.442695
        %v3543 = vpow.pop %v3542
        %v3544 = vmul.f32 %v3514, 1.442695
        %v3545 = vpow.pop %v3544
        %v3546 = vmul.f32 %v3515, 1.442695
        %v3547 = vpow.pop %v3546
        %v3548 = vsel %vm991, %v3517, 0.0
        %3549 = vadd.xlane.f32.xlu0 %v3548
        %v3550 = vpop.xlane.xlu0 %3549
        %v3551 = vsel %vm991, %v3519, 0.0
        %3552 = vadd.xlane.f32.xlu0 %v3551
        %v3553 = vpop.xlane.xlu0 %3552
        %v3554 = vsel %vm991, %v3521, 0.0
        %3555 = vadd.xlane.f32.xlu0 %v3554
        %v3556 = vpop.xlane.xlu0 %3555
        %v3557 = vsel %vm991, %v3523, 0.0
        %3558 = vadd.xlane.f32.xlu0 %v3557
        %v3559 = vpop.xlane.xlu0 %3558
        %v3560 = vsel %vm991, %v3525, 0.0
        %3561 = vadd.xlane.f32.xlu0 %v3560
        %v3562 = vpop.xlane.xlu0 %3561
        %v3563 = vsel %vm991, %v3527, 0.0
        %3564 = vadd.xlane.f32.xlu0 %v3563
        %v3565 = vpop.xlane.xlu0 %3564
        %v3566 = vsel %vm991, %v3529, 0.0
        %3567 = vadd.xlane.f32.xlu0 %v3566
        %v3568 = vpop.xlane.xlu0 %3567
        %v3569 = vsel %vm991, %v3531, 0.0
        %3570 = vadd.xlane.f32.xlu0 %v3569
        %v3571 = vpop.xlane.xlu0 %3570
        %v3572 = vsel %vm991, %v3533, 0.0
        %3573 = vadd.xlane.f32.xlu0 %v3572
        %v3574 = vpop.xlane.xlu0 %3573
        %v3575 = vsel %vm991, %v3535, 0.0
        %3576 = vadd.xlane.f32.xlu0 %v3575
        %v3577 = vpop.xlane.xlu0 %3576
        %v3578 = vsel %vm991, %v3537, 0.0
        %3579 = vadd.xlane.f32.xlu0 %v3578
        %v3580 = vpop.xlane.xlu0 %3579
        %v3581 = vsel %vm991, %v3539, 0.0
        %3582 = vadd.xlane.f32.xlu0 %v3581
        %v3583 = vpop.xlane.xlu0 %3582
        %v3584 = vsel %vm991, %v3541, 0.0
        %3585 = vadd.xlane.f32.xlu0 %v3584
        %v3586 = vpop.xlane.xlu0 %3585
        %v3587 = vsel %vm991, %v3543, 0.0
        %3588 = vadd.xlane.f32.xlu0 %v3587
        %v3589 = vpop.xlane.xlu0 %3588
        %v3590 = vsel %vm991, %v3545, 0.0
        %3591 = vadd.xlane.f32.xlu0 %v3590
        %v3592 = vpop.xlane.xlu0 %3591
        %v3593 = vsel %vm991, %v3547, 0.0
        %3594 = vadd.xlane.f32.xlu0 %v3593
        %v3595 = vpop.xlane.xlu0 %3594
        %v3596 = vrcp.pop %v3550
        %v3597 = vrcp.pop %v3553
        %v3598 = vrcp.pop %v3556
        %v3599 = vrcp.pop %v3559
        %v3600 = vrcp.pop %v3562
        %v3601 = vrcp.pop %v3565
        %v3602 = vrcp.pop %v3568
        %v3603 = vrcp.pop %v3571
        %v3604 = vrcp.pop %v3574
        %v3605 = vrcp.pop %v3577
        %v3606 = vrcp.pop %v3580
        %v3607 = vrcp.pop %v3583
        %v3608 = vrcp.pop %v3586
        %v3609 = vrcp.pop %v3589
        %v3610 = vrcp.pop %v3592
        %v3611 = vrcp.pop %v3595
        %v3612 = vmul.f32 %v3517, %v3596
        %v3613 = vmul.f32 %v3519, %v3597
        %v3614 = vmul.f32 %v3521, %v3598
        %v3615 = vmul.f32 %v3523, %v3599
        %v3616 = vmul.f32 %v3525, %v3600
        %v3617 = vmul.f32 %v3527, %v3601
        %v3618 = vmul.f32 %v3529, %v3602
        %v3619 = vmul.f32 %v3531, %v3603
        %v3620 = vmul.f32 %v3533, %v3604
        %v3621 = vmul.f32 %v3535, %v3605
        %v3622 = vmul.f32 %v3537, %v3606
        %v3623 = vmul.f32 %v3539, %v3607
        %v3624 = vmul.f32 %v3541, %v3608
        %v3625 = vmul.f32 %v3543, %v3609
        %v3626 = vmul.f32 %v3545, %v3610
        %v3627 = vmul.f32 %v3547, %v3611
        %3628 = vrot.lane.b32.xlu0 %v589, 40
        %v3629 = vpop.permute.xlu0 %3628
        %3630 = vrot.lane.b32.xlu0 %v594, 40
        %v3631 = vpop.permute.xlu0 %3630
        %3632 = vrot.lane.b32.xlu0 %v599, 40
        %v3633 = vpop.permute.xlu0 %3632
        %3634 = vrot.lane.b32.xlu0 %v604, 40
        %v3635 = vpop.permute.xlu0 %3634
        %3636 = vrot.lane.b32.xlu0 %v609, 40
        %v3637 = vpop.permute.xlu0 %3636
        %3638 = vrot.lane.b32.xlu0 %v614, 40
        %v3639 = vpop.permute.xlu0 %3638
        %3640 = vrot.lane.b32.xlu0 %v619, 40
        %v3641 = vpop.permute.xlu0 %3640
        %3642 = vrot.lane.b32.xlu0 %v624, 40
        %v3643 = vpop.permute.xlu0 %3642
        %v3653 = vsel %vm991, %v3612, 0
        %v3656 = vsel %vm991, %v3613, 0
        %v3659 = vsel %vm991, %v3614, 0
        %v3662 = vsel %vm991, %v3615, 0
        %v3665 = vsel %vm991, %v3616, 0
        %v3668 = vsel %vm991, %v3617, 0
        %v3671 = vsel %vm991, %v3618, 0
        %v3674 = vsel %vm991, %v3619, 0
        %3676 = vmatprep.subr.mxu0 0.0
        %3677 = vmatpush1.msra.mxu0 %v3629
        %3678 = vmatprep.subr.mxu0 0.0
        %3679 = vmatpush1.msra.mxu0 %v3631
        %3680 = vmatprep.subr.mxu0 0.0
        %3681 = vmatpush1.msra.mxu0 %v3633
        %3682 = vmatprep.subr.mxu0 0.0
        %3683 = vmatpush1.msra.mxu0 %v3635
        %3684 = vmatprep.subr.mxu0 0.0
        %3685 = vmatpush1.msra.mxu0 %v3637
        %3686 = vmatprep.subr.mxu0 0.0
        %3687 = vmatpush1.msra.mxu0 %v3639
        %3688 = vmatprep.subr.mxu0 0.0
        %3689 = vmatpush1.msra.mxu0 %v3641
        %3690 = vmatprep.subr.mxu0 0.0
        %3691 = vmatpush1.msra.mxu0 %v3643
        %3692 = vmatprep.subr.mxu0 0.0
        %3693 = vmatpush1.msra.mxu0 0.0
        %3694 = vmatprep.subr.mxu0 0.0
        %3695 = vmatpush1.msra.mxu0 0.0
        %3696 = vmatprep.subr.mxu0 0.0
        %3697 = vmatpush1.msra.mxu0 0.0
        %3698 = vmatprep.subr.mxu0 0.0
        %3699 = vmatpush1.msra.mxu0 0.0
        %3700 = vmatprep.subr.mxu0 0.0
        %3701 = vmatpush1.msra.mxu0 0.0
        %3702 = vmatprep.subr.mxu0 0.0
        %3703 = vmatpush1.msra.mxu0 0.0
        %3704 = vmatprep.subr.mxu0 0.0
        %3705 = vmatpush1.msra.mxu0 0.0
        %3706 = vmatprep.subr.mxu0 0.0
        %3707 = vmatpush1.msra.mxu0 0.0
        %3708 = vmatprep.subr.mxu0 0.0
        %3709 = vmatpush1.msra.mxu0 0.0
        %3710 = vmatprep.subr.mxu0 0.0
        %3711 = vmatpush1.msra.mxu0 0.0
        %3712 = vmatprep.subr.mxu0 0.0
        %3713 = vmatpush1.msra.mxu0 0.0
        %3714 = vmatprep.subr.mxu0 0.0
        %3715 = vmatpush1.msra.mxu0 0.0
        %3716 = vmatprep.subr.mxu0 0.0
        %3717 = vmatpush1.msra.mxu0 0.0
        %3718 = vmatprep.subr.mxu0 0.0
        %3719 = vmatpush1.msra.mxu0 0.0
        %3720 = vmatprep.subr.mxu0 0.0
        %3721 = vmatpush1.msra.mxu0 0.0
        %3722 = vmatprep.subr.mxu0 0.0
        %3723 = vmatpush1.msra.mxu0 0.0
        %3724 = vmatprep.subr.mxu0 0.0
        %3725 = vmatpush1.msra.mxu0 0.0
        %3726 = vmatprep.subr.mxu0 0.0
        %3727 = vmatpush1.msra.mxu0 0.0
        %3728 = vmatprep.subr.mxu0 0.0
        %3729 = vmatpush1.msra.mxu0 0.0
        %3730 = vmatprep.subr.mxu0 0.0
        %3731 = vmatpush1.msra.mxu0 0.0
        %3732 = vmatprep.subr.mxu0 0.0
        %3733 = vmatpush1.msra.mxu0 0.0
        %3734 = vmatprep.subr.mxu0 0.0
        %3735 = vmatpush1.msra.mxu0 0.0
        %3736 = vmatprep.subr.mxu0 0.0
        %3737 = vmatpush1.msra.mxu0 0.0
        %3738 = vmatprep.subr.mxu0 0.0
        %3739 = vmatpush1.msra.mxu0 0.0
        %3740 = vmatprep.mubr.f32.mxu0 0.0
        %3741 = vmatmul.mubr.f32.gmra.mrb[0].mxu0 %v3653
        %v3742 = vpop.f32.mrb[0].mxu0
        %v3743 = vadd.f32 0.0, %v3742
        %v3744 = vpop.f32.mrb[0].mxu0
        %3745 = vmatprep.mubr.f32.mxu0 0.0
        %3746 = vmatmul.mubr.f32.gmra.mrb[0].mxu0 %v3656
        %v3747 = vpop.f32.mrb[0].mxu0
        %v3748 = vadd.f32 0.0, %v3747
        %v3749 = vpop.f32.mrb[0].mxu0
        %3750 = vmatprep.mubr.f32.mxu0 0.0
        %3751 = vmatmul.mubr.f32.gmra.mrb[0].mxu0 %v3659
        %v3752 = vpop.f32.mrb[0].mxu0
        %v3753 = vadd.f32 0.0, %v3752
        %v3754 = vpop.f32.mrb[0].mxu0
        %3755 = vmatprep.mubr.f32.mxu0 0.0
        %3756 = vmatmul.mubr.f32.gmra.mrb[0].mxu0 %v3662
        %v3757 = vpop.f32.mrb[0].mxu0
        %v3758 = vadd.f32 0.0, %v3757
        %v3759 = vpop.f32.mrb[0].mxu0
        %3760 = vmatprep.mubr.f32.mxu0 0.0
        %3761 = vmatmul.mubr.f32.gmra.mrb[0].mxu0 %v3665
        %v3762 = vpop.f32.mrb[0].mxu0
        %v3763 = vadd.f32 0.0, %v3762
        %v3764 = vpop.f32.mrb[0].mxu0
        %3765 = vmatprep.mubr.f32.mxu0 0.0
        %3766 = vmatmul.mubr.f32.gmra.mrb[0].mxu0 %v3668
        %v3767 = vpop.f32.mrb[0].mxu0
        %v3768 = vadd.f32 0.0, %v3767
        %v3769 = vpop.f32.mrb[0].mxu0
        %3770 = vmatprep.mubr.f32.mxu0 0.0
        %3771 = vmatmul.mubr.f32.gmra.mrb[0].mxu0 %v3671
        %v3772 = vpop.f32.mrb[0].mxu0
        %v3773 = vadd.f32 0.0, %v3772
        %v3774 = vpop.f32.mrb[0].mxu0
        %3775 = vmatprep.mubr.f32.mxu0 0.0
        %3776 = vmatmul.mubr.f32.gmra.mrb[0].mxu0 %v3674
        %v3777 = vpop.f32.mrb[0].mxu0
        %v3778 = vadd.f32 0.0, %v3777
        %v3779 = vpop.f32.mrb[0].mxu0
        %3780 = vdwg.mxu0
        %3781 = vrot.lane.b32.xlu0 %v629, 40
        %v3782 = vpop.permute.xlu0 %3781
        %3783 = vrot.lane.b32.xlu0 %v634, 40
        %v3784 = vpop.permute.xlu0 %3783
        %3785 = vrot.lane.b32.xlu0 %v639, 40
        %v3786 = vpop.permute.xlu0 %3785
        %3787 = vrot.lane.b32.xlu0 %v644, 40
        %v3788 = vpop.permute.xlu0 %3787
        %3789 = vrot.lane.b32.xlu0 %v649, 40
        %v3790 = vpop.permute.xlu0 %3789
        %3791 = vrot.lane.b32.xlu0 %v654, 40
        %v3792 = vpop.permute.xlu0 %3791
        %3793 = vrot.lane.b32.xlu0 %v659, 40
        %v3794 = vpop.permute.xlu0 %3793
        %3795 = vrot.lane.b32.xlu0 %v664, 40
        %v3796 = vpop.permute.xlu0 %3795
        %v3806 = vsel %vm991, %v3620, 0
        %v3809 = vsel %vm991, %v3621, 0
        %v3812 = vsel %vm991, %v3622, 0
        %v3815 = vsel %vm991, %v3623, 0
        %v3818 = vsel %vm991, %v3624, 0
        %v3821 = vsel %vm991, %v3625, 0
        %v3824 = vsel %vm991, %v3626, 0
        %v3827 = vsel %vm991, %v3627, 0
        %3829 = vmatprep.subr.mxu0 0.0
        %3830 = vmatpush1.msra.mxu0 %v3782
        %3831 = vmatprep.subr.mxu0 0.0
        %3832 = vmatpush1.msra.mxu0 %v3784
        %3833 = vmatprep.subr.mxu0 0.0
        %3834 = vmatpush1.msra.mxu0 %v3786
        %3835 = vmatprep.subr.mxu0 0.0
        %3836 = vmatpush1.msra.mxu0 %v3788
        %3837 = vmatprep.subr.mxu0 0.0
        %3838 = vmatpush1.msra.mxu0 %v3790
        %3839 = vmatprep.subr.mxu0 0.0
        %3840 = vmatpush1.msra.mxu0 %v3792
        %3841 = vmatprep.subr.mxu0 0.0
        %3842 = vmatpush1.msra.mxu0 %v3794
        %3843 = vmatprep.subr.mxu0 0.0
        %3844 = vmatpush1.msra.mxu0 %v3796
        %3845 = vmatprep.subr.mxu0 0.0
        %3846 = vmatpush1.msra.mxu0 0.0
        %3847 = vmatprep.subr.mxu0 0.0
        %3848 = vmatpush1.msra.mxu0 0.0
        %3849 = vmatprep.subr.mxu0 0.0
        %3850 = vmatpush1.msra.mxu0 0.0
        %3851 = vmatprep.subr.mxu0 0.0
        %3852 = vmatpush1.msra.mxu0 0.0
        %3853 = vmatprep.subr.mxu0 0.0
        %3854 = vmatpush1.msra.mxu0 0.0
        %3855 = vmatprep.subr.mxu0 0.0
        %3856 = vmatpush1.msra.mxu0 0.0
        %3857 = vmatprep.subr.mxu0 0.0
        %3858 = vmatpush1.msra.mxu0 0.0
        %3859 = vmatprep.subr.mxu0 0.0
        %3860 = vmatpush1.msra.mxu0 0.0
        %3861 = vmatprep.subr.mxu0 0.0
        %3862 = vmatpush1.msra.mxu0 0.0
        %3863 = vmatprep.subr.mxu0 0.0
        %3864 = vmatpush1.msra.mxu0 0.0
        %3865 = vmatprep.subr.mxu0 0.0
        %3866 = vmatpush1.msra.mxu0 0.0
        %3867 = vmatprep.subr.mxu0 0.0
        %3868 = vmatpush1.msra.mxu0 0.0
        %3869 = vmatprep.subr.mxu0 0.0
        %3870 = vmatpush1.msra.mxu0 0.0
        %3871 = vmatprep.subr.mxu0 0.0
        %3872 = vmatpush1.msra.mxu0 0.0
        %3873 = vmatprep.subr.mxu0 0.0
        %3874 = vmatpush1.msra.mxu0 0.0
        %3875 = vmatprep.subr.mxu0 0.0
        %3876 = vmatpush1.msra.mxu0 0.0
        %3877 = vmatprep.subr.mxu0 0.0
        %3878 = vmatpush1.msra.mxu0 0.0
        %3879 = vmatprep.subr.mxu0 0.0
        %3880 = vmatpush1.msra.mxu0 0.0
        %3881 = vmatprep.subr.mxu0 0.0
        %3882 = vmatpush1.msra.mxu0 0.0
        %3883 = vmatprep.subr.mxu0 0.0
        %3884 = vmatpush1.msra.mxu0 0.0
        %3885 = vmatprep.subr.mxu0 0.0
        %3886 = vmatpush1.msra.mxu0 0.0
        %3887 = vmatprep.subr.mxu0 0.0
        %3888 = vmatpush1.msra.mxu0 0.0
        %3889 = vmatprep.subr.mxu0 0.0
        %3890 = vmatpush1.msra.mxu0 0.0
        %3891 = vmatprep.subr.mxu0 0.0
        %3892 = vmatpush1.msra.mxu0 0.0
        %3893 = vmatprep.mubr.f32.mxu0 0.0
        %3894 = vmatmul.mubr.f32.gmra.mrb[0].mxu0 %v3806
        %v3895 = vpop.f32.mrb[0].mxu0
        %v3896 = vadd.f32 0.0, %v3895
        %v3897 = vpop.f32.mrb[0].mxu0
        %3898 = vmatprep.mubr.f32.mxu0 0.0
        %3899 = vmatmul.mubr.f32.gmra.mrb[0].mxu0 %v3809
        %v3900 = vpop.f32.mrb[0].mxu0
        %v3901 = vadd.f32 0.0, %v3900
        %v3902 = vpop.f32.mrb[0].mxu0
        %3903 = vmatprep.mubr.f32.mxu0 0.0
        %3904 = vmatmul.mubr.f32.gmra.mrb[0].mxu0 %v3812
        %v3905 = vpop.f32.mrb[0].mxu0
        %v3906 = vadd.f32 0.0, %v3905
        %v3907 = vpop.f32.mrb[0].mxu0
        %3908 = vmatprep.mubr.f32.mxu0 0.0
        %3909 = vmatmul.mubr.f32.gmra.mrb[0].mxu0 %v3815
        %v3910 = vpop.f32.mrb[0].mxu0
        %v3911 = vadd.f32 0.0, %v3910
        %v3912 = vpop.f32.mrb[0].mxu0
        %3913 = vmatprep.mubr.f32.mxu0 0.0
        %3914 = vmatmul.mubr.f32.gmra.mrb[0].mxu0 %v3818
        %v3915 = vpop.f32.mrb[0].mxu0
        %v3916 = vadd.f32 0.0, %v3915
        %v3917 = vpop.f32.mrb[0].mxu0
        %3918 = vmatprep.mubr.f32.mxu0 0.0
        %3919 = vmatmul.mubr.f32.gmra.mrb[0].mxu0 %v3821
        %v3920 = vpop.f32.mrb[0].mxu0
        %v3921 = vadd.f32 0.0, %v3920
        %v3922 = vpop.f32.mrb[0].mxu0
        %3923 = vmatprep.mubr.f32.mxu0 0.0
        %3924 = vmatmul.mubr.f32.gmra.mrb[0].mxu0 %v3824
        %v3925 = vpop.f32.mrb[0].mxu0
        %v3926 = vadd.f32 0.0, %v3925
        %v3927 = vpop.f32.mrb[0].mxu0
        %3928 = vmatprep.mubr.f32.mxu0 0.0
        %3929 = vmatmul.mubr.f32.gmra.mrb[0].mxu0 %v3827
        %v3930 = vpop.f32.mrb[0].mxu0
        %v3931 = vadd.f32 0.0, %v3930
        %v3932 = vpop.f32.mrb[0].mxu0
        %3933 = vdwg.mxu0
        %3950 = vrot.lane.b32.xlu0 %v2103, 8
        %v3951 = vpop.permute.xlu0 %3950
        %3952 = vrot.lane.b32.xlu0 %v2108, 8
        %v3953 = vpop.permute.xlu0 %3952
        %3954 = vrot.lane.b32.xlu0 %v2113, 8
        %v3955 = vpop.permute.xlu0 %3954
        %3956 = vrot.lane.b32.xlu0 %v2118, 8
        %v3957 = vpop.permute.xlu0 %3956
        %3958 = vrot.lane.b32.xlu0 %v2123, 8
        %v3959 = vpop.permute.xlu0 %3958
        %3960 = vrot.lane.b32.xlu0 %v2128, 8
        %v3961 = vpop.permute.xlu0 %3960
        %3962 = vrot.lane.b32.xlu0 %v2133, 8
        %v3963 = vpop.permute.xlu0 %3962
        %3964 = vrot.lane.b32.xlu0 %v2138, 8
        %v3965 = vpop.permute.xlu0 %3964
        %3966 = vrot.lane.b32.xlu0 %v2256, 8
        %v3967 = vpop.permute.xlu0 %3966
        %3968 = vrot.lane.b32.xlu0 %v2261, 8
        %v3969 = vpop.permute.xlu0 %3968
        %3970 = vrot.lane.b32.xlu0 %v2266, 8
        %v3971 = vpop.permute.xlu0 %3970
        %3972 = vrot.lane.b32.xlu0 %v2271, 8
        %v3973 = vpop.permute.xlu0 %3972
        %3974 = vrot.lane.b32.xlu0 %v2276, 8
        %v3975 = vpop.permute.xlu0 %3974
        %3976 = vrot.lane.b32.xlu0 %v2281, 8
        %v3977 = vpop.permute.xlu0 %3976
        %3978 = vrot.lane.b32.xlu0 %v2286, 8
        %v3979 = vpop.permute.xlu0 %3978
        %3980 = vrot.lane.b32.xlu0 %v2291, 8
        %v3981 = vpop.permute.xlu0 %3980
        %4014 = vrot.lane.b32.xlu0 %v2923, 16
        %v4015 = vpop.permute.xlu0 %4014
        %4016 = vrot.lane.b32.xlu0 %v2928, 16
        %v4017 = vpop.permute.xlu0 %4016
        %4018 = vrot.lane.b32.xlu0 %v2933, 16
        %v4019 = vpop.permute.xlu0 %4018
        %4020 = vrot.lane.b32.xlu0 %v2938, 16
        %v4021 = vpop.permute.xlu0 %4020
        %4022 = vrot.lane.b32.xlu0 %v2943, 16
        %v4023 = vpop.permute.xlu0 %4022
        %4024 = vrot.lane.b32.xlu0 %v2948, 16
        %v4025 = vpop.permute.xlu0 %4024
        %4026 = vrot.lane.b32.xlu0 %v2953, 16
        %v4027 = vpop.permute.xlu0 %4026
        %4028 = vrot.lane.b32.xlu0 %v2958, 16
        %v4029 = vpop.permute.xlu0 %4028
        %4030 = vrot.lane.b32.xlu0 %v3076, 16
        %v4031 = vpop.permute.xlu0 %4030
        %4032 = vrot.lane.b32.xlu0 %v3081, 16
        %v4033 = vpop.permute.xlu0 %4032
        %4034 = vrot.lane.b32.xlu0 %v3086, 16
        %v4035 = vpop.permute.xlu0 %4034
        %4036 = vrot.lane.b32.xlu0 %v3091, 16
        %v4037 = vpop.permute.xlu0 %4036
        %4038 = vrot.lane.b32.xlu0 %v3096, 16
        %v4039 = vpop.permute.xlu0 %4038
        %4040 = vrot.lane.b32.xlu0 %v3101, 16
        %v4041 = vpop.permute.xlu0 %4040
        %4042 = vrot.lane.b32.xlu0 %v3106, 16
        %v4043 = vpop.permute.xlu0 %4042
        %4044 = vrot.lane.b32.xlu0 %v3111, 16
        %v4045 = vpop.permute.xlu0 %4044
        %4078 = vrot.lane.b32.xlu0 %v3743, 24
        %v4079 = vpop.permute.xlu0 %4078
        %4080 = vrot.lane.b32.xlu0 %v3748, 24
        %v4081 = vpop.permute.xlu0 %4080
        %4082 = vrot.lane.b32.xlu0 %v3753, 24
        %v4083 = vpop.permute.xlu0 %4082
        %4084 = vrot.lane.b32.xlu0 %v3758, 24
        %v4085 = vpop.permute.xlu0 %4084
        %4086 = vrot.lane.b32.xlu0 %v3763, 24
        %v4087 = vpop.permute.xlu0 %4086
        %4088 = vrot.lane.b32.xlu0 %v3768, 24
        %v4089 = vpop.permute.xlu0 %4088
        %4090 = vrot.lane.b32.xlu0 %v3773, 24
        %v4091 = vpop.permute.xlu0 %4090
        %4092 = vrot.lane.b32.xlu0 %v3778, 24
        %v4093 = vpop.permute.xlu0 %4092
        %4094 = vrot.lane.b32.xlu0 %v3896, 24
        %v4095 = vpop.permute.xlu0 %4094
        %4096 = vrot.lane.b32.xlu0 %v3901, 24
        %v4097 = vpop.permute.xlu0 %4096
        %4098 = vrot.lane.b32.xlu0 %v3906, 24
        %v4099 = vpop.permute.xlu0 %4098
        %4100 = vrot.lane.b32.xlu0 %v3911, 24
        %v4101 = vpop.permute.xlu0 %4100
        %4102 = vrot.lane.b32.xlu0 %v3916, 24
        %v4103 = vpop.permute.xlu0 %4102
        %4104 = vrot.lane.b32.xlu0 %v3921, 24
        %v4105 = vpop.permute.xlu0 %4104
        %4106 = vrot.lane.b32.xlu0 %v3926, 24
        %v4107 = vpop.permute.xlu0 %4106
        %4108 = vrot.lane.b32.xlu0 %v3931, 24
        %v4109 = vpop.permute.xlu0 %4108
        %v4126 = vsel %vm692, %v1283, %v3951
        %v4127 = vsel %vm692, %v1288, %v3953
        %v4128 = vsel %vm692, %v1293, %v3955
        %v4129 = vsel %vm692, %v1298, %v3957
        %v4130 = vsel %vm692, %v1303, %v3959
        %v4131 = vsel %vm692, %v1308, %v3961
        %v4132 = vsel %vm692, %v1313, %v3963
        %v4133 = vsel %vm692, %v1318, %v3965
        %v4134 = vsel %vm692, %v1436, %v3967
        %v4135 = vsel %vm692, %v1441, %v3969
        %v4136 = vsel %vm692, %v1446, %v3971
        %v4137 = vsel %vm692, %v1451, %v3973
        %v4138 = vsel %vm692, %v1456, %v3975
        %v4139 = vsel %vm692, %v1461, %v3977
        %v4140 = vsel %vm692, %v1466, %v3979
        %v4141 = vsel %vm692, %v1471, %v3981
        %vm4142 = vcmask 130048
        %v4143 = vsel %vm4142, %v4126, %v4015
        %v4144 = vsel %vm4142, %v4127, %v4017
        %v4145 = vsel %vm4142, %v4128, %v4019
        %v4146 = vsel %vm4142, %v4129, %v4021
        %v4147 = vsel %vm4142, %v4130, %v4023
        %v4148 = vsel %vm4142, %v4131, %v4025
        %v4149 = vsel %vm4142, %v4132, %v4027
        %v4150 = vsel %vm4142, %v4133, %v4029
        %v4151 = vsel %vm4142, %v4134, %v4031
        %v4152 = vsel %vm4142, %v4135, %v4033
        %v4153 = vsel %vm4142, %v4136, %v4035
        %v4154 = vsel %vm4142, %v4137, %v4037
        %v4155 = vsel %vm4142, %v4138, %v4039
        %v4156 = vsel %vm4142, %v4139, %v4041
        %v4157 = vsel %vm4142, %v4140, %v4043
        %v4158 = vsel %vm4142, %v4141, %v4045
        %vm4159 = vcmask 195584
        %v4160 = vsel %vm4159, %v4143, %v4079
        %v4161 = vsel %vm4159, %v4144, %v4081
        %v4162 = vsel %vm4159, %v4145, %v4083
        %v4163 = vsel %vm4159, %v4146, %v4085
        %v4164 = vsel %vm4159, %v4147, %v4087
        %v4165 = vsel %vm4159, %v4148, %v4089
        %v4166 = vsel %vm4159, %v4149, %v4091
        %v4167 = vsel %vm4159, %v4150, %v4093
        %v4168 = vsel %vm4159, %v4151, %v4095
        %v4169 = vsel %vm4159, %v4152, %v4097
        %v4170 = vsel %vm4159, %v4153, %v4099
        %v4171 = vsel %vm4159, %v4154, %v4101
        %v4172 = vsel %vm4159, %v4155, %v4103
        %v4173 = vsel %vm4159, %v4156, %v4105
        %v4174 = vsel %vm4159, %v4157, %v4107
        %v4175 = vsel %vm4159, %v4158, %v4109
        %v4176 = vld [vmem:[#allocation2] sm:$0xff]
        %v4177 = vld [vmem:[#allocation2 + $0x8] sm:$0xff]
        %v4178 = vld [vmem:[#allocation2 + $0x10] sm:$0xff]
        %v4179 = vld [vmem:[#allocation2 + $0x18] sm:$0xff]
        %v4180 = vlaneseq
        %v4181 = vshrl.u32 %v4180, 7
        %v4182 = vsub.s32 0, %v4181
        %v4183 = vrot.slane %v667, %v4182
        %v4185 = vsel %vm473, %v4160, 0
        %v4188 = vsel %vm473, %v4161, 0
        %v4191 = vsel %vm473, %v4162, 0
        %v4194 = vsel %vm473, %v4163, 0
        %v4197 = vsel %vm473, %v4164, 0
        %v4200 = vsel %vm473, %v4165, 0
        %v4203 = vsel %vm473, %v4166, 0
        %v4206 = vsel %vm473, %v4167, 0
        %v4209 = vsel %vm473, %v4168, 0
        %v4212 = vsel %vm473, %v4169, 0
        %v4215 = vsel %vm473, %v4170, 0
        %v4218 = vsel %vm473, %v4171, 0
        %v4221 = vsel %vm473, %v4172, 0
        %v4224 = vsel %vm473, %v4173, 0
        %v4227 = vsel %vm473, %v4174, 0
        %v4230 = vsel %vm473, %v4175, 0
        %4232 = vmatprep.subr.mxu0 0.0
        %4233 = vmatpush1.msra.mxu0 %v4176
        %4234 = vmatprep.subr.mxu0 0.0
        %4235 = vmatpush1.msra.mxu0 %v4177
        %4236 = vmatprep.subr.mxu0 0.0
        %4237 = vmatpush1.msra.mxu0 %v4178
        %4238 = vmatprep.subr.mxu0 0.0
        %4239 = vmatpush1.msra.mxu0 %v4179
        %4240 = vmatprep.subr.mxu0 0.0
        %4241 = vmatpush1.msra.mxu0 0.0
        %4242 = vmatprep.subr.mxu0 0.0
        %4243 = vmatpush1.msra.mxu0 0.0
        %4244 = vmatprep.subr.mxu0 0.0
        %4245 = vmatpush1.msra.mxu0 0.0
        %4246 = vmatprep.subr.mxu0 0.0
        %4247 = vmatpush1.msra.mxu0 0.0
        %4248 = vmatprep.subr.mxu0 0.0
        %4249 = vmatpush1.msra.mxu0 0.0
        %4250 = vmatprep.subr.mxu0 0.0
        %4251 = vmatpush1.msra.mxu0 0.0
        %4252 = vmatprep.subr.mxu0 0.0
        %4253 = vmatpush1.msra.mxu0 0.0
        %4254 = vmatprep.subr.mxu0 0.0
        %4255 = vmatpush1.msra.mxu0 0.0
        %4256 = vmatprep.subr.mxu0 0.0
        %4257 = vmatpush1.msra.mxu0 0.0
        %4258 = vmatprep.subr.mxu0 0.0
        %4259 = vmatpush1.msra.mxu0 0.0
        %4260 = vmatprep.subr.mxu0 0.0
        %4261 = vmatpush1.msra.mxu0 0.0
        %4262 = vmatprep.subr.mxu0 0.0
        %4263 = vmatpush1.msra.mxu0 0.0
        %4264 = vmatprep.subr.mxu0 0.0
        %4265 = vmatpush1.msra.mxu0 0.0
        %4266 = vmatprep.subr.mxu0 0.0
        %4267 = vmatpush1.msra.mxu0 0.0
        %4268 = vmatprep.subr.mxu0 0.0
        %4269 = vmatpush1.msra.mxu0 0.0
        %4270 = vmatprep.subr.mxu0 0.0
        %4271 = vmatpush1.msra.mxu0 0.0
        %4272 = vmatprep.subr.mxu0 0.0
        %4273 = vmatpush1.msra.mxu0 0.0
        %4274 = vmatprep.subr.mxu0 0.0
        %4275 = vmatpush1.msra.mxu0 0.0
        %4276 = vmatprep.subr.mxu0 0.0
        %4277 = vmatpush1.msra.mxu0 0.0
        %4278 = vmatprep.subr.mxu0 0.0
        %4279 = vmatpush1.msra.mxu0 0.0
        %4280 = vmatprep.subr.mxu0 0.0
        %4281 = vmatpush1.msra.mxu0 0.0
        %4282 = vmatprep.subr.mxu0 0.0
        %4283 = vmatpush1.msra.mxu0 0.0
        %4284 = vmatprep.subr.mxu0 0.0
        %4285 = vmatpush1.msra.mxu0 0.0
        %4286 = vmatprep.subr.mxu0 0.0
        %4287 = vmatpush1.msra.mxu0 0.0
        %4288 = vmatprep.subr.mxu0 0.0
        %4289 = vmatpush1.msra.mxu0 0.0
        %4290 = vmatprep.subr.mxu0 0.0
        %4291 = vmatpush1.msra.mxu0 0.0
        %4292 = vmatprep.subr.mxu0 0.0
        %4293 = vmatpush1.msra.mxu0 0.0
        %4294 = vmatprep.subr.mxu0 0.0
        %4295 = vmatpush1.msra.mxu0 0.0
        %4296 = vmatprep.mubr.f32.mxu0 0.0
        %4297 = vmatmul.mubr.f32.gmra.mrb[0].mxu0 %v4185
        %v4298 = vpop.f32.mrb[0].mxu0
        %v4299 = vadd.f32 %v4183, %v4298
        %v4300 = vpop.f32.mrb[0].mxu0
        %4301 = vmatprep.mubr.f32.mxu0 0.0
        %4302 = vmatmul.mubr.f32.gmra.mrb[0].mxu0 %v4188
        %v4303 = vpop.f32.mrb[0].mxu0
        %v4304 = vadd.f32 %v4183, %v4303
        %v4305 = vpop.f32.mrb[0].mxu0
        %4306 = vmatprep.mubr.f32.mxu0 0.0
        %4307 = vmatmul.mubr.f32.gmra.mrb[0].mxu0 %v4191
        %v4308 = vpop.f32.mrb[0].mxu0
        %v4309 = vadd.f32 %v4183, %v4308
        %v4310 = vpop.f32.mrb[0].mxu0
        %4311 = vmatprep.mubr.f32.mxu0 0.0
        %4312 = vmatmul.mubr.f32.gmra.mrb[0].mxu0 %v4194
        %v4313 = vpop.f32.mrb[0].mxu0
        %v4314 = vadd.f32 %v4183, %v4313
        %v4315 = vpop.f32.mrb[0].mxu0
        %4316 = vmatprep.mubr.f32.mxu0 0.0
        %4317 = vmatmul.mubr.f32.gmra.mrb[0].mxu0 %v4197
        %v4318 = vpop.f32.mrb[0].mxu0
        %v4319 = vadd.f32 %v4183, %v4318
        %v4320 = vpop.f32.mrb[0].mxu0
        %4321 = vmatprep.mubr.f32.mxu0 0.0
        %4322 = vmatmul.mubr.f32.gmra.mrb[0].mxu0 %v4200
        %v4323 = vpop.f32.mrb[0].mxu0
        %v4324 = vadd.f32 %v4183, %v4323
        %v4325 = vpop.f32.mrb[0].mxu0
        %4326 = vmatprep.mubr.f32.mxu0 0.0
        %4327 = vmatmul.mubr.f32.gmra.mrb[0].mxu0 %v4203
        %v4328 = vpop.f32.mrb[0].mxu0
        %v4329 = vadd.f32 %v4183, %v4328
        %v4330 = vpop.f32.mrb[0].mxu0
        %4331 = vmatprep.mubr.f32.mxu0 0.0
        %4332 = vmatmul.mubr.f32.gmra.mrb[0].mxu0 %v4206
        %v4333 = vpop.f32.mrb[0].mxu0
        %v4334 = vadd.f32 %v4183, %v4333
        %v4335 = vpop.f32.mrb[0].mxu0
        %4336 = vmatprep.mubr.f32.mxu0 0.0
        %4337 = vmatmul.mubr.f32.gmra.mrb[0].mxu0 %v4209
        %v4338 = vpop.f32.mrb[0].mxu0
        %v4339 = vadd.f32 %v4183, %v4338
        %v4340 = vpop.f32.mrb[0].mxu0
        %4341 = vmatprep.mubr.f32.mxu0 0.0
        %4342 = vmatmul.mubr.f32.gmra.mrb[0].mxu0 %v4212
        %v4343 = vpop.f32.mrb[0].mxu0
        %v4344 = vadd.f32 %v4183, %v4343
        %v4345 = vpop.f32.mrb[0].mxu0
        %4346 = vmatprep.mubr.f32.mxu0 0.0
        %4347 = vmatmul.mubr.f32.gmra.mrb[0].mxu0 %v4215
        %v4348 = vpop.f32.mrb[0].mxu0
        %v4349 = vadd.f32 %v4183, %v4348
        %v4350 = vpop.f32.mrb[0].mxu0
        %4351 = vmatprep.mubr.f32.mxu0 0.0
        %4352 = vmatmul.mubr.f32.gmra.mrb[0].mxu0 %v4218
        %v4353 = vpop.f32.mrb[0].mxu0
        %v4354 = vadd.f32 %v4183, %v4353
        %v4355 = vpop.f32.mrb[0].mxu0
        %4356 = vmatprep.mubr.f32.mxu0 0.0
        %4357 = vmatmul.mubr.f32.gmra.mrb[0].mxu0 %v4221
        %v4358 = vpop.f32.mrb[0].mxu0
        %v4359 = vadd.f32 %v4183, %v4358
        %v4360 = vpop.f32.mrb[0].mxu0
        %4361 = vmatprep.mubr.f32.mxu0 0.0
        %4362 = vmatmul.mubr.f32.gmra.mrb[0].mxu0 %v4224
        %v4363 = vpop.f32.mrb[0].mxu0
        %v4364 = vadd.f32 %v4183, %v4363
        %v4365 = vpop.f32.mrb[0].mxu0
        %4366 = vmatprep.mubr.f32.mxu0 0.0
        %4367 = vmatmul.mubr.f32.gmra.mrb[0].mxu0 %v4227
        %v4368 = vpop.f32.mrb[0].mxu0
        %v4369 = vadd.f32 %v4183, %v4368
        %v4370 = vpop.f32.mrb[0].mxu0
        %4371 = vmatprep.mubr.f32.mxu0 0.0
        %4372 = vmatmul.mubr.f32.gmra.mrb[0].mxu0 %v4230
        %v4373 = vpop.f32.mrb[0].mxu0
        %v4374 = vadd.f32 %v4183, %v4373
        %v4375 = vpop.f32.mrb[0].mxu0
        %4376 = vdwg.mxu0
        %v4377 = vadd.f32 %v446, %v4299
        %v4378 = vadd.f32 %v447, %v4304
        %v4379 = vadd.f32 %v448, %v4309
        %v4380 = vadd.f32 %v449, %v4314
        %v4381 = vadd.f32 %v450, %v4319
        %v4382 = vadd.f32 %v451, %v4324
        %v4383 = vadd.f32 %v452, %v4329
        %v4384 = vadd.f32 %v453, %v4334
        %v4385 = vadd.f32 %v454, %v4339
        %v4386 = vadd.f32 %v455, %v4344
        %v4387 = vadd.f32 %v456, %v4349
        %v4388 = vadd.f32 %v457, %v4354
        %v4389 = vadd.f32 %v458, %v4359
        %v4390 = vadd.f32 %v459, %v4364
        %v4391 = vadd.f32 %v460, %v4369
        %v4392 = vadd.f32 %v461, %v4374
        %v4393 = vsel %vm473, %v4377, 0.0
        %4394 = vadd.xlane.f32.xlu0 %v4393
        %v4395 = vpop.xlane.xlu0 %4394
        %v4396 = vsel %vm473, %v4378, 0.0
        %4397 = vadd.xlane.f32.xlu0 %v4396
        %v4398 = vpop.xlane.xlu0 %4397
        %v4399 = vsel %vm473, %v4379, 0.0
        %4400 = vadd.xlane.f32.xlu0 %v4399
        %v4401 = vpop.xlane.xlu0 %4400
        %v4402 = vsel %vm473, %v4380, 0.0
        %4403 = vadd.xlane.f32.xlu0 %v4402
        %v4404 = vpop.xlane.xlu0 %4403
        %v4405 = vsel %vm473, %v4381, 0.0
        %4406 = vadd.xlane.f32.xlu0 %v4405
        %v4407 = vpop.xlane.xlu0 %4406
        %v4408 = vsel %vm473, %v4382, 0.0
        %4409 = vadd.xlane.f32.xlu0 %v4408
        %v4410 = vpop.xlane.xlu0 %4409
        %v4411 = vsel %vm473, %v4383, 0.0
        %4412 = vadd.xlane.f32.xlu0 %v4411
        %v4413 = vpop.xlane.xlu0 %4412
        %v4414 = vsel %vm473, %v4384, 0.0
        %4415 = vadd.xlane.f32.xlu0 %v4414
        %v4416 = vpop.xlane.xlu0 %4415
        %v4417 = vsel %vm473, %v4385, 0.0
        %4418 = vadd.xlane.f32.xlu0 %v4417
        %v4419 = vpop.xlane.xlu0 %4418
        %v4420 = vsel %vm473, %v4386, 0.0
        %4421 = vadd.xlane.f32.xlu0 %v4420
        %v4422 = vpop.xlane.xlu0 %4421
        %v4423 = vsel %vm473, %v4387, 0.0
        %4424 = vadd.xlane.f32.xlu0 %v4423
        %v4425 = vpop.xlane.xlu0 %4424
        %v4426 = vsel %vm473, %v4388, 0.0
        %4427 = vadd.xlane.f32.xlu0 %v4426
        %v4428 = vpop.xlane.xlu0 %4427
        %v4429 = vsel %vm473, %v4389, 0.0
        %4430 = vadd.xlane.f32.xlu0 %v4429
        %v4431 = vpop.xlane.xlu0 %4430
        %v4432 = vsel %vm473, %v4390, 0.0
        %4433 = vadd.xlane.f32.xlu0 %v4432
        %v4434 = vpop.xlane.xlu0 %4433
        %v4435 = vsel %vm473, %v4391, 0.0
        %4436 = vadd.xlane.f32.xlu0 %v4435
        %v4437 = vpop.xlane.xlu0 %4436
        %v4438 = vsel %vm473, %v4392, 0.0
        %4439 = vadd.xlane.f32.xlu0 %v4438
        %v4440 = vpop.xlane.xlu0 %4439
        %v4441 = vrcp.pop 32.0
        %v4442 = vmul.f32 %v4395, %v4441
        %v4443 = vmul.f32 %v4398, %v4441
        %v4444 = vmul.f32 %v4401, %v4441
        %v4445 = vmul.f32 %v4404, %v4441
        %v4446 = vmul.f32 %v4407, %v4441
        %v4447 = vmul.f32 %v4410, %v4441
        %v4448 = vmul.f32 %v4413, %v4441
        %v4449 = vmul.f32 %v4416, %v4441
        %v4450 = vmul.f32 %v4419, %v4441
        %v4451 = vmul.f32 %v4422, %v4441
        %v4452 = vmul.f32 %v4425, %v4441
        %v4453 = vmul.f32 %v4428, %v4441
        %v4454 = vmul.f32 %v4431, %v4441
        %v4455 = vmul.f32 %v4434, %v4441
        %v4456 = vmul.f32 %v4437, %v4441
        %v4457 = vmul.f32 %v4440, %v4441
        %v4458 = vsub.f32 %v4377, %v4442
        %v4459 = vsub.f32 %v4378, %v4443
        %v4460 = vsub.f32 %v4379, %v4444
        %v4461 = vsub.f32 %v4380, %v4445
        %v4462 = vsub.f32 %v4381, %v4446
        %v4463 = vsub.f32 %v4382, %v4447
        %v4464 = vsub.f32 %v4383, %v4448
        %v4465 = vsub.f32 %v4384, %v4449
        %v4466 = vsub.f32 %v4385, %v4450
        %v4467 = vsub.f32 %v4386, %v4451
        %v4468 = vsub.f32 %v4387, %v4452
        %v4469 = vsub.f32 %v4388, %v4453
        %v4470 = vsub.f32 %v4389, %v4454
        %v4471 = vsub.f32 %v4390, %v4455
        %v4472 = vsub.f32 %v4391, %v4456
        %v4473 = vsub.f32 %v4392, %v4457
        %v4474 = vmul.f32 %v4458, %v4458
        %v4475 = vmul.f32 %v4459, %v4459
        %v4476 = vmul.f32 %v4460, %v4460
        %v4477 = vmul.f32 %v4461, %v4461
        %v4478 = vmul.f32 %v4462, %v4462
        %v4479 = vmul.f32 %v4463, %v4463
        %v4480 = vmul.f32 %v4464, %v4464
        %v4481 = vmul.f32 %v4465, %v4465
        %v4482 = vmul.f32 %v4466, %v4466
        %v4483 = vmul.f32 %v4467, %v4467
        %v4484 = vmul.f32 %v4468, %v4468
        %v4485 = vmul.f32 %v4469, %v4469
        %v4486 = vmul.f32 %v4470, %v4470
        %v4487 = vmul.f32 %v4471, %v4471
        %v4488 = vmul.f32 %v4472, %v4472
        %v4489 = vmul.f32 %v4473, %v4473
        %v4490 = vsel %vm473, %v4474, 0.0
        %4491 = vadd.xlane.f32.xlu0 %v4490
        %v4492 = vpop.xlane.xlu0 %4491
        %v4493 = vsel %vm473, %v4475, 0.0
        %4494 = vadd.xlane.f32.xlu0 %v4493
        %v4495 = vpop.xlane.xlu0 %4494
        %v4496 = vsel %vm473, %v4476, 0.0
        %4497 = vadd.xlane.f32.xlu0 %v4496
        %v4498 = vpop.xlane.xlu0 %4497
        %v4499 = vsel %vm473, %v4477, 0.0
        %4500 = vadd.xlane.f32.xlu0 %v4499
        %v4501 = vpop.xlane.xlu0 %4500
        %v4502 = vsel %vm473, %v4478, 0.0
        %4503 = vadd.xlane.f32.xlu0 %v4502
        %v4504 = vpop.xlane.xlu0 %4503
        %v4505 = vsel %vm473, %v4479, 0.0
        %4506 = vadd.xlane.f32.xlu0 %v4505
        %v4507 = vpop.xlane.xlu0 %4506
        %v4508 = vsel %vm473, %v4480, 0.0
        %4509 = vadd.xlane.f32.xlu0 %v4508
        %v4510 = vpop.xlane.xlu0 %4509
        %v4511 = vsel %vm473, %v4481, 0.0
        %4512 = vadd.xlane.f32.xlu0 %v4511
        %v4513 = vpop.xlane.xlu0 %4512
        %v4514 = vsel %vm473, %v4482, 0.0
        %4515 = vadd.xlane.f32.xlu0 %v4514
        %v4516 = vpop.xlane.xlu0 %4515
        %v4517 = vsel %vm473, %v4483, 0.0
        %4518 = vadd.xlane.f32.xlu0 %v4517
        %v4519 = vpop.xlane.xlu0 %4518
        %v4520 = vsel %vm473, %v4484, 0.0
        %4521 = vadd.xlane.f32.xlu0 %v4520
        %v4522 = vpop.xlane.xlu0 %4521
        %v4523 = vsel %vm473, %v4485, 0.0
        %4524 = vadd.xlane.f32.xlu0 %v4523
        %v4525 = vpop.xlane.xlu0 %4524
        %v4526 = vsel %vm473, %v4486, 0.0
        %4527 = vadd.xlane.f32.xlu0 %v4526
        %v4528 = vpop.xlane.xlu0 %4527
        %v4529 = vsel %vm473, %v4487, 0.0
        %4530 = vadd.xlane.f32.xlu0 %v4529
        %v4531 = vpop.xlane.xlu0 %4530
        %v4532 = vsel %vm473, %v4488, 0.0
        %4533 = vadd.xlane.f32.xlu0 %v4532
        %v4534 = vpop.xlane.xlu0 %4533
        %v4535 = vsel %vm473, %v4489, 0.0
        %4536 = vadd.xlane.f32.xlu0 %v4535
        %v4537 = vpop.xlane.xlu0 %4536
        %v4538 = vmul.f32 %v4492, %v4441
        %v4539 = vmul.f32 %v4495, %v4441
        %v4540 = vmul.f32 %v4498, %v4441
        %v4541 = vmul.f32 %v4501, %v4441
        %v4542 = vmul.f32 %v4504, %v4441
        %v4543 = vmul.f32 %v4507, %v4441
        %v4544 = vmul.f32 %v4510, %v4441
        %v4545 = vmul.f32 %v4513, %v4441
        %v4546 = vmul.f32 %v4516, %v4441
        %v4547 = vmul.f32 %v4519, %v4441
        %v4548 = vmul.f32 %v4522, %v4441
        %v4549 = vmul.f32 %v4525, %v4441
        %v4550 = vmul.f32 %v4528, %v4441
        %v4551 = vmul.f32 %v4531, %v4441
        %v4552 = vmul.f32 %v4534, %v4441
        %v4553 = vmul.f32 %v4537, %v4441
        %v4554 = vadd.f32 %v4538, 1e-05
        %v4555 = vadd.f32 %v4539, 1e-05
        %v4556 = vadd.f32 %v4540, 1e-05
        %v4557 = vadd.f32 %v4541, 1e-05
        %v4558 = vadd.f32 %v4542, 1e-05
        %v4559 = vadd.f32 %v4543, 1e-05
        %v4560 = vadd.f32 %v4544, 1e-05
        %v4561 = vadd.f32 %v4545, 1e-05
        %v4562 = vadd.f32 %v4546, 1e-05
        %v4563 = vadd.f32 %v4547, 1e-05
        %v4564 = vadd.f32 %v4548, 1e-05
        %v4565 = vadd.f32 %v4549, 1e-05
        %v4566 = vadd.f32 %v4550, 1e-05
        %v4567 = vadd.f32 %v4551, 1e-05
        %v4568 = vadd.f32 %v4552, 1e-05
        %v4569 = vadd.f32 %v4553, 1e-05
        %v4570 = vrsqrt.pop %v4554
        %v4571 = vrsqrt.pop %v4555
        %v4572 = vrsqrt.pop %v4556
        %v4573 = vrsqrt.pop %v4557
        %v4574 = vrsqrt.pop %v4558
        %v4575 = vrsqrt.pop %v4559
        %v4576 = vrsqrt.pop %v4560
        %v4577 = vrsqrt.pop %v4561
        %v4578 = vrsqrt.pop %v4562
        %v4579 = vrsqrt.pop %v4563
        %v4580 = vrsqrt.pop %v4564
        %v4581 = vrsqrt.pop %v4565
        %v4582 = vrsqrt.pop %v4566
        %v4583 = vrsqrt.pop %v4567
        %v4584 = vrsqrt.pop %v4568
        %v4585 = vrsqrt.pop %v4569
        %v4586 = vmul.f32 %v4458, %v4570
        %v4587 = vmul.f32 %v4459, %v4571
        %v4588 = vmul.f32 %v4460, %v4572
        %v4589 = vmul.f32 %v4461, %v4573
        %v4590 = vmul.f32 %v4462, %v4574
        %v4591 = vmul.f32 %v4463, %v4575
        %v4592 = vmul.f32 %v4464, %v4576
        %v4593 = vmul.f32 %v4465, %v4577
        %v4594 = vmul.f32 %v4466, %v4578
        %v4595 = vmul.f32 %v4467, %v4579
        %v4596 = vmul.f32 %v4468, %v4580
        %v4597 = vmul.f32 %v4469, %v4581
        %v4598 = vmul.f32 %v4470, %v4582
        %v4599 = vmul.f32 %v4471, %v4583
        %v4600 = vmul.f32 %v4472, %v4584
        %v4601 = vmul.f32 %v4473, %v4585
        %v4602 = vlaneseq
        %v4603 = vshrl.u32 %v4602, 7
        %v4604 = vsub.s32 1, %v4603
        %v4605 = vrot.slane %v667, %v4604
        %v4606 = vmul.f32 %v4586, %v4605
        %v4607 = vmul.f32 %v4587, %v4605
        %v4608 = vmul.f32 %v4588, %v4605
        %v4609 = vmul.f32 %v4589, %v4605
        %v4610 = vmul.f32 %v4590, %v4605
        %v4611 = vmul.f32 %v4591, %v4605
        %v4612 = vmul.f32 %v4592, %v4605
        %v4613 = vmul.f32 %v4593, %v4605
        %v4614 = vmul.f32 %v4594, %v4605
        %v4615 = vmul.f32 %v4595, %v4605
        %v4616 = vmul.f32 %v4596, %v4605
        %v4617 = vmul.f32 %v4597, %v4605
        %v4618 = vmul.f32 %v4598, %v4605
        %v4619 = vmul.f32 %v4599, %v4605
        %v4620 = vmul.f32 %v4600, %v4605
        %v4621 = vmul.f32 %v4601, %v4605
        %v4622 = vlaneseq
        %v4623 = vshrl.u32 %v4622, 7
        %v4624 = vsub.s32 2, %v4623
        %v4625 = vrot.slane %v667, %v4624
        %v4626 = vadd.f32 %v4606, %v4625
        %v4627 = vadd.f32 %v4607, %v4625
        %v4628 = vadd.f32 %v4608, %v4625
        %v4629 = vadd.f32 %v4609, %v4625
        %v4630 = vadd.f32 %v4610, %v4625
        %v4631 = vadd.f32 %v4611, %v4625
        %v4632 = vadd.f32 %v4612, %v4625
        %v4633 = vadd.f32 %v4613, %v4625
        %v4634 = vadd.f32 %v4614, %v4625
        %v4635 = vadd.f32 %v4615, %v4625
        %v4636 = vadd.f32 %v4616, %v4625
        %v4637 = vadd.f32 %v4617, %v4625
        %v4638 = vadd.f32 %v4618, %v4625
        %v4639 = vadd.f32 %v4619, %v4625
        %v4640 = vadd.f32 %v4620, %v4625
        %v4641 = vadd.f32 %v4621, %v4625
        %v4642 = vld [vmem:[#allocation5] sm:$0xff]
        %v4643 = vld [vmem:[#allocation5 + $0x8] sm:$0xff]
        %v4644 = vld [vmem:[#allocation5 + $0x10] sm:$0xff]
        %v4645 = vld [vmem:[#allocation5 + $0x18] sm:$0xff]
        %v4646 = vld [vmem:[%s6] sm:$0x1]
        %v4648 = vlaneseq
        %v4649 = vshrl.u32 %v4648, 7
        %v4650 = vsub.s32 0, %v4649
        %v4651 = vrot.slane %v4646, %v4650
        %v4654 = vsel %vm473, %v4626, 0
        %v4657 = vsel %vm473, %v4627, 0
        %v4660 = vsel %vm473, %v4628, 0
        %v4663 = vsel %vm473, %v4629, 0
        %v4666 = vsel %vm473, %v4630, 0
        %v4669 = vsel %vm473, %v4631, 0
        %v4672 = vsel %vm473, %v4632, 0
        %v4675 = vsel %vm473, %v4633, 0
        %v4678 = vsel %vm473, %v4634, 0
        %v4681 = vsel %vm473, %v4635, 0
        %v4684 = vsel %vm473, %v4636, 0
        %v4687 = vsel %vm473, %v4637, 0
        %v4690 = vsel %vm473, %v4638, 0
        %v4693 = vsel %vm473, %v4639, 0
        %v4696 = vsel %vm473, %v4640, 0
        %v4699 = vsel %vm473, %v4641, 0
        %4701 = vmatprep.subr.mxu0 0.0
        %4702 = vmatpush1.msra.mxu0 %v4642
        %4703 = vmatprep.subr.mxu0 0.0
        %4704 = vmatpush1.msra.mxu0 %v4643
        %4705 = vmatprep.subr.mxu0 0.0
        %4706 = vmatpush1.msra.mxu0 %v4644
        %4707 = vmatprep.subr.mxu0 0.0
        %4708 = vmatpush1.msra.mxu0 %v4645
        %4709 = vmatprep.subr.mxu0 0.0
        %4710 = vmatpush1.msra.mxu0 0.0
        %4711 = vmatprep.subr.mxu0 0.0
        %4712 = vmatpush1.msra.mxu0 0.0
        %4713 = vmatprep.subr.mxu0 0.0
        %4714 = vmatpush1.msra.mxu0 0.0
        %4715 = vmatprep.subr.mxu0 0.0
        %4716 = vmatpush1.msra.mxu0 0.0
        %4717 = vmatprep.subr.mxu0 0.0
        %4718 = vmatpush1.msra.mxu0 0.0
        %4719 = vmatprep.subr.mxu0 0.0
        %4720 = vmatpush1.msra.mxu0 0.0
        %4721 = vmatprep.subr.mxu0 0.0
        %4722 = vmatpush1.msra.mxu0 0.0
        %4723 = vmatprep.subr.mxu0 0.0
        %4724 = vmatpush1.msra.mxu0 0.0
        %4725 = vmatprep.subr.mxu0 0.0
        %4726 = vmatpush1.msra.mxu0 0.0
        %4727 = vmatprep.subr.mxu0 0.0
        %4728 = vmatpush1.msra.mxu0 0.0
        %4729 = vmatprep.subr.mxu0 0.0
        %4730 = vmatpush1.msra.mxu0 0.0
        %4731 = vmatprep.subr.mxu0 0.0
        %4732 = vmatpush1.msra.mxu0 0.0
        %4733 = vmatprep.subr.mxu0 0.0
        %4734 = vmatpush1.msra.mxu0 0.0
        %4735 = vmatprep.subr.mxu0 0.0
        %4736 = vmatpush1.msra.mxu0 0.0
        %4737 = vmatprep.subr.mxu0 0.0
        %4738 = vmatpush1.msra.mxu0 0.0
        %4739 = vmatprep.subr.mxu0 0.0
        %4740 = vmatpush1.msra.mxu0 0.0
        %4741 = vmatprep.subr.mxu0 0.0
        %4742 = vmatpush1.msra.mxu0 0.0
        %4743 = vmatprep.subr.mxu0 0.0
        %4744 = vmatpush1.msra.mxu0 0.0
        %4745 = vmatprep.subr.mxu0 0.0
        %4746 = vmatpush1.msra.mxu0 0.0
        %4747 = vmatprep.subr.mxu0 0.0
        %4748 = vmatpush1.msra.mxu0 0.0
        %4749 = vmatprep.subr.mxu0 0.0
        %4750 = vmatpush1.msra.mxu0 0.0
        %4751 = vmatprep.subr.mxu0 0.0
        %4752 = vmatpush1.msra.mxu0 0.0
        %4753 = vmatprep.subr.mxu0 0.0
        %4754 = vmatpush1.msra.mxu0 0.0
        %4755 = vmatprep.subr.mxu0 0.0
        %4756 = vmatpush1.msra.mxu0 0.0
        %4757 = vmatprep.subr.mxu0 0.0
        %4758 = vmatpush1.msra.mxu0 0.0
        %4759 = vmatprep.subr.mxu0 0.0
        %4760 = vmatpush1.msra.mxu0 0.0
        %4761 = vmatprep.subr.mxu0 0.0
        %4762 = vmatpush1.msra.mxu0 0.0
        %4763 = vmatprep.subr.mxu0 0.0
        %4764 = vmatpush1.msra.mxu0 0.0
        %4765 = vmatprep.mubr.f32.mxu0 0.0
        %4766 = vmatmul.mubr.f32.gmra.mrb[0].mxu0 %v4654
        %v4767 = vpop.f32.mrb[0].mxu0
        %v4768 = vadd.f32 %v4651, %v4767
        %v4769 = vpop.f32.mrb[0].mxu0
        %4770 = vmatprep.mubr.f32.mxu0 0.0
        %4771 = vmatmul.mubr.f32.gmra.mrb[0].mxu0 %v4657
        %v4772 = vpop.f32.mrb[0].mxu0
        %v4773 = vadd.f32 %v4651, %v4772
        %v4774 = vpop.f32.mrb[0].mxu0
        %4775 = vmatprep.mubr.f32.mxu0 0.0
        %4776 = vmatmul.mubr.f32.gmra.mrb[0].mxu0 %v4660
        %v4777 = vpop.f32.mrb[0].mxu0
        %v4778 = vadd.f32 %v4651, %v4777
        %v4779 = vpop.f32.mrb[0].mxu0
        %4780 = vmatprep.mubr.f32.mxu0 0.0
        %4781 = vmatmul.mubr.f32.gmra.mrb[0].mxu0 %v4663
        %v4782 = vpop.f32.mrb[0].mxu0
        %v4783 = vadd.f32 %v4651, %v4782
        %v4784 = vpop.f32.mrb[0].mxu0
        %4785 = vmatprep.mubr.f32.mxu0 0.0
        %4786 = vmatmul.mubr.f32.gmra.mrb[0].mxu0 %v4666
        %v4787 = vpop.f32.mrb[0].mxu0
        %v4788 = vadd.f32 %v4651, %v4787
        %v4789 = vpop.f32.mrb[0].mxu0
        %4790 = vmatprep.mubr.f32.mxu0 0.0
        %4791 = vmatmul.mubr.f32.gmra.mrb[0].mxu0 %v4669
        %v4792 = vpop.f32.mrb[0].mxu0
        %v4793 = vadd.f32 %v4651, %v4792
        %v4794 = vpop.f32.mrb[0].mxu0
        %4795 = vmatprep.mubr.f32.mxu0 0.0
        %4796 = vmatmul.mubr.f32.gmra.mrb[0].mxu0 %v4672
        %v4797 = vpop.f32.mrb[0].mxu0
        %v4798 = vadd.f32 %v4651, %v4797
        %v4799 = vpop.f32.mrb[0].mxu0
        %4800 = vmatprep.mubr.f32.mxu0 0.0
        %4801 = vmatmul.mubr.f32.gmra.mrb[0].mxu0 %v4675
        %v4802 = vpop.f32.mrb[0].mxu0
        %v4803 = vadd.f32 %v4651, %v4802
        %v4804 = vpop.f32.mrb[0].mxu0
        %4805 = vmatprep.mubr.f32.mxu0 0.0
        %4806 = vmatmul.mubr.f32.gmra.mrb[0].mxu0 %v4678
        %v4807 = vpop.f32.mrb[0].mxu0
        %v4808 = vadd.f32 %v4651, %v4807
        %v4809 = vpop.f32.mrb[0].mxu0
        %4810 = vmatprep.mubr.f32.mxu0 0.0
        %4811 = vmatmul.mubr.f32.gmra.mrb[0].mxu0 %v4681
        %v4812 = vpop.f32.mrb[0].mxu0
        %v4813 = vadd.f32 %v4651, %v4812
        %v4814 = vpop.f32.mrb[0].mxu0
        %4815 = vmatprep.mubr.f32.mxu0 0.0
        %4816 = vmatmul.mubr.f32.gmra.mrb[0].mxu0 %v4684
        %v4817 = vpop.f32.mrb[0].mxu0
        %v4818 = vadd.f32 %v4651, %v4817
        %v4819 = vpop.f32.mrb[0].mxu0
        %4820 = vmatprep.mubr.f32.mxu0 0.0
        %4821 = vmatmul.mubr.f32.gmra.mrb[0].mxu0 %v4687
        %v4822 = vpop.f32.mrb[0].mxu0
        %v4823 = vadd.f32 %v4651, %v4822
        %v4824 = vpop.f32.mrb[0].mxu0
        %4825 = vmatprep.mubr.f32.mxu0 0.0
        %4826 = vmatmul.mubr.f32.gmra.mrb[0].mxu0 %v4690
        %v4827 = vpop.f32.mrb[0].mxu0
        %v4828 = vadd.f32 %v4651, %v4827
        %v4829 = vpop.f32.mrb[0].mxu0
        %4830 = vmatprep.mubr.f32.mxu0 0.0
        %4831 = vmatmul.mubr.f32.gmra.mrb[0].mxu0 %v4693
        %v4832 = vpop.f32.mrb[0].mxu0
        %v4833 = vadd.f32 %v4651, %v4832
        %v4834 = vpop.f32.mrb[0].mxu0
        %4835 = vmatprep.mubr.f32.mxu0 0.0
        %4836 = vmatmul.mubr.f32.gmra.mrb[0].mxu0 %v4696
        %v4837 = vpop.f32.mrb[0].mxu0
        %v4838 = vadd.f32 %v4651, %v4837
        %v4839 = vpop.f32.mrb[0].mxu0
        %4840 = vmatprep.mubr.f32.mxu0 0.0
        %4841 = vmatmul.mubr.f32.gmra.mrb[0].mxu0 %v4699
        %v4842 = vpop.f32.mrb[0].mxu0
        %v4843 = vadd.f32 %v4651, %v4842
        %v4844 = vpop.f32.mrb[0].mxu0
        %4845 = vdwg.mxu0
        %v4846 = vmax.f32 %v4768, 0.0
        %v4847 = vmax.f32 %v4773, 0.0
        %v4848 = vmax.f32 %v4778, 0.0
        %v4849 = vmax.f32 %v4783, 0.0
        %v4850 = vmax.f32 %v4788, 0.0
        %v4851 = vmax.f32 %v4793, 0.0
        %v4852 = vmax.f32 %v4798, 0.0
        %v4853 = vmax.f32 %v4803, 0.0
        %v4854 = vmax.f32 %v4808, 0.0
        %v4855 = vmax.f32 %v4813, 0.0
        %v4856 = vmax.f32 %v4818, 0.0
        %v4857 = vmax.f32 %v4823, 0.0
        %v4858 = vmax.f32 %v4828, 0.0
        %v4859 = vmax.f32 %v4833, 0.0
        %v4860 = vmax.f32 %v4838, 0.0
        %v4861 = vmax.f32 %v4843, 0.0
        %v4862 = vld [vmem:[%s7] sm:$0xff]
        %v4863 = vld [vmem:[%s7 + $0x8] sm:$0xff]
        %v4864 = vld [vmem:[%s7 + $0x10] sm:$0xff]
        %v4865 = vld [vmem:[%s7 + $0x18] sm:$0xff]
        %v4866 = vld [vmem:[%s7 + $0x20] sm:$0xff]
        %v4867 = vld [vmem:[%s7 + $0x28] sm:$0xff]
        %v4868 = vld [vmem:[%s7 + $0x30] sm:$0xff]
        %v4869 = vld [vmem:[%s7 + $0x38] sm:$0xff]
        %v4870 = vlaneseq
        %v4871 = vshrl.u32 %v4870, 7
        %v4872 = vsub.s32 3, %v4871
        %v4873 = vrot.slane %v667, %v4872
        %v4875 = vsel %vm991, %v4846, 0
        %v4878 = vsel %vm991, %v4847, 0
        %v4881 = vsel %vm991, %v4848, 0
        %v4884 = vsel %vm991, %v4849, 0
        %v4887 = vsel %vm991, %v4850, 0
        %v4890 = vsel %vm991, %v4851, 0
        %v4893 = vsel %vm991, %v4852, 0
        %v4896 = vsel %vm991, %v4853, 0
        %v4899 = vsel %vm991, %v4854, 0
        %v4902 = vsel %vm991, %v4855, 0
        %v4905 = vsel %vm991, %v4856, 0
        %v4908 = vsel %vm991, %v4857, 0
        %v4911 = vsel %vm991, %v4858, 0
        %v4914 = vsel %vm991, %v4859, 0
        %v4917 = vsel %vm991, %v4860, 0
        %v4920 = vsel %vm991, %v4861, 0
        %4922 = vmatprep.subr.mxu0 0.0
        %4923 = vmatpush1.msra.mxu0 %v4862
        %4924 = vmatprep.subr.mxu0 0.0
        %4925 = vmatpush1.msra.mxu0 %v4863
        %4926 = vmatprep.subr.mxu0 0.0
        %4927 = vmatpush1.msra.mxu0 %v4864
        %4928 = vmatprep.subr.mxu0 0.0
        %4929 = vmatpush1.msra.mxu0 %v4865
        %4930 = vmatprep.subr.mxu0 0.0
        %4931 = vmatpush1.msra.mxu0 %v4866
        %4932 = vmatprep.subr.mxu0 0.0
        %4933 = vmatpush1.msra.mxu0 %v4867
        %4934 = vmatprep.subr.mxu0 0.0
        %4935 = vmatpush1.msra.mxu0 %v4868
        %4936 = vmatprep.subr.mxu0 0.0
        %4937 = vmatpush1.msra.mxu0 %v4869
        %4938 = vmatprep.subr.mxu0 0.0
        %4939 = vmatpush1.msra.mxu0 0.0
        %4940 = vmatprep.subr.mxu0 0.0
        %4941 = vmatpush1.msra.mxu0 0.0
        %4942 = vmatprep.subr.mxu0 0.0
        %4943 = vmatpush1.msra.mxu0 0.0
        %4944 = vmatprep.subr.mxu0 0.0
        %4945 = vmatpush1.msra.mxu0 0.0
        %4946 = vmatprep.subr.mxu0 0.0
        %4947 = vmatpush1.msra.mxu0 0.0
        %4948 = vmatprep.subr.mxu0 0.0
        %4949 = vmatpush1.msra.mxu0 0.0
        %4950 = vmatprep.subr.mxu0 0.0
        %4951 = vmatpush1.msra.mxu0 0.0
        %4952 = vmatprep.subr.mxu0 0.0
        %4953 = vmatpush1.msra.mxu0 0.0
        %4954 = vmatprep.subr.mxu0 0.0
        %4955 = vmatpush1.msra.mxu0 0.0
        %4956 = vmatprep.subr.mxu0 0.0
        %4957 = vmatpush1.msra.mxu0 0.0
        %4958 = vmatprep.subr.mxu0 0.0
        %4959 = vmatpush1.msra.mxu0 0.0
        %4960 = vmatprep.subr.mxu0 0.0
        %4961 = vmatpush1.msra.mxu0 0.0
        %4962 = vmatprep.subr.mxu0 0.0
        %4963 = vmatpush1.msra.mxu0 0.0
        %4964 = vmatprep.subr.mxu0 0.0
        %4965 = vmatpush1.msra.mxu0 0.0
        %4966 = vmatprep.subr.mxu0 0.0
        %4967 = vmatpush1.msra.mxu0 0.0
        %4968 = vmatprep.subr.mxu0 0.0
        %4969 = vmatpush1.msra.mxu0 0.0
        %4970 = vmatprep.subr.mxu0 0.0
        %4971 = vmatpush1.msra.mxu0 0.0
        %4972 = vmatprep.subr.mxu0 0.0
        %4973 = vmatpush1.msra.mxu0 0.0
        %4974 = vmatprep.subr.mxu0 0.0
        %4975 = vmatpush1.msra.mxu0 0.0
        %4976 = vmatprep.subr.mxu0 0.0
        %4977 = vmatpush1.msra.mxu0 0.0
        %4978 = vmatprep.subr.mxu0 0.0
        %4979 = vmatpush1.msra.mxu0 0.0
        %4980 = vmatprep.subr.mxu0 0.0
        %4981 = vmatpush1.msra.mxu0 0.0
        %4982 = vmatprep.subr.mxu0 0.0
        %4983 = vmatpush1.msra.mxu0 0.0
        %4984 = vmatprep.subr.mxu0 0.0
        %4985 = vmatpush1.msra.mxu0 0.0
        %4986 = vmatprep.mubr.f32.mxu0 0.0
        %4987 = vmatmul.mubr.f32.gmra.mrb[0].mxu0 %v4875
        %v4988 = vpop.f32.mrb[0].mxu0
        %v4989 = vadd.f32 %v4873, %v4988
        %v4990 = vpop.f32.mrb[0].mxu0
        %4991 = vmatprep.mubr.f32.mxu0 0.0
        %4992 = vmatmul.mubr.f32.gmra.mrb[0].mxu0 %v4878
        %v4993 = vpop.f32.mrb[0].mxu0
        %v4994 = vadd.f32 %v4873, %v4993
        %v4995 = vpop.f32.mrb[0].mxu0
        %4996 = vmatprep.mubr.f32.mxu0 0.0
        %4997 = vmatmul.mubr.f32.gmra.mrb[0].mxu0 %v4881
        %v4998 = vpop.f32.mrb[0].mxu0
        %v4999 = vadd.f32 %v4873, %v4998
        %v5000 = vpop.f32.mrb[0].mxu0
        %5001 = vmatprep.mubr.f32.mxu0 0.0
        %5002 = vmatmul.mubr.f32.gmra.mrb[0].mxu0 %v4884
        %v5003 = vpop.f32.mrb[0].mxu0
        %v5004 = vadd.f32 %v4873, %v5003
        %v5005 = vpop.f32.mrb[0].mxu0
        %5006 = vmatprep.mubr.f32.mxu0 0.0
        %5007 = vmatmul.mubr.f32.gmra.mrb[0].mxu0 %v4887
        %v5008 = vpop.f32.mrb[0].mxu0
        %v5009 = vadd.f32 %v4873, %v5008
        %v5010 = vpop.f32.mrb[0].mxu0
        %5011 = vmatprep.mubr.f32.mxu0 0.0
        %5012 = vmatmul.mubr.f32.gmra.mrb[0].mxu0 %v4890
        %v5013 = vpop.f32.mrb[0].mxu0
        %v5014 = vadd.f32 %v4873, %v5013
        %v5015 = vpop.f32.mrb[0].mxu0
        %5016 = vmatprep.mubr.f32.mxu0 0.0
        %5017 = vmatmul.mubr.f32.gmra.mrb[0].mxu0 %v4893
        %v5018 = vpop.f32.mrb[0].mxu0
        %v5019 = vadd.f32 %v4873, %v5018
        %v5020 = vpop.f32.mrb[0].mxu0
        %5021 = vmatprep.mubr.f32.mxu0 0.0
        %5022 = vmatmul.mubr.f32.gmra.mrb[0].mxu0 %v4896
        %v5023 = vpop.f32.mrb[0].mxu0
        %v5024 = vadd.f32 %v4873, %v5023
        %v5025 = vpop.f32.mrb[0].mxu0
        %5026 = vmatprep.mubr.f32.mxu0 0.0
        %5027 = vmatmul.mubr.f32.gmra.mrb[0].mxu0 %v4899
        %v5028 = vpop.f32.mrb[0].mxu0
        %v5029 = vadd.f32 %v4873, %v5028
        %v5030 = vpop.f32.mrb[0].mxu0
        %5031 = vmatprep.mubr.f32.mxu0 0.0
        %5032 = vmatmul.mubr.f32.gmra.mrb[0].mxu0 %v4902
        %v5033 = vpop.f32.mrb[0].mxu0
        %v5034 = vadd.f32 %v4873, %v5033
        %v5035 = vpop.f32.mrb[0].mxu0
        %5036 = vmatprep.mubr.f32.mxu0 0.0
        %5037 = vmatmul.mubr.f32.gmra.mrb[0].mxu0 %v4905
        %v5038 = vpop.f32.mrb[0].mxu0
        %v5039 = vadd.f32 %v4873, %v5038
        %v5040 = vpop.f32.mrb[0].mxu0
        %5041 = vmatprep.mubr.f32.mxu0 0.0
        %5042 = vmatmul.mubr.f32.gmra.mrb[0].mxu0 %v4908
        %v5043 = vpop.f32.mrb[0].mxu0
        %v5044 = vadd.f32 %v4873, %v5043
        %v5045 = vpop.f32.mrb[0].mxu0
        %5046 = vmatprep.mubr.f32.mxu0 0.0
        %5047 = vmatmul.mubr.f32.gmra.mrb[0].mxu0 %v4911
        %v5048 = vpop.f32.mrb[0].mxu0
        %v5049 = vadd.f32 %v4873, %v5048
        %v5050 = vpop.f32.mrb[0].mxu0
        %5051 = vmatprep.mubr.f32.mxu0 0.0
        %5052 = vmatmul.mubr.f32.gmra.mrb[0].mxu0 %v4914
        %v5053 = vpop.f32.mrb[0].mxu0
        %v5054 = vadd.f32 %v4873, %v5053
        %v5055 = vpop.f32.mrb[0].mxu0
        %5056 = vmatprep.mubr.f32.mxu0 0.0
        %5057 = vmatmul.mubr.f32.gmra.mrb[0].mxu0 %v4917
        %v5058 = vpop.f32.mrb[0].mxu0
        %v5059 = vadd.f32 %v4873, %v5058
        %v5060 = vpop.f32.mrb[0].mxu0
        %5061 = vmatprep.mubr.f32.mxu0 0.0
        %5062 = vmatmul.mubr.f32.gmra.mrb[0].mxu0 %v4920
        %v5063 = vpop.f32.mrb[0].mxu0
        %v5064 = vadd.f32 %v4873, %v5063
        %v5065 = vpop.f32.mrb[0].mxu0
        %5066 = vdwg.mxu0
        %v5067 = vadd.f32 %v4626, %v4989
        %v5068 = vadd.f32 %v4627, %v4994
        %v5069 = vadd.f32 %v4628, %v4999
        %v5070 = vadd.f32 %v4629, %v5004
        %v5071 = vadd.f32 %v4630, %v5009
        %v5072 = vadd.f32 %v4631, %v5014
        %v5073 = vadd.f32 %v4632, %v5019
        %v5074 = vadd.f32 %v4633, %v5024
        %v5075 = vadd.f32 %v4634, %v5029
        %v5076 = vadd.f32 %v4635, %v5034
        %v5077 = vadd.f32 %v4636, %v5039
        %v5078 = vadd.f32 %v4637, %v5044
        %v5079 = vadd.f32 %v4638, %v5049
        %v5080 = vadd.f32 %v4639, %v5054
        %v5081 = vadd.f32 %v4640, %v5059
        %v5082 = vadd.f32 %v4641, %v5064
        %v5083 = vsel %vm473, %v5067, 0.0
        %5084 = vadd.xlane.f32.xlu0 %v5083
        %v5085 = vpop.xlane.xlu0 %5084
        %v5086 = vsel %vm473, %v5068, 0.0
        %5087 = vadd.xlane.f32.xlu0 %v5086
        %v5088 = vpop.xlane.xlu0 %5087
        %v5089 = vsel %vm473, %v5069, 0.0
        %5090 = vadd.xlane.f32.xlu0 %v5089
        %v5091 = vpop.xlane.xlu0 %5090
        %v5092 = vsel %vm473, %v5070, 0.0
        %5093 = vadd.xlane.f32.xlu0 %v5092
        %v5094 = vpop.xlane.xlu0 %5093
        %v5095 = vsel %vm473, %v5071, 0.0
        %5096 = vadd.xlane.f32.xlu0 %v5095
        %v5097 = vpop.xlane.xlu0 %5096
        %v5098 = vsel %vm473, %v5072, 0.0
        %5099 = vadd.xlane.f32.xlu0 %v5098
        %v5100 = vpop.xlane.xlu0 %5099
        %v5101 = vsel %vm473, %v5073, 0.0
        %5102 = vadd.xlane.f32.xlu0 %v5101
        %v5103 = vpop.xlane.xlu0 %5102
        %v5104 = vsel %vm473, %v5074, 0.0
        %5105 = vadd.xlane.f32.xlu0 %v5104
        %v5106 = vpop.xlane.xlu0 %5105
        %v5107 = vsel %vm473, %v5075, 0.0
        %5108 = vadd.xlane.f32.xlu0 %v5107
        %v5109 = vpop.xlane.xlu0 %5108
        %v5110 = vsel %vm473, %v5076, 0.0
        %5111 = vadd.xlane.f32.xlu0 %v5110
        %v5112 = vpop.xlane.xlu0 %5111
        %v5113 = vsel %vm473, %v5077, 0.0
        %5114 = vadd.xlane.f32.xlu0 %v5113
        %v5115 = vpop.xlane.xlu0 %5114
        %v5116 = vsel %vm473, %v5078, 0.0
        %5117 = vadd.xlane.f32.xlu0 %v5116
        %v5118 = vpop.xlane.xlu0 %5117
        %v5119 = vsel %vm473, %v5079, 0.0
        %5120 = vadd.xlane.f32.xlu0 %v5119
        %v5121 = vpop.xlane.xlu0 %5120
        %v5122 = vsel %vm473, %v5080, 0.0
        %5123 = vadd.xlane.f32.xlu0 %v5122
        %v5124 = vpop.xlane.xlu0 %5123
        %v5125 = vsel %vm473, %v5081, 0.0
        %5126 = vadd.xlane.f32.xlu0 %v5125
        %v5127 = vpop.xlane.xlu0 %5126
        %v5128 = vsel %vm473, %v5082, 0.0
        %5129 = vadd.xlane.f32.xlu0 %v5128
        %v5130 = vpop.xlane.xlu0 %5129
        %v5131 = vmul.f32 %v5085, %v4441
        %v5132 = vmul.f32 %v5088, %v4441
        %v5133 = vmul.f32 %v5091, %v4441
        %v5134 = vmul.f32 %v5094, %v4441
        %v5135 = vmul.f32 %v5097, %v4441
        %v5136 = vmul.f32 %v5100, %v4441
        %v5137 = vmul.f32 %v5103, %v4441
        %v5138 = vmul.f32 %v5106, %v4441
        %v5139 = vmul.f32 %v5109, %v4441
        %v5140 = vmul.f32 %v5112, %v4441
        %v5141 = vmul.f32 %v5115, %v4441
        %v5142 = vmul.f32 %v5118, %v4441
        %v5143 = vmul.f32 %v5121, %v4441
        %v5144 = vmul.f32 %v5124, %v4441
        %v5145 = vmul.f32 %v5127, %v4441
        %v5146 = vmul.f32 %v5130, %v4441
        %v5147 = vsub.f32 %v5067, %v5131
        %v5148 = vsub.f32 %v5068, %v5132
        %v5149 = vsub.f32 %v5069, %v5133
        %v5150 = vsub.f32 %v5070, %v5134
        %v5151 = vsub.f32 %v5071, %v5135
        %v5152 = vsub.f32 %v5072, %v5136
        %v5153 = vsub.f32 %v5073, %v5137
        %v5154 = vsub.f32 %v5074, %v5138
        %v5155 = vsub.f32 %v5075, %v5139
        %v5156 = vsub.f32 %v5076, %v5140
        %v5157 = vsub.f32 %v5077, %v5141
        %v5158 = vsub.f32 %v5078, %v5142
        %v5159 = vsub.f32 %v5079, %v5143
        %v5160 = vsub.f32 %v5080, %v5144
        %v5161 = vsub.f32 %v5081, %v5145
        %v5162 = vsub.f32 %v5082, %v5146
        %v5163 = vmul.f32 %v5147, %v5147
        %v5164 = vmul.f32 %v5148, %v5148
        %v5165 = vmul.f32 %v5149, %v5149
        %v5166 = vmul.f32 %v5150, %v5150
        %v5167 = vmul.f32 %v5151, %v5151
        %v5168 = vmul.f32 %v5152, %v5152
        %v5169 = vmul.f32 %v5153, %v5153
        %v5170 = vmul.f32 %v5154, %v5154
        %v5171 = vmul.f32 %v5155, %v5155
        %v5172 = vmul.f32 %v5156, %v5156
        %v5173 = vmul.f32 %v5157, %v5157
        %v5174 = vmul.f32 %v5158, %v5158
        %v5175 = vmul.f32 %v5159, %v5159
        %v5176 = vmul.f32 %v5160, %v5160
        %v5177 = vmul.f32 %v5161, %v5161
        %v5178 = vmul.f32 %v5162, %v5162
        %v5179 = vsel %vm473, %v5163, 0.0
        %5180 = vadd.xlane.f32.xlu0 %v5179
        %v5181 = vpop.xlane.xlu0 %5180
        %v5182 = vsel %vm473, %v5164, 0.0
        %5183 = vadd.xlane.f32.xlu0 %v5182
        %v5184 = vpop.xlane.xlu0 %5183
        %v5185 = vsel %vm473, %v5165, 0.0
        %5186 = vadd.xlane.f32.xlu0 %v5185
        %v5187 = vpop.xlane.xlu0 %5186
        %v5188 = vsel %vm473, %v5166, 0.0
        %5189 = vadd.xlane.f32.xlu0 %v5188
        %v5190 = vpop.xlane.xlu0 %5189
        %v5191 = vsel %vm473, %v5167, 0.0
        %5192 = vadd.xlane.f32.xlu0 %v5191
        %v5193 = vpop.xlane.xlu0 %5192
        %v5194 = vsel %vm473, %v5168, 0.0
        %5195 = vadd.xlane.f32.xlu0 %v5194
        %v5196 = vpop.xlane.xlu0 %5195
        %v5197 = vsel %vm473, %v5169, 0.0
        %5198 = vadd.xlane.f32.xlu0 %v5197
        %v5199 = vpop.xlane.xlu0 %5198
        %v5200 = vsel %vm473, %v5170, 0.0
        %5201 = vadd.xlane.f32.xlu0 %v5200
        %v5202 = vpop.xlane.xlu0 %5201
        %v5203 = vsel %vm473, %v5171, 0.0
        %5204 = vadd.xlane.f32.xlu0 %v5203
        %v5205 = vpop.xlane.xlu0 %5204
        %v5206 = vsel %vm473, %v5172, 0.0
        %5207 = vadd.xlane.f32.xlu0 %v5206
        %v5208 = vpop.xlane.xlu0 %5207
        %v5209 = vsel %vm473, %v5173, 0.0
        %5210 = vadd.xlane.f32.xlu0 %v5209
        %v5211 = vpop.xlane.xlu0 %5210
        %v5212 = vsel %vm473, %v5174, 0.0
        %5213 = vadd.xlane.f32.xlu0 %v5212
        %v5214 = vpop.xlane.xlu0 %5213
        %v5215 = vsel %vm473, %v5175, 0.0
        %5216 = vadd.xlane.f32.xlu0 %v5215
        %v5217 = vpop.xlane.xlu0 %5216
        %v5218 = vsel %vm473, %v5176, 0.0
        %5219 = vadd.xlane.f32.xlu0 %v5218
        %v5220 = vpop.xlane.xlu0 %5219
        %v5221 = vsel %vm473, %v5177, 0.0
        %5222 = vadd.xlane.f32.xlu0 %v5221
        %v5223 = vpop.xlane.xlu0 %5222
        %v5224 = vsel %vm473, %v5178, 0.0
        %5225 = vadd.xlane.f32.xlu0 %v5224
        %v5226 = vpop.xlane.xlu0 %5225
        %v5227 = vmul.f32 %v5181, %v4441
        %v5228 = vmul.f32 %v5184, %v4441
        %v5229 = vmul.f32 %v5187, %v4441
        %v5230 = vmul.f32 %v5190, %v4441
        %v5231 = vmul.f32 %v5193, %v4441
        %v5232 = vmul.f32 %v5196, %v4441
        %v5233 = vmul.f32 %v5199, %v4441
        %v5234 = vmul.f32 %v5202, %v4441
        %v5235 = vmul.f32 %v5205, %v4441
        %v5236 = vmul.f32 %v5208, %v4441
        %v5237 = vmul.f32 %v5211, %v4441
        %v5238 = vmul.f32 %v5214, %v4441
        %v5239 = vmul.f32 %v5217, %v4441
        %v5240 = vmul.f32 %v5220, %v4441
        %v5241 = vmul.f32 %v5223, %v4441
        %v5242 = vmul.f32 %v5226, %v4441
        %v5243 = vadd.f32 %v5227, 1e-05
        %v5244 = vadd.f32 %v5228, 1e-05
        %v5245 = vadd.f32 %v5229, 1e-05
        %v5246 = vadd.f32 %v5230, 1e-05
        %v5247 = vadd.f32 %v5231, 1e-05
        %v5248 = vadd.f32 %v5232, 1e-05
        %v5249 = vadd.f32 %v5233, 1e-05
        %v5250 = vadd.f32 %v5234, 1e-05
        %v5251 = vadd.f32 %v5235, 1e-05
        %v5252 = vadd.f32 %v5236, 1e-05
        %v5253 = vadd.f32 %v5237, 1e-05
        %v5254 = vadd.f32 %v5238, 1e-05
        %v5255 = vadd.f32 %v5239, 1e-05
        %v5256 = vadd.f32 %v5240, 1e-05
        %v5257 = vadd.f32 %v5241, 1e-05
        %v5258 = vadd.f32 %v5242, 1e-05
        %v5259 = vrsqrt.pop %v5243
        %v5260 = vrsqrt.pop %v5244
        %v5261 = vrsqrt.pop %v5245
        %v5262 = vrsqrt.pop %v5246
        %v5263 = vrsqrt.pop %v5247
        %v5264 = vrsqrt.pop %v5248
        %v5265 = vrsqrt.pop %v5249
        %v5266 = vrsqrt.pop %v5250
        %v5267 = vrsqrt.pop %v5251
        %v5268 = vrsqrt.pop %v5252
        %v5269 = vrsqrt.pop %v5253
        %v5270 = vrsqrt.pop %v5254
        %v5271 = vrsqrt.pop %v5255
        %v5272 = vrsqrt.pop %v5256
        %v5273 = vrsqrt.pop %v5257
        %v5274 = vrsqrt.pop %v5258
        %v5275 = vmul.f32 %v5147, %v5259
        %v5276 = vmul.f32 %v5148, %v5260
        %v5277 = vmul.f32 %v5149, %v5261
        %v5278 = vmul.f32 %v5150, %v5262
        %v5279 = vmul.f32 %v5151, %v5263
        %v5280 = vmul.f32 %v5152, %v5264
        %v5281 = vmul.f32 %v5153, %v5265
        %v5282 = vmul.f32 %v5154, %v5266
        %v5283 = vmul.f32 %v5155, %v5267
        %v5284 = vmul.f32 %v5156, %v5268
        %v5285 = vmul.f32 %v5157, %v5269
        %v5286 = vmul.f32 %v5158, %v5270
        %v5287 = vmul.f32 %v5159, %v5271
        %v5288 = vmul.f32 %v5160, %v5272
        %v5289 = vmul.f32 %v5161, %v5273
        %v5290 = vmul.f32 %v5162, %v5274
        %v5291 = vlaneseq
        %v5292 = vshrl.u32 %v5291, 7
        %v5293 = vsub.s32 4, %v5292
        %v5294 = vrot.slane %v667, %v5293
        %v5295 = vmul.f32 %v5275, %v5294
        %v5296 = vmul.f32 %v5276, %v5294
        %v5297 = vmul.f32 %v5277, %v5294
        %v5298 = vmul.f32 %v5278, %v5294
        %v5299 = vmul.f32 %v5279, %v5294
        %v5300 = vmul.f32 %v5280, %v5294
        %v5301 = vmul.f32 %v5281, %v5294
        %v5302 = vmul.f32 %v5282, %v5294
        %v5303 = vmul.f32 %v5283, %v5294
        %v5304 = vmul.f32 %v5284, %v5294
        %v5305 = vmul.f32 %v5285, %v5294
        %v5306 = vmul.f32 %v5286, %v5294
        %v5307 = vmul.f32 %v5287, %v5294
        %v5308 = vmul.f32 %v5288, %v5294
        %v5309 = vmul.f32 %v5289, %v5294
        %v5310 = vmul.f32 %v5290, %v5294
        %v5311 = vlaneseq
        %v5312 = vshrl.u32 %v5311, 7
        %v5313 = vsub.s32 5, %v5312
        %v5314 = vrot.slane %v667, %v5313
        %v5315 = vadd.f32 %v5295, %v5314
        %v5316 = vadd.f32 %v5296, %v5314
        %v5317 = vadd.f32 %v5297, %v5314
        %v5318 = vadd.f32 %v5298, %v5314
        %v5319 = vadd.f32 %v5299, %v5314
        %v5320 = vadd.f32 %v5300, %v5314
        %v5321 = vadd.f32 %v5301, %v5314
        %v5322 = vadd.f32 %v5302, %v5314
        %v5323 = vadd.f32 %v5303, %v5314
        %v5324 = vadd.f32 %v5304, %v5314
        %v5325 = vadd.f32 %v5305, %v5314
        %v5326 = vadd.f32 %v5306, %v5314
        %v5327 = vadd.f32 %v5307, %v5314
        %v5328 = vadd.f32 %v5308, %v5314
        %v5329 = vadd.f32 %v5309, %v5314
        %v5330 = vadd.f32 %v5310, %v5314
        %5331 = vxpose.xlu0.b32.start [1/16] %v5315, 128
        %5332 = vxpose.xlu0.b32.cont [2/16] %v5316, 128
        %5333 = vxpose.xlu0.b32.cont [3/16] %v5317, 128
        %5334 = vxpose.xlu0.b32.cont [4/16] %v5318, 128
        %5335 = vxpose.xlu0.b32.cont [5/16] %v5319, 128
        %5336 = vxpose.xlu0.b32.cont [6/16] %v5320, 128
        %5337 = vxpose.xlu0.b32.cont [7/16] %v5321, 128
        %5338 = vxpose.xlu0.b32.cont [8/16] %v5322, 128
        %5339 = vxpose.xlu0.b32.cont [9/16] 0.0, 128
        %5340 = vxpose.xlu0.b32.cont [10/16] 0.0, 128
        %5341 = vxpose.xlu0.b32.cont [11/16] 0.0, 128
        %5342 = vxpose.xlu0.b32.cont [12/16] 0.0, 128
        %5343 = vxpose.xlu0.b32.cont [13/16] 0.0, 128
        %5344 = vxpose.xlu0.b32.cont [14/16] 0.0, 128
        %5345 = vxpose.xlu0.b32.cont [15/16] 0.0, 128
        %5346 = vxpose.xlu0.b32.end [16/16] 0.0, 128
        %v5347 = vpop.trf.xlu0
        %v5348 = vpop.trf.xlu0
        %v5349 = vpop.trf.xlu0
        %v5350 = vpop.trf.xlu0
        %v5351 = vpop.trf.xlu0
        %v5352 = vpop.trf.xlu0
        %v5353 = vpop.trf.xlu0
        %v5354 = vpop.trf.xlu0
        %v5355 = vpop.trf.xlu0
        %v5356 = vpop.trf.xlu0
        %v5357 = vpop.trf.xlu0
        %v5358 = vpop.trf.xlu0
        %v5359 = vpop.trf.xlu0
        %v5360 = vpop.trf.xlu0
        %v5361 = vpop.trf.xlu0
        %v5362 = vpop.trf.xlu0
        %5363 = vxpose.xlu0.b32.start [1/16] %v5323, 128
        %5364 = vxpose.xlu0.b32.cont [2/16] %v5324, 128
        %5365 = vxpose.xlu0.b32.cont [3/16] %v5325, 128
        %5366 = vxpose.xlu0.b32.cont [4/16] %v5326, 128
        %5367 = vxpose.xlu0.b32.cont [5/16] %v5327, 128
        %5368 = vxpose.xlu0.b32.cont [6/16] %v5328, 128
        %5369 = vxpose.xlu0.b32.cont [7/16] %v5329, 128
        %5370 = vxpose.xlu0.b32.cont [8/16] %v5330, 128
        %5371 = vxpose.xlu0.b32.cont [9/16] 0.0, 128
        %5372 = vxpose.xlu0.b32.cont [10/16] 0.0, 128
        %5373 = vxpose.xlu0.b32.cont [11/16] 0.0, 128
        %5374 = vxpose.xlu0.b32.cont [12/16] 0.0, 128
        %5375 = vxpose.xlu0.b32.cont [13/16] 0.0, 128
        %5376 = vxpose.xlu0.b32.cont [14/16] 0.0, 128
        %5377 = vxpose.xlu0.b32.cont [15/16] 0.0, 128
        %5378 = vxpose.xlu0.b32.end [16/16] 0.0, 128
        %v5379 = vpop.trf.xlu0
        %v5380 = vpop.trf.xlu0
        %v5381 = vpop.trf.xlu0
        %v5382 = vpop.trf.xlu0
        %v5383 = vpop.trf.xlu0
        %v5384 = vpop.trf.xlu0
        %v5385 = vpop.trf.xlu0
        %v5386 = vpop.trf.xlu0
        %v5387 = vpop.trf.xlu0
        %v5388 = vpop.trf.xlu0
        %v5389 = vpop.trf.xlu0
        %v5390 = vpop.trf.xlu0
        %v5391 = vpop.trf.xlu0
        %v5392 = vpop.trf.xlu0
        %v5393 = vpop.trf.xlu0
        %v5394 = vpop.trf.xlu0
        %v5395 = vcombine.high %v5347, 0.0
        %v5397 = vunpack.c.l.s4 1983009808
        %v5398 = vunpack.c.0.s8 %v5397
        %v5399 = vlaneseq
        %v5400 = vshrl.u32 %v5399, 7
        %v5401 = vsub.s32 %v5398, %v5400
        %v5402 = vrot.slane %v5347, %v5401
        %v5404 = vunpack.c.l.s4 1983009808
        %v5405 = vunpack.c.0.s8 %v5404
        %v5406 = vlaneseq
        %v5407 = vshrl.u32 %v5406, 7
        %v5408 = vsub.s32 %v5405, %v5407
        %v5409 = vrot.slane %v5395, %v5408
        %v5410 = vcombine.high %v5379, 0.0
        %v5412 = vunpack.c.l.s4 1983009808
        %v5413 = vunpack.c.0.s8 %v5412
        %v5414 = vlaneseq
        %v5415 = vshrl.u32 %v5414, 7
        %v5416 = vsub.s32 %v5413, %v5415
        %v5417 = vrot.slane %v5379, %v5416
        %v5419 = vunpack.c.l.s4 1983009808
        %v5420 = vunpack.c.0.s8 %v5419
        %v5421 = vlaneseq
        %v5422 = vshrl.u32 %v5421, 7
        %v5423 = vsub.s32 %v5420, %v5422
        %v5424 = vrot.slane %v5410, %v5423
        %v5425 = vcombine.low %v5402, %v5417
        %v5426 = vcombine.high %v5402, %v5417
        %v5428 = vunpack.c.l.s4 1934713408
        %v5429 = vunpack.c.0.s8 %v5428
        %v5430 = vlaneseq
        %v5431 = vshrl.u32 %v5430, 7
        %v5432 = vsub.s32 %v5429, %v5431
        %v5433 = vrot.slane %v5425, %v5432
        %v5435 = vunpack.c.l.s4 1934713408
        %v5436 = vunpack.c.0.s8 %v5435
        %v5437 = vlaneseq
        %v5438 = vshrl.u32 %v5437, 7
        %v5439 = vsub.s32 %v5436, %v5438
        %v5440 = vrot.slane %v5426, %v5439
        %v5441 = vcombine.low %v5409, %v5424
        %v5442 = vcombine.high %v5409, %v5424
        %v5444 = vunpack.c.l.s4 1934713408
        %v5445 = vunpack.c.0.s8 %v5444
        %v5446 = vlaneseq
        %v5447 = vshrl.u32 %v5446, 7
        %v5448 = vsub.s32 %v5445, %v5447
        %v5449 = vrot.slane %v5441, %v5448
        %v5451 = vunpack.c.l.s4 1934713408
        %v5452 = vunpack.c.0.s8 %v5451
        %v5453 = vlaneseq
        %v5454 = vshrl.u32 %v5453, 7
        %v5455 = vsub.s32 %v5452, %v5454
        %v5456 = vrot.slane %v5442, %v5455
        %v5457 = vcombine.high %v5433, 0.0
        %v5458 = vcombine.high %v5440, 0.0
        %v5459 = vcombine.high %v5449, 0.0
        %v5460 = vcombine.high %v5456, 0.0
        %v5461 = vcombine.high %v5348, 0.0
        %v5463 = vunpack.c.l.s4 1983009808
        %v5464 = vunpack.c.0.s8 %v5463
        %v5465 = vlaneseq
        %v5466 = vshrl.u32 %v5465, 7
        %v5467 = vsub.s32 %v5464, %v5466
        %v5468 = vrot.slane %v5348, %v5467
        %v5470 = vunpack.c.l.s4 1983009808
        %v5471 = vunpack.c.0.s8 %v5470
        %v5472 = vlaneseq
        %v5473 = vshrl.u32 %v5472, 7
        %v5474 = vsub.s32 %v5471, %v5473
        %v5475 = vrot.slane %v5461, %v5474
        %v5476 = vcombine.high %v5380, 0.0
        %v5478 = vunpack.c.l.s4 1983009808
        %v5479 = vunpack.c.0.s8 %v5478
        %v5480 = vlaneseq
        %v5481 = vshrl.u32 %v5480, 7
        %v5482 = vsub.s32 %v5479, %v5481
        %v5483 = vrot.slane %v5380, %v5482
        %v5485 = vunpack.c.l.s4 1983009808
        %v5486 = vunpack.c.0.s8 %v5485
        %v5487 = vlaneseq
        %v5488 = vshrl.u32 %v5487, 7
        %v5489 = vsub.s32 %v5486, %v5488
        %v5490 = vrot.slane %v5476, %v5489
        %v5491 = vcombine.low %v5468, %v5483
        %v5492 = vcombine.high %v5468, %v5483
        %v5494 = vunpack.c.l.s4 1934713408
        %v5495 = vunpack.c.0.s8 %v5494
        %v5496 = vlaneseq
        %v5497 = vshrl.u32 %v5496, 7
        %v5498 = vsub.s32 %v5495, %v5497
        %v5499 = vrot.slane %v5491, %v5498
        %v5501 = vunpack.c.l.s4 1934713408
        %v5502 = vunpack.c.0.s8 %v5501
        %v5503 = vlaneseq
        %v5504 = vshrl.u32 %v5503, 7
        %v5505 = vsub.s32 %v5502, %v5504
        %v5506 = vrot.slane %v5492, %v5505
        %v5507 = vcombine.low %v5475, %v5490
        %v5508 = vcombine.high %v5475, %v5490
        %v5510 = vunpack.c.l.s4 1934713408
        %v5511 = vunpack.c.0.s8 %v5510
        %v5512 = vlaneseq
        %v5513 = vshrl.u32 %v5512, 7
        %v5514 = vsub.s32 %v5511, %v5513
        %v5515 = vrot.slane %v5507, %v5514
        %v5517 = vunpack.c.l.s4 1934713408
        %v5518 = vunpack.c.0.s8 %v5517
        %v5519 = vlaneseq
        %v5520 = vshrl.u32 %v5519, 7
        %v5521 = vsub.s32 %v5518, %v5520
        %v5522 = vrot.slane %v5508, %v5521
        %v5523 = vcombine.high %v5499, 0.0
        %v5524 = vcombine.high %v5506, 0.0
        %v5525 = vcombine.high %v5515, 0.0
        %v5526 = vcombine.high %v5522, 0.0
        %v5527 = vcombine.high %v5349, 0.0
        %v5529 = vunpack.c.l.s4 1983009808
        %v5530 = vunpack.c.0.s8 %v5529
        %v5531 = vlaneseq
        %v5532 = vshrl.u32 %v5531, 7
        %v5533 = vsub.s32 %v5530, %v5532
        %v5534 = vrot.slane %v5349, %v5533
        %v5536 = vunpack.c.l.s4 1983009808
        %v5537 = vunpack.c.0.s8 %v5536
        %v5538 = vlaneseq
        %v5539 = vshrl.u32 %v5538, 7
        %v5540 = vsub.s32 %v5537, %v5539
        %v5541 = vrot.slane %v5527, %v5540
        %v5542 = vcombine.high %v5381, 0.0
        %v5544 = vunpack.c.l.s4 1983009808
        %v5545 = vunpack.c.0.s8 %v5544
        %v5546 = vlaneseq
        %v5547 = vshrl.u32 %v5546, 7
        %v5548 = vsub.s32 %v5545, %v5547
        %v5549 = vrot.slane %v5381, %v5548
        %v5551 = vunpack.c.l.s4 1983009808
        %v5552 = vunpack.c.0.s8 %v5551
        %v5553 = vlaneseq
        %v5554 = vshrl.u32 %v5553, 7
        %v5555 = vsub.s32 %v5552, %v5554
        %v5556 = vrot.slane %v5542, %v5555
        %v5557 = vcombine.low %v5534, %v5549
        %v5558 = vcombine.high %v5534, %v5549
        %v5560 = vunpack.c.l.s4 1934713408
        %v5561 = vunpack.c.0.s8 %v5560
        %v5562 = vlaneseq
        %v5563 = vshrl.u32 %v5562, 7
        %v5564 = vsub.s32 %v5561, %v5563
        %v5565 = vrot.slane %v5557, %v5564
        %v5567 = vunpack.c.l.s4 1934713408
        %v5568 = vunpack.c.0.s8 %v5567
        %v5569 = vlaneseq
        %v5570 = vshrl.u32 %v5569, 7
        %v5571 = vsub.s32 %v5568, %v5570
        %v5572 = vrot.slane %v5558, %v5571
        %v5573 = vcombine.low %v5541, %v5556
        %v5574 = vcombine.high %v5541, %v5556
        %v5576 = vunpack.c.l.s4 1934713408
        %v5577 = vunpack.c.0.s8 %v5576
        %v5578 = vlaneseq
        %v5579 = vshrl.u32 %v5578, 7
        %v5580 = vsub.s32 %v5577, %v5579
        %v5581 = vrot.slane %v5573, %v5580
        %v5583 = vunpack.c.l.s4 1934713408
        %v5584 = vunpack.c.0.s8 %v5583
        %v5585 = vlaneseq
        %v5586 = vshrl.u32 %v5585, 7
        %v5587 = vsub.s32 %v5584, %v5586
        %v5588 = vrot.slane %v5574, %v5587
        %v5589 = vcombine.high %v5565, 0.0
        %v5590 = vcombine.high %v5572, 0.0
        %v5591 = vcombine.high %v5581, 0.0
        %v5592 = vcombine.high %v5588, 0.0
        %v5593 = vcombine.high %v5350, 0.0
        %v5595 = vunpack.c.l.s4 1983009808
        %v5596 = vunpack.c.0.s8 %v5595
        %v5597 = vlaneseq
        %v5598 = vshrl.u32 %v5597, 7
        %v5599 = vsub.s32 %v5596, %v5598
        %v5600 = vrot.slane %v5350, %v5599
        %v5602 = vunpack.c.l.s4 1983009808
        %v5603 = vunpack.c.0.s8 %v5602
        %v5604 = vlaneseq
        %v5605 = vshrl.u32 %v5604, 7
        %v5606 = vsub.s32 %v5603, %v5605
        %v5607 = vrot.slane %v5593, %v5606
        %v5608 = vcombine.high %v5382, 0.0
        %v5610 = vunpack.c.l.s4 1983009808
        %v5611 = vunpack.c.0.s8 %v5610
        %v5612 = vlaneseq
        %v5613 = vshrl.u32 %v5612, 7
        %v5614 = vsub.s32 %v5611, %v5613
        %v5615 = vrot.slane %v5382, %v5614
        %v5617 = vunpack.c.l.s4 1983009808
        %v5618 = vunpack.c.0.s8 %v5617
        %v5619 = vlaneseq
        %v5620 = vshrl.u32 %v5619, 7
        %v5621 = vsub.s32 %v5618, %v5620
        %v5622 = vrot.slane %v5608, %v5621
        %v5623 = vcombine.low %v5600, %v5615
        %v5624 = vcombine.high %v5600, %v5615
        %v5626 = vunpack.c.l.s4 1934713408
        %v5627 = vunpack.c.0.s8 %v5626
        %v5628 = vlaneseq
        %v5629 = vshrl.u32 %v5628, 7
        %v5630 = vsub.s32 %v5627, %v5629
        %v5631 = vrot.slane %v5623, %v5630
        %v5633 = vunpack.c.l.s4 1934713408
        %v5634 = vunpack.c.0.s8 %v5633
        %v5635 = vlaneseq
        %v5636 = vshrl.u32 %v5635, 7
        %v5637 = vsub.s32 %v5634, %v5636
        %v5638 = vrot.slane %v5624, %v5637
        %v5639 = vcombine.low %v5607, %v5622
        %v5640 = vcombine.high %v5607, %v5622
        %v5642 = vunpack.c.l.s4 1934713408
        %v5643 = vunpack.c.0.s8 %v5642
        %v5644 = vlaneseq
        %v5645 = vshrl.u32 %v5644, 7
        %v5646 = vsub.s32 %v5643, %v5645
        %v5647 = vrot.slane %v5639, %v5646
        %v5649 = vunpack.c.l.s4 1934713408
        %v5650 = vunpack.c.0.s8 %v5649
        %v5651 = vlaneseq
        %v5652 = vshrl.u32 %v5651, 7
        %v5653 = vsub.s32 %v5650, %v5652
        %v5654 = vrot.slane %v5640, %v5653
        %v5655 = vcombine.high %v5631, 0.0
        %v5656 = vcombine.high %v5638, 0.0
        %v5657 = vcombine.high %v5647, 0.0
        %v5658 = vcombine.high %v5654, 0.0
        %5660 = vrot.lane.b32.xlu0 %v5457, 64
        %v5661 = vpop.permute.xlu0 %5660
        %5664 = vrot.lane.b32.xlu0 %v5458, 64
        %v5665 = vpop.permute.xlu0 %5664
        %5668 = vrot.lane.b32.xlu0 %v5459, 64
        %v5669 = vpop.permute.xlu0 %5668
        %5672 = vrot.lane.b32.xlu0 %v5460, 64
        %v5673 = vpop.permute.xlu0 %5672
        %5676 = vrot.lane.b32.xlu0 %v5523, 64
        %v5677 = vpop.permute.xlu0 %5676
        %5680 = vrot.lane.b32.xlu0 %v5524, 64
        %v5681 = vpop.permute.xlu0 %5680
        %5684 = vrot.lane.b32.xlu0 %v5525, 64
        %v5685 = vpop.permute.xlu0 %5684
        %5688 = vrot.lane.b32.xlu0 %v5526, 64
        %v5689 = vpop.permute.xlu0 %5688
        %5692 = vrot.lane.b32.xlu0 %v5589, 64
        %v5693 = vpop.permute.xlu0 %5692
        %5696 = vrot.lane.b32.xlu0 %v5590, 64
        %v5697 = vpop.permute.xlu0 %5696
        %5700 = vrot.lane.b32.xlu0 %v5591, 64
        %v5701 = vpop.permute.xlu0 %5700
        %5704 = vrot.lane.b32.xlu0 %v5592, 64
        %v5705 = vpop.permute.xlu0 %5704
        %5708 = vrot.lane.b32.xlu0 %v5655, 64
        %v5709 = vpop.permute.xlu0 %5708
        %5712 = vrot.lane.b32.xlu0 %v5656, 64
        %v5713 = vpop.permute.xlu0 %5712
        %5716 = vrot.lane.b32.xlu0 %v5657, 64
        %v5717 = vpop.permute.xlu0 %5716
        %5720 = vrot.lane.b32.xlu0 %v5658, 64
        %v5721 = vpop.permute.xlu0 %5720
        %v5723 = vsel %vm991, %v5433, %v5661
        %v5724 = vsel %vm991, %v5440, %v5665
        %v5725 = vsel %vm991, %v5449, %v5669
        %v5726 = vsel %vm991, %v5456, %v5673
        %v5727 = vsel %vm991, %v5499, %v5677
        %v5728 = vsel %vm991, %v5506, %v5681
        %v5729 = vsel %vm991, %v5515, %v5685
        %v5730 = vsel %vm991, %v5522, %v5689
        %v5731 = vsel %vm991, %v5565, %v5693
        %v5732 = vsel %vm991, %v5572, %v5697
        %v5733 = vsel %vm991, %v5581, %v5701
        %v5734 = vsel %vm991, %v5588, %v5705
        %v5735 = vsel %vm991, %v5631, %v5709
        %v5736 = vsel %vm991, %v5638, %v5713
        %v5737 = vsel %vm991, %v5647, %v5717
        %v5738 = vsel %vm991, %v5654, %v5721
        %v5755 = vcombine.low %v5723, %v5724
        %v5756 = vcombine.low %v5725, %v5726
        %v5758 = vunpack.c.l.s4 1983009808
        %v5759 = vunpack.c.0.s8 %v5758
        %v5760 = vlaneseq
        %v5761 = vshrl.u32 %v5760, 7
        %v5762 = vsub.s32 %v5759, %v5761
        %v5763 = vrot.slane %v5755, %v5762
        %v5765 = vunpack.c.l.s4 1983009808
        %v5766 = vunpack.c.0.s8 %v5765
        %v5767 = vlaneseq
        %v5768 = vshrl.u32 %v5767, 7
        %v5769 = vsub.s32 %v5766, %v5768
        %v5770 = vrot.slane %v5756, %v5769
        %v5771 = vcombine.low %v5763, %v5770
        %v5772 = vcombine.low %v5727, %v5728
        %v5773 = vcombine.low %v5729, %v5730
        %v5775 = vunpack.c.l.s4 1983009808
        %v5776 = vunpack.c.0.s8 %v5775
        %v5777 = vlaneseq
        %v5778 = vshrl.u32 %v5777, 7
        %v5779 = vsub.s32 %v5776, %v5778
        %v5780 = vrot.slane %v5772, %v5779
        %v5782 = vunpack.c.l.s4 1983009808
        %v5783 = vunpack.c.0.s8 %v5782
        %v5784 = vlaneseq
        %v5785 = vshrl.u32 %v5784, 7
        %v5786 = vsub.s32 %v5783, %v5785
        %v5787 = vrot.slane %v5773, %v5786
        %v5788 = vcombine.low %v5780, %v5787
        %v5789 = vcombine.low %v5731, %v5732
        %v5790 = vcombine.low %v5733, %v5734
        %v5792 = vunpack.c.l.s4 1983009808
        %v5793 = vunpack.c.0.s8 %v5792
        %v5794 = vlaneseq
        %v5795 = vshrl.u32 %v5794, 7
        %v5796 = vsub.s32 %v5793, %v5795
        %v5797 = vrot.slane %v5789, %v5796
        %v5799 = vunpack.c.l.s4 1983009808
        %v5800 = vunpack.c.0.s8 %v5799
        %v5801 = vlaneseq
        %v5802 = vshrl.u32 %v5801, 7
        %v5803 = vsub.s32 %v5800, %v5802
        %v5804 = vrot.slane %v5790, %v5803
        %v5805 = vcombine.low %v5797, %v5804
        %v5806 = vcombine.low %v5735, %v5736
        %v5807 = vcombine.low %v5737, %v5738
        %v5809 = vunpack.c.l.s4 1983009808
        %v5810 = vunpack.c.0.s8 %v5809
        %v5811 = vlaneseq
        %v5812 = vshrl.u32 %v5811, 7
        %v5813 = vsub.s32 %v5810, %v5812
        %v5814 = vrot.slane %v5806, %v5813
        %v5816 = vunpack.c.l.s4 1983009808
        %v5817 = vunpack.c.0.s8 %v5816
        %v5818 = vlaneseq
        %v5819 = vshrl.u32 %v5818, 7
        %v5820 = vsub.s32 %v5817, %v5819
        %v5821 = vrot.slane %v5807, %v5820
        %v5822 = vcombine.low %v5814, %v5821
        %5827 = vst [vmem:[%s358] sm:$0xff] %v5771
        %5828 = vst [vmem:[%s358 + $0x8] sm:$0xff] %v5788
        %5829 = vst [vmem:[%s358 + $0x10] sm:$0xff] %v5805
        %5830 = vst [vmem:[%s358 + $0x18] sm:$0xff] %v5822
        %s5831 = sand.u32 %s227, 1
        %s5832 = scalar_lea.sflag [#allocation4], %s5831
        %s5833 = sand.u32 %s227, 1
        %s5834 = smul.addr %s5833, 32
        %s5835 = scalar_lea.vmem [#allocation7], %s5834
        // Predicated region
        $region65: #{tpu_custom_call.1} parent=55 // pred_check
          %p5836 = pneg %p237
        $region66: #{tpu_custom_call.1} parent=55 // pred_check_branch
          %5838 = sbr.rel (%p5836) target = $region68
        $region67: #{tpu_custom_call.1} parent=55 // pred_region
          %s5840 = ssub.s32 512, 512
          %5841 = vsyncadd %s5832, %s5840
          %s5842 = smul.addr %s25, 16
          %s5843 = smul.addr %s5842, 32
          %s5844 = scalar_lea.hbm %s9, %s5843
          %s5846 = sshll.u32 %s5835, 4
          %s5847 = int_to_ptr.vmem [resolvable:$true] %s5846
          %5849 = dma.vmem_to_hbm [thread:$0]  %s5847, 512, %s5844, %s5832
        $region68: #{tpu_custom_call.1} parent=55 // pred_fallthru
          _
      $region56: #{tpu_custom_call.1} parent=5 // pred_fallthru
        _
      %p5850 = scmp.le.s32.totalorder 2, %s20
      // Predicated region
      $region69: #{tpu_custom_call.1} parent=5 // pred_check
        %p5851 = pneg %p5850
      $region70: #{tpu_custom_call.1} parent=5 // pred_check_branch
        %5853 = sbr.rel (%p5851) target = $region72
      $region71: #{tpu_custom_call.1} parent=5 // pred_region
        %s5854 = ssub.s32 %s20, 2
        // Predicated region
        $region73: #{tpu_custom_call.1} parent=71 // pred_check
          %p5855 = pneg %p243
        $region74: #{tpu_custom_call.1} parent=71 // pred_check_branch
          %5857 = sbr.rel (%p5855) target = $region76
        $region75: #{tpu_custom_call.1} parent=71 // pred_region
          %s5858 = sand.u32 %s228, 1
          %s5859 = scalar_lea.sflag [#allocation4], %s5858
          %s5860 = sand.u32 %s228, 1
          %s5861 = smul.addr %s5860, 32
          %s5862 = scalar_lea.vmem [#allocation7], %s5861
          %5863 = dma.done %s5859, 512
        $region76: #{tpu_custom_call.1} parent=71 // pred_fallthru
          _
      $region72: #{tpu_custom_call.1} parent=5 // pred_fallthru
        _
    $region6: #{tpu_custom_call.1} parent=1 // loop_footer
      %s24 = sadd.s32 1, %s20
    $region7: #{tpu_custom_call.1} parent=1 // loop_footer_branch
      %19 = sbr.rel target = $region3
    $region8: #{tpu_custom_call.1} parent=1 // loop_exit
      _
    %5864 = vsyncpa [#allocation3], 1
    %s5865 = scalar_lea.sflag [#allocation3], 1
    %5866 = vsyncpa %s5865, 1
    %5867 = vsyncpa [#allocation6], 1
    %5868 = vsyncpa [#allocation4], 1
    %s5869 = scalar_lea.sflag [#allocation4], 1
    %5870 = vsyncpa %s5869, 1

// kernel: tpu_custom_call.1
$region0: #{tpu_custom_call.1}
  #allocation0 [shape = 'u32[]', space=smem, size = 0x4, offset = 0x4, fixed_abs, tag = 'smem constant byte address 0x4 - core index']
  #allocation1 [shape = 'u32[144,128]{1,0:T(1,128)}', space=vmem, size = 0x12000, scoped, tag = 'internal scratch']
  %s0 = inlined_call_operand.vmem [shape: f32[4,64,32], index: 0, kind: input, shape index: {}]
  %s1 = inlined_call_operand.vmem [shape: f32[64,32], index: 1, kind: input, shape index: {}]
  %s2 = inlined_call_operand.vmem [shape: f32[32,96], index: 2, kind: input, shape index: {}]
  %s3 = inlined_call_operand.vmem [shape: f32[1,96], index: 3, kind: input, shape index: {}]
  %s4 = inlined_call_operand.vmem [shape: f32[32,32], index: 4, kind: input, shape index: {}]
  %s5 = inlined_call_operand.vmem [shape: f32[32,64], index: 5, kind: input, shape index: {}]
  %s6 = inlined_call_operand.vmem [shape: f32[1,64], index: 6, kind: input, shape index: {}]
  %s7 = inlined_call_operand.vmem [shape: f32[64,32], index: 7, kind: input, shape index: {}]
  %s8 = inlined_call_operand.vmem [shape: f32[6,32], index: 8, kind: input, shape index: {}]
  %s9 = inlined_call_operand.vmem [shape: f32[4,64,32], index: 9, kind: output, shape index: {}]
  %s10 = sld [smem:[#allocation0]]
  $region69: #{tpu_custom_call.1} parent=0
    _
  %s12 = ssub.s32 1, %s10
  %s13 = scalar_select 0, %s12, %s10
  loop: start=0, step=1, limit=4
  $region2: #{tpu_custom_call.1} parent=0 // loop_pre_header
    _
  $region3: #{tpu_custom_call.1} parent=0 // loop_header
    %s15 = sphi 0, %s19
    %p16 = scmp.ge.s32.totalorder %s15, 4
    %s25 = sphi 0, %s27
    %s28 = sphi 0, %s25
    %s29 = sphi 0, %s28
    %s45 = sphi 0, %s29
    %s49 = sphi 0, %s49
    %s51 = sphi 0, %s49
    %s52 = sphi 0, %s51
    %s66 = sphi 0, %s52
    %s70 = sphi 0, %s70
    %s72 = sphi 0, %s70
    %s73 = sphi 0, %s72
    %s87 = sphi 0, %s73
    %s91 = sphi 0, %s91
    %s93 = sphi 0, %s91
    %s94 = sphi 0, %s93
    %s108 = sphi 0, %s94
    %s112 = sphi 0, %s112
    %s114 = sphi 0, %s112
    %s115 = sphi 0, %s114
    %s129 = sphi 0, %s115
    %s133 = sphi 0, %s133
    %s135 = sphi 0, %s133
    %s136 = sphi 0, %s135
    %s150 = sphi 0, %s136
    %s154 = sphi 0, %s154
    %s156 = sphi 0, %s154
    %s157 = sphi 0, %s156
    %s171 = sphi 0, %s157
    %s175 = sphi 0, %s175
    %s177 = sphi 0, %s175
    %s178 = sphi 0, %s177
    %s192 = sphi 0, %s178
    %s196 = sphi 0, %s196
    %s198 = sphi 0, %s196
    %s199 = sphi 0, %s198
    %s213 = sphi 0, %s199
    %s219 = sphi 0, %s221
    %s222 = sphi 0, %s219
    %s223 = sphi 0, %s222
    %s239 = sphi 0, %s223
  $region4: #{tpu_custom_call.1} parent=0 // loop_header_branch
    %18 = sbr.rel (%p16) target = $region8
  $region5: #{tpu_custom_call.1} parent=0 // loop_body
    %s20 = ssub.s32 %s15, 1
    %s21 = ssub.s32 %s15, 2
    %s22 = sadd.s32 %s15, 1
    %s23 = ssub.s32 %s15, %s22
    %p24 = scmp.eq.s32.totalorder %s23, 0
    %s26 = sadd.s32 %s25, 1
    %s27 = scalar_select %p24, %s25, %s26
    %p30 = pneg %p24
    %p31 = scmp.eq.s32.totalorder %s15, 1
    %p32 = por %p30, %p31
    %p33 = scmp.ne.s32.totalorder %s25, %s28
    %p34 = scmp.eq.s32.totalorder %s15, 0
    %p35 = por %p33, %p34
    %p36 = scmp.ne.s32.totalorder %s25, %s28
    %p37 = scmp.eq.s32.totalorder %s20, 1
    %p38 = por %p36, %p37
    %p39 = scmp.ne.s32.totalorder %s28, %s29
    %p40 = scmp.eq.s32.totalorder %s20, 0
    %p41 = por %p39, %p40
    %p42 = scmp.ne.s32.totalorder %s28, %s29
    %p43 = scmp.eq.s32.totalorder %s21, 1
    %p44 = por %p42, %p43
    %p46 = scmp.ne.s32.totalorder %s29, %s45
    %p47 = scmp.eq.s32.totalorder %s21, 0
    %p48 = por %p46, %p47
    %s50 = sadd.s32 %s49, 1
    %p53 = scmp.eq.s32.totalorder %s15, 1
    %p54 = scmp.ne.s32.totalorder %s49, %s51
    %p55 = scmp.eq.s32.totalorder %s15, 0
    %p56 = por %p54, %p55
    %p57 = scmp.ne.s32.totalorder %s49, %s51
    %p58 = scmp.eq.s32.totalorder %s20, 1
    %p59 = por %p57, %p58
    %p60 = scmp.ne.s32.totalorder %s51, %s52
    %p61 = scmp.eq.s32.totalorder %s20, 0
    %p62 = por %p60, %p61
    %p63 = scmp.ne.s32.totalorder %s51, %s52
    %p64 = scmp.eq.s32.totalorder %s21, 1
    %p65 = por %p63, %p64
    %p67 = scmp.ne.s32.totalorder %s52, %s66
    %p68 = scmp.eq.s32.totalorder %s21, 0
    %p69 = por %p67, %p68
    %s71 = sadd.s32 %s70, 1
    %p74 = scmp.eq.s32.totalorder %s15, 1
    %p75 = scmp.ne.s32.totalorder %s70, %s72
    %p76 = scmp.eq.s32.totalorder %s15, 0
    %p77 = por %p75, %p76
    %p78 = scmp.ne.s32.totalorder %s70, %s72
    %p79 = scmp.eq.s32.totalorder %s20, 1
    %p80 = por %p78, %p79
    %p81 = scmp.ne.s32.totalorder %s72, %s73
    %p82 = scmp.eq.s32.totalorder %s20, 0
    %p83 = por %p81, %p82
    %p84 = scmp.ne.s32.totalorder %s72, %s73
    %p85 = scmp.eq.s32.totalorder %s21, 1
    %p86 = por %p84, %p85
    %p88 = scmp.ne.s32.totalorder %s73, %s87
    %p89 = scmp.eq.s32.totalorder %s21, 0
    %p90 = por %p88, %p89
    %s92 = sadd.s32 %s91, 1
    %p95 = scmp.eq.s32.totalorder %s15, 1
    %p96 = scmp.ne.s32.totalorder %s91, %s93
    %p97 = scmp.eq.s32.totalorder %s15, 0
    %p98 = por %p96, %p97
    %p99 = scmp.ne.s32.totalorder %s91, %s93
    %p100 = scmp.eq.s32.totalorder %s20, 1
    %p101 = por %p99, %p100
    %p102 = scmp.ne.s32.totalorder %s93, %s94
    %p103 = scmp.eq.s32.totalorder %s20, 0
    %p104 = por %p102, %p103
    %p105 = scmp.ne.s32.totalorder %s93, %s94
    %p106 = scmp.eq.s32.totalorder %s21, 1
    %p107 = por %p105, %p106
    %p109 = scmp.ne.s32.totalorder %s94, %s108
    %p110 = scmp.eq.s32.totalorder %s21, 0
    %p111 = por %p109, %p110
    %s113 = sadd.s32 %s112, 1
    %p116 = scmp.eq.s32.totalorder %s15, 1
    %p117 = scmp.ne.s32.totalorder %s112, %s114
    %p118 = scmp.eq.s32.totalorder %s15, 0
    %p119 = por %p117, %p118
    %p120 = scmp.ne.s32.totalorder %s112, %s114
    %p121 = scmp.eq.s32.totalorder %s20, 1
    %p122 = por %p120, %p121
    %p123 = scmp.ne.s32.totalorder %s114, %s115
    %p124 = scmp.eq.s32.totalorder %s20, 0
    %p125 = por %p123, %p124
    %p126 = scmp.ne.s32.totalorder %s114, %s115
    %p127 = scmp.eq.s32.totalorder %s21, 1
    %p128 = por %p126, %p127
    %p130 = scmp.ne.s32.totalorder %s115, %s129
    %p131 = scmp.eq.s32.totalorder %s21, 0
    %p132 = por %p130, %p131
    %s134 = sadd.s32 %s133, 1
    %p137 = scmp.eq.s32.totalorder %s15, 1
    %p138 = scmp.ne.s32.totalorder %s133, %s135
    %p139 = scmp.eq.s32.totalorder %s15, 0
    %p140 = por %p138, %p139
    %p141 = scmp.ne.s32.totalorder %s133, %s135
    %p142 = scmp.eq.s32.totalorder %s20, 1
    %p143 = por %p141, %p142
    %p144 = scmp.ne.s32.totalorder %s135, %s136
    %p145 = scmp.eq.s32.totalorder %s20, 0
    %p146 = por %p144, %p145
    %p147 = scmp.ne.s32.totalorder %s135, %s136
    %p148 = scmp.eq.s32.totalorder %s21, 1
    %p149 = por %p147, %p148
    %p151 = scmp.ne.s32.totalorder %s136, %s150
    %p152 = scmp.eq.s32.totalorder %s21, 0
    %p153 = por %p151, %p152
    %s155 = sadd.s32 %s154, 1
    %p158 = scmp.eq.s32.totalorder %s15, 1
    %p159 = scmp.ne.s32.totalorder %s154, %s156
    %p160 = scmp.eq.s32.totalorder %s15, 0
    %p161 = por %p159, %p160
    %p162 = scmp.ne.s32.totalorder %s154, %s156
    %p163 = scmp.eq.s32.totalorder %s20, 1
    %p164 = por %p162, %p163
    %p165 = scmp.ne.s32.totalorder %s156, %s157
    %p166 = scmp.eq.s32.totalorder %s20, 0
    %p167 = por %p165, %p166
    %p168 = scmp.ne.s32.totalorder %s156, %s157
    %p169 = scmp.eq.s32.totalorder %s21, 1
    %p170 = por %p168, %p169
    %p172 = scmp.ne.s32.totalorder %s157, %s171
    %p173 = scmp.eq.s32.totalorder %s21, 0
    %p174 = por %p172, %p173
    %s176 = sadd.s32 %s175, 1
    %p179 = scmp.eq.s32.totalorder %s15, 1
    %p180 = scmp.ne.s32.totalorder %s175, %s177
    %p181 = scmp.eq.s32.totalorder %s15, 0
    %p182 = por %p180, %p181
    %p183 = scmp.ne.s32.totalorder %s175, %s177
    %p184 = scmp.eq.s32.totalorder %s20, 1
    %p185 = por %p183, %p184
    %p186 = scmp.ne.s32.totalorder %s177, %s178
    %p187 = scmp.eq.s32.totalorder %s20, 0
    %p188 = por %p186, %p187
    %p189 = scmp.ne.s32.totalorder %s177, %s178
    %p190 = scmp.eq.s32.totalorder %s21, 1
    %p191 = por %p189, %p190
    %p193 = scmp.ne.s32.totalorder %s178, %s192
    %p194 = scmp.eq.s32.totalorder %s21, 0
    %p195 = por %p193, %p194
    %s197 = sadd.s32 %s196, 1
    %p200 = scmp.eq.s32.totalorder %s15, 1
    %p201 = scmp.ne.s32.totalorder %s196, %s198
    %p202 = scmp.eq.s32.totalorder %s15, 0
    %p203 = por %p201, %p202
    %p204 = scmp.ne.s32.totalorder %s196, %s198
    %p205 = scmp.eq.s32.totalorder %s20, 1
    %p206 = por %p204, %p205
    %p207 = scmp.ne.s32.totalorder %s198, %s199
    %p208 = scmp.eq.s32.totalorder %s20, 0
    %p209 = por %p207, %p208
    %p210 = scmp.ne.s32.totalorder %s198, %s199
    %p211 = scmp.eq.s32.totalorder %s21, 1
    %p212 = por %p210, %p211
    %p214 = scmp.ne.s32.totalorder %s199, %s213
    %p215 = scmp.eq.s32.totalorder %s21, 0
    %p216 = por %p214, %p215
    %s217 = ssub.s32 %s15, %s22
    %p218 = scmp.eq.s32.totalorder %s217, 0
    %s220 = sadd.s32 %s219, 1
    %s221 = scalar_select %p218, %s219, %s220
    %p224 = pneg %p218
    %p225 = scmp.eq.s32.totalorder %s15, 1
    %p226 = por %p224, %p225
    %p227 = scmp.ne.s32.totalorder %s219, %s222
    %p228 = scmp.eq.s32.totalorder %s15, 0
    %p229 = por %p227, %p228
    %p230 = scmp.ne.s32.totalorder %s219, %s222
    %p231 = scmp.eq.s32.totalorder %s20, 1
    %p232 = por %p230, %p231
    %p233 = scmp.ne.s32.totalorder %s222, %s223
    %p234 = scmp.eq.s32.totalorder %s20, 0
    %p235 = por %p233, %p234
    %p236 = scmp.ne.s32.totalorder %s222, %s223
    %p237 = scmp.eq.s32.totalorder %s21, 1
    %p238 = por %p236, %p237
    %p240 = scmp.ne.s32.totalorder %s223, %s239
    %p241 = scmp.eq.s32.totalorder %s21, 0
    %p242 = por %p240, %p241
    %p243 = scmp.le.s32.totalorder 1, %s15
    %p244 = scmp.lt.s32.totalorder %s15, 3
    %p245 = pnand %p243, %p244
    %p246 = pneg %p245
    // Predicated region
    $region9: #{tpu_custom_call.1} parent=5 // pred_check
      _
    $region10: #{tpu_custom_call.1} parent=5 // pred_check_branch
      %248 = sbr.rel (%p245) target = $region12
    $region11: #{tpu_custom_call.1} parent=5 // pred_region
      %s249 = ssub.s32 %s15, 1
      // Predicated region
      $region13: #{tpu_custom_call.1} parent=11 // pred_check
        %p250 = pneg %p62
      $region14: #{tpu_custom_call.1} parent=11 // pred_check_branch
        %252 = sbr.rel (%p250) target = $region16
      $region15: #{tpu_custom_call.1} parent=11 // pred_region
        _
      $region16: #{tpu_custom_call.1} parent=11 // pred_fallthru
        _
      // Predicated region
      $region17: #{tpu_custom_call.1} parent=11 // pred_check
        %p253 = pneg %p83
      $region18: #{tpu_custom_call.1} parent=11 // pred_check_branch
        %255 = sbr.rel (%p253) target = $region20
      $region19: #{tpu_custom_call.1} parent=11 // pred_region
        _
      $region20: #{tpu_custom_call.1} parent=11 // pred_fallthru
        _
      // Predicated region
      $region21: #{tpu_custom_call.1} parent=11 // pred_check
        %p256 = pneg %p104
      $region22: #{tpu_custom_call.1} parent=11 // pred_check_branch
        %258 = sbr.rel (%p256) target = $region24
      $region23: #{tpu_custom_call.1} parent=11 // pred_region
        _
      $region24: #{tpu_custom_call.1} parent=11 // pred_fallthru
        _
      // Predicated region
      $region25: #{tpu_custom_call.1} parent=11 // pred_check
        %p259 = pneg %p125
      $region26: #{tpu_custom_call.1} parent=11 // pred_check_branch
        %261 = sbr.rel (%p259) target = $region28
      $region27: #{tpu_custom_call.1} parent=11 // pred_region
        _
      $region28: #{tpu_custom_call.1} parent=11 // pred_fallthru
        _
      // Predicated region
      $region29: #{tpu_custom_call.1} parent=11 // pred_check
        %p262 = pneg %p146
      $region30: #{tpu_custom_call.1} parent=11 // pred_check_branch
        %264 = sbr.rel (%p262) target = $region32
      $region31: #{tpu_custom_call.1} parent=11 // pred_region
        _
      $region32: #{tpu_custom_call.1} parent=11 // pred_fallthru
        _
      // Predicated region
      $region33: #{tpu_custom_call.1} parent=11 // pred_check
        %p265 = pneg %p167
      $region34: #{tpu_custom_call.1} parent=11 // pred_check_branch
        %267 = sbr.rel (%p265) target = $region36
      $region35: #{tpu_custom_call.1} parent=11 // pred_region
        _
      $region36: #{tpu_custom_call.1} parent=11 // pred_fallthru
        _
      // Predicated region
      $region37: #{tpu_custom_call.1} parent=11 // pred_check
        %p268 = pneg %p188
      $region38: #{tpu_custom_call.1} parent=11 // pred_check_branch
        %270 = sbr.rel (%p268) target = $region40
      $region39: #{tpu_custom_call.1} parent=11 // pred_region
        _
      $region40: #{tpu_custom_call.1} parent=11 // pred_fallthru
        _
      // Predicated region
      $region41: #{tpu_custom_call.1} parent=11 // pred_check
        %p271 = pneg %p209
      $region42: #{tpu_custom_call.1} parent=11 // pred_check_branch
        %273 = sbr.rel (%p271) target = $region44
      $region43: #{tpu_custom_call.1} parent=11 // pred_region
        _
      $region44: #{tpu_custom_call.1} parent=11 // pred_fallthru
        _
    $region12: #{tpu_custom_call.1} parent=5 // pred_fallthru
      _
    %p274 = scmp.lt.s32.totalorder %s15, 2
    // Predicated region
    $region45: #{tpu_custom_call.1} parent=5 // pred_check
      %p275 = pneg %p274
    $region46: #{tpu_custom_call.1} parent=5 // pred_check_branch
      %277 = sbr.rel (%p275) target = $region48
    $region47: #{tpu_custom_call.1} parent=5 // pred_region
      // Predicated region
      $region49: #{tpu_custom_call.1} parent=47 // pred_check
        %p278 = pneg %p35
      $region50: #{tpu_custom_call.1} parent=47 // pred_check_branch
        %280 = sbr.rel (%p278) target = $region52
      $region51: #{tpu_custom_call.1} parent=47 // pred_region
        %s281 = smul.u32 2, %s15
        %p282 = scmp.lt.s32.totalorder %s281, 3
        %s283 = scalar_select %p282, %s281, 3
        %s284 = smul.addr %s283, 8
        %s285 = smul.addr %s284, 8
        %s286 = scalar_lea.vmem %s0, %s285
        %s287 = smul.u32 2, %s15
      $region52: #{tpu_custom_call.1} parent=47 // pred_fallthru
        _
    $region48: #{tpu_custom_call.1} parent=5 // pred_fallthru
      _
    %p288 = scmp.le.s32.totalorder 1, %s15
    %p289 = scmp.lt.s32.totalorder %s15, 3
    %p290 = pnand %p288, %p289
    %p291 = pneg %p290
    // Predicated region
    $region53: #{tpu_custom_call.1} parent=5 // pred_check
      _
    $region54: #{tpu_custom_call.1} parent=5 // pred_check_branch
      %293 = sbr.rel (%p290) target = $region56
    $region55: #{tpu_custom_call.1} parent=5 // pred_region
      %s294 = ssub.s32 %s15, 1
      %s295 = smul.u32 2, %s20
      %p296 = scmp.lt.s32.totalorder %s295, 3
      %s297 = scalar_select %p296, %s295, 3
      %s298 = smul.addr %s297, 8
      %s299 = smul.addr %s298, 8
      %s300 = scalar_lea.vmem %s0, %s299
      %p301 = pneg %p41
      %p302 = pneg %p38
      %p303 = pneg %p62
      %p304 = pneg %p59
      %p305 = pneg %p83
      %p306 = pneg %p80
      %p307 = pneg %p104
      %p308 = pneg %p101
      %p309 = pneg %p125
      %p310 = pneg %p122
      %p311 = pneg %p146
      %p312 = pneg %p143
      %p313 = pneg %p167
      %p314 = pneg %p164
      %p315 = pneg %p188
      %p316 = pneg %p185
      %p317 = pneg %p209
      %p318 = pneg %p206
      %p319 = pneg %p235
      %p320 = pneg %p232
      %s321 = smul.u32 2, %s20
      %p322 = scmp.lt.s32.totalorder %s321, 3
      %s323 = scalar_select %p322, %s321, 3
      %s324 = smul.addr %s323, 8
      %s325 = smul.addr %s324, 8
      %s326 = scalar_lea.vmem %s9, %s325
      %s327 = smul.u32 2, %s20
      %p328 = scmp.lt.s32.totalorder %s327, 3
      %s329 = scalar_select %p328, %s327, 3
      %s330 = smul.addr %s329, 8
      %s331 = smul.addr %s330, 8
      %s332 = scalar_lea.vmem %s0, %s331
      %s333 = smul.u32 2, %s20
      %s334 = smul.u32 2, %s20
      %p335 = scmp.lt.s32.totalorder %s334, 3
      %s336 = scalar_select %p335, %s334, 3
      %s337 = smul.addr %s336, 8
      %s338 = smul.addr %s337, 8
      %s339 = scalar_lea.vmem %s9, %s338
      %s340 = smul.u32 2, %s20
      %v341 = vld [vmem:[%s332] sm:$0xff]
      %v342 = vld [vmem:[%s332 + $0x8] sm:$0xff]
      %v343 = vld [vmem:[%s332 + $0x10] sm:$0xff]
      %v344 = vld [vmem:[%s332 + $0x18] sm:$0xff]
      %v345 = vld [vmem:[%s332 + $0x20] sm:$0xff]
      %v346 = vld [vmem:[%s332 + $0x28] sm:$0xff]
      %v347 = vld [vmem:[%s332 + $0x30] sm:$0xff]
      %v348 = vld [vmem:[%s332 + $0x38] sm:$0xff]
      %v349 = vld [vmem:[%s332 + $0x40] sm:$0xff]
      %v350 = vld [vmem:[%s332 + $0x48] sm:$0xff]
      %v351 = vld [vmem:[%s332 + $0x50] sm:$0xff]
      %v352 = vld [vmem:[%s332 + $0x58] sm:$0xff]
      %v353 = vld [vmem:[%s332 + $0x60] sm:$0xff]
      %v354 = vld [vmem:[%s332 + $0x68] sm:$0xff]
      %v355 = vld [vmem:[%s332 + $0x70] sm:$0xff]
      %v356 = vld [vmem:[%s332 + $0x78] sm:$0xff]
      %v357 = vld [vmem:[%s1] sm:$0xff]
      %v358 = vld [vmem:[%s1 + $0x8] sm:$0xff]
      %v359 = vld [vmem:[%s1 + $0x10] sm:$0xff]
      %v360 = vld [vmem:[%s1 + $0x18] sm:$0xff]
      %v361 = vld [vmem:[%s1 + $0x20] sm:$0xff]
      %v362 = vld [vmem:[%s1 + $0x28] sm:$0xff]
      %v363 = vld [vmem:[%s1 + $0x30] sm:$0xff]
      %v364 = vld [vmem:[%s1 + $0x38] sm:$0xff]
      %v365 = vadd.f32 %v341, %v357
      %v366 = vadd.f32 %v342, %v358
      %v367 = vadd.f32 %v343, %v359
      %v368 = vadd.f32 %v344, %v360
      %v369 = vadd.f32 %v345, %v361
      %v370 = vadd.f32 %v346, %v362
      %v371 = vadd.f32 %v347, %v363
      %v372 = vadd.f32 %v348, %v364
      %v373 = vadd.f32 %v349, %v357
      %v374 = vadd.f32 %v350, %v358
      %v375 = vadd.f32 %v351, %v359
      %v376 = vadd.f32 %v352, %v360
      %v377 = vadd.f32 %v353, %v361
      %v378 = vadd.f32 %v354, %v362
      %v379 = vadd.f32 %v355, %v363
      %v380 = vadd.f32 %v356, %v364
      %v381 = vld [vmem:[%s2] sm:$0xff]
      %v382 = vld [vmem:[%s2 + $0x8] sm:$0xff]
      %v383 = vld [vmem:[%s2 + $0x10] sm:$0xff]
      %v384 = vld [vmem:[%s2 + $0x18] sm:$0xff]
      %v385 = vld [vmem:[%s3] sm:$0x1]
      %v387 = vlaneseq
      %v388 = vshrl.u32 %v387, 7
      %v389 = vsub.s32 0, %v388
      %v390 = vrot.slane %v385, %v389
      %vm392 = vcmask 261120
      %v394 = vsel %vm392, %v365, 0
      %v397 = vsel %vm392, %v366, 0
      %v400 = vsel %vm392, %v367, 0
      %v403 = vsel %vm392, %v368, 0
      %v406 = vsel %vm392, %v369, 0
      %v409 = vsel %vm392, %v370, 0
      %v412 = vsel %vm392, %v371, 0
      %v415 = vsel %vm392, %v372, 0
      %v418 = vsel %vm392, %v373, 0
      %v421 = vsel %vm392, %v374, 0
      %v424 = vsel %vm392, %v375, 0
      %v427 = vsel %vm392, %v376, 0
      %v430 = vsel %vm392, %v377, 0
      %v433 = vsel %vm392, %v378, 0
      %v436 = vsel %vm392, %v379, 0
      %v439 = vsel %vm392, %v380, 0
      %441 = vmatprep.subr.mxu0 0.0
      %442 = vmatpush1.msra.mxu0 %v381
      %443 = vmatprep.subr.mxu0 0.0
      %444 = vmatpush1.msra.mxu0 %v382
      %445 = vmatprep.subr.mxu0 0.0
      %446 = vmatpush1.msra.mxu0 %v383
      %447 = vmatprep.subr.mxu0 0.0
      %448 = vmatpush1.msra.mxu0 %v384
      %449 = vmatprep.subr.mxu0 0.0
      %450 = vmatpush1.msra.mxu0 0.0
      %451 = vmatprep.subr.mxu0 0.0
      %452 = vmatpush1.msra.mxu0 0.0
      %453 = vmatprep.subr.mxu0 0.0
      %454 = vmatpush1.msra.mxu0 0.0
      %455 = vmatprep.subr.mxu0 0.0
      %456 = vmatpush1.msra.mxu0 0.0
      %457 = vmatprep.subr.mxu0 0.0
      %458 = vmatpush1.msra.mxu0 0.0
      %459 = vmatprep.subr.mxu0 0.0
      %460 = vmatpush1.msra.mxu0 0.0
      %461 = vmatprep.subr.mxu0 0.0
      %462 = vmatpush1.msra.mxu0 0.0
      %463 = vmatprep.subr.mxu0 0.0
      %464 = vmatpush1.msra.mxu0 0.0
      %465 = vmatprep.subr.mxu0 0.0
      %466 = vmatpush1.msra.mxu0 0.0
      %467 = vmatprep.subr.mxu0 0.0
      %468 = vmatpush1.msra.mxu0 0.0
      %469 = vmatprep.subr.mxu0 0.0
      %470 = vmatpush1.msra.mxu0 0.0
      %471 = vmatprep.subr.mxu0 0.0
      %472 = vmatpush1.msra.mxu0 0.0
      %473 = vmatprep.subr.mxu0 0.0
      %474 = vmatpush1.msra.mxu0 0.0
      %475 = vmatprep.subr.mxu0 0.0
      %476 = vmatpush1.msra.mxu0 0.0
      %477 = vmatprep.subr.mxu0 0.0
      %478 = vmatpush1.msra.mxu0 0.0
      %479 = vmatprep.subr.mxu0 0.0
      %480 = vmatpush1.msra.mxu0 0.0
      %481 = vmatprep.subr.mxu0 0.0
      %482 = vmatpush1.msra.mxu0 0.0
      %483 = vmatprep.subr.mxu0 0.0
      %484 = vmatpush1.msra.mxu0 0.0
      %485 = vmatprep.subr.mxu0 0.0
      %486 = vmatpush1.msra.mxu0 0.0
      %487 = vmatprep.subr.mxu0 0.0
      %488 = vmatpush1.msra.mxu0 0.0
      %489 = vmatprep.subr.mxu0 0.0
      %490 = vmatpush1.msra.mxu0 0.0
      %491 = vmatprep.subr.mxu0 0.0
      %492 = vmatpush1.msra.mxu0 0.0
      %493 = vmatprep.subr.mxu0 0.0
      %494 = vmatpush1.msra.mxu0 0.0
      %495 = vmatprep.subr.mxu0 0.0
      %496 = vmatpush1.msra.mxu0 0.0
      %497 = vmatprep.subr.mxu0 0.0
      %498 = vmatpush1.msra.mxu0 0.0
      %499 = vmatprep.subr.mxu0 0.0
      %500 = vmatpush1.msra.mxu0 0.0
      %501 = vmatprep.subr.mxu0 0.0
      %502 = vmatpush1.msra.mxu0 0.0
      %503 = vmatprep.subr.mxu0 0.0
      %504 = vmatpush1.msra.mxu0 0.0
      %505 = vmatprep.mubr.f32.mxu0 0.0
      %506 = vmatmul.mubr.f32.gmra.mrb[0].mxu0 %v394
      %v507 = vpop.f32.mrb[0].mxu0
      %v508 = vadd.f32 %v390, %v507
      %v509 = vpop.f32.mrb[0].mxu0
      %510 = vmatprep.mubr.f32.mxu0 0.0
      %511 = vmatmul.mubr.f32.gmra.mrb[0].mxu0 %v397
      %v512 = vpop.f32.mrb[0].mxu0
      %v513 = vadd.f32 %v390, %v512
      %v514 = vpop.f32.mrb[0].mxu0
      %515 = vmatprep.mubr.f32.mxu0 0.0
      %516 = vmatmul.mubr.f32.gmra.mrb[0].mxu0 %v400
      %v517 = vpop.f32.mrb[0].mxu0
      %v518 = vadd.f32 %v390, %v517
      %v519 = vpop.f32.mrb[0].mxu0
      %520 = vmatprep.mubr.f32.mxu0 0.0
      %521 = vmatmul.mubr.f32.gmra.mrb[0].mxu0 %v403
      %v522 = vpop.f32.mrb[0].mxu0
      %v523 = vadd.f32 %v390, %v522
      %v524 = vpop.f32.mrb[0].mxu0
      %525 = vmatprep.mubr.f32.mxu0 0.0
      %526 = vmatmul.mubr.f32.gmra.mrb[0].mxu0 %v406
      %v527 = vpop.f32.mrb[0].mxu0
      %v528 = vadd.f32 %v390, %v527
      %v529 = vpop.f32.mrb[0].mxu0
      %530 = vmatprep.mubr.f32.mxu0 0.0
      %531 = vmatmul.mubr.f32.gmra.mrb[0].mxu0 %v409
      %v532 = vpop.f32.mrb[0].mxu0
      %v533 = vadd.f32 %v390, %v532
      %v534 = vpop.f32.mrb[0].mxu0
      %535 = vmatprep.mubr.f32.mxu0 0.0
      %536 = vmatmul.mubr.f32.gmra.mrb[0].mxu0 %v412
      %v537 = vpop.f32.mrb[0].mxu0
      %v538 = vadd.f32 %v390, %v537
      %v539 = vpop.f32.mrb[0].mxu0
      %540 = vmatprep.mubr.f32.mxu0 0.0
      %541 = vmatmul.mubr.f32.gmra.mrb[0].mxu0 %v415
      %v542 = vpop.f32.mrb[0].mxu0
      %v543 = vadd.f32 %v390, %v542
      %v544 = vpop.f32.mrb[0].mxu0
      %545 = vmatprep.mubr.f32.mxu0 0.0
      %546 = vmatmul.mubr.f32.gmra.mrb[0].mxu0 %v418
      %v547 = vpop.f32.mrb[0].mxu0
      %v548 = vadd.f32 %v390, %v547
      %v549 = vpop.f32.mrb[0].mxu0
      %550 = vmatprep.mubr.f32.mxu0 0.0
      %551 = vmatmul.mubr.f32.gmra.mrb[0].mxu0 %v421
      %v552 = vpop.f32.mrb[0].mxu0
      %v553 = vadd.f32 %v390, %v552
      %v554 = vpop.f32.mrb[0].mxu0
      %555 = vmatprep.mubr.f32.mxu0 0.0
      %556 = vmatmul.mubr.f32.gmra.mrb[0].mxu0 %v424
      %v557 = vpop.f32.mrb[0].mxu0
      %v558 = vadd.f32 %v390, %v557
      %v559 = vpop.f32.mrb[0].mxu0
      %560 = vmatprep.mubr.f32.mxu0 0.0
      %561 = vmatmul.mubr.f32.gmra.mrb[0].mxu0 %v427
      %v562 = vpop.f32.mrb[0].mxu0
      %v563 = vadd.f32 %v390, %v562
      %v564 = vpop.f32.mrb[0].mxu0
      %565 = vmatprep.mubr.f32.mxu0 0.0
      %566 = vmatmul.mubr.f32.gmra.mrb[0].mxu0 %v430
      %v567 = vpop.f32.mrb[0].mxu0
      %v568 = vadd.f32 %v390, %v567
      %v569 = vpop.f32.mrb[0].mxu0
      %570 = vmatprep.mubr.f32.mxu0 0.0
      %571 = vmatmul.mubr.f32.gmra.mrb[0].mxu0 %v433
      %v572 = vpop.f32.mrb[0].mxu0
      %v573 = vadd.f32 %v390, %v572
      %v574 = vpop.f32.mrb[0].mxu0
      %575 = vmatprep.mubr.f32.mxu0 0.0
      %576 = vmatmul.mubr.f32.gmra.mrb[0].mxu0 %v436
      %v577 = vpop.f32.mrb[0].mxu0
      %v578 = vadd.f32 %v390, %v577
      %v579 = vpop.f32.mrb[0].mxu0
      %580 = vmatprep.mubr.f32.mxu0 0.0
      %581 = vmatmul.mubr.f32.gmra.mrb[0].mxu0 %v439
      %v582 = vpop.f32.mrb[0].mxu0
      %v583 = vadd.f32 %v390, %v582
      %v584 = vpop.f32.mrb[0].mxu0
      %585 = vdwg.mxu0
      %v586 = vld [vmem:[%s8] sm:$0x3f]
      %595 = vrot.lane.b32.xlu0 %v508, 96
      %v596 = vpop.permute.xlu0 %595
      %597 = vrot.lane.b32.xlu0 %v513, 96
      %v598 = vpop.permute.xlu0 %597
      %599 = vrot.lane.b32.xlu0 %v518, 96
      %v600 = vpop.permute.xlu0 %599
      %601 = vrot.lane.b32.xlu0 %v523, 96
      %v602 = vpop.permute.xlu0 %601
      %603 = vrot.lane.b32.xlu0 %v528, 96
      %v604 = vpop.permute.xlu0 %603
      %605 = vrot.lane.b32.xlu0 %v533, 96
      %v606 = vpop.permute.xlu0 %605
      %607 = vrot.lane.b32.xlu0 %v538, 96
      %v608 = vpop.permute.xlu0 %607
      %609 = vrot.lane.b32.xlu0 %v543, 96
      %v610 = vpop.permute.xlu0 %609
      %vm611 = vcmask 64512
      %v612 = vsel %vm611, %v508, 0
      %v614 = vsel %vm611, %v513, 0
      %v616 = vsel %vm611, %v518, 0
      %v618 = vsel %vm611, %v523, 0
      %v620 = vsel %vm611, %v528, 0
      %v622 = vsel %vm611, %v533, 0
      %v624 = vsel %vm611, %v538, 0
      %v626 = vsel %vm611, %v543, 0
      %v628 = vsel %vm611, %v596, 0
      %v630 = vsel %vm611, %v598, 0
      %v632 = vsel %vm611, %v600, 0
      %v634 = vsel %vm611, %v602, 0
      %v636 = vsel %vm611, %v604, 0
      %v638 = vsel %vm611, %v606, 0
      %v640 = vsel %vm611, %v608, 0
      %v642 = vsel %vm611, %v610, 0
      %644 = vmatprep.subr.mxu0 0.0
      %645 = vmatpush1.xpose.msra.mxu0 %v628
      %646 = vmatprep.subr.mxu0 0.0
      %647 = vmatpush1.xpose.msra.mxu0 %v630
      %648 = vmatprep.subr.mxu0 0.0
      %649 = vmatpush1.xpose.msra.mxu0 %v632
      %650 = vmatprep.subr.mxu0 0.0
      %651 = vmatpush1.xpose.msra.mxu0 %v634
      %652 = vmatprep.subr.mxu0 0.0
      %653 = vmatpush1.xpose.msra.mxu0 %v636
      %654 = vmatprep.subr.mxu0 0.0
      %655 = vmatpush1.xpose.msra.mxu0 %v638
      %656 = vmatprep.subr.mxu0 0.0
      %657 = vmatpush1.xpose.msra.mxu0 %v640
      %658 = vmatprep.subr.mxu0 0.0
      %659 = vmatpush1.xpose.msra.mxu0 %v642
      %660 = vmatprep.subr.mxu0 0.0
      %661 = vmatpush1.xpose.msra.mxu0 0.0
      %662 = vmatprep.subr.mxu0 0.0
      %663 = vmatpush1.xpose.msra.mxu0 0.0
      %664 = vmatprep.subr.mxu0 0.0
      %665 = vmatpush1.xpose.msra.mxu0 0.0
      %666 = vmatprep.subr.mxu0 0.0
      %667 = vmatpush1.xpose.msra.mxu0 0.0
      %668 = vmatprep.subr.mxu0 0.0
      %669 = vmatpush1.xpose.msra.mxu0 0.0
      %670 = vmatprep.subr.mxu0 0.0
      %671 = vmatpush1.xpose.msra.mxu0 0.0
      %672 = vmatprep.subr.mxu0 0.0
      %673 = vmatpush1.xpose.msra.mxu0 0.0
      %674 = vmatprep.subr.mxu0 0.0
      %675 = vmatpush1.xpose.msra.mxu0 0.0
      %676 = vmatprep.subr.mxu0 0.0
      %677 = vmatpush1.xpose.msra.mxu0 0.0
      %678 = vmatprep.subr.mxu0 0.0
      %679 = vmatpush1.xpose.msra.mxu0 0.0
      %680 = vmatprep.subr.mxu0 0.0
      %681 = vmatpush1.xpose.msra.mxu0 0.0
      %682 = vmatprep.subr.mxu0 0.0
      %683 = vmatpush1.xpose.msra.mxu0 0.0
      %684 = vmatprep.subr.mxu0 0.0
      %685 = vmatpush1.xpose.msra.mxu0 0.0
      %686 = vmatprep.subr.mxu0 0.0
      %687 = vmatpush1.xpose.msra.mxu0 0.0
      %688 = vmatprep.subr.mxu0 0.0
      %689 = vmatpush1.xpose.msra.mxu0 0.0
      %690 = vmatprep.subr.mxu0 0.0
      %691 = vmatpush1.xpose.msra.mxu0 0.0
      %692 = vmatprep.subr.mxu0 0.0
      %693 = vmatpush1.xpose.msra.mxu0 0.0
      %694 = vmatprep.subr.mxu0 0.0
      %695 = vmatpush1.xpose.msra.mxu0 0.0
      %696 = vmatprep.subr.mxu0 0.0
      %697 = vmatpush1.xpose.msra.mxu0 0.0
      %698 = vmatprep.subr.mxu0 0.0
      %699 = vmatpush1.xpose.msra.mxu0 0.0
      %700 = vmatprep.subr.mxu0 0.0
      %701 = vmatpush1.xpose.msra.mxu0 0.0
      %702 = vmatprep.subr.mxu0 0.0
      %703 = vmatpush1.xpose.msra.mxu0 0.0
      %704 = vmatprep.subr.mxu0 0.0
      %705 = vmatpush1.xpose.msra.mxu0 0.0
      %706 = vmatprep.subr.mxu0 0.0
      %707 = vmatpush1.xpose.msra.mxu0 0.0
      %708 = vmatprep.mubr.f32.mxu0 0.0
      %709 = vmatmul.mubr.f32.gmra.mrb[0].mxu0 %v612
      %v710 = vpop.f32.mrb[0].mxu0
      %v711 = vadd.f32 0.0, %v710
      %v712 = vpop.f32.mrb[0].mxu0
      %713 = vmatprep.mubr.f32.mxu0 0.0
      %714 = vmatmul.mubr.f32.gmra.mrb[0].mxu0 %v614
      %v715 = vpop.f32.mrb[0].mxu0
      %v716 = vadd.f32 0.0, %v715
      %v717 = vpop.f32.mrb[0].mxu0
      %718 = vmatprep.mubr.f32.mxu0 0.0
      %719 = vmatmul.mubr.f32.gmra.mrb[0].mxu0 %v616
      %v720 = vpop.f32.mrb[0].mxu0
      %v721 = vadd.f32 0.0, %v720
      %v722 = vpop.f32.mrb[0].mxu0
      %723 = vmatprep.mubr.f32.mxu0 0.0
      %724 = vmatmul.mubr.f32.gmra.mrb[0].mxu0 %v618
      %v725 = vpop.f32.mrb[0].mxu0
      %v726 = vadd.f32 0.0, %v725
      %v727 = vpop.f32.mrb[0].mxu0
      %728 = vmatprep.mubr.f32.mxu0 0.0
      %729 = vmatmul.mubr.f32.gmra.mrb[0].mxu0 %v620
      %v730 = vpop.f32.mrb[0].mxu0
      %v731 = vadd.f32 0.0, %v730
      %v732 = vpop.f32.mrb[0].mxu0
      %733 = vmatprep.mubr.f32.mxu0 0.0
      %734 = vmatmul.mubr.f32.gmra.mrb[0].mxu0 %v622
      %v735 = vpop.f32.mrb[0].mxu0
      %v736 = vadd.f32 0.0, %v735
      %v737 = vpop.f32.mrb[0].mxu0
      %738 = vmatprep.mubr.f32.mxu0 0.0
      %739 = vmatmul.mubr.f32.gmra.mrb[0].mxu0 %v624
      %v740 = vpop.f32.mrb[0].mxu0
      %v741 = vadd.f32 0.0, %v740
      %v742 = vpop.f32.mrb[0].mxu0
      %743 = vmatprep.mubr.f32.mxu0 0.0
      %744 = vmatmul.mubr.f32.gmra.mrb[0].mxu0 %v626
      %v745 = vpop.f32.mrb[0].mxu0
      %v746 = vadd.f32 0.0, %v745
      %v747 = vpop.f32.mrb[0].mxu0
      %748 = vdwg.mxu0
      %757 = vrot.lane.b32.xlu0 %v548, 96
      %v758 = vpop.permute.xlu0 %757
      %759 = vrot.lane.b32.xlu0 %v553, 96
      %v760 = vpop.permute.xlu0 %759
      %761 = vrot.lane.b32.xlu0 %v558, 96
      %v762 = vpop.permute.xlu0 %761
      %763 = vrot.lane.b32.xlu0 %v563, 96
      %v764 = vpop.permute.xlu0 %763
      %765 = vrot.lane.b32.xlu0 %v568, 96
      %v766 = vpop.permute.xlu0 %765
      %767 = vrot.lane.b32.xlu0 %v573, 96
      %v768 = vpop.permute.xlu0 %767
      %769 = vrot.lane.b32.xlu0 %v578, 96
      %v770 = vpop.permute.xlu0 %769
      %771 = vrot.lane.b32.xlu0 %v583, 96
      %v772 = vpop.permute.xlu0 %771
      %v773 = vsel %vm611, %v548, 0
      %v775 = vsel %vm611, %v553, 0
      %v777 = vsel %vm611, %v558, 0
      %v779 = vsel %vm611, %v563, 0
      %v781 = vsel %vm611, %v568, 0
      %v783 = vsel %vm611, %v573, 0
      %v785 = vsel %vm611, %v578, 0
      %v787 = vsel %vm611, %v583, 0
      %v789 = vsel %vm611, %v758, 0
      %v791 = vsel %vm611, %v760, 0
      %v793 = vsel %vm611, %v762, 0
      %v795 = vsel %vm611, %v764, 0
      %v797 = vsel %vm611, %v766, 0
      %v799 = vsel %vm611, %v768, 0
      %v801 = vsel %vm611, %v770, 0
      %v803 = vsel %vm611, %v772, 0
      %805 = vmatprep.subr.mxu0 0.0
      %806 = vmatpush1.xpose.msra.mxu0 %v789
      %807 = vmatprep.subr.mxu0 0.0
      %808 = vmatpush1.xpose.msra.mxu0 %v791
      %809 = vmatprep.subr.mxu0 0.0
      %810 = vmatpush1.xpose.msra.mxu0 %v793
      %811 = vmatprep.subr.mxu0 0.0
      %812 = vmatpush1.xpose.msra.mxu0 %v795
      %813 = vmatprep.subr.mxu0 0.0
      %814 = vmatpush1.xpose.msra.mxu0 %v797
      %815 = vmatprep.subr.mxu0 0.0
      %816 = vmatpush1.xpose.msra.mxu0 %v799
      %817 = vmatprep.subr.mxu0 0.0
      %818 = vmatpush1.xpose.msra.mxu0 %v801
      %819 = vmatprep.subr.mxu0 0.0
      %820 = vmatpush1.xpose.msra.mxu0 %v803
      %821 = vmatprep.subr.mxu0 0.0
      %822 = vmatpush1.xpose.msra.mxu0 0.0
      %823 = vmatprep.subr.mxu0 0.0
      %824 = vmatpush1.xpose.msra.mxu0 0.0
      %825 = vmatprep.subr.mxu0 0.0
      %826 = vmatpush1.xpose.msra.mxu0 0.0
      %827 = vmatprep.subr.mxu0 0.0
      %828 = vmatpush1.xpose.msra.mxu0 0.0
      %829 = vmatprep.subr.mxu0 0.0
      %830 = vmatpush1.xpose.msra.mxu0 0.0
      %831 = vmatprep.subr.mxu0 0.0
      %832 = vmatpush1.xpose.msra.mxu0 0.0
      %833 = vmatprep.subr.mxu0 0.0
      %834 = vmatpush1.xpose.msra.mxu0 0.0
      %835 = vmatprep.subr.mxu0 0.0
      %836 = vmatpush1.xpose.msra.mxu0 0.0
      %837 = vmatprep.subr.mxu0 0.0
      %838 = vmatpush1.xpose.msra.mxu0 0.0
      %839 = vmatprep.subr.mxu0 0.0
      %840 = vmatpush1.xpose.msra.mxu0 0.0
      %841 = vmatprep.subr.mxu0 0.0
      %842 = vmatpush1.xpose.msra.mxu0 0.0
      %843 = vmatprep.subr.mxu0 0.0
      %844 = vmatpush1.xpose.msra.mxu0 0.0
      %845 = vmatprep.subr.mxu0 0.0
      %846 = vmatpush1.xpose.msra.mxu0 0.0
      %847 = vmatprep.subr.mxu0 0.0
      %848 = vmatpush1.xpose.msra.mxu0 0.0
      %849 = vmatprep.subr.mxu0 0.0
      %850 = vmatpush1.xpose.msra.mxu0 0.0
      %851 = vmatprep.subr.mxu0 0.0
      %852 = vmatpush1.xpose.msra.mxu0 0.0
      %853 = vmatprep.subr.mxu0 0.0
      %854 = vmatpush1.xpose.msra.mxu0 0.0
      %855 = vmatprep.subr.mxu0 0.0
      %856 = vmatpush1.xpose.msra.mxu0 0.0
      %857 = vmatprep.subr.mxu0 0.0
      %858 = vmatpush1.xpose.msra.mxu0 0.0
      %859 = vmatprep.subr.mxu0 0.0
      %860 = vmatpush1.xpose.msra.mxu0 0.0
      %861 = vmatprep.subr.mxu0 0.0
      %862 = vmatpush1.xpose.msra.mxu0 0.0
      %863 = vmatprep.subr.mxu0 0.0
      %864 = vmatpush1.xpose.msra.mxu0 0.0
      %865 = vmatprep.subr.mxu0 0.0
      %866 = vmatpush1.xpose.msra.mxu0 0.0
      %867 = vmatprep.subr.mxu0 0.0
      %868 = vmatpush1.xpose.msra.mxu0 0.0
      %869 = vmatprep.mubr.f32.mxu0 0.0
      %870 = vmatmul.mubr.f32.gmra.mrb[0].mxu0 %v773
      %v871 = vpop.f32.mrb[0].mxu0
      %v872 = vadd.f32 0.0, %v871
      %v873 = vpop.f32.mrb[0].mxu0
      %874 = vmatprep.mubr.f32.mxu0 0.0
      %875 = vmatmul.mubr.f32.gmra.mrb[0].mxu0 %v775
      %v876 = vpop.f32.mrb[0].mxu0
      %v877 = vadd.f32 0.0, %v876
      %v878 = vpop.f32.mrb[0].mxu0
      %879 = vmatprep.mubr.f32.mxu0 0.0
      %880 = vmatmul.mubr.f32.gmra.mrb[0].mxu0 %v777
      %v881 = vpop.f32.mrb[0].mxu0
      %v882 = vadd.f32 0.0, %v881
      %v883 = vpop.f32.mrb[0].mxu0
      %884 = vmatprep.mubr.f32.mxu0 0.0
      %885 = vmatmul.mubr.f32.gmra.mrb[0].mxu0 %v779
      %v886 = vpop.f32.mrb[0].mxu0
      %v887 = vadd.f32 0.0, %v886
      %v888 = vpop.f32.mrb[0].mxu0
      %889 = vmatprep.mubr.f32.mxu0 0.0
      %890 = vmatmul.mubr.f32.gmra.mrb[0].mxu0 %v781
      %v891 = vpop.f32.mrb[0].mxu0
      %v892 = vadd.f32 0.0, %v891
      %v893 = vpop.f32.mrb[0].mxu0
      %894 = vmatprep.mubr.f32.mxu0 0.0
      %895 = vmatmul.mubr.f32.gmra.mrb[0].mxu0 %v783
      %v896 = vpop.f32.mrb[0].mxu0
      %v897 = vadd.f32 0.0, %v896
      %v898 = vpop.f32.mrb[0].mxu0
      %899 = vmatprep.mubr.f32.mxu0 0.0
      %900 = vmatmul.mubr.f32.gmra.mrb[0].mxu0 %v785
      %v901 = vpop.f32.mrb[0].mxu0
      %v902 = vadd.f32 0.0, %v901
      %v903 = vpop.f32.mrb[0].mxu0
      %904 = vmatprep.mubr.f32.mxu0 0.0
      %905 = vmatmul.mubr.f32.gmra.mrb[0].mxu0 %v787
      %v906 = vpop.f32.mrb[0].mxu0
      %v907 = vadd.f32 0.0, %v906
      %v908 = vpop.f32.mrb[0].mxu0
      %909 = vdwg.mxu0
      %vm910 = vcmask 523264
      %v911 = vsel %vm910, %v711, -inf
      %912 = vmax.xlane.f32.xlu0 %v911
      %v913 = vpop.xlane.xlu0 %912
      %v914 = vsel %vm910, %v716, -inf
      %915 = vmax.xlane.f32.xlu0 %v914
      %v916 = vpop.xlane.xlu0 %915
      %v917 = vsel %vm910, %v721, -inf
      %918 = vmax.xlane.f32.xlu0 %v917
      %v919 = vpop.xlane.xlu0 %918
      %v920 = vsel %vm910, %v726, -inf
      %921 = vmax.xlane.f32.xlu0 %v920
      %v922 = vpop.xlane.xlu0 %921
      %v923 = vsel %vm910, %v731, -inf
      %924 = vmax.xlane.f32.xlu0 %v923
      %v925 = vpop.xlane.xlu0 %924
      %v926 = vsel %vm910, %v736, -inf
      %927 = vmax.xlane.f32.xlu0 %v926
      %v928 = vpop.xlane.xlu0 %927
      %v929 = vsel %vm910, %v741, -inf
      %930 = vmax.xlane.f32.xlu0 %v929
      %v931 = vpop.xlane.xlu0 %930
      %v932 = vsel %vm910, %v746, -inf
      %933 = vmax.xlane.f32.xlu0 %v932
      %v934 = vpop.xlane.xlu0 %933
      %v935 = vsel %vm910, %v872, -inf
      %936 = vmax.xlane.f32.xlu0 %v935
      %v937 = vpop.xlane.xlu0 %936
      %v938 = vsel %vm910, %v877, -inf
      %939 = vmax.xlane.f32.xlu0 %v938
      %v940 = vpop.xlane.xlu0 %939
      %v941 = vsel %vm910, %v882, -inf
      %942 = vmax.xlane.f32.xlu0 %v941
      %v943 = vpop.xlane.xlu0 %942
      %v944 = vsel %vm910, %v887, -inf
      %945 = vmax.xlane.f32.xlu0 %v944
      %v946 = vpop.xlane.xlu0 %945
      %v947 = vsel %vm910, %v892, -inf
      %948 = vmax.xlane.f32.xlu0 %v947
      %v949 = vpop.xlane.xlu0 %948
      %v950 = vsel %vm910, %v897, -inf
      %951 = vmax.xlane.f32.xlu0 %v950
      %v952 = vpop.xlane.xlu0 %951
      %v953 = vsel %vm910, %v902, -inf
      %954 = vmax.xlane.f32.xlu0 %v953
      %v955 = vpop.xlane.xlu0 %954
      %v956 = vsel %vm910, %v907, -inf
      %957 = vmax.xlane.f32.xlu0 %v956
      %v958 = vpop.xlane.xlu0 %957
      %v959 = vsub.f32 %v711, %v913
      %v960 = vsub.f32 %v716, %v916
      %v961 = vsub.f32 %v721, %v919
      %v962 = vsub.f32 %v726, %v922
      %v963 = vsub.f32 %v731, %v925
      %v964 = vsub.f32 %v736, %v928
      %v965 = vsub.f32 %v741, %v931
      %v966 = vsub.f32 %v746, %v934
      %v967 = vsub.f32 %v872, %v937
      %v968 = vsub.f32 %v877, %v940
      %v969 = vsub.f32 %v882, %v943
      %v970 = vsub.f32 %v887, %v946
      %v971 = vsub.f32 %v892, %v949
      %v972 = vsub.f32 %v897, %v952
      %v973 = vsub.f32 %v902, %v955
      %v974 = vsub.f32 %v907, %v958
      %v975 = vmul.f32 %v959, 1.442695
      %v976 = vpow.pop %v975
      %v977 = vmul.f32 %v960, 1.442695
      %v978 = vpow.pop %v977
      %v979 = vmul.f32 %v961, 1.442695
      %v980 = vpow.pop %v979
      %v981 = vmul.f32 %v962, 1.442695
      %v982 = vpow.pop %v981
      %v983 = vmul.f32 %v963, 1.442695
      %v984 = vpow.pop %v983
      %v985 = vmul.f32 %v964, 1.442695
      %v986 = vpow.pop %v985
      %v987 = vmul.f32 %v965, 1.442695
      %v988 = vpow.pop %v987
      %v989 = vmul.f32 %v966, 1.442695
      %v990 = vpow.pop %v989
      %v991 = vmul.f32 %v967, 1.442695
      %v992 = vpow.pop %v991
      %v993 = vmul.f32 %v968, 1.442695
      %v994 = vpow.pop %v993
      %v995 = vmul.f32 %v969, 1.442695
      %v996 = vpow.pop %v995
      %v997 = vmul.f32 %v970, 1.442695
      %v998 = vpow.pop %v997
      %v999 = vmul.f32 %v971, 1.442695
      %v1000 = vpow.pop %v999
      %v1001 = vmul.f32 %v972, 1.442695
      %v1002 = vpow.pop %v1001
      %v1003 = vmul.f32 %v973, 1.442695
      %v1004 = vpow.pop %v1003
      %v1005 = vmul.f32 %v974, 1.442695
      %v1006 = vpow.pop %v1005
      %v1007 = vsel %vm910, %v976, 0.0
      %1008 = vadd.xlane.f32.xlu0 %v1007
      %v1009 = vpop.xlane.xlu0 %1008
      %v1010 = vsel %vm910, %v978, 0.0
      %1011 = vadd.xlane.f32.xlu0 %v1010
      %v1012 = vpop.xlane.xlu0 %1011
      %v1013 = vsel %vm910, %v980, 0.0
      %1014 = vadd.xlane.f32.xlu0 %v1013
      %v1015 = vpop.xlane.xlu0 %1014
      %v1016 = vsel %vm910, %v982, 0.0
      %1017 = vadd.xlane.f32.xlu0 %v1016
      %v1018 = vpop.xlane.xlu0 %1017
      %v1019 = vsel %vm910, %v984, 0.0
      %1020 = vadd.xlane.f32.xlu0 %v1019
      %v1021 = vpop.xlane.xlu0 %1020
      %v1022 = vsel %vm910, %v986, 0.0
      %1023 = vadd.xlane.f32.xlu0 %v1022
      %v1024 = vpop.xlane.xlu0 %1023
      %v1025 = vsel %vm910, %v988, 0.0
      %1026 = vadd.xlane.f32.xlu0 %v1025
      %v1027 = vpop.xlane.xlu0 %1026
      %v1028 = vsel %vm910, %v990, 0.0
      %1029 = vadd.xlane.f32.xlu0 %v1028
      %v1030 = vpop.xlane.xlu0 %1029
      %v1031 = vsel %vm910, %v992, 0.0
      %1032 = vadd.xlane.f32.xlu0 %v1031
      %v1033 = vpop.xlane.xlu0 %1032
      %v1034 = vsel %vm910, %v994, 0.0
      %1035 = vadd.xlane.f32.xlu0 %v1034
      %v1036 = vpop.xlane.xlu0 %1035
      %v1037 = vsel %vm910, %v996, 0.0
      %1038 = vadd.xlane.f32.xlu0 %v1037
      %v1039 = vpop.xlane.xlu0 %1038
      %v1040 = vsel %vm910, %v998, 0.0
      %1041 = vadd.xlane.f32.xlu0 %v1040
      %v1042 = vpop.xlane.xlu0 %1041
      %v1043 = vsel %vm910, %v1000, 0.0
      %1044 = vadd.xlane.f32.xlu0 %v1043
      %v1045 = vpop.xlane.xlu0 %1044
      %v1046 = vsel %vm910, %v1002, 0.0
      %1047 = vadd.xlane.f32.xlu0 %v1046
      %v1048 = vpop.xlane.xlu0 %1047
      %v1049 = vsel %vm910, %v1004, 0.0
      %1050 = vadd.xlane.f32.xlu0 %v1049
      %v1051 = vpop.xlane.xlu0 %1050
      %v1052 = vsel %vm910, %v1006, 0.0
      %1053 = vadd.xlane.f32.xlu0 %v1052
      %v1054 = vpop.xlane.xlu0 %1053
      %v1055 = vrcp.pop %v1009
      %v1056 = vrcp.pop %v1012
      %v1057 = vrcp.pop %v1015
      %v1058 = vrcp.pop %v1018
      %v1059 = vrcp.pop %v1021
      %v1060 = vrcp.pop %v1024
      %v1061 = vrcp.pop %v1027
      %v1062 = vrcp.pop %v1030
      %v1063 = vrcp.pop %v1033
      %v1064 = vrcp.pop %v1036
      %v1065 = vrcp.pop %v1039
      %v1066 = vrcp.pop %v1042
      %v1067 = vrcp.pop %v1045
      %v1068 = vrcp.pop %v1048
      %v1069 = vrcp.pop %v1051
      %v1070 = vrcp.pop %v1054
      %v1071 = vmul.f32 %v976, %v1055
      %v1072 = vmul.f32 %v978, %v1056
      %v1073 = vmul.f32 %v980, %v1057
      %v1074 = vmul.f32 %v982, %v1058
      %v1075 = vmul.f32 %v984, %v1059
      %v1076 = vmul.f32 %v986, %v1060
      %v1077 = vmul.f32 %v988, %v1061
      %v1078 = vmul.f32 %v990, %v1062
      %v1079 = vmul.f32 %v992, %v1063
      %v1080 = vmul.f32 %v994, %v1064
      %v1081 = vmul.f32 %v996, %v1065
      %v1082 = vmul.f32 %v998, %v1066
      %v1083 = vmul.f32 %v1000, %v1067
      %v1084 = vmul.f32 %v1002, %v1068
      %v1085 = vmul.f32 %v1004, %v1069
      %v1086 = vmul.f32 %v1006, %v1070
      %1087 = vrot.lane.b32.xlu0 %v508, 64
      %v1088 = vpop.permute.xlu0 %1087
      %1089 = vrot.lane.b32.xlu0 %v513, 64
      %v1090 = vpop.permute.xlu0 %1089
      %1091 = vrot.lane.b32.xlu0 %v518, 64
      %v1092 = vpop.permute.xlu0 %1091
      %1093 = vrot.lane.b32.xlu0 %v523, 64
      %v1094 = vpop.permute.xlu0 %1093
      %1095 = vrot.lane.b32.xlu0 %v528, 64
      %v1096 = vpop.permute.xlu0 %1095
      %1097 = vrot.lane.b32.xlu0 %v533, 64
      %v1098 = vpop.permute.xlu0 %1097
      %1099 = vrot.lane.b32.xlu0 %v538, 64
      %v1100 = vpop.permute.xlu0 %1099
      %1101 = vrot.lane.b32.xlu0 %v543, 64
      %v1102 = vpop.permute.xlu0 %1101
      %v1112 = vsel %vm910, %v1071, 0
      %v1115 = vsel %vm910, %v1072, 0
      %v1118 = vsel %vm910, %v1073, 0
      %v1121 = vsel %vm910, %v1074, 0
      %v1124 = vsel %vm910, %v1075, 0
      %v1127 = vsel %vm910, %v1076, 0
      %v1130 = vsel %vm910, %v1077, 0
      %v1133 = vsel %vm910, %v1078, 0
      %1135 = vmatprep.subr.mxu0 0.0
      %1136 = vmatpush1.msra.mxu0 %v1088
      %1137 = vmatprep.subr.mxu0 0.0
      %1138 = vmatpush1.msra.mxu0 %v1090
      %1139 = vmatprep.subr.mxu0 0.0
      %1140 = vmatpush1.msra.mxu0 %v1092
      %1141 = vmatprep.subr.mxu0 0.0
      %1142 = vmatpush1.msra.mxu0 %v1094
      %1143 = vmatprep.subr.mxu0 0.0
      %1144 = vmatpush1.msra.mxu0 %v1096
      %1145 = vmatprep.subr.mxu0 0.0
      %1146 = vmatpush1.msra.mxu0 %v1098
      %1147 = vmatprep.subr.mxu0 0.0
      %1148 = vmatpush1.msra.mxu0 %v1100
      %1149 = vmatprep.subr.mxu0 0.0
      %1150 = vmatpush1.msra.mxu0 %v1102
      %1151 = vmatprep.subr.mxu0 0.0
      %1152 = vmatpush1.msra.mxu0 0.0
      %1153 = vmatprep.subr.mxu0 0.0
      %1154 = vmatpush1.msra.mxu0 0.0
      %1155 = vmatprep.subr.mxu0 0.0
      %1156 = vmatpush1.msra.mxu0 0.0
      %1157 = vmatprep.subr.mxu0 0.0
      %1158 = vmatpush1.msra.mxu0 0.0
      %1159 = vmatprep.subr.mxu0 0.0
      %1160 = vmatpush1.msra.mxu0 0.0
      %1161 = vmatprep.subr.mxu0 0.0
      %1162 = vmatpush1.msra.mxu0 0.0
      %1163 = vmatprep.subr.mxu0 0.0
      %1164 = vmatpush1.msra.mxu0 0.0
      %1165 = vmatprep.subr.mxu0 0.0
      %1166 = vmatpush1.msra.mxu0 0.0
      %1167 = vmatprep.subr.mxu0 0.0
      %1168 = vmatpush1.msra.mxu0 0.0
      %1169 = vmatprep.subr.mxu0 0.0
      %1170 = vmatpush1.msra.mxu0 0.0
      %1171 = vmatprep.subr.mxu0 0.0
      %1172 = vmatpush1.msra.mxu0 0.0
      %1173 = vmatprep.subr.mxu0 0.0
      %1174 = vmatpush1.msra.mxu0 0.0
      %1175 = vmatprep.subr.mxu0 0.0
      %1176 = vmatpush1.msra.mxu0 0.0
      %1177 = vmatprep.subr.mxu0 0.0
      %1178 = vmatpush1.msra.mxu0 0.0
      %1179 = vmatprep.subr.mxu0 0.0
      %1180 = vmatpush1.msra.mxu0 0.0
      %1181 = vmatprep.subr.mxu0 0.0
      %1182 = vmatpush1.msra.mxu0 0.0
      %1183 = vmatprep.subr.mxu0 0.0
      %1184 = vmatpush1.msra.mxu0 0.0
      %1185 = vmatprep.subr.mxu0 0.0
      %1186 = vmatpush1.msra.mxu0 0.0
      %1187 = vmatprep.subr.mxu0 0.0
      %1188 = vmatpush1.msra.mxu0 0.0
      %1189 = vmatprep.subr.mxu0 0.0
      %1190 = vmatpush1.msra.mxu0 0.0
      %1191 = vmatprep.subr.mxu0 0.0
      %1192 = vmatpush1.msra.mxu0 0.0
      %1193 = vmatprep.subr.mxu0 0.0
      %1194 = vmatpush1.msra.mxu0 0.0
      %1195 = vmatprep.subr.mxu0 0.0
      %1196 = vmatpush1.msra.mxu0 0.0
      %1197 = vmatprep.subr.mxu0 0.0
      %1198 = vmatpush1.msra.mxu0 0.0
      %1199 = vmatprep.mubr.f32.mxu0 0.0
      %1200 = vmatmul.mubr.f32.gmra.mrb[0].mxu0 %v1112
      %v1201 = vpop.f32.mrb[0].mxu0
      %v1202 = vadd.f32 0.0, %v1201
      %v1203 = vpop.f32.mrb[0].mxu0
      %1204 = vmatprep.mubr.f32.mxu0 0.0
      %1205 = vmatmul.mubr.f32.gmra.mrb[0].mxu0 %v1115
      %v1206 = vpop.f32.mrb[0].mxu0
      %v1207 = vadd.f32 0.0, %v1206
      %v1208 = vpop.f32.mrb[0].mxu0
      %1209 = vmatprep.mubr.f32.mxu0 0.0
      %1210 = vmatmul.mubr.f32.gmra.mrb[0].mxu0 %v1118
      %v1211 = vpop.f32.mrb[0].mxu0
      %v1212 = vadd.f32 0.0, %v1211
      %v1213 = vpop.f32.mrb[0].mxu0
      %1214 = vmatprep.mubr.f32.mxu0 0.0
      %1215 = vmatmul.mubr.f32.gmra.mrb[0].mxu0 %v1121
      %v1216 = vpop.f32.mrb[0].mxu0
      %v1217 = vadd.f32 0.0, %v1216
      %v1218 = vpop.f32.mrb[0].mxu0
      %1219 = vmatprep.mubr.f32.mxu0 0.0
      %1220 = vmatmul.mubr.f32.gmra.mrb[0].mxu0 %v1124
      %v1221 = vpop.f32.mrb[0].mxu0
      %v1222 = vadd.f32 0.0, %v1221
      %v1223 = vpop.f32.mrb[0].mxu0
      %1224 = vmatprep.mubr.f32.mxu0 0.0
      %1225 = vmatmul.mubr.f32.gmra.mrb[0].mxu0 %v1127
      %v1226 = vpop.f32.mrb[0].mxu0
      %v1227 = vadd.f32 0.0, %v1226
      %v1228 = vpop.f32.mrb[0].mxu0
      %1229 = vmatprep.mubr.f32.mxu0 0.0
      %1230 = vmatmul.mubr.f32.gmra.mrb[0].mxu0 %v1130
      %v1231 = vpop.f32.mrb[0].mxu0
      %v1232 = vadd.f32 0.0, %v1231
      %v1233 = vpop.f32.mrb[0].mxu0
      %1234 = vmatprep.mubr.f32.mxu0 0.0
      %1235 = vmatmul.mubr.f32.gmra.mrb[0].mxu0 %v1133
      %v1236 = vpop.f32.mrb[0].mxu0
      %v1237 = vadd.f32 0.0, %v1236
      %v1238 = vpop.f32.mrb[0].mxu0
      %1239 = vdwg.mxu0
      %1240 = vrot.lane.b32.xlu0 %v548, 64
      %v1241 = vpop.permute.xlu0 %1240
      %1242 = vrot.lane.b32.xlu0 %v553, 64
      %v1243 = vpop.permute.xlu0 %1242
      %1244 = vrot.lane.b32.xlu0 %v558, 64
      %v1245 = vpop.permute.xlu0 %1244
      %1246 = vrot.lane.b32.xlu0 %v563, 64
      %v1247 = vpop.permute.xlu0 %1246
      %1248 = vrot.lane.b32.xlu0 %v568, 64
      %v1249 = vpop.permute.xlu0 %1248
      %1250 = vrot.lane.b32.xlu0 %v573, 64
      %v1251 = vpop.permute.xlu0 %1250
      %1252 = vrot.lane.b32.xlu0 %v578, 64
      %v1253 = vpop.permute.xlu0 %1252
      %1254 = vrot.lane.b32.xlu0 %v583, 64
      %v1255 = vpop.permute.xlu0 %1254
      %v1265 = vsel %vm910, %v1079, 0
      %v1268 = vsel %vm910, %v1080, 0
      %v1271 = vsel %vm910, %v1081, 0
      %v1274 = vsel %vm910, %v1082, 0
      %v1277 = vsel %vm910, %v1083, 0
      %v1280 = vsel %vm910, %v1084, 0
      %v1283 = vsel %vm910, %v1085, 0
      %v1286 = vsel %vm910, %v1086, 0
      %1288 = vmatprep.subr.mxu0 0.0
      %1289 = vmatpush1.msra.mxu0 %v1241
      %1290 = vmatprep.subr.mxu0 0.0
      %1291 = vmatpush1.msra.mxu0 %v1243
      %1292 = vmatprep.subr.mxu0 0.0
      %1293 = vmatpush1.msra.mxu0 %v1245
      %1294 = vmatprep.subr.mxu0 0.0
      %1295 = vmatpush1.msra.mxu0 %v1247
      %1296 = vmatprep.subr.mxu0 0.0
      %1297 = vmatpush1.msra.mxu0 %v1249
      %1298 = vmatprep.subr.mxu0 0.0
      %1299 = vmatpush1.msra.mxu0 %v1251
      %1300 = vmatprep.subr.mxu0 0.0
      %1301 = vmatpush1.msra.mxu0 %v1253
      %1302 = vmatprep.subr.mxu0 0.0
      %1303 = vmatpush1.msra.mxu0 %v1255
      %1304 = vmatprep.subr.mxu0 0.0
      %1305 = vmatpush1.msra.mxu0 0.0
      %1306 = vmatprep.subr.mxu0 0.0
      %1307 = vmatpush1.msra.mxu0 0.0
      %1308 = vmatprep.subr.mxu0 0.0
      %1309 = vmatpush1.msra.mxu0 0.0
      %1310 = vmatprep.subr.mxu0 0.0
      %1311 = vmatpush1.msra.mxu0 0.0
      %1312 = vmatprep.subr.mxu0 0.0
      %1313 = vmatpush1.msra.mxu0 0.0
      %1314 = vmatprep.subr.mxu0 0.0
      %1315 = vmatpush1.msra.mxu0 0.0
      %1316 = vmatprep.subr.mxu0 0.0
      %1317 = vmatpush1.msra.mxu0 0.0
      %1318 = vmatprep.subr.mxu0 0.0
      %1319 = vmatpush1.msra.mxu0 0.0
      %1320 = vmatprep.subr.mxu0 0.0
      %1321 = vmatpush1.msra.mxu0 0.0
      %1322 = vmatprep.subr.mxu0 0.0
      %1323 = vmatpush1.msra.mxu0 0.0
      %1324 = vmatprep.subr.mxu0 0.0
      %1325 = vmatpush1.msra.mxu0 0.0
      %1326 = vmatprep.subr.mxu0 0.0
      %1327 = vmatpush1.msra.mxu0 0.0
      %1328 = vmatprep.subr.mxu0 0.0
      %1329 = vmatpush1.msra.mxu0 0.0
      %1330 = vmatprep.subr.mxu0 0.0
      %1331 = vmatpush1.msra.mxu0 0.0
      %1332 = vmatprep.subr.mxu0 0.0
      %1333 = vmatpush1.msra.mxu0 0.0
      %1334 = vmatprep.subr.mxu0 0.0
      %1335 = vmatpush1.msra.mxu0 0.0
      %1336 = vmatprep.subr.mxu0 0.0
      %1337 = vmatpush1.msra.mxu0 0.0
      %1338 = vmatprep.subr.mxu0 0.0
      %1339 = vmatpush1.msra.mxu0 0.0
      %1340 = vmatprep.subr.mxu0 0.0
      %1341 = vmatpush1.msra.mxu0 0.0
      %1342 = vmatprep.subr.mxu0 0.0
      %1343 = vmatpush1.msra.mxu0 0.0
      %1344 = vmatprep.subr.mxu0 0.0
      %1345 = vmatpush1.msra.mxu0 0.0
      %1346 = vmatprep.subr.mxu0 0.0
      %1347 = vmatpush1.msra.mxu0 0.0
      %1348 = vmatprep.subr.mxu0 0.0
      %1349 = vmatpush1.msra.mxu0 0.0
      %1350 = vmatprep.subr.mxu0 0.0
      %1351 = vmatpush1.msra.mxu0 0.0
      %1352 = vmatprep.mubr.f32.mxu0 0.0
      %1353 = vmatmul.mubr.f32.gmra.mrb[0].mxu0 %v1265
      %v1354 = vpop.f32.mrb[0].mxu0
      %v1355 = vadd.f32 0.0, %v1354
      %v1356 = vpop.f32.mrb[0].mxu0
      %1357 = vmatprep.mubr.f32.mxu0 0.0
      %1358 = vmatmul.mubr.f32.gmra.mrb[0].mxu0 %v1268
      %v1359 = vpop.f32.mrb[0].mxu0
      %v1360 = vadd.f32 0.0, %v1359
      %v1361 = vpop.f32.mrb[0].mxu0
      %1362 = vmatprep.mubr.f32.mxu0 0.0
      %1363 = vmatmul.mubr.f32.gmra.mrb[0].mxu0 %v1271
      %v1364 = vpop.f32.mrb[0].mxu0
      %v1365 = vadd.f32 0.0, %v1364
      %v1366 = vpop.f32.mrb[0].mxu0
      %1367 = vmatprep.mubr.f32.mxu0 0.0
      %1368 = vmatmul.mubr.f32.gmra.mrb[0].mxu0 %v1274
      %v1369 = vpop.f32.mrb[0].mxu0
      %v1370 = vadd.f32 0.0, %v1369
      %v1371 = vpop.f32.mrb[0].mxu0
      %1372 = vmatprep.mubr.f32.mxu0 0.0
      %1373 = vmatmul.mubr.f32.gmra.mrb[0].mxu0 %v1277
      %v1374 = vpop.f32.mrb[0].mxu0
      %v1375 = vadd.f32 0.0, %v1374
      %v1376 = vpop.f32.mrb[0].mxu0
      %1377 = vmatprep.mubr.f32.mxu0 0.0
      %1378 = vmatmul.mubr.f32.gmra.mrb[0].mxu0 %v1280
      %v1379 = vpop.f32.mrb[0].mxu0
      %v1380 = vadd.f32 0.0, %v1379
      %v1381 = vpop.f32.mrb[0].mxu0
      %1382 = vmatprep.mubr.f32.mxu0 0.0
      %1383 = vmatmul.mubr.f32.gmra.mrb[0].mxu0 %v1283
      %v1384 = vpop.f32.mrb[0].mxu0
      %v1385 = vadd.f32 0.0, %v1384
      %v1386 = vpop.f32.mrb[0].mxu0
      %1387 = vmatprep.mubr.f32.mxu0 0.0
      %1388 = vmatmul.mubr.f32.gmra.mrb[0].mxu0 %v1286
      %v1389 = vpop.f32.mrb[0].mxu0
      %v1390 = vadd.f32 0.0, %v1389
      %v1391 = vpop.f32.mrb[0].mxu0
      %1392 = vdwg.mxu0
      %1393 = vrot.lane.b32.xlu0 %v508, 120
      %v1394 = vpop.permute.xlu0 %1393
      %1395 = vrot.lane.b32.xlu0 %v513, 120
      %v1396 = vpop.permute.xlu0 %1395
      %1397 = vrot.lane.b32.xlu0 %v518, 120
      %v1398 = vpop.permute.xlu0 %1397
      %1399 = vrot.lane.b32.xlu0 %v523, 120
      %v1400 = vpop.permute.xlu0 %1399
      %1401 = vrot.lane.b32.xlu0 %v528, 120
      %v1402 = vpop.permute.xlu0 %1401
      %1403 = vrot.lane.b32.xlu0 %v533, 120
      %v1404 = vpop.permute.xlu0 %1403
      %1405 = vrot.lane.b32.xlu0 %v538, 120
      %v1406 = vpop.permute.xlu0 %1405
      %1407 = vrot.lane.b32.xlu0 %v543, 120
      %v1408 = vpop.permute.xlu0 %1407
      %1409 = vrot.lane.b32.xlu0 %v508, 88
      %v1410 = vpop.permute.xlu0 %1409
      %1411 = vrot.lane.b32.xlu0 %v513, 88
      %v1412 = vpop.permute.xlu0 %1411
      %1413 = vrot.lane.b32.xlu0 %v518, 88
      %v1414 = vpop.permute.xlu0 %1413
      %1415 = vrot.lane.b32.xlu0 %v523, 88
      %v1416 = vpop.permute.xlu0 %1415
      %1417 = vrot.lane.b32.xlu0 %v528, 88
      %v1418 = vpop.permute.xlu0 %1417
      %1419 = vrot.lane.b32.xlu0 %v533, 88
      %v1420 = vpop.permute.xlu0 %1419
      %1421 = vrot.lane.b32.xlu0 %v538, 88
      %v1422 = vpop.permute.xlu0 %1421
      %1423 = vrot.lane.b32.xlu0 %v543, 88
      %v1424 = vpop.permute.xlu0 %1423
      %v1425 = vsel %vm611, %v1394, 0
      %v1427 = vsel %vm611, %v1396, 0
      %v1429 = vsel %vm611, %v1398, 0
      %v1431 = vsel %vm611, %v1400, 0
      %v1433 = vsel %vm611, %v1402, 0
      %v1435 = vsel %vm611, %v1404, 0
      %v1437 = vsel %vm611, %v1406, 0
      %v1439 = vsel %vm611, %v1408, 0
      %v1441 = vsel %vm611, %v1410, 0
      %v1443 = vsel %vm611, %v1412, 0
      %v1445 = vsel %vm611, %v1414, 0
      %v1447 = vsel %vm611, %v1416, 0
      %v1449 = vsel %vm611, %v1418, 0
      %v1451 = vsel %vm611, %v1420, 0
      %v1453 = vsel %vm611, %v1422, 0
      %v1455 = vsel %vm611, %v1424, 0
      %1457 = vmatprep.subr.mxu0 0.0
      %1458 = vmatpush1.xpose.msra.mxu0 %v1441
      %1459 = vmatprep.subr.mxu0 0.0
      %1460 = vmatpush1.xpose.msra.mxu0 %v1443
      %1461 = vmatprep.subr.mxu0 0.0
      %1462 = vmatpush1.xpose.msra.mxu0 %v1445
      %1463 = vmatprep.subr.mxu0 0.0
      %1464 = vmatpush1.xpose.msra.mxu0 %v1447
      %1465 = vmatprep.subr.mxu0 0.0
      %1466 = vmatpush1.xpose.msra.mxu0 %v1449
      %1467 = vmatprep.subr.mxu0 0.0
      %1468 = vmatpush1.xpose.msra.mxu0 %v1451
      %1469 = vmatprep.subr.mxu0 0.0
      %1470 = vmatpush1.xpose.msra.mxu0 %v1453
      %1471 = vmatprep.subr.mxu0 0.0
      %1472 = vmatpush1.xpose.msra.mxu0 %v1455
      %1473 = vmatprep.subr.mxu0 0.0
      %1474 = vmatpush1.xpose.msra.mxu0 0.0
      %1475 = vmatprep.subr.mxu0 0.0
      %1476 = vmatpush1.xpose.msra.mxu0 0.0
      %1477 = vmatprep.subr.mxu0 0.0
      %1478 = vmatpush1.xpose.msra.mxu0 0.0
      %1479 = vmatprep.subr.mxu0 0.0
      %1480 = vmatpush1.xpose.msra.mxu0 0.0
      %1481 = vmatprep.subr.mxu0 0.0
      %1482 = vmatpush1.xpose.msra.mxu0 0.0
      %1483 = vmatprep.subr.mxu0 0.0
      %1484 = vmatpush1.xpose.msra.mxu0 0.0
      %1485 = vmatprep.subr.mxu0 0.0
      %1486 = vmatpush1.xpose.msra.mxu0 0.0
      %1487 = vmatprep.subr.mxu0 0.0
      %1488 = vmatpush1.xpose.msra.mxu0 0.0
      %1489 = vmatprep.subr.mxu0 0.0
      %1490 = vmatpush1.xpose.msra.mxu0 0.0
      %1491 = vmatprep.subr.mxu0 0.0
      %1492 = vmatpush1.xpose.msra.mxu0 0.0
      %1493 = vmatprep.subr.mxu0 0.0
      %1494 = vmatpush1.xpose.msra.mxu0 0.0
      %1495 = vmatprep.subr.mxu0 0.0
      %1496 = vmatpush1.xpose.msra.mxu0 0.0
      %1497 = vmatprep.subr.mxu0 0.0
      %1498 = vmatpush1.xpose.msra.mxu0 0.0
      %1499 = vmatprep.subr.mxu0 0.0
      %1500 = vmatpush1.xpose.msra.mxu0 0.0
      %1501 = vmatprep.subr.mxu0 0.0
      %1502 = vmatpush1.xpose.msra.mxu0 0.0
      %1503 = vmatprep.subr.mxu0 0.0
      %1504 = vmatpush1.xpose.msra.mxu0 0.0
      %1505 = vmatprep.subr.mxu0 0.0
      %1506 = vmatpush1.xpose.msra.mxu0 0.0
      %1507 = vmatprep.subr.mxu0 0.0
      %1508 = vmatpush1.xpose.msra.mxu0 0.0
      %1509 = vmatprep.subr.mxu0 0.0
      %1510 = vmatpush1.xpose.msra.mxu0 0.0
      %1511 = vmatprep.subr.mxu0 0.0
      %1512 = vmatpush1.xpose.msra.mxu0 0.0
      %1513 = vmatprep.subr.mxu0 0.0
      %1514 = vmatpush1.xpose.msra.mxu0 0.0
      %1515 = vmatprep.subr.mxu0 0.0
      %1516 = vmatpush1.xpose.msra.mxu0 0.0
      %1517 = vmatprep.subr.mxu0 0.0
      %1518 = vmatpush1.xpose.msra.mxu0 0.0
      %1519 = vmatprep.subr.mxu0 0.0
      %1520 = vmatpush1.xpose.msra.mxu0 0.0
      %1521 = vmatprep.mubr.f32.mxu0 0.0
      %1522 = vmatmul.mubr.f32.gmra.mrb[0].mxu0 %v1425
      %v1523 = vpop.f32.mrb[0].mxu0
      %v1524 = vadd.f32 0.0, %v1523
      %v1525 = vpop.f32.mrb[0].mxu0
      %1526 = vmatprep.mubr.f32.mxu0 0.0
      %1527 = vmatmul.mubr.f32.gmra.mrb[0].mxu0 %v1427
      %v1528 = vpop.f32.mrb[0].mxu0
      %v1529 = vadd.f32 0.0, %v1528
      %v1530 = vpop.f32.mrb[0].mxu0
      %1531 = vmatprep.mubr.f32.mxu0 0.0
      %1532 = vmatmul.mubr.f32.gmra.mrb[0].mxu0 %v1429
      %v1533 = vpop.f32.mrb[0].mxu0
      %v1534 = vadd.f32 0.0, %v1533
      %v1535 = vpop.f32.mrb[0].mxu0
      %1536 = vmatprep.mubr.f32.mxu0 0.0
      %1537 = vmatmul.mubr.f32.gmra.mrb[0].mxu0 %v1431
      %v1538 = vpop.f32.mrb[0].mxu0
      %v1539 = vadd.f32 0.0, %v1538
      %v1540 = vpop.f32.mrb[0].mxu0
      %1541 = vmatprep.mubr.f32.mxu0 0.0
      %1542 = vmatmul.mubr.f32.gmra.mrb[0].mxu0 %v1433
      %v1543 = vpop.f32.mrb[0].mxu0
      %v1544 = vadd.f32 0.0, %v1543
      %v1545 = vpop.f32.mrb[0].mxu0
      %1546 = vmatprep.mubr.f32.mxu0 0.0
      %1547 = vmatmul.mubr.f32.gmra.mrb[0].mxu0 %v1435
      %v1548 = vpop.f32.mrb[0].mxu0
      %v1549 = vadd.f32 0.0, %v1548
      %v1550 = vpop.f32.mrb[0].mxu0
      %1551 = vmatprep.mubr.f32.mxu0 0.0
      %1552 = vmatmul.mubr.f32.gmra.mrb[0].mxu0 %v1437
      %v1553 = vpop.f32.mrb[0].mxu0
      %v1554 = vadd.f32 0.0, %v1553
      %v1555 = vpop.f32.mrb[0].mxu0
      %1556 = vmatprep.mubr.f32.mxu0 0.0
      %1557 = vmatmul.mubr.f32.gmra.mrb[0].mxu0 %v1439
      %v1558 = vpop.f32.mrb[0].mxu0
      %v1559 = vadd.f32 0.0, %v1558
      %v1560 = vpop.f32.mrb[0].mxu0
      %1561 = vdwg.mxu0
      %1562 = vrot.lane.b32.xlu0 %v548, 120
      %v1563 = vpop.permute.xlu0 %1562
      %1564 = vrot.lane.b32.xlu0 %v553, 120
      %v1565 = vpop.permute.xlu0 %1564
      %1566 = vrot.lane.b32.xlu0 %v558, 120
      %v1567 = vpop.permute.xlu0 %1566
      %1568 = vrot.lane.b32.xlu0 %v563, 120
      %v1569 = vpop.permute.xlu0 %1568
      %1570 = vrot.lane.b32.xlu0 %v568, 120
      %v1571 = vpop.permute.xlu0 %1570
      %1572 = vrot.lane.b32.xlu0 %v573, 120
      %v1573 = vpop.permute.xlu0 %1572
      %1574 = vrot.lane.b32.xlu0 %v578, 120
      %v1575 = vpop.permute.xlu0 %1574
      %1576 = vrot.lane.b32.xlu0 %v583, 120
      %v1577 = vpop.permute.xlu0 %1576
      %1578 = vrot.lane.b32.xlu0 %v548, 88
      %v1579 = vpop.permute.xlu0 %1578
      %1580 = vrot.lane.b32.xlu0 %v553, 88
      %v1581 = vpop.permute.xlu0 %1580
      %1582 = vrot.lane.b32.xlu0 %v558, 88
      %v1583 = vpop.permute.xlu0 %1582
      %1584 = vrot.lane.b32.xlu0 %v563, 88
      %v1585 = vpop.permute.xlu0 %1584
      %1586 = vrot.lane.b32.xlu0 %v568, 88
      %v1587 = vpop.permute.xlu0 %1586
      %1588 = vrot.lane.b32.xlu0 %v573, 88
      %v1589 = vpop.permute.xlu0 %1588
      %1590 = vrot.lane.b32.xlu0 %v578, 88
      %v1591 = vpop.permute.xlu0 %1590
      %1592 = vrot.lane.b32.xlu0 %v583, 88
      %v1593 = vpop.permute.xlu0 %1592
      %v1594 = vsel %vm611, %v1563, 0
      %v1596 = vsel %vm611, %v1565, 0
      %v1598 = vsel %vm611, %v1567, 0
      %v1600 = vsel %vm611, %v1569, 0
      %v1602 = vsel %vm611, %v1571, 0
      %v1604 = vsel %vm611, %v1573, 0
      %v1606 = vsel %vm611, %v1575, 0
      %v1608 = vsel %vm611, %v1577, 0
      %v1610 = vsel %vm611, %v1579, 0
      %v1612 = vsel %vm611, %v1581, 0
      %v1614 = vsel %vm611, %v1583, 0
      %v1616 = vsel %vm611, %v1585, 0
      %v1618 = vsel %vm611, %v1587, 0
      %v1620 = vsel %vm611, %v1589, 0
      %v1622 = vsel %vm611, %v1591, 0
      %v1624 = vsel %vm611, %v1593, 0
      %1626 = vmatprep.subr.mxu0 0.0
      %1627 = vmatpush1.xpose.msra.mxu0 %v1610
      %1628 = vmatprep.subr.mxu0 0.0
      %1629 = vmatpush1.xpose.msra.mxu0 %v1612
      %1630 = vmatprep.subr.mxu0 0.0
      %1631 = vmatpush1.xpose.msra.mxu0 %v1614
      %1632 = vmatprep.subr.mxu0 0.0
      %1633 = vmatpush1.xpose.msra.mxu0 %v1616
      %1634 = vmatprep.subr.mxu0 0.0
      %1635 = vmatpush1.xpose.msra.mxu0 %v1618
      %1636 = vmatprep.subr.mxu0 0.0
      %1637 = vmatpush1.xpose.msra.mxu0 %v1620
      %1638 = vmatprep.subr.mxu0 0.0
      %1639 = vmatpush1.xpose.msra.mxu0 %v1622
      %1640 = vmatprep.subr.mxu0 0.0
      %1641 = vmatpush1.xpose.msra.mxu0 %v1624
      %1642 = vmatprep.subr.mxu0 0.0
      %1643 = vmatpush1.xpose.msra.mxu0 0.0
      %1644 = vmatprep.subr.mxu0 0.0
      %1645 = vmatpush1.xpose.msra.mxu0 0.0
      %1646 = vmatprep.subr.mxu0 0.0
      %1647 = vmatpush1.xpose.msra.mxu0 0.0
      %1648 = vmatprep.subr.mxu0 0.0
      %1649 = vmatpush1.xpose.msra.mxu0 0.0
      %1650 = vmatprep.subr.mxu0 0.0
      %1651 = vmatpush1.xpose.msra.mxu0 0.0
      %1652 = vmatprep.subr.mxu0 0.0
      %1653 = vmatpush1.xpose.msra.mxu0 0.0
      %1654 = vmatprep.subr.mxu0 0.0
      %1655 = vmatpush1.xpose.msra.mxu0 0.0
      %1656 = vmatprep.subr.mxu0 0.0
      %1657 = vmatpush1.xpose.msra.mxu0 0.0
      %1658 = vmatprep.subr.mxu0 0.0
      %1659 = vmatpush1.xpose.msra.mxu0 0.0
      %1660 = vmatprep.subr.mxu0 0.0
      %1661 = vmatpush1.xpose.msra.mxu0 0.0
      %1662 = vmatprep.subr.mxu0 0.0
      %1663 = vmatpush1.xpose.msra.mxu0 0.0
      %1664 = vmatprep.subr.mxu0 0.0
      %1665 = vmatpush1.xpose.msra.mxu0 0.0
      %1666 = vmatprep.subr.mxu0 0.0
      %1667 = vmatpush1.xpose.msra.mxu0 0.0
      %1668 = vmatprep.subr.mxu0 0.0
      %1669 = vmatpush1.xpose.msra.mxu0 0.0
      %1670 = vmatprep.subr.mxu0 0.0
      %1671 = vmatpush1.xpose.msra.mxu0 0.0
      %1672 = vmatprep.subr.mxu0 0.0
      %1673 = vmatpush1.xpose.msra.mxu0 0.0
      %1674 = vmatprep.subr.mxu0 0.0
      %1675 = vmatpush1.xpose.msra.mxu0 0.0
      %1676 = vmatprep.subr.mxu0 0.0
      %1677 = vmatpush1.xpose.msra.mxu0 0.0
      %1678 = vmatprep.subr.mxu0 0.0
      %1679 = vmatpush1.xpose.msra.mxu0 0.0
      %1680 = vmatprep.subr.mxu0 0.0
      %1681 = vmatpush1.xpose.msra.mxu0 0.0
      %1682 = vmatprep.subr.mxu0 0.0
      %1683 = vmatpush1.xpose.msra.mxu0 0.0
      %1684 = vmatprep.subr.mxu0 0.0
      %1685 = vmatpush1.xpose.msra.mxu0 0.0
      %1686 = vmatprep.subr.mxu0 0.0
      %1687 = vmatpush1.xpose.msra.mxu0 0.0
      %1688 = vmatprep.subr.mxu0 0.0
      %1689 = vmatpush1.xpose.msra.mxu0 0.0
      %1690 = vmatprep.mubr.f32.mxu0 0.0
      %1691 = vmatmul.mubr.f32.gmra.mrb[0].mxu0 %v1594
      %v1692 = vpop.f32.mrb[0].mxu0
      %v1693 = vadd.f32 0.0, %v1692
      %v1694 = vpop.f32.mrb[0].mxu0
      %1695 = vmatprep.mubr.f32.mxu0 0.0
      %1696 = vmatmul.mubr.f32.gmra.mrb[0].mxu0 %v1596
      %v1697 = vpop.f32.mrb[0].mxu0
      %v1698 = vadd.f32 0.0, %v1697
      %v1699 = vpop.f32.mrb[0].mxu0
      %1700 = vmatprep.mubr.f32.mxu0 0.0
      %1701 = vmatmul.mubr.f32.gmra.mrb[0].mxu0 %v1598
      %v1702 = vpop.f32.mrb[0].mxu0
      %v1703 = vadd.f32 0.0, %v1702
      %v1704 = vpop.f32.mrb[0].mxu0
      %1705 = vmatprep.mubr.f32.mxu0 0.0
      %1706 = vmatmul.mubr.f32.gmra.mrb[0].mxu0 %v1600
      %v1707 = vpop.f32.mrb[0].mxu0
      %v1708 = vadd.f32 0.0, %v1707
      %v1709 = vpop.f32.mrb[0].mxu0
      %1710 = vmatprep.mubr.f32.mxu0 0.0
      %1711 = vmatmul.mubr.f32.gmra.mrb[0].mxu0 %v1602
      %v1712 = vpop.f32.mrb[0].mxu0
      %v1713 = vadd.f32 0.0, %v1712
      %v1714 = vpop.f32.mrb[0].mxu0
      %1715 = vmatprep.mubr.f32.mxu0 0.0
      %1716 = vmatmul.mubr.f32.gmra.mrb[0].mxu0 %v1604
      %v1717 = vpop.f32.mrb[0].mxu0
      %v1718 = vadd.f32 0.0, %v1717
      %v1719 = vpop.f32.mrb[0].mxu0
      %1720 = vmatprep.mubr.f32.mxu0 0.0
      %1721 = vmatmul.mubr.f32.gmra.mrb[0].mxu0 %v1606
      %v1722 = vpop.f32.mrb[0].mxu0
      %v1723 = vadd.f32 0.0, %v1722
      %v1724 = vpop.f32.mrb[0].mxu0
      %1725 = vmatprep.mubr.f32.mxu0 0.0
      %1726 = vmatmul.mubr.f32.gmra.mrb[0].mxu0 %v1608
      %v1727 = vpop.f32.mrb[0].mxu0
      %v1728 = vadd.f32 0.0, %v1727
      %v1729 = vpop.f32.mrb[0].mxu0
      %1730 = vdwg.mxu0
      %v1731 = vsel %vm910, %v1524, -inf
      %1732 = vmax.xlane.f32.xlu0 %v1731
      %v1733 = vpop.xlane.xlu0 %1732
      %v1734 = vsel %vm910, %v1529, -inf
      %1735 = vmax.xlane.f32.xlu0 %v1734
      %v1736 = vpop.xlane.xlu0 %1735
      %v1737 = vsel %vm910, %v1534, -inf
      %1738 = vmax.xlane.f32.xlu0 %v1737
      %v1739 = vpop.xlane.xlu0 %1738
      %v1740 = vsel %vm910, %v1539, -inf
      %1741 = vmax.xlane.f32.xlu0 %v1740
      %v1742 = vpop.xlane.xlu0 %1741
      %v1743 = vsel %vm910, %v1544, -inf
      %1744 = vmax.xlane.f32.xlu0 %v1743
      %v1745 = vpop.xlane.xlu0 %1744
      %v1746 = vsel %vm910, %v1549, -inf
      %1747 = vmax.xlane.f32.xlu0 %v1746
      %v1748 = vpop.xlane.xlu0 %1747
      %v1749 = vsel %vm910, %v1554, -inf
      %1750 = vmax.xlane.f32.xlu0 %v1749
      %v1751 = vpop.xlane.xlu0 %1750
      %v1752 = vsel %vm910, %v1559, -inf
      %1753 = vmax.xlane.f32.xlu0 %v1752
      %v1754 = vpop.xlane.xlu0 %1753
      %v1755 = vsel %vm910, %v1693, -inf
      %1756 = vmax.xlane.f32.xlu0 %v1755
      %v1757 = vpop.xlane.xlu0 %1756
      %v1758 = vsel %vm910, %v1698, -inf
      %1759 = vmax.xlane.f32.xlu0 %v1758
      %v1760 = vpop.xlane.xlu0 %1759
      %v1761 = vsel %vm910, %v1703, -inf
      %1762 = vmax.xlane.f32.xlu0 %v1761
      %v1763 = vpop.xlane.xlu0 %1762
      %v1764 = vsel %vm910, %v1708, -inf
      %1765 = vmax.xlane.f32.xlu0 %v1764
      %v1766 = vpop.xlane.xlu0 %1765
      %v1767 = vsel %vm910, %v1713, -inf
      %1768 = vmax.xlane.f32.xlu0 %v1767
      %v1769 = vpop.xlane.xlu0 %1768
      %v1770 = vsel %vm910, %v1718, -inf
      %1771 = vmax.xlane.f32.xlu0 %v1770
      %v1772 = vpop.xlane.xlu0 %1771
      %v1773 = vsel %vm910, %v1723, -inf
      %1774 = vmax.xlane.f32.xlu0 %v1773
      %v1775 = vpop.xlane.xlu0 %1774
      %v1776 = vsel %vm910, %v1728, -inf
      %1777 = vmax.xlane.f32.xlu0 %v1776
      %v1778 = vpop.xlane.xlu0 %1777
      %v1779 = vsub.f32 %v1524, %v1733
      %v1780 = vsub.f32 %v1529, %v1736
      %v1781 = vsub.f32 %v1534, %v1739
      %v1782 = vsub.f32 %v1539, %v1742
      %v1783 = vsub.f32 %v1544, %v1745
      %v1784 = vsub.f32 %v1549, %v1748
      %v1785 = vsub.f32 %v1554, %v1751
      %v1786 = vsub.f32 %v1559, %v1754
      %v1787 = vsub.f32 %v1693, %v1757
      %v1788 = vsub.f32 %v1698, %v1760
      %v1789 = vsub.f32 %v1703, %v1763
      %v1790 = vsub.f32 %v1708, %v1766
      %v1791 = vsub.f32 %v1713, %v1769
      %v1792 = vsub.f32 %v1718, %v1772
      %v1793 = vsub.f32 %v1723, %v1775
      %v1794 = vsub.f32 %v1728, %v1778
      %v1795 = vmul.f32 %v1779, 1.442695
      %v1796 = vpow.pop %v1795
      %v1797 = vmul.f32 %v1780, 1.442695
      %v1798 = vpow.pop %v1797
      %v1799 = vmul.f32 %v1781, 1.442695
      %v1800 = vpow.pop %v1799
      %v1801 = vmul.f32 %v1782, 1.442695
      %v1802 = vpow.pop %v1801
      %v1803 = vmul.f32 %v1783, 1.442695
      %v1804 = vpow.pop %v1803
      %v1805 = vmul.f32 %v1784, 1.442695
      %v1806 = vpow.pop %v1805
      %v1807 = vmul.f32 %v1785, 1.442695
      %v1808 = vpow.pop %v1807
      %v1809 = vmul.f32 %v1786, 1.442695
      %v1810 = vpow.pop %v1809
      %v1811 = vmul.f32 %v1787, 1.442695
      %v1812 = vpow.pop %v1811
      %v1813 = vmul.f32 %v1788, 1.442695
      %v1814 = vpow.pop %v1813
      %v1815 = vmul.f32 %v1789, 1.442695
      %v1816 = vpow.pop %v1815
      %v1817 = vmul.f32 %v1790, 1.442695
      %v1818 = vpow.pop %v1817
      %v1819 = vmul.f32 %v1791, 1.442695
      %v1820 = vpow.pop %v1819
      %v1821 = vmul.f32 %v1792, 1.442695
      %v1822 = vpow.pop %v1821
      %v1823 = vmul.f32 %v1793, 1.442695
      %v1824 = vpow.pop %v1823
      %v1825 = vmul.f32 %v1794, 1.442695
      %v1826 = vpow.pop %v1825
      %v1827 = vsel %vm910, %v1796, 0.0
      %1828 = vadd.xlane.f32.xlu0 %v1827
      %v1829 = vpop.xlane.xlu0 %1828
      %v1830 = vsel %vm910, %v1798, 0.0
      %1831 = vadd.xlane.f32.xlu0 %v1830
      %v1832 = vpop.xlane.xlu0 %1831
      %v1833 = vsel %vm910, %v1800, 0.0
      %1834 = vadd.xlane.f32.xlu0 %v1833
      %v1835 = vpop.xlane.xlu0 %1834
      %v1836 = vsel %vm910, %v1802, 0.0
      %1837 = vadd.xlane.f32.xlu0 %v1836
      %v1838 = vpop.xlane.xlu0 %1837
      %v1839 = vsel %vm910, %v1804, 0.0
      %1840 = vadd.xlane.f32.xlu0 %v1839
      %v1841 = vpop.xlane.xlu0 %1840
      %v1842 = vsel %vm910, %v1806, 0.0
      %1843 = vadd.xlane.f32.xlu0 %v1842
      %v1844 = vpop.xlane.xlu0 %1843
      %v1845 = vsel %vm910, %v1808, 0.0
      %1846 = vadd.xlane.f32.xlu0 %v1845
      %v1847 = vpop.xlane.xlu0 %1846
      %v1848 = vsel %vm910, %v1810, 0.0
      %1849 = vadd.xlane.f32.xlu0 %v1848
      %v1850 = vpop.xlane.xlu0 %1849
      %v1851 = vsel %vm910, %v1812, 0.0
      %1852 = vadd.xlane.f32.xlu0 %v1851
      %v1853 = vpop.xlane.xlu0 %1852
      %v1854 = vsel %vm910, %v1814, 0.0
      %1855 = vadd.xlane.f32.xlu0 %v1854
      %v1856 = vpop.xlane.xlu0 %1855
      %v1857 = vsel %vm910, %v1816, 0.0
      %1858 = vadd.xlane.f32.xlu0 %v1857
      %v1859 = vpop.xlane.xlu0 %1858
      %v1860 = vsel %vm910, %v1818, 0.0
      %1861 = vadd.xlane.f32.xlu0 %v1860
      %v1862 = vpop.xlane.xlu0 %1861
      %v1863 = vsel %vm910, %v1820, 0.0
      %1864 = vadd.xlane.f32.xlu0 %v1863
      %v1865 = vpop.xlane.xlu0 %1864
      %v1866 = vsel %vm910, %v1822, 0.0
      %1867 = vadd.xlane.f32.xlu0 %v1866
      %v1868 = vpop.xlane.xlu0 %1867
      %v1869 = vsel %vm910, %v1824, 0.0
      %1870 = vadd.xlane.f32.xlu0 %v1869
      %v1871 = vpop.xlane.xlu0 %1870
      %v1872 = vsel %vm910, %v1826, 0.0
      %1873 = vadd.xlane.f32.xlu0 %v1872
      %v1874 = vpop.xlane.xlu0 %1873
      %v1875 = vrcp.pop %v1829
      %v1876 = vrcp.pop %v1832
      %v1877 = vrcp.pop %v1835
      %v1878 = vrcp.pop %v1838
      %v1879 = vrcp.pop %v1841
      %v1880 = vrcp.pop %v1844
      %v1881 = vrcp.pop %v1847
      %v1882 = vrcp.pop %v1850
      %v1883 = vrcp.pop %v1853
      %v1884 = vrcp.pop %v1856
      %v1885 = vrcp.pop %v1859
      %v1886 = vrcp.pop %v1862
      %v1887 = vrcp.pop %v1865
      %v1888 = vrcp.pop %v1868
      %v1889 = vrcp.pop %v1871
      %v1890 = vrcp.pop %v1874
      %v1891 = vmul.f32 %v1796, %v1875
      %v1892 = vmul.f32 %v1798, %v1876
      %v1893 = vmul.f32 %v1800, %v1877
      %v1894 = vmul.f32 %v1802, %v1878
      %v1895 = vmul.f32 %v1804, %v1879
      %v1896 = vmul.f32 %v1806, %v1880
      %v1897 = vmul.f32 %v1808, %v1881
      %v1898 = vmul.f32 %v1810, %v1882
      %v1899 = vmul.f32 %v1812, %v1883
      %v1900 = vmul.f32 %v1814, %v1884
      %v1901 = vmul.f32 %v1816, %v1885
      %v1902 = vmul.f32 %v1818, %v1886
      %v1903 = vmul.f32 %v1820, %v1887
      %v1904 = vmul.f32 %v1822, %v1888
      %v1905 = vmul.f32 %v1824, %v1889
      %v1906 = vmul.f32 %v1826, %v1890
      %1907 = vrot.lane.b32.xlu0 %v508, 56
      %v1908 = vpop.permute.xlu0 %1907
      %1909 = vrot.lane.b32.xlu0 %v513, 56
      %v1910 = vpop.permute.xlu0 %1909
      %1911 = vrot.lane.b32.xlu0 %v518, 56
      %v1912 = vpop.permute.xlu0 %1911
      %1913 = vrot.lane.b32.xlu0 %v523, 56
      %v1914 = vpop.permute.xlu0 %1913
      %1915 = vrot.lane.b32.xlu0 %v528, 56
      %v1916 = vpop.permute.xlu0 %1915
      %1917 = vrot.lane.b32.xlu0 %v533, 56
      %v1918 = vpop.permute.xlu0 %1917
      %1919 = vrot.lane.b32.xlu0 %v538, 56
      %v1920 = vpop.permute.xlu0 %1919
      %1921 = vrot.lane.b32.xlu0 %v543, 56
      %v1922 = vpop.permute.xlu0 %1921
      %v1932 = vsel %vm910, %v1891, 0
      %v1935 = vsel %vm910, %v1892, 0
      %v1938 = vsel %vm910, %v1893, 0
      %v1941 = vsel %vm910, %v1894, 0
      %v1944 = vsel %vm910, %v1895, 0
      %v1947 = vsel %vm910, %v1896, 0
      %v1950 = vsel %vm910, %v1897, 0
      %v1953 = vsel %vm910, %v1898, 0
      %1955 = vmatprep.subr.mxu0 0.0
      %1956 = vmatpush1.msra.mxu0 %v1908
      %1957 = vmatprep.subr.mxu0 0.0
      %1958 = vmatpush1.msra.mxu0 %v1910
      %1959 = vmatprep.subr.mxu0 0.0
      %1960 = vmatpush1.msra.mxu0 %v1912
      %1961 = vmatprep.subr.mxu0 0.0
      %1962 = vmatpush1.msra.mxu0 %v1914
      %1963 = vmatprep.subr.mxu0 0.0
      %1964 = vmatpush1.msra.mxu0 %v1916
      %1965 = vmatprep.subr.mxu0 0.0
      %1966 = vmatpush1.msra.mxu0 %v1918
      %1967 = vmatprep.subr.mxu0 0.0
      %1968 = vmatpush1.msra.mxu0 %v1920
      %1969 = vmatprep.subr.mxu0 0.0
      %1970 = vmatpush1.msra.mxu0 %v1922
      %1971 = vmatprep.subr.mxu0 0.0
      %1972 = vmatpush1.msra.mxu0 0.0
      %1973 = vmatprep.subr.mxu0 0.0
      %1974 = vmatpush1.msra.mxu0 0.0
      %1975 = vmatprep.subr.mxu0 0.0
      %1976 = vmatpush1.msra.mxu0 0.0
      %1977 = vmatprep.subr.mxu0 0.0
      %1978 = vmatpush1.msra.mxu0 0.0
      %1979 = vmatprep.subr.mxu0 0.0
      %1980 = vmatpush1.msra.mxu0 0.0
      %1981 = vmatprep.subr.mxu0 0.0
      %1982 = vmatpush1.msra.mxu0 0.0
      %1983 = vmatprep.subr.mxu0 0.0
      %1984 = vmatpush1.msra.mxu0 0.0
      %1985 = vmatprep.subr.mxu0 0.0
      %1986 = vmatpush1.msra.mxu0 0.0
      %1987 = vmatprep.subr.mxu0 0.0
      %1988 = vmatpush1.msra.mxu0 0.0
      %1989 = vmatprep.subr.mxu0 0.0
      %1990 = vmatpush1.msra.mxu0 0.0
      %1991 = vmatprep.subr.mxu0 0.0
      %1992 = vmatpush1.msra.mxu0 0.0
      %1993 = vmatprep.subr.mxu0 0.0
      %1994 = vmatpush1.msra.mxu0 0.0
      %1995 = vmatprep.subr.mxu0 0.0
      %1996 = vmatpush1.msra.mxu0 0.0
      %1997 = vmatprep.subr.mxu0 0.0
      %1998 = vmatpush1.msra.mxu0 0.0
      %1999 = vmatprep.subr.mxu0 0.0
      %2000 = vmatpush1.msra.mxu0 0.0
      %2001 = vmatprep.subr.mxu0 0.0
      %2002 = vmatpush1.msra.mxu0 0.0
      %2003 = vmatprep.subr.mxu0 0.0
      %2004 = vmatpush1.msra.mxu0 0.0
      %2005 = vmatprep.subr.mxu0 0.0
      %2006 = vmatpush1.msra.mxu0 0.0
      %2007 = vmatprep.subr.mxu0 0.0
      %2008 = vmatpush1.msra.mxu0 0.0
      %2009 = vmatprep.subr.mxu0 0.0
      %2010 = vmatpush1.msra.mxu0 0.0
      %2011 = vmatprep.subr.mxu0 0.0
      %2012 = vmatpush1.msra.mxu0 0.0
      %2013 = vmatprep.subr.mxu0 0.0
      %2014 = vmatpush1.msra.mxu0 0.0
      %2015 = vmatprep.subr.mxu0 0.0
      %2016 = vmatpush1.msra.mxu0 0.0
      %2017 = vmatprep.subr.mxu0 0.0
      %2018 = vmatpush1.msra.mxu0 0.0
      %2019 = vmatprep.mubr.f32.mxu0 0.0
      %2020 = vmatmul.mubr.f32.gmra.mrb[0].mxu0 %v1932
      %v2021 = vpop.f32.mrb[0].mxu0
      %v2022 = vadd.f32 0.0, %v2021
      %v2023 = vpop.f32.mrb[0].mxu0
      %2024 = vmatprep.mubr.f32.mxu0 0.0
      %2025 = vmatmul.mubr.f32.gmra.mrb[0].mxu0 %v1935
      %v2026 = vpop.f32.mrb[0].mxu0
      %v2027 = vadd.f32 0.0, %v2026
      %v2028 = vpop.f32.mrb[0].mxu0
      %2029 = vmatprep.mubr.f32.mxu0 0.0
      %2030 = vmatmul.mubr.f32.gmra.mrb[0].mxu0 %v1938
      %v2031 = vpop.f32.mrb[0].mxu0
      %v2032 = vadd.f32 0.0, %v2031
      %v2033 = vpop.f32.mrb[0].mxu0
      %2034 = vmatprep.mubr.f32.mxu0 0.0
      %2035 = vmatmul.mubr.f32.gmra.mrb[0].mxu0 %v1941
      %v2036 = vpop.f32.mrb[0].mxu0
      %v2037 = vadd.f32 0.0, %v2036
      %v2038 = vpop.f32.mrb[0].mxu0
      %2039 = vmatprep.mubr.f32.mxu0 0.0
      %2040 = vmatmul.mubr.f32.gmra.mrb[0].mxu0 %v1944
      %v2041 = vpop.f32.mrb[0].mxu0
      %v2042 = vadd.f32 0.0, %v2041
      %v2043 = vpop.f32.mrb[0].mxu0
      %2044 = vmatprep.mubr.f32.mxu0 0.0
      %2045 = vmatmul.mubr.f32.gmra.mrb[0].mxu0 %v1947
      %v2046 = vpop.f32.mrb[0].mxu0
      %v2047 = vadd.f32 0.0, %v2046
      %v2048 = vpop.f32.mrb[0].mxu0
      %2049 = vmatprep.mubr.f32.mxu0 0.0
      %2050 = vmatmul.mubr.f32.gmra.mrb[0].mxu0 %v1950
      %v2051 = vpop.f32.mrb[0].mxu0
      %v2052 = vadd.f32 0.0, %v2051
      %v2053 = vpop.f32.mrb[0].mxu0
      %2054 = vmatprep.mubr.f32.mxu0 0.0
      %2055 = vmatmul.mubr.f32.gmra.mrb[0].mxu0 %v1953
      %v2056 = vpop.f32.mrb[0].mxu0
      %v2057 = vadd.f32 0.0, %v2056
      %v2058 = vpop.f32.mrb[0].mxu0
      %2059 = vdwg.mxu0
      %2060 = vrot.lane.b32.xlu0 %v548, 56
      %v2061 = vpop.permute.xlu0 %2060
      %2062 = vrot.lane.b32.xlu0 %v553, 56
      %v2063 = vpop.permute.xlu0 %2062
      %2064 = vrot.lane.b32.xlu0 %v558, 56
      %v2065 = vpop.permute.xlu0 %2064
      %2066 = vrot.lane.b32.xlu0 %v563, 56
      %v2067 = vpop.permute.xlu0 %2066
      %2068 = vrot.lane.b32.xlu0 %v568, 56
      %v2069 = vpop.permute.xlu0 %2068
      %2070 = vrot.lane.b32.xlu0 %v573, 56
      %v2071 = vpop.permute.xlu0 %2070
      %2072 = vrot.lane.b32.xlu0 %v578, 56
      %v2073 = vpop.permute.xlu0 %2072
      %2074 = vrot.lane.b32.xlu0 %v583, 56
      %v2075 = vpop.permute.xlu0 %2074
      %v2085 = vsel %vm910, %v1899, 0
      %v2088 = vsel %vm910, %v1900, 0
      %v2091 = vsel %vm910, %v1901, 0
      %v2094 = vsel %vm910, %v1902, 0
      %v2097 = vsel %vm910, %v1903, 0
      %v2100 = vsel %vm910, %v1904, 0
      %v2103 = vsel %vm910, %v1905, 0
      %v2106 = vsel %vm910, %v1906, 0
      %2108 = vmatprep.subr.mxu0 0.0
      %2109 = vmatpush1.msra.mxu0 %v2061
      %2110 = vmatprep.subr.mxu0 0.0
      %2111 = vmatpush1.msra.mxu0 %v2063
      %2112 = vmatprep.subr.mxu0 0.0
      %2113 = vmatpush1.msra.mxu0 %v2065
      %2114 = vmatprep.subr.mxu0 0.0
      %2115 = vmatpush1.msra.mxu0 %v2067
      %2116 = vmatprep.subr.mxu0 0.0
      %2117 = vmatpush1.msra.mxu0 %v2069
      %2118 = vmatprep.subr.mxu0 0.0
      %2119 = vmatpush1.msra.mxu0 %v2071
      %2120 = vmatprep.subr.mxu0 0.0
      %2121 = vmatpush1.msra.mxu0 %v2073
      %2122 = vmatprep.subr.mxu0 0.0
      %2123 = vmatpush1.msra.mxu0 %v2075
      %2124 = vmatprep.subr.mxu0 0.0
      %2125 = vmatpush1.msra.mxu0 0.0
      %2126 = vmatprep.subr.mxu0 0.0
      %2127 = vmatpush1.msra.mxu0 0.0
      %2128 = vmatprep.subr.mxu0 0.0
      %2129 = vmatpush1.msra.mxu0 0.0
      %2130 = vmatprep.subr.mxu0 0.0
      %2131 = vmatpush1.msra.mxu0 0.0
      %2132 = vmatprep.subr.mxu0 0.0
      %2133 = vmatpush1.msra.mxu0 0.0
      %2134 = vmatprep.subr.mxu0 0.0
      %2135 = vmatpush1.msra.mxu0 0.0
      %2136 = vmatprep.subr.mxu0 0.0
      %2137 = vmatpush1.msra.mxu0 0.0
      %2138 = vmatprep.subr.mxu0 0.0
      %2139 = vmatpush1.msra.mxu0 0.0
      %2140 = vmatprep.subr.mxu0 0.0
      %2141 = vmatpush1.msra.mxu0 0.0
      %2142 = vmatprep.subr.mxu0 0.0
      %2143 = vmatpush1.msra.mxu0 0.0
      %2144 = vmatprep.subr.mxu0 0.0
      %2145 = vmatpush1.msra.mxu0 0.0
      %2146 = vmatprep.subr.mxu0 0.0
      %2147 = vmatpush1.msra.mxu0 0.0
      %2148 = vmatprep.subr.mxu0 0.0
      %2149 = vmatpush1.msra.mxu0 0.0
      %2150 = vmatprep.subr.mxu0 0.0
      %2151 = vmatpush1.msra.mxu0 0.0
      %2152 = vmatprep.subr.mxu0 0.0
      %2153 = vmatpush1.msra.mxu0 0.0
      %2154 = vmatprep.subr.mxu0 0.0
      %2155 = vmatpush1.msra.mxu0 0.0
      %2156 = vmatprep.subr.mxu0 0.0
      %2157 = vmatpush1.msra.mxu0 0.0
      %2158 = vmatprep.subr.mxu0 0.0
      %2159 = vmatpush1.msra.mxu0 0.0
      %2160 = vmatprep.subr.mxu0 0.0
      %2161 = vmatpush1.msra.mxu0 0.0
      %2162 = vmatprep.subr.mxu0 0.0
      %2163 = vmatpush1.msra.mxu0 0.0
      %2164 = vmatprep.subr.mxu0 0.0
      %2165 = vmatpush1.msra.mxu0 0.0
      %2166 = vmatprep.subr.mxu0 0.0
      %2167 = vmatpush1.msra.mxu0 0.0
      %2168 = vmatprep.subr.mxu0 0.0
      %2169 = vmatpush1.msra.mxu0 0.0
      %2170 = vmatprep.subr.mxu0 0.0
      %2171 = vmatpush1.msra.mxu0 0.0
      %2172 = vmatprep.mubr.f32.mxu0 0.0
      %2173 = vmatmul.mubr.f32.gmra.mrb[0].mxu0 %v2085
      %v2174 = vpop.f32.mrb[0].mxu0
      %v2175 = vadd.f32 0.0, %v2174
      %v2176 = vpop.f32.mrb[0].mxu0
      %2177 = vmatprep.mubr.f32.mxu0 0.0
      %2178 = vmatmul.mubr.f32.gmra.mrb[0].mxu0 %v2088
      %v2179 = vpop.f32.mrb[0].mxu0
      %v2180 = vadd.f32 0.0, %v2179
      %v2181 = vpop.f32.mrb[0].mxu0
      %2182 = vmatprep.mubr.f32.mxu0 0.0
      %2183 = vmatmul.mubr.f32.gmra.mrb[0].mxu0 %v2091
      %v2184 = vpop.f32.mrb[0].mxu0
      %v2185 = vadd.f32 0.0, %v2184
      %v2186 = vpop.f32.mrb[0].mxu0
      %2187 = vmatprep.mubr.f32.mxu0 0.0
      %2188 = vmatmul.mubr.f32.gmra.mrb[0].mxu0 %v2094
      %v2189 = vpop.f32.mrb[0].mxu0
      %v2190 = vadd.f32 0.0, %v2189
      %v2191 = vpop.f32.mrb[0].mxu0
      %2192 = vmatprep.mubr.f32.mxu0 0.0
      %2193 = vmatmul.mubr.f32.gmra.mrb[0].mxu0 %v2097
      %v2194 = vpop.f32.mrb[0].mxu0
      %v2195 = vadd.f32 0.0, %v2194
      %v2196 = vpop.f32.mrb[0].mxu0
      %2197 = vmatprep.mubr.f32.mxu0 0.0
      %2198 = vmatmul.mubr.f32.gmra.mrb[0].mxu0 %v2100
      %v2199 = vpop.f32.mrb[0].mxu0
      %v2200 = vadd.f32 0.0, %v2199
      %v2201 = vpop.f32.mrb[0].mxu0
      %2202 = vmatprep.mubr.f32.mxu0 0.0
      %2203 = vmatmul.mubr.f32.gmra.mrb[0].mxu0 %v2103
      %v2204 = vpop.f32.mrb[0].mxu0
      %v2205 = vadd.f32 0.0, %v2204
      %v2206 = vpop.f32.mrb[0].mxu0
      %2207 = vmatprep.mubr.f32.mxu0 0.0
      %2208 = vmatmul.mubr.f32.gmra.mrb[0].mxu0 %v2106
      %v2209 = vpop.f32.mrb[0].mxu0
      %v2210 = vadd.f32 0.0, %v2209
      %v2211 = vpop.f32.mrb[0].mxu0
      %2212 = vdwg.mxu0
      %2213 = vrot.lane.b32.xlu0 %v508, 112
      %v2214 = vpop.permute.xlu0 %2213
      %2215 = vrot.lane.b32.xlu0 %v513, 112
      %v2216 = vpop.permute.xlu0 %2215
      %2217 = vrot.lane.b32.xlu0 %v518, 112
      %v2218 = vpop.permute.xlu0 %2217
      %2219 = vrot.lane.b32.xlu0 %v523, 112
      %v2220 = vpop.permute.xlu0 %2219
      %2221 = vrot.lane.b32.xlu0 %v528, 112
      %v2222 = vpop.permute.xlu0 %2221
      %2223 = vrot.lane.b32.xlu0 %v533, 112
      %v2224 = vpop.permute.xlu0 %2223
      %2225 = vrot.lane.b32.xlu0 %v538, 112
      %v2226 = vpop.permute.xlu0 %2225
      %2227 = vrot.lane.b32.xlu0 %v543, 112
      %v2228 = vpop.permute.xlu0 %2227
      %2229 = vrot.lane.b32.xlu0 %v508, 80
      %v2230 = vpop.permute.xlu0 %2229
      %2231 = vrot.lane.b32.xlu0 %v513, 80
      %v2232 = vpop.permute.xlu0 %2231
      %2233 = vrot.lane.b32.xlu0 %v518, 80
      %v2234 = vpop.permute.xlu0 %2233
      %2235 = vrot.lane.b32.xlu0 %v523, 80
      %v2236 = vpop.permute.xlu0 %2235
      %2237 = vrot.lane.b32.xlu0 %v528, 80
      %v2238 = vpop.permute.xlu0 %2237
      %2239 = vrot.lane.b32.xlu0 %v533, 80
      %v2240 = vpop.permute.xlu0 %2239
      %2241 = vrot.lane.b32.xlu0 %v538, 80
      %v2242 = vpop.permute.xlu0 %2241
      %2243 = vrot.lane.b32.xlu0 %v543, 80
      %v2244 = vpop.permute.xlu0 %2243
      %v2245 = vsel %vm611, %v2214, 0
      %v2247 = vsel %vm611, %v2216, 0
      %v2249 = vsel %vm611, %v2218, 0
      %v2251 = vsel %vm611, %v2220, 0
      %v2253 = vsel %vm611, %v2222, 0
      %v2255 = vsel %vm611, %v2224, 0
      %v2257 = vsel %vm611, %v2226, 0
      %v2259 = vsel %vm611, %v2228, 0
      %v2261 = vsel %vm611, %v2230, 0
      %v2263 = vsel %vm611, %v2232, 0
      %v2265 = vsel %vm611, %v2234, 0
      %v2267 = vsel %vm611, %v2236, 0
      %v2269 = vsel %vm611, %v2238, 0
      %v2271 = vsel %vm611, %v2240, 0
      %v2273 = vsel %vm611, %v2242, 0
      %v2275 = vsel %vm611, %v2244, 0
      %2277 = vmatprep.subr.mxu0 0.0
      %2278 = vmatpush1.xpose.msra.mxu0 %v2261
      %2279 = vmatprep.subr.mxu0 0.0
      %2280 = vmatpush1.xpose.msra.mxu0 %v2263
      %2281 = vmatprep.subr.mxu0 0.0
      %2282 = vmatpush1.xpose.msra.mxu0 %v2265
      %2283 = vmatprep.subr.mxu0 0.0
      %2284 = vmatpush1.xpose.msra.mxu0 %v2267
      %2285 = vmatprep.subr.mxu0 0.0
      %2286 = vmatpush1.xpose.msra.mxu0 %v2269
      %2287 = vmatprep.subr.mxu0 0.0
      %2288 = vmatpush1.xpose.msra.mxu0 %v2271
      %2289 = vmatprep.subr.mxu0 0.0
      %2290 = vmatpush1.xpose.msra.mxu0 %v2273
      %2291 = vmatprep.subr.mxu0 0.0
      %2292 = vmatpush1.xpose.msra.mxu0 %v2275
      %2293 = vmatprep.subr.mxu0 0.0
      %2294 = vmatpush1.xpose.msra.mxu0 0.0
      %2295 = vmatprep.subr.mxu0 0.0
      %2296 = vmatpush1.xpose.msra.mxu0 0.0
      %2297 = vmatprep.subr.mxu0 0.0
      %2298 = vmatpush1.xpose.msra.mxu0 0.0
      %2299 = vmatprep.subr.mxu0 0.0
      %2300 = vmatpush1.xpose.msra.mxu0 0.0
      %2301 = vmatprep.subr.mxu0 0.0
      %2302 = vmatpush1.xpose.msra.mxu0 0.0
      %2303 = vmatprep.subr.mxu0 0.0
      %2304 = vmatpush1.xpose.msra.mxu0 0.0
      %2305 = vmatprep.subr.mxu0 0.0
      %2306 = vmatpush1.xpose.msra.mxu0 0.0
      %2307 = vmatprep.subr.mxu0 0.0
      %2308 = vmatpush1.xpose.msra.mxu0 0.0
      %2309 = vmatprep.subr.mxu0 0.0
      %2310 = vmatpush1.xpose.msra.mxu0 0.0
      %2311 = vmatprep.subr.mxu0 0.0
      %2312 = vmatpush1.xpose.msra.mxu0 0.0
      %2313 = vmatprep.subr.mxu0 0.0
      %2314 = vmatpush1.xpose.msra.mxu0 0.0
      %2315 = vmatprep.subr.mxu0 0.0
      %2316 = vmatpush1.xpose.msra.mxu0 0.0
      %2317 = vmatprep.subr.mxu0 0.0
      %2318 = vmatpush1.xpose.msra.mxu0 0.0
      %2319 = vmatprep.subr.mxu0 0.0
      %2320 = vmatpush1.xpose.msra.mxu0 0.0
      %2321 = vmatprep.subr.mxu0 0.0
      %2322 = vmatpush1.xpose.msra.mxu0 0.0
      %2323 = vmatprep.subr.mxu0 0.0
      %2324 = vmatpush1.xpose.msra.mxu0 0.0
      %2325 = vmatprep.subr.mxu0 0.0
      %2326 = vmatpush1.xpose.msra.mxu0 0.0
      %2327 = vmatprep.subr.mxu0 0.0
      %2328 = vmatpush1.xpose.msra.mxu0 0.0
      %2329 = vmatprep.subr.mxu0 0.0
      %2330 = vmatpush1.xpose.msra.mxu0 0.0
      %2331 = vmatprep.subr.mxu0 0.0
      %2332 = vmatpush1.xpose.msra.mxu0 0.0
      %2333 = vmatprep.subr.mxu0 0.0
      %2334 = vmatpush1.xpose.msra.mxu0 0.0
      %2335 = vmatprep.subr.mxu0 0.0
      %2336 = vmatpush1.xpose.msra.mxu0 0.0
      %2337 = vmatprep.subr.mxu0 0.0
      %2338 = vmatpush1.xpose.msra.mxu0 0.0
      %2339 = vmatprep.subr.mxu0 0.0
      %2340 = vmatpush1.xpose.msra.mxu0 0.0
      %2341 = vmatprep.mubr.f32.mxu0 0.0
      %2342 = vmatmul.mubr.f32.gmra.mrb[0].mxu0 %v2245
      %v2343 = vpop.f32.mrb[0].mxu0
      %v2344 = vadd.f32 0.0, %v2343
      %v2345 = vpop.f32.mrb[0].mxu0
      %2346 = vmatprep.mubr.f32.mxu0 0.0
      %2347 = vmatmul.mubr.f32.gmra.mrb[0].mxu0 %v2247
      %v2348 = vpop.f32.mrb[0].mxu0
      %v2349 = vadd.f32 0.0, %v2348
      %v2350 = vpop.f32.mrb[0].mxu0
      %2351 = vmatprep.mubr.f32.mxu0 0.0
      %2352 = vmatmul.mubr.f32.gmra.mrb[0].mxu0 %v2249
      %v2353 = vpop.f32.mrb[0].mxu0
      %v2354 = vadd.f32 0.0, %v2353
      %v2355 = vpop.f32.mrb[0].mxu0
      %2356 = vmatprep.mubr.f32.mxu0 0.0
      %2357 = vmatmul.mubr.f32.gmra.mrb[0].mxu0 %v2251
      %v2358 = vpop.f32.mrb[0].mxu0
      %v2359 = vadd.f32 0.0, %v2358
      %v2360 = vpop.f32.mrb[0].mxu0
      %2361 = vmatprep.mubr.f32.mxu0 0.0
      %2362 = vmatmul.mubr.f32.gmra.mrb[0].mxu0 %v2253
      %v2363 = vpop.f32.mrb[0].mxu0
      %v2364 = vadd.f32 0.0, %v2363
      %v2365 = vpop.f32.mrb[0].mxu0
      %2366 = vmatprep.mubr.f32.mxu0 0.0
      %2367 = vmatmul.mubr.f32.gmra.mrb[0].mxu0 %v2255
      %v2368 = vpop.f32.mrb[0].mxu0
      %v2369 = vadd.f32 0.0, %v2368
      %v2370 = vpop.f32.mrb[0].mxu0
      %2371 = vmatprep.mubr.f32.mxu0 0.0
      %2372 = vmatmul.mubr.f32.gmra.mrb[0].mxu0 %v2257
      %v2373 = vpop.f32.mrb[0].mxu0
      %v2374 = vadd.f32 0.0, %v2373
      %v2375 = vpop.f32.mrb[0].mxu0
      %2376 = vmatprep.mubr.f32.mxu0 0.0
      %2377 = vmatmul.mubr.f32.gmra.mrb[0].mxu0 %v2259
      %v2378 = vpop.f32.mrb[0].mxu0
      %v2379 = vadd.f32 0.0, %v2378
      %v2380 = vpop.f32.mrb[0].mxu0
      %2381 = vdwg.mxu0
      %2382 = vrot.lane.b32.xlu0 %v548, 112
      %v2383 = vpop.permute.xlu0 %2382
      %2384 = vrot.lane.b32.xlu0 %v553, 112
      %v2385 = vpop.permute.xlu0 %2384
      %2386 = vrot.lane.b32.xlu0 %v558, 112
      %v2387 = vpop.permute.xlu0 %2386
      %2388 = vrot.lane.b32.xlu0 %v563, 112
      %v2389 = vpop.permute.xlu0 %2388
      %2390 = vrot.lane.b32.xlu0 %v568, 112
      %v2391 = vpop.permute.xlu0 %2390
      %2392 = vrot.lane.b32.xlu0 %v573, 112
      %v2393 = vpop.permute.xlu0 %2392
      %2394 = vrot.lane.b32.xlu0 %v578, 112
      %v2395 = vpop.permute.xlu0 %2394
      %2396 = vrot.lane.b32.xlu0 %v583, 112
      %v2397 = vpop.permute.xlu0 %2396
      %2398 = vrot.lane.b32.xlu0 %v548, 80
      %v2399 = vpop.permute.xlu0 %2398
      %2400 = vrot.lane.b32.xlu0 %v553, 80
      %v2401 = vpop.permute.xlu0 %2400
      %2402 = vrot.lane.b32.xlu0 %v558, 80
      %v2403 = vpop.permute.xlu0 %2402
      %2404 = vrot.lane.b32.xlu0 %v563, 80
      %v2405 = vpop.permute.xlu0 %2404
      %2406 = vrot.lane.b32.xlu0 %v568, 80
      %v2407 = vpop.permute.xlu0 %2406
      %2408 = vrot.lane.b32.xlu0 %v573, 80
      %v2409 = vpop.permute.xlu0 %2408
      %2410 = vrot.lane.b32.xlu0 %v578, 80
      %v2411 = vpop.permute.xlu0 %2410
      %2412 = vrot.lane.b32.xlu0 %v583, 80
      %v2413 = vpop.permute.xlu0 %2412
      %v2414 = vsel %vm611, %v2383, 0
      %v2416 = vsel %vm611, %v2385, 0
      %v2418 = vsel %vm611, %v2387, 0
      %v2420 = vsel %vm611, %v2389, 0
      %v2422 = vsel %vm611, %v2391, 0
      %v2424 = vsel %vm611, %v2393, 0
      %v2426 = vsel %vm611, %v2395, 0
      %v2428 = vsel %vm611, %v2397, 0
      %v2430 = vsel %vm611, %v2399, 0
      %v2432 = vsel %vm611, %v2401, 0
      %v2434 = vsel %vm611, %v2403, 0
      %v2436 = vsel %vm611, %v2405, 0
      %v2438 = vsel %vm611, %v2407, 0
      %v2440 = vsel %vm611, %v2409, 0
      %v2442 = vsel %vm611, %v2411, 0
      %v2444 = vsel %vm611, %v2413, 0
      %2446 = vmatprep.subr.mxu0 0.0
      %2447 = vmatpush1.xpose.msra.mxu0 %v2430
      %2448 = vmatprep.subr.mxu0 0.0
      %2449 = vmatpush1.xpose.msra.mxu0 %v2432
      %2450 = vmatprep.subr.mxu0 0.0
      %2451 = vmatpush1.xpose.msra.mxu0 %v2434
      %2452 = vmatprep.subr.mxu0 0.0
      %2453 = vmatpush1.xpose.msra.mxu0 %v2436
      %2454 = vmatprep.subr.mxu0 0.0
      %2455 = vmatpush1.xpose.msra.mxu0 %v2438
      %2456 = vmatprep.subr.mxu0 0.0
      %2457 = vmatpush1.xpose.msra.mxu0 %v2440
      %2458 = vmatprep.subr.mxu0 0.0
      %2459 = vmatpush1.xpose.msra.mxu0 %v2442
      %2460 = vmatprep.subr.mxu0 0.0
      %2461 = vmatpush1.xpose.msra.mxu0 %v2444
      %2462 = vmatprep.subr.mxu0 0.0
      %2463 = vmatpush1.xpose.msra.mxu0 0.0
      %2464 = vmatprep.subr.mxu0 0.0
      %2465 = vmatpush1.xpose.msra.mxu0 0.0
      %2466 = vmatprep.subr.mxu0 0.0
      %2467 = vmatpush1.xpose.msra.mxu0 0.0
      %2468 = vmatprep.subr.mxu0 0.0
      %2469 = vmatpush1.xpose.msra.mxu0 0.0
      %2470 = vmatprep.subr.mxu0 0.0
      %2471 = vmatpush1.xpose.msra.mxu0 0.0
      %2472 = vmatprep.subr.mxu0 0.0
      %2473 = vmatpush1.xpose.msra.mxu0 0.0
      %2474 = vmatprep.subr.mxu0 0.0
      %2475 = vmatpush1.xpose.msra.mxu0 0.0
      %2476 = vmatprep.subr.mxu0 0.0
      %2477 = vmatpush1.xpose.msra.mxu0 0.0
      %2478 = vmatprep.subr.mxu0 0.0
      %2479 = vmatpush1.xpose.msra.mxu0 0.0
      %2480 = vmatprep.subr.mxu0 0.0
      %2481 = vmatpush1.xpose.msra.mxu0 0.0
      %2482 = vmatprep.subr.mxu0 0.0
      %2483 = vmatpush1.xpose.msra.mxu0 0.0
      %2484 = vmatprep.subr.mxu0 0.0
      %2485 = vmatpush1.xpose.msra.mxu0 0.0
      %2486 = vmatprep.subr.mxu0 0.0
      %2487 = vmatpush1.xpose.msra.mxu0 0.0
      %2488 = vmatprep.subr.mxu0 0.0
      %2489 = vmatpush1.xpose.msra.mxu0 0.0
      %2490 = vmatprep.subr.mxu0 0.0
      %2491 = vmatpush1.xpose.msra.mxu0 0.0
      %2492 = vmatprep.subr.mxu0 0.0
      %2493 = vmatpush1.xpose.msra.mxu0 0.0
      %2494 = vmatprep.subr.mxu0 0.0
      %2495 = vmatpush1.xpose.msra.mxu0 0.0
      %2496 = vmatprep.subr.mxu0 0.0
      %2497 = vmatpush1.xpose.msra.mxu0 0.0
      %2498 = vmatprep.subr.mxu0 0.0
      %2499 = vmatpush1.xpose.msra.mxu0 0.0
      %2500 = vmatprep.subr.mxu0 0.0
      %2501 = vmatpush1.xpose.msra.mxu0 0.0
      %2502 = vmatprep.subr.mxu0 0.0
      %2503 = vmatpush1.xpose.msra.mxu0 0.0
      %2504 = vmatprep.subr.mxu0 0.0
      %2505 = vmatpush1.xpose.msra.mxu0 0.0
      %2506 = vmatprep.subr.mxu0 0.0
      %2507 = vmatpush1.xpose.msra.mxu0 0.0
      %2508 = vmatprep.subr.mxu0 0.0
      %2509 = vmatpush1.xpose.msra.mxu0 0.0
      %2510 = vmatprep.mubr.f32.mxu0 0.0
      %2511 = vmatmul.mubr.f32.gmra.mrb[0].mxu0 %v2414
      %v2512 = vpop.f32.mrb[0].mxu0
      %v2513 = vadd.f32 0.0, %v2512
      %v2514 = vpop.f32.mrb[0].mxu0
      %2515 = vmatprep.mubr.f32.mxu0 0.0
      %2516 = vmatmul.mubr.f32.gmra.mrb[0].mxu0 %v2416
      %v2517 = vpop.f32.mrb[0].mxu0
      %v2518 = vadd.f32 0.0, %v2517
      %v2519 = vpop.f32.mrb[0].mxu0
      %2520 = vmatprep.mubr.f32.mxu0 0.0
      %2521 = vmatmul.mubr.f32.gmra.mrb[0].mxu0 %v2418
      %v2522 = vpop.f32.mrb[0].mxu0
      %v2523 = vadd.f32 0.0, %v2522
      %v2524 = vpop.f32.mrb[0].mxu0
      %2525 = vmatprep.mubr.f32.mxu0 0.0
      %2526 = vmatmul.mubr.f32.gmra.mrb[0].mxu0 %v2420
      %v2527 = vpop.f32.mrb[0].mxu0
      %v2528 = vadd.f32 0.0, %v2527
      %v2529 = vpop.f32.mrb[0].mxu0
      %2530 = vmatprep.mubr.f32.mxu0 0.0
      %2531 = vmatmul.mubr.f32.gmra.mrb[0].mxu0 %v2422
      %v2532 = vpop.f32.mrb[0].mxu0
      %v2533 = vadd.f32 0.0, %v2532
      %v2534 = vpop.f32.mrb[0].mxu0
      %2535 = vmatprep.mubr.f32.mxu0 0.0
      %2536 = vmatmul.mubr.f32.gmra.mrb[0].mxu0 %v2424
      %v2537 = vpop.f32.mrb[0].mxu0
      %v2538 = vadd.f32 0.0, %v2537
      %v2539 = vpop.f32.mrb[0].mxu0
      %2540 = vmatprep.mubr.f32.mxu0 0.0
      %2541 = vmatmul.mubr.f32.gmra.mrb[0].mxu0 %v2426
      %v2542 = vpop.f32.mrb[0].mxu0
      %v2543 = vadd.f32 0.0, %v2542
      %v2544 = vpop.f32.mrb[0].mxu0
      %2545 = vmatprep.mubr.f32.mxu0 0.0
      %2546 = vmatmul.mubr.f32.gmra.mrb[0].mxu0 %v2428
      %v2547 = vpop.f32.mrb[0].mxu0
      %v2548 = vadd.f32 0.0, %v2547
      %v2549 = vpop.f32.mrb[0].mxu0
      %2550 = vdwg.mxu0
      %v2551 = vsel %vm910, %v2344, -inf
      %2552 = vmax.xlane.f32.xlu0 %v2551
      %v2553 = vpop.xlane.xlu0 %2552
      %v2554 = vsel %vm910, %v2349, -inf
      %2555 = vmax.xlane.f32.xlu0 %v2554
      %v2556 = vpop.xlane.xlu0 %2555
      %v2557 = vsel %vm910, %v2354, -inf
      %2558 = vmax.xlane.f32.xlu0 %v2557
      %v2559 = vpop.xlane.xlu0 %2558
      %v2560 = vsel %vm910, %v2359, -inf
      %2561 = vmax.xlane.f32.xlu0 %v2560
      %v2562 = vpop.xlane.xlu0 %2561
      %v2563 = vsel %vm910, %v2364, -inf
      %2564 = vmax.xlane.f32.xlu0 %v2563
      %v2565 = vpop.xlane.xlu0 %2564
      %v2566 = vsel %vm910, %v2369, -inf
      %2567 = vmax.xlane.f32.xlu0 %v2566
      %v2568 = vpop.xlane.xlu0 %2567
      %v2569 = vsel %vm910, %v2374, -inf
      %2570 = vmax.xlane.f32.xlu0 %v2569
      %v2571 = vpop.xlane.xlu0 %2570
      %v2572 = vsel %vm910, %v2379, -inf
      %2573 = vmax.xlane.f32.xlu0 %v2572
      %v2574 = vpop.xlane.xlu0 %2573
      %v2575 = vsel %vm910, %v2513, -inf
      %2576 = vmax.xlane.f32.xlu0 %v2575
      %v2577 = vpop.xlane.xlu0 %2576
      %v2578 = vsel %vm910, %v2518, -inf
      %2579 = vmax.xlane.f32.xlu0 %v2578
      %v2580 = vpop.xlane.xlu0 %2579
      %v2581 = vsel %vm910, %v2523, -inf
      %2582 = vmax.xlane.f32.xlu0 %v2581
      %v2583 = vpop.xlane.xlu0 %2582
      %v2584 = vsel %vm910, %v2528, -inf
      %2585 = vmax.xlane.f32.xlu0 %v2584
      %v2586 = vpop.xlane.xlu0 %2585
      %v2587 = vsel %vm910, %v2533, -inf
      %2588 = vmax.xlane.f32.xlu0 %v2587
      %v2589 = vpop.xlane.xlu0 %2588
      %v2590 = vsel %vm910, %v2538, -inf
      %2591 = vmax.xlane.f32.xlu0 %v2590
      %v2592 = vpop.xlane.xlu0 %2591
      %v2593 = vsel %vm910, %v2543, -inf
      %2594 = vmax.xlane.f32.xlu0 %v2593
      %v2595 = vpop.xlane.xlu0 %2594
      %v2596 = vsel %vm910, %v2548, -inf
      %2597 = vmax.xlane.f32.xlu0 %v2596
      %v2598 = vpop.xlane.xlu0 %2597
      %v2599 = vsub.f32 %v2344, %v2553
      %v2600 = vsub.f32 %v2349, %v2556
      %v2601 = vsub.f32 %v2354, %v2559
      %v2602 = vsub.f32 %v2359, %v2562
      %v2603 = vsub.f32 %v2364, %v2565
      %v2604 = vsub.f32 %v2369, %v2568
      %v2605 = vsub.f32 %v2374, %v2571
      %v2606 = vsub.f32 %v2379, %v2574
      %v2607 = vsub.f32 %v2513, %v2577
      %v2608 = vsub.f32 %v2518, %v2580
      %v2609 = vsub.f32 %v2523, %v2583
      %v2610 = vsub.f32 %v2528, %v2586
      %v2611 = vsub.f32 %v2533, %v2589
      %v2612 = vsub.f32 %v2538, %v2592
      %v2613 = vsub.f32 %v2543, %v2595
      %v2614 = vsub.f32 %v2548, %v2598
      %v2615 = vmul.f32 %v2599, 1.442695
      %v2616 = vpow.pop %v2615
      %v2617 = vmul.f32 %v2600, 1.442695
      %v2618 = vpow.pop %v2617
      %v2619 = vmul.f32 %v2601, 1.442695
      %v2620 = vpow.pop %v2619
      %v2621 = vmul.f32 %v2602, 1.442695
      %v2622 = vpow.pop %v2621
      %v2623 = vmul.f32 %v2603, 1.442695
      %v2624 = vpow.pop %v2623
      %v2625 = vmul.f32 %v2604, 1.442695
      %v2626 = vpow.pop %v2625
      %v2627 = vmul.f32 %v2605, 1.442695
      %v2628 = vpow.pop %v2627
      %v2629 = vmul.f32 %v2606, 1.442695
      %v2630 = vpow.pop %v2629
      %v2631 = vmul.f32 %v2607, 1.442695
      %v2632 = vpow.pop %v2631
      %v2633 = vmul.f32 %v2608, 1.442695
      %v2634 = vpow.pop %v2633
      %v2635 = vmul.f32 %v2609, 1.442695
      %v2636 = vpow.pop %v2635
      %v2637 = vmul.f32 %v2610, 1.442695
      %v2638 = vpow.pop %v2637
      %v2639 = vmul.f32 %v2611, 1.442695
      %v2640 = vpow.pop %v2639
      %v2641 = vmul.f32 %v2612, 1.442695
      %v2642 = vpow.pop %v2641
      %v2643 = vmul.f32 %v2613, 1.442695
      %v2644 = vpow.pop %v2643
      %v2645 = vmul.f32 %v2614, 1.442695
      %v2646 = vpow.pop %v2645
      %v2647 = vsel %vm910, %v2616, 0.0
      %2648 = vadd.xlane.f32.xlu0 %v2647
      %v2649 = vpop.xlane.xlu0 %2648
      %v2650 = vsel %vm910, %v2618, 0.0
      %2651 = vadd.xlane.f32.xlu0 %v2650
      %v2652 = vpop.xlane.xlu0 %2651
      %v2653 = vsel %vm910, %v2620, 0.0
      %2654 = vadd.xlane.f32.xlu0 %v2653
      %v2655 = vpop.xlane.xlu0 %2654
      %v2656 = vsel %vm910, %v2622, 0.0
      %2657 = vadd.xlane.f32.xlu0 %v2656
      %v2658 = vpop.xlane.xlu0 %2657
      %v2659 = vsel %vm910, %v2624, 0.0
      %2660 = vadd.xlane.f32.xlu0 %v2659
      %v2661 = vpop.xlane.xlu0 %2660
      %v2662 = vsel %vm910, %v2626, 0.0
      %2663 = vadd.xlane.f32.xlu0 %v2662
      %v2664 = vpop.xlane.xlu0 %2663
      %v2665 = vsel %vm910, %v2628, 0.0
      %2666 = vadd.xlane.f32.xlu0 %v2665
      %v2667 = vpop.xlane.xlu0 %2666
      %v2668 = vsel %vm910, %v2630, 0.0
      %2669 = vadd.xlane.f32.xlu0 %v2668
      %v2670 = vpop.xlane.xlu0 %2669
      %v2671 = vsel %vm910, %v2632, 0.0
      %2672 = vadd.xlane.f32.xlu0 %v2671
      %v2673 = vpop.xlane.xlu0 %2672
      %v2674 = vsel %vm910, %v2634, 0.0
      %2675 = vadd.xlane.f32.xlu0 %v2674
      %v2676 = vpop.xlane.xlu0 %2675
      %v2677 = vsel %vm910, %v2636, 0.0
      %2678 = vadd.xlane.f32.xlu0 %v2677
      %v2679 = vpop.xlane.xlu0 %2678
      %v2680 = vsel %vm910, %v2638, 0.0
      %2681 = vadd.xlane.f32.xlu0 %v2680
      %v2682 = vpop.xlane.xlu0 %2681
      %v2683 = vsel %vm910, %v2640, 0.0
      %2684 = vadd.xlane.f32.xlu0 %v2683
      %v2685 = vpop.xlane.xlu0 %2684
      %v2686 = vsel %vm910, %v2642, 0.0
      %2687 = vadd.xlane.f32.xlu0 %v2686
      %v2688 = vpop.xlane.xlu0 %2687
      %v2689 = vsel %vm910, %v2644, 0.0
      %2690 = vadd.xlane.f32.xlu0 %v2689
      %v2691 = vpop.xlane.xlu0 %2690
      %v2692 = vsel %vm910, %v2646, 0.0
      %2693 = vadd.xlane.f32.xlu0 %v2692
      %v2694 = vpop.xlane.xlu0 %2693
      %v2695 = vrcp.pop %v2649
      %v2696 = vrcp.pop %v2652
      %v2697 = vrcp.pop %v2655
      %v2698 = vrcp.pop %v2658
      %v2699 = vrcp.pop %v2661
      %v2700 = vrcp.pop %v2664
      %v2701 = vrcp.pop %v2667
      %v2702 = vrcp.pop %v2670
      %v2703 = vrcp.pop %v2673
      %v2704 = vrcp.pop %v2676
      %v2705 = vrcp.pop %v2679
      %v2706 = vrcp.pop %v2682
      %v2707 = vrcp.pop %v2685
      %v2708 = vrcp.pop %v2688
      %v2709 = vrcp.pop %v2691
      %v2710 = vrcp.pop %v2694
      %v2711 = vmul.f32 %v2616, %v2695
      %v2712 = vmul.f32 %v2618, %v2696
      %v2713 = vmul.f32 %v2620, %v2697
      %v2714 = vmul.f32 %v2622, %v2698
      %v2715 = vmul.f32 %v2624, %v2699
      %v2716 = vmul.f32 %v2626, %v2700
      %v2717 = vmul.f32 %v2628, %v2701
      %v2718 = vmul.f32 %v2630, %v2702
      %v2719 = vmul.f32 %v2632, %v2703
      %v2720 = vmul.f32 %v2634, %v2704
      %v2721 = vmul.f32 %v2636, %v2705
      %v2722 = vmul.f32 %v2638, %v2706
      %v2723 = vmul.f32 %v2640, %v2707
      %v2724 = vmul.f32 %v2642, %v2708
      %v2725 = vmul.f32 %v2644, %v2709
      %v2726 = vmul.f32 %v2646, %v2710
      %2727 = vrot.lane.b32.xlu0 %v508, 48
      %v2728 = vpop.permute.xlu0 %2727
      %2729 = vrot.lane.b32.xlu0 %v513, 48
      %v2730 = vpop.permute.xlu0 %2729
      %2731 = vrot.lane.b32.xlu0 %v518, 48
      %v2732 = vpop.permute.xlu0 %2731
      %2733 = vrot.lane.b32.xlu0 %v523, 48
      %v2734 = vpop.permute.xlu0 %2733
      %2735 = vrot.lane.b32.xlu0 %v528, 48
      %v2736 = vpop.permute.xlu0 %2735
      %2737 = vrot.lane.b32.xlu0 %v533, 48
      %v2738 = vpop.permute.xlu0 %2737
      %2739 = vrot.lane.b32.xlu0 %v538, 48
      %v2740 = vpop.permute.xlu0 %2739
      %2741 = vrot.lane.b32.xlu0 %v543, 48
      %v2742 = vpop.permute.xlu0 %2741
      %v2752 = vsel %vm910, %v2711, 0
      %v2755 = vsel %vm910, %v2712, 0
      %v2758 = vsel %vm910, %v2713, 0
      %v2761 = vsel %vm910, %v2714, 0
      %v2764 = vsel %vm910, %v2715, 0
      %v2767 = vsel %vm910, %v2716, 0
      %v2770 = vsel %vm910, %v2717, 0
      %v2773 = vsel %vm910, %v2718, 0
      %2775 = vmatprep.subr.mxu0 0.0
      %2776 = vmatpush1.msra.mxu0 %v2728
      %2777 = vmatprep.subr.mxu0 0.0
      %2778 = vmatpush1.msra.mxu0 %v2730
      %2779 = vmatprep.subr.mxu0 0.0
      %2780 = vmatpush1.msra.mxu0 %v2732
      %2781 = vmatprep.subr.mxu0 0.0
      %2782 = vmatpush1.msra.mxu0 %v2734
      %2783 = vmatprep.subr.mxu0 0.0
      %2784 = vmatpush1.msra.mxu0 %v2736
      %2785 = vmatprep.subr.mxu0 0.0
      %2786 = vmatpush1.msra.mxu0 %v2738
      %2787 = vmatprep.subr.mxu0 0.0
      %2788 = vmatpush1.msra.mxu0 %v2740
      %2789 = vmatprep.subr.mxu0 0.0
      %2790 = vmatpush1.msra.mxu0 %v2742
      %2791 = vmatprep.subr.mxu0 0.0
      %2792 = vmatpush1.msra.mxu0 0.0
      %2793 = vmatprep.subr.mxu0 0.0
      %2794 = vmatpush1.msra.mxu0 0.0
      %2795 = vmatprep.subr.mxu0 0.0
      %2796 = vmatpush1.msra.mxu0 0.0
      %2797 = vmatprep.subr.mxu0 0.0
      %2798 = vmatpush1.msra.mxu0 0.0
      %2799 = vmatprep.subr.mxu0 0.0
      %2800 = vmatpush1.msra.mxu0 0.0
      %2801 = vmatprep.subr.mxu0 0.0
      %2802 = vmatpush1.msra.mxu0 0.0
      %2803 = vmatprep.subr.mxu0 0.0
      %2804 = vmatpush1.msra.mxu0 0.0
      %2805 = vmatprep.subr.mxu0 0.0
      %2806 = vmatpush1.msra.mxu0 0.0
      %2807 = vmatprep.subr.mxu0 0.0
      %2808 = vmatpush1.msra.mxu0 0.0
      %2809 = vmatprep.subr.mxu0 0.0
      %2810 = vmatpush1.msra.mxu0 0.0
      %2811 = vmatprep.subr.mxu0 0.0
      %2812 = vmatpush1.msra.mxu0 0.0
      %2813 = vmatprep.subr.mxu0 0.0
      %2814 = vmatpush1.msra.mxu0 0.0
      %2815 = vmatprep.subr.mxu0 0.0
      %2816 = vmatpush1.msra.mxu0 0.0
      %2817 = vmatprep.subr.mxu0 0.0
      %2818 = vmatpush1.msra.mxu0 0.0
      %2819 = vmatprep.subr.mxu0 0.0
      %2820 = vmatpush1.msra.mxu0 0.0
      %2821 = vmatprep.subr.mxu0 0.0
      %2822 = vmatpush1.msra.mxu0 0.0
      %2823 = vmatprep.subr.mxu0 0.0
      %2824 = vmatpush1.msra.mxu0 0.0
      %2825 = vmatprep.subr.mxu0 0.0
      %2826 = vmatpush1.msra.mxu0 0.0
      %2827 = vmatprep.subr.mxu0 0.0
      %2828 = vmatpush1.msra.mxu0 0.0
      %2829 = vmatprep.subr.mxu0 0.0
      %2830 = vmatpush1.msra.mxu0 0.0
      %2831 = vmatprep.subr.mxu0 0.0
      %2832 = vmatpush1.msra.mxu0 0.0
      %2833 = vmatprep.subr.mxu0 0.0
      %2834 = vmatpush1.msra.mxu0 0.0
      %2835 = vmatprep.subr.mxu0 0.0
      %2836 = vmatpush1.msra.mxu0 0.0
      %2837 = vmatprep.subr.mxu0 0.0
      %2838 = vmatpush1.msra.mxu0 0.0
      %2839 = vmatprep.mubr.f32.mxu0 0.0
      %2840 = vmatmul.mubr.f32.gmra.mrb[0].mxu0 %v2752
      %v2841 = vpop.f32.mrb[0].mxu0
      %v2842 = vadd.f32 0.0, %v2841
      %v2843 = vpop.f32.mrb[0].mxu0
      %2844 = vmatprep.mubr.f32.mxu0 0.0
      %2845 = vmatmul.mubr.f32.gmra.mrb[0].mxu0 %v2755
      %v2846 = vpop.f32.mrb[0].mxu0
      %v2847 = vadd.f32 0.0, %v2846
      %v2848 = vpop.f32.mrb[0].mxu0
      %2849 = vmatprep.mubr.f32.mxu0 0.0
      %2850 = vmatmul.mubr.f32.gmra.mrb[0].mxu0 %v2758
      %v2851 = vpop.f32.mrb[0].mxu0
      %v2852 = vadd.f32 0.0, %v2851
      %v2853 = vpop.f32.mrb[0].mxu0
      %2854 = vmatprep.mubr.f32.mxu0 0.0
      %2855 = vmatmul.mubr.f32.gmra.mrb[0].mxu0 %v2761
      %v2856 = vpop.f32.mrb[0].mxu0
      %v2857 = vadd.f32 0.0, %v2856
      %v2858 = vpop.f32.mrb[0].mxu0
      %2859 = vmatprep.mubr.f32.mxu0 0.0
      %2860 = vmatmul.mubr.f32.gmra.mrb[0].mxu0 %v2764
      %v2861 = vpop.f32.mrb[0].mxu0
      %v2862 = vadd.f32 0.0, %v2861
      %v2863 = vpop.f32.mrb[0].mxu0
      %2864 = vmatprep.mubr.f32.mxu0 0.0
      %2865 = vmatmul.mubr.f32.gmra.mrb[0].mxu0 %v2767
      %v2866 = vpop.f32.mrb[0].mxu0
      %v2867 = vadd.f32 0.0, %v2866
      %v2868 = vpop.f32.mrb[0].mxu0
      %2869 = vmatprep.mubr.f32.mxu0 0.0
      %2870 = vmatmul.mubr.f32.gmra.mrb[0].mxu0 %v2770
      %v2871 = vpop.f32.mrb[0].mxu0
      %v2872 = vadd.f32 0.0, %v2871
      %v2873 = vpop.f32.mrb[0].mxu0
      %2874 = vmatprep.mubr.f32.mxu0 0.0
      %2875 = vmatmul.mubr.f32.gmra.mrb[0].mxu0 %v2773
      %v2876 = vpop.f32.mrb[0].mxu0
      %v2877 = vadd.f32 0.0, %v2876
      %v2878 = vpop.f32.mrb[0].mxu0
      %2879 = vdwg.mxu0
      %2880 = vrot.lane.b32.xlu0 %v548, 48
      %v2881 = vpop.permute.xlu0 %2880
      %2882 = vrot.lane.b32.xlu0 %v553, 48
      %v2883 = vpop.permute.xlu0 %2882
      %2884 = vrot.lane.b32.xlu0 %v558, 48
      %v2885 = vpop.permute.xlu0 %2884
      %2886 = vrot.lane.b32.xlu0 %v563, 48
      %v2887 = vpop.permute.xlu0 %2886
      %2888 = vrot.lane.b32.xlu0 %v568, 48
      %v2889 = vpop.permute.xlu0 %2888
      %2890 = vrot.lane.b32.xlu0 %v573, 48
      %v2891 = vpop.permute.xlu0 %2890
      %2892 = vrot.lane.b32.xlu0 %v578, 48
      %v2893 = vpop.permute.xlu0 %2892
      %2894 = vrot.lane.b32.xlu0 %v583, 48
      %v2895 = vpop.permute.xlu0 %2894
      %v2905 = vsel %vm910, %v2719, 0
      %v2908 = vsel %vm910, %v2720, 0
      %v2911 = vsel %vm910, %v2721, 0
      %v2914 = vsel %vm910, %v2722, 0
      %v2917 = vsel %vm910, %v2723, 0
      %v2920 = vsel %vm910, %v2724, 0
      %v2923 = vsel %vm910, %v2725, 0
      %v2926 = vsel %vm910, %v2726, 0
      %2928 = vmatprep.subr.mxu0 0.0
      %2929 = vmatpush1.msra.mxu0 %v2881
      %2930 = vmatprep.subr.mxu0 0.0
      %2931 = vmatpush1.msra.mxu0 %v2883
      %2932 = vmatprep.subr.mxu0 0.0
      %2933 = vmatpush1.msra.mxu0 %v2885
      %2934 = vmatprep.subr.mxu0 0.0
      %2935 = vmatpush1.msra.mxu0 %v2887
      %2936 = vmatprep.subr.mxu0 0.0
      %2937 = vmatpush1.msra.mxu0 %v2889
      %2938 = vmatprep.subr.mxu0 0.0
      %2939 = vmatpush1.msra.mxu0 %v2891
      %2940 = vmatprep.subr.mxu0 0.0
      %2941 = vmatpush1.msra.mxu0 %v2893
      %2942 = vmatprep.subr.mxu0 0.0
      %2943 = vmatpush1.msra.mxu0 %v2895
      %2944 = vmatprep.subr.mxu0 0.0
      %2945 = vmatpush1.msra.mxu0 0.0
      %2946 = vmatprep.subr.mxu0 0.0
      %2947 = vmatpush1.msra.mxu0 0.0
      %2948 = vmatprep.subr.mxu0 0.0
      %2949 = vmatpush1.msra.mxu0 0.0
      %2950 = vmatprep.subr.mxu0 0.0
      %2951 = vmatpush1.msra.mxu0 0.0
      %2952 = vmatprep.subr.mxu0 0.0
      %2953 = vmatpush1.msra.mxu0 0.0
      %2954 = vmatprep.subr.mxu0 0.0
      %2955 = vmatpush1.msra.mxu0 0.0
      %2956 = vmatprep.subr.mxu0 0.0
      %2957 = vmatpush1.msra.mxu0 0.0
      %2958 = vmatprep.subr.mxu0 0.0
      %2959 = vmatpush1.msra.mxu0 0.0
      %2960 = vmatprep.subr.mxu0 0.0
      %2961 = vmatpush1.msra.mxu0 0.0
      %2962 = vmatprep.subr.mxu0 0.0
      %2963 = vmatpush1.msra.mxu0 0.0
      %2964 = vmatprep.subr.mxu0 0.0
      %2965 = vmatpush1.msra.mxu0 0.0
      %2966 = vmatprep.subr.mxu0 0.0
      %2967 = vmatpush1.msra.mxu0 0.0
      %2968 = vmatprep.subr.mxu0 0.0
      %2969 = vmatpush1.msra.mxu0 0.0
      %2970 = vmatprep.subr.mxu0 0.0
      %2971 = vmatpush1.msra.mxu0 0.0
      %2972 = vmatprep.subr.mxu0 0.0
      %2973 = vmatpush1.msra.mxu0 0.0
      %2974 = vmatprep.subr.mxu0 0.0
      %2975 = vmatpush1.msra.mxu0 0.0
      %2976 = vmatprep.subr.mxu0 0.0
      %2977 = vmatpush1.msra.mxu0 0.0
      %2978 = vmatprep.subr.mxu0 0.0
      %2979 = vmatpush1.msra.mxu0 0.0
      %2980 = vmatprep.subr.mxu0 0.0
      %2981 = vmatpush1.msra.mxu0 0.0
      %2982 = vmatprep.subr.mxu0 0.0
      %2983 = vmatpush1.msra.mxu0 0.0
      %2984 = vmatprep.subr.mxu0 0.0
      %2985 = vmatpush1.msra.mxu0 0.0
      %2986 = vmatprep.subr.mxu0 0.0
      %2987 = vmatpush1.msra.mxu0 0.0
      %2988 = vmatprep.subr.mxu0 0.0
      %2989 = vmatpush1.msra.mxu0 0.0
      %2990 = vmatprep.subr.mxu0 0.0
      %2991 = vmatpush1.msra.mxu0 0.0
      %2992 = vmatprep.mubr.f32.mxu0 0.0
      %2993 = vmatmul.mubr.f32.gmra.mrb[0].mxu0 %v2905
      %v2994 = vpop.f32.mrb[0].mxu0
      %v2995 = vadd.f32 0.0, %v2994
      %v2996 = vpop.f32.mrb[0].mxu0
      %2997 = vmatprep.mubr.f32.mxu0 0.0
      %2998 = vmatmul.mubr.f32.gmra.mrb[0].mxu0 %v2908
      %v2999 = vpop.f32.mrb[0].mxu0
      %v3000 = vadd.f32 0.0, %v2999
      %v3001 = vpop.f32.mrb[0].mxu0
      %3002 = vmatprep.mubr.f32.mxu0 0.0
      %3003 = vmatmul.mubr.f32.gmra.mrb[0].mxu0 %v2911
      %v3004 = vpop.f32.mrb[0].mxu0
      %v3005 = vadd.f32 0.0, %v3004
      %v3006 = vpop.f32.mrb[0].mxu0
      %3007 = vmatprep.mubr.f32.mxu0 0.0
      %3008 = vmatmul.mubr.f32.gmra.mrb[0].mxu0 %v2914
      %v3009 = vpop.f32.mrb[0].mxu0
      %v3010 = vadd.f32 0.0, %v3009
      %v3011 = vpop.f32.mrb[0].mxu0
      %3012 = vmatprep.mubr.f32.mxu0 0.0
      %3013 = vmatmul.mubr.f32.gmra.mrb[0].mxu0 %v2917
      %v3014 = vpop.f32.mrb[0].mxu0
      %v3015 = vadd.f32 0.0, %v3014
      %v3016 = vpop.f32.mrb[0].mxu0
      %3017 = vmatprep.mubr.f32.mxu0 0.0
      %3018 = vmatmul.mubr.f32.gmra.mrb[0].mxu0 %v2920
      %v3019 = vpop.f32.mrb[0].mxu0
      %v3020 = vadd.f32 0.0, %v3019
      %v3021 = vpop.f32.mrb[0].mxu0
      %3022 = vmatprep.mubr.f32.mxu0 0.0
      %3023 = vmatmul.mubr.f32.gmra.mrb[0].mxu0 %v2923
      %v3024 = vpop.f32.mrb[0].mxu0
      %v3025 = vadd.f32 0.0, %v3024
      %v3026 = vpop.f32.mrb[0].mxu0
      %3027 = vmatprep.mubr.f32.mxu0 0.0
      %3028 = vmatmul.mubr.f32.gmra.mrb[0].mxu0 %v2926
      %v3029 = vpop.f32.mrb[0].mxu0
      %v3030 = vadd.f32 0.0, %v3029
      %v3031 = vpop.f32.mrb[0].mxu0
      %3032 = vdwg.mxu0
      %3033 = vrot.lane.b32.xlu0 %v508, 104
      %v3034 = vpop.permute.xlu0 %3033
      %3035 = vrot.lane.b32.xlu0 %v513, 104
      %v3036 = vpop.permute.xlu0 %3035
      %3037 = vrot.lane.b32.xlu0 %v518, 104
      %v3038 = vpop.permute.xlu0 %3037
      %3039 = vrot.lane.b32.xlu0 %v523, 104
      %v3040 = vpop.permute.xlu0 %3039
      %3041 = vrot.lane.b32.xlu0 %v528, 104
      %v3042 = vpop.permute.xlu0 %3041
      %3043 = vrot.lane.b32.xlu0 %v533, 104
      %v3044 = vpop.permute.xlu0 %3043
      %3045 = vrot.lane.b32.xlu0 %v538, 104
      %v3046 = vpop.permute.xlu0 %3045
      %3047 = vrot.lane.b32.xlu0 %v543, 104
      %v3048 = vpop.permute.xlu0 %3047
      %3049 = vrot.lane.b32.xlu0 %v508, 72
      %v3050 = vpop.permute.xlu0 %3049
      %3051 = vrot.lane.b32.xlu0 %v513, 72
      %v3052 = vpop.permute.xlu0 %3051
      %3053 = vrot.lane.b32.xlu0 %v518, 72
      %v3054 = vpop.permute.xlu0 %3053
      %3055 = vrot.lane.b32.xlu0 %v523, 72
      %v3056 = vpop.permute.xlu0 %3055
      %3057 = vrot.lane.b32.xlu0 %v528, 72
      %v3058 = vpop.permute.xlu0 %3057
      %3059 = vrot.lane.b32.xlu0 %v533, 72
      %v3060 = vpop.permute.xlu0 %3059
      %3061 = vrot.lane.b32.xlu0 %v538, 72
      %v3062 = vpop.permute.xlu0 %3061
      %3063 = vrot.lane.b32.xlu0 %v543, 72
      %v3064 = vpop.permute.xlu0 %3063
      %v3065 = vsel %vm611, %v3034, 0
      %v3067 = vsel %vm611, %v3036, 0
      %v3069 = vsel %vm611, %v3038, 0
      %v3071 = vsel %vm611, %v3040, 0
      %v3073 = vsel %vm611, %v3042, 0
      %v3075 = vsel %vm611, %v3044, 0
      %v3077 = vsel %vm611, %v3046, 0
      %v3079 = vsel %vm611, %v3048, 0
      %v3081 = vsel %vm611, %v3050, 0
      %v3083 = vsel %vm611, %v3052, 0
      %v3085 = vsel %vm611, %v3054, 0
      %v3087 = vsel %vm611, %v3056, 0
      %v3089 = vsel %vm611, %v3058, 0
      %v3091 = vsel %vm611, %v3060, 0
      %v3093 = vsel %vm611, %v3062, 0
      %v3095 = vsel %vm611, %v3064, 0
      %3097 = vmatprep.subr.mxu0 0.0
      %3098 = vmatpush1.xpose.msra.mxu0 %v3081
      %3099 = vmatprep.subr.mxu0 0.0
      %3100 = vmatpush1.xpose.msra.mxu0 %v3083
      %3101 = vmatprep.subr.mxu0 0.0
      %3102 = vmatpush1.xpose.msra.mxu0 %v3085
      %3103 = vmatprep.subr.mxu0 0.0
      %3104 = vmatpush1.xpose.msra.mxu0 %v3087
      %3105 = vmatprep.subr.mxu0 0.0
      %3106 = vmatpush1.xpose.msra.mxu0 %v3089
      %3107 = vmatprep.subr.mxu0 0.0
      %3108 = vmatpush1.xpose.msra.mxu0 %v3091
      %3109 = vmatprep.subr.mxu0 0.0
      %3110 = vmatpush1.xpose.msra.mxu0 %v3093
      %3111 = vmatprep.subr.mxu0 0.0
      %3112 = vmatpush1.xpose.msra.mxu0 %v3095
      %3113 = vmatprep.subr.mxu0 0.0
      %3114 = vmatpush1.xpose.msra.mxu0 0.0
      %3115 = vmatprep.subr.mxu0 0.0
      %3116 = vmatpush1.xpose.msra.mxu0 0.0
      %3117 = vmatprep.subr.mxu0 0.0
      %3118 = vmatpush1.xpose.msra.mxu0 0.0
      %3119 = vmatprep.subr.mxu0 0.0
      %3120 = vmatpush1.xpose.msra.mxu0 0.0
      %3121 = vmatprep.subr.mxu0 0.0
      %3122 = vmatpush1.xpose.msra.mxu0 0.0
      %3123 = vmatprep.subr.mxu0 0.0
      %3124 = vmatpush1.xpose.msra.mxu0 0.0
      %3125 = vmatprep.subr.mxu0 0.0
      %3126 = vmatpush1.xpose.msra.mxu0 0.0
      %3127 = vmatprep.subr.mxu0 0.0
      %3128 = vmatpush1.xpose.msra.mxu0 0.0
      %3129 = vmatprep.subr.mxu0 0.0
      %3130 = vmatpush1.xpose.msra.mxu0 0.0
      %3131 = vmatprep.subr.mxu0 0.0
      %3132 = vmatpush1.xpose.msra.mxu0 0.0
      %3133 = vmatprep.subr.mxu0 0.0
      %3134 = vmatpush1.xpose.msra.mxu0 0.0
      %3135 = vmatprep.subr.mxu0 0.0
      %3136 = vmatpush1.xpose.msra.mxu0 0.0
      %3137 = vmatprep.subr.mxu0 0.0
      %3138 = vmatpush1.xpose.msra.mxu0 0.0
      %3139 = vmatprep.subr.mxu0 0.0
      %3140 = vmatpush1.xpose.msra.mxu0 0.0
      %3141 = vmatprep.subr.mxu0 0.0
      %3142 = vmatpush1.xpose.msra.mxu0 0.0
      %3143 = vmatprep.subr.mxu0 0.0
      %3144 = vmatpush1.xpose.msra.mxu0 0.0
      %3145 = vmatprep.subr.mxu0 0.0
      %3146 = vmatpush1.xpose.msra.mxu0 0.0
      %3147 = vmatprep.subr.mxu0 0.0
      %3148 = vmatpush1.xpose.msra.mxu0 0.0
      %3149 = vmatprep.subr.mxu0 0.0
      %3150 = vmatpush1.xpose.msra.mxu0 0.0
      %3151 = vmatprep.subr.mxu0 0.0
      %3152 = vmatpush1.xpose.msra.mxu0 0.0
      %3153 = vmatprep.subr.mxu0 0.0
      %3154 = vmatpush1.xpose.msra.mxu0 0.0
      %3155 = vmatprep.subr.mxu0 0.0
      %3156 = vmatpush1.xpose.msra.mxu0 0.0
      %3157 = vmatprep.subr.mxu0 0.0
      %3158 = vmatpush1.xpose.msra.mxu0 0.0
      %3159 = vmatprep.subr.mxu0 0.0
      %3160 = vmatpush1.xpose.msra.mxu0 0.0
      %3161 = vmatprep.mubr.f32.mxu0 0.0
      %3162 = vmatmul.mubr.f32.gmra.mrb[0].mxu0 %v3065
      %v3163 = vpop.f32.mrb[0].mxu0
      %v3164 = vadd.f32 0.0, %v3163
      %v3165 = vpop.f32.mrb[0].mxu0
      %3166 = vmatprep.mubr.f32.mxu0 0.0
      %3167 = vmatmul.mubr.f32.gmra.mrb[0].mxu0 %v3067
      %v3168 = vpop.f32.mrb[0].mxu0
      %v3169 = vadd.f32 0.0, %v3168
      %v3170 = vpop.f32.mrb[0].mxu0
      %3171 = vmatprep.mubr.f32.mxu0 0.0
      %3172 = vmatmul.mubr.f32.gmra.mrb[0].mxu0 %v3069
      %v3173 = vpop.f32.mrb[0].mxu0
      %v3174 = vadd.f32 0.0, %v3173
      %v3175 = vpop.f32.mrb[0].mxu0
      %3176 = vmatprep.mubr.f32.mxu0 0.0
      %3177 = vmatmul.mubr.f32.gmra.mrb[0].mxu0 %v3071
      %v3178 = vpop.f32.mrb[0].mxu0
      %v3179 = vadd.f32 0.0, %v3178
      %v3180 = vpop.f32.mrb[0].mxu0
      %3181 = vmatprep.mubr.f32.mxu0 0.0
      %3182 = vmatmul.mubr.f32.gmra.mrb[0].mxu0 %v3073
      %v3183 = vpop.f32.mrb[0].mxu0
      %v3184 = vadd.f32 0.0, %v3183
      %v3185 = vpop.f32.mrb[0].mxu0
      %3186 = vmatprep.mubr.f32.mxu0 0.0
      %3187 = vmatmul.mubr.f32.gmra.mrb[0].mxu0 %v3075
      %v3188 = vpop.f32.mrb[0].mxu0
      %v3189 = vadd.f32 0.0, %v3188
      %v3190 = vpop.f32.mrb[0].mxu0
      %3191 = vmatprep.mubr.f32.mxu0 0.0
      %3192 = vmatmul.mubr.f32.gmra.mrb[0].mxu0 %v3077
      %v3193 = vpop.f32.mrb[0].mxu0
      %v3194 = vadd.f32 0.0, %v3193
      %v3195 = vpop.f32.mrb[0].mxu0
      %3196 = vmatprep.mubr.f32.mxu0 0.0
      %3197 = vmatmul.mubr.f32.gmra.mrb[0].mxu0 %v3079
      %v3198 = vpop.f32.mrb[0].mxu0
      %v3199 = vadd.f32 0.0, %v3198
      %v3200 = vpop.f32.mrb[0].mxu0
      %3201 = vdwg.mxu0
      %3202 = vrot.lane.b32.xlu0 %v548, 104
      %v3203 = vpop.permute.xlu0 %3202
      %3204 = vrot.lane.b32.xlu0 %v553, 104
      %v3205 = vpop.permute.xlu0 %3204
      %3206 = vrot.lane.b32.xlu0 %v558, 104
      %v3207 = vpop.permute.xlu0 %3206
      %3208 = vrot.lane.b32.xlu0 %v563, 104
      %v3209 = vpop.permute.xlu0 %3208
      %3210 = vrot.lane.b32.xlu0 %v568, 104
      %v3211 = vpop.permute.xlu0 %3210
      %3212 = vrot.lane.b32.xlu0 %v573, 104
      %v3213 = vpop.permute.xlu0 %3212
      %3214 = vrot.lane.b32.xlu0 %v578, 104
      %v3215 = vpop.permute.xlu0 %3214
      %3216 = vrot.lane.b32.xlu0 %v583, 104
      %v3217 = vpop.permute.xlu0 %3216
      %3218 = vrot.lane.b32.xlu0 %v548, 72
      %v3219 = vpop.permute.xlu0 %3218
      %3220 = vrot.lane.b32.xlu0 %v553, 72
      %v3221 = vpop.permute.xlu0 %3220
      %3222 = vrot.lane.b32.xlu0 %v558, 72
      %v3223 = vpop.permute.xlu0 %3222
      %3224 = vrot.lane.b32.xlu0 %v563, 72
      %v3225 = vpop.permute.xlu0 %3224
      %3226 = vrot.lane.b32.xlu0 %v568, 72
      %v3227 = vpop.permute.xlu0 %3226
      %3228 = vrot.lane.b32.xlu0 %v573, 72
      %v3229 = vpop.permute.xlu0 %3228
      %3230 = vrot.lane.b32.xlu0 %v578, 72
      %v3231 = vpop.permute.xlu0 %3230
      %3232 = vrot.lane.b32.xlu0 %v583, 72
      %v3233 = vpop.permute.xlu0 %3232
      %v3234 = vsel %vm611, %v3203, 0
      %v3236 = vsel %vm611, %v3205, 0
      %v3238 = vsel %vm611, %v3207, 0
      %v3240 = vsel %vm611, %v3209, 0
      %v3242 = vsel %vm611, %v3211, 0
      %v3244 = vsel %vm611, %v3213, 0
      %v3246 = vsel %vm611, %v3215, 0
      %v3248 = vsel %vm611, %v3217, 0
      %v3250 = vsel %vm611, %v3219, 0
      %v3252 = vsel %vm611, %v3221, 0
      %v3254 = vsel %vm611, %v3223, 0
      %v3256 = vsel %vm611, %v3225, 0
      %v3258 = vsel %vm611, %v3227, 0
      %v3260 = vsel %vm611, %v3229, 0
      %v3262 = vsel %vm611, %v3231, 0
      %v3264 = vsel %vm611, %v3233, 0
      %3266 = vmatprep.subr.mxu0 0.0
      %3267 = vmatpush1.xpose.msra.mxu0 %v3250
      %3268 = vmatprep.subr.mxu0 0.0
      %3269 = vmatpush1.xpose.msra.mxu0 %v3252
      %3270 = vmatprep.subr.mxu0 0.0
      %3271 = vmatpush1.xpose.msra.mxu0 %v3254
      %3272 = vmatprep.subr.mxu0 0.0
      %3273 = vmatpush1.xpose.msra.mxu0 %v3256
      %3274 = vmatprep.subr.mxu0 0.0
      %3275 = vmatpush1.xpose.msra.mxu0 %v3258
      %3276 = vmatprep.subr.mxu0 0.0
      %3277 = vmatpush1.xpose.msra.mxu0 %v3260
      %3278 = vmatprep.subr.mxu0 0.0
      %3279 = vmatpush1.xpose.msra.mxu0 %v3262
      %3280 = vmatprep.subr.mxu0 0.0
      %3281 = vmatpush1.xpose.msra.mxu0 %v3264
      %3282 = vmatprep.subr.mxu0 0.0
      %3283 = vmatpush1.xpose.msra.mxu0 0.0
      %3284 = vmatprep.subr.mxu0 0.0
      %3285 = vmatpush1.xpose.msra.mxu0 0.0
      %3286 = vmatprep.subr.mxu0 0.0
      %3287 = vmatpush1.xpose.msra.mxu0 0.0
      %3288 = vmatprep.subr.mxu0 0.0
      %3289 = vmatpush1.xpose.msra.mxu0 0.0
      %3290 = vmatprep.subr.mxu0 0.0
      %3291 = vmatpush1.xpose.msra.mxu0 0.0
      %3292 = vmatprep.subr.mxu0 0.0
      %3293 = vmatpush1.xpose.msra.mxu0 0.0
      %3294 = vmatprep.subr.mxu0 0.0
      %3295 = vmatpush1.xpose.msra.mxu0 0.0
      %3296 = vmatprep.subr.mxu0 0.0
      %3297 = vmatpush1.xpose.msra.mxu0 0.0
      %3298 = vmatprep.subr.mxu0 0.0
      %3299 = vmatpush1.xpose.msra.mxu0 0.0
      %3300 = vmatprep.subr.mxu0 0.0
      %3301 = vmatpush1.xpose.msra.mxu0 0.0
      %3302 = vmatprep.subr.mxu0 0.0
      %3303 = vmatpush1.xpose.msra.mxu0 0.0
      %3304 = vmatprep.subr.mxu0 0.0
      %3305 = vmatpush1.xpose.msra.mxu0 0.0
      %3306 = vmatprep.subr.mxu0 0.0
      %3307 = vmatpush1.xpose.msra.mxu0 0.0
      %3308 = vmatprep.subr.mxu0 0.0
      %3309 = vmatpush1.xpose.msra.mxu0 0.0
      %3310 = vmatprep.subr.mxu0 0.0
      %3311 = vmatpush1.xpose.msra.mxu0 0.0
      %3312 = vmatprep.subr.mxu0 0.0
      %3313 = vmatpush1.xpose.msra.mxu0 0.0
      %3314 = vmatprep.subr.mxu0 0.0
      %3315 = vmatpush1.xpose.msra.mxu0 0.0
      %3316 = vmatprep.subr.mxu0 0.0
      %3317 = vmatpush1.xpose.msra.mxu0 0.0
      %3318 = vmatprep.subr.mxu0 0.0
      %3319 = vmatpush1.xpose.msra.mxu0 0.0
      %3320 = vmatprep.subr.mxu0 0.0
      %3321 = vmatpush1.xpose.msra.mxu0 0.0
      %3322 = vmatprep.subr.mxu0 0.0
      %3323 = vmatpush1.xpose.msra.mxu0 0.0
      %3324 = vmatprep.subr.mxu0 0.0
      %3325 = vmatpush1.xpose.msra.mxu0 0.0
      %3326 = vmatprep.subr.mxu0 0.0
      %3327 = vmatpush1.xpose.msra.mxu0 0.0
      %3328 = vmatprep.subr.mxu0 0.0
      %3329 = vmatpush1.xpose.msra.mxu0 0.0
      %3330 = vmatprep.mubr.f32.mxu0 0.0
      %3331 = vmatmul.mubr.f32.gmra.mrb[0].mxu0 %v3234
      %v3332 = vpop.f32.mrb[0].mxu0
      %v3333 = vadd.f32 0.0, %v3332
      %v3334 = vpop.f32.mrb[0].mxu0
      %3335 = vmatprep.mubr.f32.mxu0 0.0
      %3336 = vmatmul.mubr.f32.gmra.mrb[0].mxu0 %v3236
      %v3337 = vpop.f32.mrb[0].mxu0
      %v3338 = vadd.f32 0.0, %v3337
      %v3339 = vpop.f32.mrb[0].mxu0
      %3340 = vmatprep.mubr.f32.mxu0 0.0
      %3341 = vmatmul.mubr.f32.gmra.mrb[0].mxu0 %v3238
      %v3342 = vpop.f32.mrb[0].mxu0
      %v3343 = vadd.f32 0.0, %v3342
      %v3344 = vpop.f32.mrb[0].mxu0
      %3345 = vmatprep.mubr.f32.mxu0 0.0
      %3346 = vmatmul.mubr.f32.gmra.mrb[0].mxu0 %v3240
      %v3347 = vpop.f32.mrb[0].mxu0
      %v3348 = vadd.f32 0.0, %v3347
      %v3349 = vpop.f32.mrb[0].mxu0
      %3350 = vmatprep.mubr.f32.mxu0 0.0
      %3351 = vmatmul.mubr.f32.gmra.mrb[0].mxu0 %v3242
      %v3352 = vpop.f32.mrb[0].mxu0
      %v3353 = vadd.f32 0.0, %v3352
      %v3354 = vpop.f32.mrb[0].mxu0
      %3355 = vmatprep.mubr.f32.mxu0 0.0
      %3356 = vmatmul.mubr.f32.gmra.mrb[0].mxu0 %v3244
      %v3357 = vpop.f32.mrb[0].mxu0
      %v3358 = vadd.f32 0.0, %v3357
      %v3359 = vpop.f32.mrb[0].mxu0
      %3360 = vmatprep.mubr.f32.mxu0 0.0
      %3361 = vmatmul.mubr.f32.gmra.mrb[0].mxu0 %v3246
      %v3362 = vpop.f32.mrb[0].mxu0
      %v3363 = vadd.f32 0.0, %v3362
      %v3364 = vpop.f32.mrb[0].mxu0
      %3365 = vmatprep.mubr.f32.mxu0 0.0
      %3366 = vmatmul.mubr.f32.gmra.mrb[0].mxu0 %v3248
      %v3367 = vpop.f32.mrb[0].mxu0
      %v3368 = vadd.f32 0.0, %v3367
      %v3369 = vpop.f32.mrb[0].mxu0
      %3370 = vdwg.mxu0
      %v3371 = vsel %vm910, %v3164, -inf
      %3372 = vmax.xlane.f32.xlu0 %v3371
      %v3373 = vpop.xlane.xlu0 %3372
      %v3374 = vsel %vm910, %v3169, -inf
      %3375 = vmax.xlane.f32.xlu0 %v3374
      %v3376 = vpop.xlane.xlu0 %3375
      %v3377 = vsel %vm910, %v3174, -inf
      %3378 = vmax.xlane.f32.xlu0 %v3377
      %v3379 = vpop.xlane.xlu0 %3378
      %v3380 = vsel %vm910, %v3179, -inf
      %3381 = vmax.xlane.f32.xlu0 %v3380
      %v3382 = vpop.xlane.xlu0 %3381
      %v3383 = vsel %vm910, %v3184, -inf
      %3384 = vmax.xlane.f32.xlu0 %v3383
      %v3385 = vpop.xlane.xlu0 %3384
      %v3386 = vsel %vm910, %v3189, -inf
      %3387 = vmax.xlane.f32.xlu0 %v3386
      %v3388 = vpop.xlane.xlu0 %3387
      %v3389 = vsel %vm910, %v3194, -inf
      %3390 = vmax.xlane.f32.xlu0 %v3389
      %v3391 = vpop.xlane.xlu0 %3390
      %v3392 = vsel %vm910, %v3199, -inf
      %3393 = vmax.xlane.f32.xlu0 %v3392
      %v3394 = vpop.xlane.xlu0 %3393
      %v3395 = vsel %vm910, %v3333, -inf
      %3396 = vmax.xlane.f32.xlu0 %v3395
      %v3397 = vpop.xlane.xlu0 %3396
      %v3398 = vsel %vm910, %v3338, -inf
      %3399 = vmax.xlane.f32.xlu0 %v3398
      %v3400 = vpop.xlane.xlu0 %3399
      %v3401 = vsel %vm910, %v3343, -inf
      %3402 = vmax.xlane.f32.xlu0 %v3401
      %v3403 = vpop.xlane.xlu0 %3402
      %v3404 = vsel %vm910, %v3348, -inf
      %3405 = vmax.xlane.f32.xlu0 %v3404
      %v3406 = vpop.xlane.xlu0 %3405
      %v3407 = vsel %vm910, %v3353, -inf
      %3408 = vmax.xlane.f32.xlu0 %v3407
      %v3409 = vpop.xlane.xlu0 %3408
      %v3410 = vsel %vm910, %v3358, -inf
      %3411 = vmax.xlane.f32.xlu0 %v3410
      %v3412 = vpop.xlane.xlu0 %3411
      %v3413 = vsel %vm910, %v3363, -inf
      %3414 = vmax.xlane.f32.xlu0 %v3413
      %v3415 = vpop.xlane.xlu0 %3414
      %v3416 = vsel %vm910, %v3368, -inf
      %3417 = vmax.xlane.f32.xlu0 %v3416
      %v3418 = vpop.xlane.xlu0 %3417
      %v3419 = vsub.f32 %v3164, %v3373
      %v3420 = vsub.f32 %v3169, %v3376
      %v3421 = vsub.f32 %v3174, %v3379
      %v3422 = vsub.f32 %v3179, %v3382
      %v3423 = vsub.f32 %v3184, %v3385
      %v3424 = vsub.f32 %v3189, %v3388
      %v3425 = vsub.f32 %v3194, %v3391
      %v3426 = vsub.f32 %v3199, %v3394
      %v3427 = vsub.f32 %v3333, %v3397
      %v3428 = vsub.f32 %v3338, %v3400
      %v3429 = vsub.f32 %v3343, %v3403
      %v3430 = vsub.f32 %v3348, %v3406
      %v3431 = vsub.f32 %v3353, %v3409
      %v3432 = vsub.f32 %v3358, %v3412
      %v3433 = vsub.f32 %v3363, %v3415
      %v3434 = vsub.f32 %v3368, %v3418
      %v3435 = vmul.f32 %v3419, 1.442695
      %v3436 = vpow.pop %v3435
      %v3437 = vmul.f32 %v3420, 1.442695
      %v3438 = vpow.pop %v3437
      %v3439 = vmul.f32 %v3421, 1.442695
      %v3440 = vpow.pop %v3439
      %v3441 = vmul.f32 %v3422, 1.442695
      %v3442 = vpow.pop %v3441
      %v3443 = vmul.f32 %v3423, 1.442695
      %v3444 = vpow.pop %v3443
      %v3445 = vmul.f32 %v3424, 1.442695
      %v3446 = vpow.pop %v3445
      %v3447 = vmul.f32 %v3425, 1.442695
      %v3448 = vpow.pop %v3447
      %v3449 = vmul.f32 %v3426, 1.442695
      %v3450 = vpow.pop %v3449
      %v3451 = vmul.f32 %v3427, 1.442695
      %v3452 = vpow.pop %v3451
      %v3453 = vmul.f32 %v3428, 1.442695
      %v3454 = vpow.pop %v3453
      %v3455 = vmul.f32 %v3429, 1.442695
      %v3456 = vpow.pop %v3455
      %v3457 = vmul.f32 %v3430, 1.442695
      %v3458 = vpow.pop %v3457
      %v3459 = vmul.f32 %v3431, 1.442695
      %v3460 = vpow.pop %v3459
      %v3461 = vmul.f32 %v3432, 1.442695
      %v3462 = vpow.pop %v3461
      %v3463 = vmul.f32 %v3433, 1.442695
      %v3464 = vpow.pop %v3463
      %v3465 = vmul.f32 %v3434, 1.442695
      %v3466 = vpow.pop %v3465
      %v3467 = vsel %vm910, %v3436, 0.0
      %3468 = vadd.xlane.f32.xlu0 %v3467
      %v3469 = vpop.xlane.xlu0 %3468
      %v3470 = vsel %vm910, %v3438, 0.0
      %3471 = vadd.xlane.f32.xlu0 %v3470
      %v3472 = vpop.xlane.xlu0 %3471
      %v3473 = vsel %vm910, %v3440, 0.0
      %3474 = vadd.xlane.f32.xlu0 %v3473
      %v3475 = vpop.xlane.xlu0 %3474
      %v3476 = vsel %vm910, %v3442, 0.0
      %3477 = vadd.xlane.f32.xlu0 %v3476
      %v3478 = vpop.xlane.xlu0 %3477
      %v3479 = vsel %vm910, %v3444, 0.0
      %3480 = vadd.xlane.f32.xlu0 %v3479
      %v3481 = vpop.xlane.xlu0 %3480
      %v3482 = vsel %vm910, %v3446, 0.0
      %3483 = vadd.xlane.f32.xlu0 %v3482
      %v3484 = vpop.xlane.xlu0 %3483
      %v3485 = vsel %vm910, %v3448, 0.0
      %3486 = vadd.xlane.f32.xlu0 %v3485
      %v3487 = vpop.xlane.xlu0 %3486
      %v3488 = vsel %vm910, %v3450, 0.0
      %3489 = vadd.xlane.f32.xlu0 %v3488
      %v3490 = vpop.xlane.xlu0 %3489
      %v3491 = vsel %vm910, %v3452, 0.0
      %3492 = vadd.xlane.f32.xlu0 %v3491
      %v3493 = vpop.xlane.xlu0 %3492
      %v3494 = vsel %vm910, %v3454, 0.0
      %3495 = vadd.xlane.f32.xlu0 %v3494
      %v3496 = vpop.xlane.xlu0 %3495
      %v3497 = vsel %vm910, %v3456, 0.0
      %3498 = vadd.xlane.f32.xlu0 %v3497
      %v3499 = vpop.xlane.xlu0 %3498
      %v3500 = vsel %vm910, %v3458, 0.0
      %3501 = vadd.xlane.f32.xlu0 %v3500
      %v3502 = vpop.xlane.xlu0 %3501
      %v3503 = vsel %vm910, %v3460, 0.0
      %3504 = vadd.xlane.f32.xlu0 %v3503
      %v3505 = vpop.xlane.xlu0 %3504
      %v3506 = vsel %vm910, %v3462, 0.0
      %3507 = vadd.xlane.f32.xlu0 %v3506
      %v3508 = vpop.xlane.xlu0 %3507
      %v3509 = vsel %vm910, %v3464, 0.0
      %3510 = vadd.xlane.f32.xlu0 %v3509
      %v3511 = vpop.xlane.xlu0 %3510
      %v3512 = vsel %vm910, %v3466, 0.0
      %3513 = vadd.xlane.f32.xlu0 %v3512
      %v3514 = vpop.xlane.xlu0 %3513
      %v3515 = vrcp.pop %v3469
      %v3516 = vrcp.pop %v3472
      %v3517 = vrcp.pop %v3475
      %v3518 = vrcp.pop %v3478
      %v3519 = vrcp.pop %v3481
      %v3520 = vrcp.pop %v3484
      %v3521 = vrcp.pop %v3487
      %v3522 = vrcp.pop %v3490
      %v3523 = vrcp.pop %v3493
      %v3524 = vrcp.pop %v3496
      %v3525 = vrcp.pop %v3499
      %v3526 = vrcp.pop %v3502
      %v3527 = vrcp.pop %v3505
      %v3528 = vrcp.pop %v3508
      %v3529 = vrcp.pop %v3511
      %v3530 = vrcp.pop %v3514
      %v3531 = vmul.f32 %v3436, %v3515
      %v3532 = vmul.f32 %v3438, %v3516
      %v3533 = vmul.f32 %v3440, %v3517
      %v3534 = vmul.f32 %v3442, %v3518
      %v3535 = vmul.f32 %v3444, %v3519
      %v3536 = vmul.f32 %v3446, %v3520
      %v3537 = vmul.f32 %v3448, %v3521
      %v3538 = vmul.f32 %v3450, %v3522
      %v3539 = vmul.f32 %v3452, %v3523
      %v3540 = vmul.f32 %v3454, %v3524
      %v3541 = vmul.f32 %v3456, %v3525
      %v3542 = vmul.f32 %v3458, %v3526
      %v3543 = vmul.f32 %v3460, %v3527
      %v3544 = vmul.f32 %v3462, %v3528
      %v3545 = vmul.f32 %v3464, %v3529
      %v3546 = vmul.f32 %v3466, %v3530
      %3547 = vrot.lane.b32.xlu0 %v508, 40
      %v3548 = vpop.permute.xlu0 %3547
      %3549 = vrot.lane.b32.xlu0 %v513, 40
      %v3550 = vpop.permute.xlu0 %3549
      %3551 = vrot.lane.b32.xlu0 %v518, 40
      %v3552 = vpop.permute.xlu0 %3551
      %3553 = vrot.lane.b32.xlu0 %v523, 40
      %v3554 = vpop.permute.xlu0 %3553
      %3555 = vrot.lane.b32.xlu0 %v528, 40
      %v3556 = vpop.permute.xlu0 %3555
      %3557 = vrot.lane.b32.xlu0 %v533, 40
      %v3558 = vpop.permute.xlu0 %3557
      %3559 = vrot.lane.b32.xlu0 %v538, 40
      %v3560 = vpop.permute.xlu0 %3559
      %3561 = vrot.lane.b32.xlu0 %v543, 40
      %v3562 = vpop.permute.xlu0 %3561
      %v3572 = vsel %vm910, %v3531, 0
      %v3575 = vsel %vm910, %v3532, 0
      %v3578 = vsel %vm910, %v3533, 0
      %v3581 = vsel %vm910, %v3534, 0
      %v3584 = vsel %vm910, %v3535, 0
      %v3587 = vsel %vm910, %v3536, 0
      %v3590 = vsel %vm910, %v3537, 0
      %v3593 = vsel %vm910, %v3538, 0
      %3595 = vmatprep.subr.mxu0 0.0
      %3596 = vmatpush1.msra.mxu0 %v3548
      %3597 = vmatprep.subr.mxu0 0.0
      %3598 = vmatpush1.msra.mxu0 %v3550
      %3599 = vmatprep.subr.mxu0 0.0
      %3600 = vmatpush1.msra.mxu0 %v3552
      %3601 = vmatprep.subr.mxu0 0.0
      %3602 = vmatpush1.msra.mxu0 %v3554
      %3603 = vmatprep.subr.mxu0 0.0
      %3604 = vmatpush1.msra.mxu0 %v3556
      %3605 = vmatprep.subr.mxu0 0.0
      %3606 = vmatpush1.msra.mxu0 %v3558
      %3607 = vmatprep.subr.mxu0 0.0
      %3608 = vmatpush1.msra.mxu0 %v3560
      %3609 = vmatprep.subr.mxu0 0.0
      %3610 = vmatpush1.msra.mxu0 %v3562
      %3611 = vmatprep.subr.mxu0 0.0
      %3612 = vmatpush1.msra.mxu0 0.0
      %3613 = vmatprep.subr.mxu0 0.0
      %3614 = vmatpush1.msra.mxu0 0.0
      %3615 = vmatprep.subr.mxu0 0.0
      %3616 = vmatpush1.msra.mxu0 0.0
      %3617 = vmatprep.subr.mxu0 0.0
      %3618 = vmatpush1.msra.mxu0 0.0
      %3619 = vmatprep.subr.mxu0 0.0
      %3620 = vmatpush1.msra.mxu0 0.0
      %3621 = vmatprep.subr.mxu0 0.0
      %3622 = vmatpush1.msra.mxu0 0.0
      %3623 = vmatprep.subr.mxu0 0.0
      %3624 = vmatpush1.msra.mxu0 0.0
      %3625 = vmatprep.subr.mxu0 0.0
      %3626 = vmatpush1.msra.mxu0 0.0
      %3627 = vmatprep.subr.mxu0 0.0
      %3628 = vmatpush1.msra.mxu0 0.0
      %3629 = vmatprep.subr.mxu0 0.0
      %3630 = vmatpush1.msra.mxu0 0.0
      %3631 = vmatprep.subr.mxu0 0.0
      %3632 = vmatpush1.msra.mxu0 0.0
      %3633 = vmatprep.subr.mxu0 0.0
      %3634 = vmatpush1.msra.mxu0 0.0
      %3635 = vmatprep.subr.mxu0 0.0
      %3636 = vmatpush1.msra.mxu0 0.0
      %3637 = vmatprep.subr.mxu0 0.0
      %3638 = vmatpush1.msra.mxu0 0.0
      %3639 = vmatprep.subr.mxu0 0.0
      %3640 = vmatpush1.msra.mxu0 0.0
      %3641 = vmatprep.subr.mxu0 0.0
      %3642 = vmatpush1.msra.mxu0 0.0
      %3643 = vmatprep.subr.mxu0 0.0
      %3644 = vmatpush1.msra.mxu0 0.0
      %3645 = vmatprep.subr.mxu0 0.0
      %3646 = vmatpush1.msra.mxu0 0.0
      %3647 = vmatprep.subr.mxu0 0.0
      %3648 = vmatpush1.msra.mxu0 0.0
      %3649 = vmatprep.subr.mxu0 0.0
      %3650 = vmatpush1.msra.mxu0 0.0
      %3651 = vmatprep.subr.mxu0 0.0
      %3652 = vmatpush1.msra.mxu0 0.0
      %3653 = vmatprep.subr.mxu0 0.0
      %3654 = vmatpush1.msra.mxu0 0.0
      %3655 = vmatprep.subr.mxu0 0.0
      %3656 = vmatpush1.msra.mxu0 0.0
      %3657 = vmatprep.subr.mxu0 0.0
      %3658 = vmatpush1.msra.mxu0 0.0
      %3659 = vmatprep.mubr.f32.mxu0 0.0
      %3660 = vmatmul.mubr.f32.gmra.mrb[0].mxu0 %v3572
      %v3661 = vpop.f32.mrb[0].mxu0
      %v3662 = vadd.f32 0.0, %v3661
      %v3663 = vpop.f32.mrb[0].mxu0
      %3664 = vmatprep.mubr.f32.mxu0 0.0
      %3665 = vmatmul.mubr.f32.gmra.mrb[0].mxu0 %v3575
      %v3666 = vpop.f32.mrb[0].mxu0
      %v3667 = vadd.f32 0.0, %v3666
      %v3668 = vpop.f32.mrb[0].mxu0
      %3669 = vmatprep.mubr.f32.mxu0 0.0
      %3670 = vmatmul.mubr.f32.gmra.mrb[0].mxu0 %v3578
      %v3671 = vpop.f32.mrb[0].mxu0
      %v3672 = vadd.f32 0.0, %v3671
      %v3673 = vpop.f32.mrb[0].mxu0
      %3674 = vmatprep.mubr.f32.mxu0 0.0
      %3675 = vmatmul.mubr.f32.gmra.mrb[0].mxu0 %v3581
      %v3676 = vpop.f32.mrb[0].mxu0
      %v3677 = vadd.f32 0.0, %v3676
      %v3678 = vpop.f32.mrb[0].mxu0
      %3679 = vmatprep.mubr.f32.mxu0 0.0
      %3680 = vmatmul.mubr.f32.gmra.mrb[0].mxu0 %v3584
      %v3681 = vpop.f32.mrb[0].mxu0
      %v3682 = vadd.f32 0.0, %v3681
      %v3683 = vpop.f32.mrb[0].mxu0
      %3684 = vmatprep.mubr.f32.mxu0 0.0
      %3685 = vmatmul.mubr.f32.gmra.mrb[0].mxu0 %v3587
      %v3686 = vpop.f32.mrb[0].mxu0
      %v3687 = vadd.f32 0.0, %v3686
      %v3688 = vpop.f32.mrb[0].mxu0
      %3689 = vmatprep.mubr.f32.mxu0 0.0
      %3690 = vmatmul.mubr.f32.gmra.mrb[0].mxu0 %v3590
      %v3691 = vpop.f32.mrb[0].mxu0
      %v3692 = vadd.f32 0.0, %v3691
      %v3693 = vpop.f32.mrb[0].mxu0
      %3694 = vmatprep.mubr.f32.mxu0 0.0
      %3695 = vmatmul.mubr.f32.gmra.mrb[0].mxu0 %v3593
      %v3696 = vpop.f32.mrb[0].mxu0
      %v3697 = vadd.f32 0.0, %v3696
      %v3698 = vpop.f32.mrb[0].mxu0
      %3699 = vdwg.mxu0
      %3700 = vrot.lane.b32.xlu0 %v548, 40
      %v3701 = vpop.permute.xlu0 %3700
      %3702 = vrot.lane.b32.xlu0 %v553, 40
      %v3703 = vpop.permute.xlu0 %3702
      %3704 = vrot.lane.b32.xlu0 %v558, 40
      %v3705 = vpop.permute.xlu0 %3704
      %3706 = vrot.lane.b32.xlu0 %v563, 40
      %v3707 = vpop.permute.xlu0 %3706
      %3708 = vrot.lane.b32.xlu0 %v568, 40
      %v3709 = vpop.permute.xlu0 %3708
      %3710 = vrot.lane.b32.xlu0 %v573, 40
      %v3711 = vpop.permute.xlu0 %3710
      %3712 = vrot.lane.b32.xlu0 %v578, 40
      %v3713 = vpop.permute.xlu0 %3712
      %3714 = vrot.lane.b32.xlu0 %v583, 40
      %v3715 = vpop.permute.xlu0 %3714
      %v3725 = vsel %vm910, %v3539, 0
      %v3728 = vsel %vm910, %v3540, 0
      %v3731 = vsel %vm910, %v3541, 0
      %v3734 = vsel %vm910, %v3542, 0
      %v3737 = vsel %vm910, %v3543, 0
      %v3740 = vsel %vm910, %v3544, 0
      %v3743 = vsel %vm910, %v3545, 0
      %v3746 = vsel %vm910, %v3546, 0
      %3748 = vmatprep.subr.mxu0 0.0
      %3749 = vmatpush1.msra.mxu0 %v3701
      %3750 = vmatprep.subr.mxu0 0.0
      %3751 = vmatpush1.msra.mxu0 %v3703
      %3752 = vmatprep.subr.mxu0 0.0
      %3753 = vmatpush1.msra.mxu0 %v3705
      %3754 = vmatprep.subr.mxu0 0.0
      %3755 = vmatpush1.msra.mxu0 %v3707
      %3756 = vmatprep.subr.mxu0 0.0
      %3757 = vmatpush1.msra.mxu0 %v3709
      %3758 = vmatprep.subr.mxu0 0.0
      %3759 = vmatpush1.msra.mxu0 %v3711
      %3760 = vmatprep.subr.mxu0 0.0
      %3761 = vmatpush1.msra.mxu0 %v3713
      %3762 = vmatprep.subr.mxu0 0.0
      %3763 = vmatpush1.msra.mxu0 %v3715
      %3764 = vmatprep.subr.mxu0 0.0
      %3765 = vmatpush1.msra.mxu0 0.0
      %3766 = vmatprep.subr.mxu0 0.0
      %3767 = vmatpush1.msra.mxu0 0.0
      %3768 = vmatprep.subr.mxu0 0.0
      %3769 = vmatpush1.msra.mxu0 0.0
      %3770 = vmatprep.subr.mxu0 0.0
      %3771 = vmatpush1.msra.mxu0 0.0
      %3772 = vmatprep.subr.mxu0 0.0
      %3773 = vmatpush1.msra.mxu0 0.0
      %3774 = vmatprep.subr.mxu0 0.0
      %3775 = vmatpush1.msra.mxu0 0.0
      %3776 = vmatprep.subr.mxu0 0.0
      %3777 = vmatpush1.msra.mxu0 0.0
      %3778 = vmatprep.subr.mxu0 0.0
      %3779 = vmatpush1.msra.mxu0 0.0
      %3780 = vmatprep.subr.mxu0 0.0
      %3781 = vmatpush1.msra.mxu0 0.0
      %3782 = vmatprep.subr.mxu0 0.0
      %3783 = vmatpush1.msra.mxu0 0.0
      %3784 = vmatprep.subr.mxu0 0.0
      %3785 = vmatpush1.msra.mxu0 0.0
      %3786 = vmatprep.subr.mxu0 0.0
      %3787 = vmatpush1.msra.mxu0 0.0
      %3788 = vmatprep.subr.mxu0 0.0
      %3789 = vmatpush1.msra.mxu0 0.0
      %3790 = vmatprep.subr.mxu0 0.0
      %3791 = vmatpush1.msra.mxu0 0.0
      %3792 = vmatprep.subr.mxu0 0.0
      %3793 = vmatpush1.msra.mxu0 0.0
      %3794 = vmatprep.subr.mxu0 0.0
      %3795 = vmatpush1.msra.mxu0 0.0
      %3796 = vmatprep.subr.mxu0 0.0
      %3797 = vmatpush1.msra.mxu0 0.0
      %3798 = vmatprep.subr.mxu0 0.0
      %3799 = vmatpush1.msra.mxu0 0.0
      %3800 = vmatprep.subr.mxu0 0.0
      %3801 = vmatpush1.msra.mxu0 0.0
      %3802 = vmatprep.subr.mxu0 0.0
      %3803 = vmatpush1.msra.mxu0 0.0
      %3804 = vmatprep.subr.mxu0 0.0
      %3805 = vmatpush1.msra.mxu0 0.0
      %3806 = vmatprep.subr.mxu0 0.0
      %3807 = vmatpush1.msra.mxu0 0.0
      %3808 = vmatprep.subr.mxu0 0.0
      %3809 = vmatpush1.msra.mxu0 0.0
      %3810 = vmatprep.subr.mxu0 0.0
      %3811 = vmatpush1.msra.mxu0 0.0
      %3812 = vmatprep.mubr.f32.mxu0 0.0
      %3813 = vmatmul.mubr.f32.gmra.mrb[0].mxu0 %v3725
      %v3814 = vpop.f32.mrb[0].mxu0
      %v3815 = vadd.f32 0.0, %v3814
      %v3816 = vpop.f32.mrb[0].mxu0
      %3817 = vmatprep.mubr.f32.mxu0 0.0
      %3818 = vmatmul.mubr.f32.gmra.mrb[0].mxu0 %v3728
      %v3819 = vpop.f32.mrb[0].mxu0
      %v3820 = vadd.f32 0.0, %v3819
      %v3821 = vpop.f32.mrb[0].mxu0
      %3822 = vmatprep.mubr.f32.mxu0 0.0
      %3823 = vmatmul.mubr.f32.gmra.mrb[0].mxu0 %v3731
      %v3824 = vpop.f32.mrb[0].mxu0
      %v3825 = vadd.f32 0.0, %v3824
      %v3826 = vpop.f32.mrb[0].mxu0
      %3827 = vmatprep.mubr.f32.mxu0 0.0
      %3828 = vmatmul.mubr.f32.gmra.mrb[0].mxu0 %v3734
      %v3829 = vpop.f32.mrb[0].mxu0
      %v3830 = vadd.f32 0.0, %v3829
      %v3831 = vpop.f32.mrb[0].mxu0
      %3832 = vmatprep.mubr.f32.mxu0 0.0
      %3833 = vmatmul.mubr.f32.gmra.mrb[0].mxu0 %v3737
      %v3834 = vpop.f32.mrb[0].mxu0
      %v3835 = vadd.f32 0.0, %v3834
      %v3836 = vpop.f32.mrb[0].mxu0
      %3837 = vmatprep.mubr.f32.mxu0 0.0
      %3838 = vmatmul.mubr.f32.gmra.mrb[0].mxu0 %v3740
      %v3839 = vpop.f32.mrb[0].mxu0
      %v3840 = vadd.f32 0.0, %v3839
      %v3841 = vpop.f32.mrb[0].mxu0
      %3842 = vmatprep.mubr.f32.mxu0 0.0
      %3843 = vmatmul.mubr.f32.gmra.mrb[0].mxu0 %v3743
      %v3844 = vpop.f32.mrb[0].mxu0
      %v3845 = vadd.f32 0.0, %v3844
      %v3846 = vpop.f32.mrb[0].mxu0
      %3847 = vmatprep.mubr.f32.mxu0 0.0
      %3848 = vmatmul.mubr.f32.gmra.mrb[0].mxu0 %v3746
      %v3849 = vpop.f32.mrb[0].mxu0
      %v3850 = vadd.f32 0.0, %v3849
      %v3851 = vpop.f32.mrb[0].mxu0
      %3852 = vdwg.mxu0
      %3869 = vrot.lane.b32.xlu0 %v2022, 8
      %v3870 = vpop.permute.xlu0 %3869
      %3871 = vrot.lane.b32.xlu0 %v2027, 8
      %v3872 = vpop.permute.xlu0 %3871
      %3873 = vrot.lane.b32.xlu0 %v2032, 8
      %v3874 = vpop.permute.xlu0 %3873
      %3875 = vrot.lane.b32.xlu0 %v2037, 8
      %v3876 = vpop.permute.xlu0 %3875
      %3877 = vrot.lane.b32.xlu0 %v2042, 8
      %v3878 = vpop.permute.xlu0 %3877
      %3879 = vrot.lane.b32.xlu0 %v2047, 8
      %v3880 = vpop.permute.xlu0 %3879
      %3881 = vrot.lane.b32.xlu0 %v2052, 8
      %v3882 = vpop.permute.xlu0 %3881
      %3883 = vrot.lane.b32.xlu0 %v2057, 8
      %v3884 = vpop.permute.xlu0 %3883
      %3885 = vrot.lane.b32.xlu0 %v2175, 8
      %v3886 = vpop.permute.xlu0 %3885
      %3887 = vrot.lane.b32.xlu0 %v2180, 8
      %v3888 = vpop.permute.xlu0 %3887
      %3889 = vrot.lane.b32.xlu0 %v2185, 8
      %v3890 = vpop.permute.xlu0 %3889
      %3891 = vrot.lane.b32.xlu0 %v2190, 8
      %v3892 = vpop.permute.xlu0 %3891
      %3893 = vrot.lane.b32.xlu0 %v2195, 8
      %v3894 = vpop.permute.xlu0 %3893
      %3895 = vrot.lane.b32.xlu0 %v2200, 8
      %v3896 = vpop.permute.xlu0 %3895
      %3897 = vrot.lane.b32.xlu0 %v2205, 8
      %v3898 = vpop.permute.xlu0 %3897
      %3899 = vrot.lane.b32.xlu0 %v2210, 8
      %v3900 = vpop.permute.xlu0 %3899
      %3933 = vrot.lane.b32.xlu0 %v2842, 16
      %v3934 = vpop.permute.xlu0 %3933
      %3935 = vrot.lane.b32.xlu0 %v2847, 16
      %v3936 = vpop.permute.xlu0 %3935
      %3937 = vrot.lane.b32.xlu0 %v2852, 16
      %v3938 = vpop.permute.xlu0 %3937
      %3939 = vrot.lane.b32.xlu0 %v2857, 16
      %v3940 = vpop.permute.xlu0 %3939
      %3941 = vrot.lane.b32.xlu0 %v2862, 16
      %v3942 = vpop.permute.xlu0 %3941
      %3943 = vrot.lane.b32.xlu0 %v2867, 16
      %v3944 = vpop.permute.xlu0 %3943
      %3945 = vrot.lane.b32.xlu0 %v2872, 16
      %v3946 = vpop.permute.xlu0 %3945
      %3947 = vrot.lane.b32.xlu0 %v2877, 16
      %v3948 = vpop.permute.xlu0 %3947
      %3949 = vrot.lane.b32.xlu0 %v2995, 16
      %v3950 = vpop.permute.xlu0 %3949
      %3951 = vrot.lane.b32.xlu0 %v3000, 16
      %v3952 = vpop.permute.xlu0 %3951
      %3953 = vrot.lane.b32.xlu0 %v3005, 16
      %v3954 = vpop.permute.xlu0 %3953
      %3955 = vrot.lane.b32.xlu0 %v3010, 16
      %v3956 = vpop.permute.xlu0 %3955
      %3957 = vrot.lane.b32.xlu0 %v3015, 16
      %v3958 = vpop.permute.xlu0 %3957
      %3959 = vrot.lane.b32.xlu0 %v3020, 16
      %v3960 = vpop.permute.xlu0 %3959
      %3961 = vrot.lane.b32.xlu0 %v3025, 16
      %v3962 = vpop.permute.xlu0 %3961
      %3963 = vrot.lane.b32.xlu0 %v3030, 16
      %v3964 = vpop.permute.xlu0 %3963
      %3997 = vrot.lane.b32.xlu0 %v3662, 24
      %v3998 = vpop.permute.xlu0 %3997
      %3999 = vrot.lane.b32.xlu0 %v3667, 24
      %v4000 = vpop.permute.xlu0 %3999
      %4001 = vrot.lane.b32.xlu0 %v3672, 24
      %v4002 = vpop.permute.xlu0 %4001
      %4003 = vrot.lane.b32.xlu0 %v3677, 24
      %v4004 = vpop.permute.xlu0 %4003
      %4005 = vrot.lane.b32.xlu0 %v3682, 24
      %v4006 = vpop.permute.xlu0 %4005
      %4007 = vrot.lane.b32.xlu0 %v3687, 24
      %v4008 = vpop.permute.xlu0 %4007
      %4009 = vrot.lane.b32.xlu0 %v3692, 24
      %v4010 = vpop.permute.xlu0 %4009
      %4011 = vrot.lane.b32.xlu0 %v3697, 24
      %v4012 = vpop.permute.xlu0 %4011
      %4013 = vrot.lane.b32.xlu0 %v3815, 24
      %v4014 = vpop.permute.xlu0 %4013
      %4015 = vrot.lane.b32.xlu0 %v3820, 24
      %v4016 = vpop.permute.xlu0 %4015
      %4017 = vrot.lane.b32.xlu0 %v3825, 24
      %v4018 = vpop.permute.xlu0 %4017
      %4019 = vrot.lane.b32.xlu0 %v3830, 24
      %v4020 = vpop.permute.xlu0 %4019
      %4021 = vrot.lane.b32.xlu0 %v3835, 24
      %v4022 = vpop.permute.xlu0 %4021
      %4023 = vrot.lane.b32.xlu0 %v3840, 24
      %v4024 = vpop.permute.xlu0 %4023
      %4025 = vrot.lane.b32.xlu0 %v3845, 24
      %v4026 = vpop.permute.xlu0 %4025
      %4027 = vrot.lane.b32.xlu0 %v3850, 24
      %v4028 = vpop.permute.xlu0 %4027
      %v4045 = vsel %vm611, %v1202, %v3870
      %v4046 = vsel %vm611, %v1207, %v3872
      %v4047 = vsel %vm611, %v1212, %v3874
      %v4048 = vsel %vm611, %v1217, %v3876
      %v4049 = vsel %vm611, %v1222, %v3878
      %v4050 = vsel %vm611, %v1227, %v3880
      %v4051 = vsel %vm611, %v1232, %v3882
      %v4052 = vsel %vm611, %v1237, %v3884
      %v4053 = vsel %vm611, %v1355, %v3886
      %v4054 = vsel %vm611, %v1360, %v3888
      %v4055 = vsel %vm611, %v1365, %v3890
      %v4056 = vsel %vm611, %v1370, %v3892
      %v4057 = vsel %vm611, %v1375, %v3894
      %v4058 = vsel %vm611, %v1380, %v3896
      %v4059 = vsel %vm611, %v1385, %v3898
      %v4060 = vsel %vm611, %v1390, %v3900
      %vm4061 = vcmask 130048
      %v4062 = vsel %vm4061, %v4045, %v3934
      %v4063 = vsel %vm4061, %v4046, %v3936
      %v4064 = vsel %vm4061, %v4047, %v3938
      %v4065 = vsel %vm4061, %v4048, %v3940
      %v4066 = vsel %vm4061, %v4049, %v3942
      %v4067 = vsel %vm4061, %v4050, %v3944
      %v4068 = vsel %vm4061, %v4051, %v3946
      %v4069 = vsel %vm4061, %v4052, %v3948
      %v4070 = vsel %vm4061, %v4053, %v3950
      %v4071 = vsel %vm4061, %v4054, %v3952
      %v4072 = vsel %vm4061, %v4055, %v3954
      %v4073 = vsel %vm4061, %v4056, %v3956
      %v4074 = vsel %vm4061, %v4057, %v3958
      %v4075 = vsel %vm4061, %v4058, %v3960
      %v4076 = vsel %vm4061, %v4059, %v3962
      %v4077 = vsel %vm4061, %v4060, %v3964
      %vm4078 = vcmask 195584
      %v4079 = vsel %vm4078, %v4062, %v3998
      %v4080 = vsel %vm4078, %v4063, %v4000
      %v4081 = vsel %vm4078, %v4064, %v4002
      %v4082 = vsel %vm4078, %v4065, %v4004
      %v4083 = vsel %vm4078, %v4066, %v4006
      %v4084 = vsel %vm4078, %v4067, %v4008
      %v4085 = vsel %vm4078, %v4068, %v4010
      %v4086 = vsel %vm4078, %v4069, %v4012
      %v4087 = vsel %vm4078, %v4070, %v4014
      %v4088 = vsel %vm4078, %v4071, %v4016
      %v4089 = vsel %vm4078, %v4072, %v4018
      %v4090 = vsel %vm4078, %v4073, %v4020
      %v4091 = vsel %vm4078, %v4074, %v4022
      %v4092 = vsel %vm4078, %v4075, %v4024
      %v4093 = vsel %vm4078, %v4076, %v4026
      %v4094 = vsel %vm4078, %v4077, %v4028
      %v4095 = vld [vmem:[%s4] sm:$0xff]
      %v4096 = vld [vmem:[%s4 + $0x8] sm:$0xff]
      %v4097 = vld [vmem:[%s4 + $0x10] sm:$0xff]
      %v4098 = vld [vmem:[%s4 + $0x18] sm:$0xff]
      %v4099 = vlaneseq
      %v4100 = vshrl.u32 %v4099, 7
      %v4101 = vsub.s32 0, %v4100
      %v4102 = vrot.slane %v586, %v4101
      %v4104 = vsel %vm392, %v4079, 0
      %v4107 = vsel %vm392, %v4080, 0
      %v4110 = vsel %vm392, %v4081, 0
      %v4113 = vsel %vm392, %v4082, 0
      %v4116 = vsel %vm392, %v4083, 0
      %v4119 = vsel %vm392, %v4084, 0
      %v4122 = vsel %vm392, %v4085, 0
      %v4125 = vsel %vm392, %v4086, 0
      %v4128 = vsel %vm392, %v4087, 0
      %v4131 = vsel %vm392, %v4088, 0
      %v4134 = vsel %vm392, %v4089, 0
      %v4137 = vsel %vm392, %v4090, 0
      %v4140 = vsel %vm392, %v4091, 0
      %v4143 = vsel %vm392, %v4092, 0
      %v4146 = vsel %vm392, %v4093, 0
      %v4149 = vsel %vm392, %v4094, 0
      %4151 = vmatprep.subr.mxu0 0.0
      %4152 = vmatpush1.msra.mxu0 %v4095
      %4153 = vmatprep.subr.mxu0 0.0
      %4154 = vmatpush1.msra.mxu0 %v4096
      %4155 = vmatprep.subr.mxu0 0.0
      %4156 = vmatpush1.msra.mxu0 %v4097
      %4157 = vmatprep.subr.mxu0 0.0
      %4158 = vmatpush1.msra.mxu0 %v4098
      %4159 = vmatprep.subr.mxu0 0.0
      %4160 = vmatpush1.msra.mxu0 0.0
      %4161 = vmatprep.subr.mxu0 0.0
      %4162 = vmatpush1.msra.mxu0 0.0
      %4163 = vmatprep.subr.mxu0 0.0
      %4164 = vmatpush1.msra.mxu0 0.0
      %4165 = vmatprep.subr.mxu0 0.0
      %4166 = vmatpush1.msra.mxu0 0.0
      %4167 = vmatprep.subr.mxu0 0.0
      %4168 = vmatpush1.msra.mxu0 0.0
      %4169 = vmatprep.subr.mxu0 0.0
      %4170 = vmatpush1.msra.mxu0 0.0
      %4171 = vmatprep.subr.mxu0 0.0
      %4172 = vmatpush1.msra.mxu0 0.0
      %4173 = vmatprep.subr.mxu0 0.0
      %4174 = vmatpush1.msra.mxu0 0.0
      %4175 = vmatprep.subr.mxu0 0.0
      %4176 = vmatpush1.msra.mxu0 0.0
      %4177 = vmatprep.subr.mxu0 0.0
      %4178 = vmatpush1.msra.mxu0 0.0
      %4179 = vmatprep.subr.mxu0 0.0
      %4180 = vmatpush1.msra.mxu0 0.0
      %4181 = vmatprep.subr.mxu0 0.0
      %4182 = vmatpush1.msra.mxu0 0.0
      %4183 = vmatprep.subr.mxu0 0.0
      %4184 = vmatpush1.msra.mxu0 0.0
      %4185 = vmatprep.subr.mxu0 0.0
      %4186 = vmatpush1.msra.mxu0 0.0
      %4187 = vmatprep.subr.mxu0 0.0
      %4188 = vmatpush1.msra.mxu0 0.0
      %4189 = vmatprep.subr.mxu0 0.0
      %4190 = vmatpush1.msra.mxu0 0.0
      %4191 = vmatprep.subr.mxu0 0.0
      %4192 = vmatpush1.msra.mxu0 0.0
      %4193 = vmatprep.subr.mxu0 0.0
      %4194 = vmatpush1.msra.mxu0 0.0
      %4195 = vmatprep.subr.mxu0 0.0
      %4196 = vmatpush1.msra.mxu0 0.0
      %4197 = vmatprep.subr.mxu0 0.0
      %4198 = vmatpush1.msra.mxu0 0.0
      %4199 = vmatprep.subr.mxu0 0.0
      %4200 = vmatpush1.msra.mxu0 0.0
      %4201 = vmatprep.subr.mxu0 0.0
      %4202 = vmatpush1.msra.mxu0 0.0
      %4203 = vmatprep.subr.mxu0 0.0
      %4204 = vmatpush1.msra.mxu0 0.0
      %4205 = vmatprep.subr.mxu0 0.0
      %4206 = vmatpush1.msra.mxu0 0.0
      %4207 = vmatprep.subr.mxu0 0.0
      %4208 = vmatpush1.msra.mxu0 0.0
      %4209 = vmatprep.subr.mxu0 0.0
      %4210 = vmatpush1.msra.mxu0 0.0
      %4211 = vmatprep.subr.mxu0 0.0
      %4212 = vmatpush1.msra.mxu0 0.0
      %4213 = vmatprep.subr.mxu0 0.0
      %4214 = vmatpush1.msra.mxu0 0.0
      %4215 = vmatprep.mubr.f32.mxu0 0.0
      %4216 = vmatmul.mubr.f32.gmra.mrb[0].mxu0 %v4104
      %v4217 = vpop.f32.mrb[0].mxu0
      %v4218 = vadd.f32 %v4102, %v4217
      %v4219 = vpop.f32.mrb[0].mxu0
      %4220 = vmatprep.mubr.f32.mxu0 0.0
      %4221 = vmatmul.mubr.f32.gmra.mrb[0].mxu0 %v4107
      %v4222 = vpop.f32.mrb[0].mxu0
      %v4223 = vadd.f32 %v4102, %v4222
      %v4224 = vpop.f32.mrb[0].mxu0
      %4225 = vmatprep.mubr.f32.mxu0 0.0
      %4226 = vmatmul.mubr.f32.gmra.mrb[0].mxu0 %v4110
      %v4227 = vpop.f32.mrb[0].mxu0
      %v4228 = vadd.f32 %v4102, %v4227
      %v4229 = vpop.f32.mrb[0].mxu0
      %4230 = vmatprep.mubr.f32.mxu0 0.0
      %4231 = vmatmul.mubr.f32.gmra.mrb[0].mxu0 %v4113
      %v4232 = vpop.f32.mrb[0].mxu0
      %v4233 = vadd.f32 %v4102, %v4232
      %v4234 = vpop.f32.mrb[0].mxu0
      %4235 = vmatprep.mubr.f32.mxu0 0.0
      %4236 = vmatmul.mubr.f32.gmra.mrb[0].mxu0 %v4116
      %v4237 = vpop.f32.mrb[0].mxu0
      %v4238 = vadd.f32 %v4102, %v4237
      %v4239 = vpop.f32.mrb[0].mxu0
      %4240 = vmatprep.mubr.f32.mxu0 0.0
      %4241 = vmatmul.mubr.f32.gmra.mrb[0].mxu0 %v4119
      %v4242 = vpop.f32.mrb[0].mxu0
      %v4243 = vadd.f32 %v4102, %v4242
      %v4244 = vpop.f32.mrb[0].mxu0
      %4245 = vmatprep.mubr.f32.mxu0 0.0
      %4246 = vmatmul.mubr.f32.gmra.mrb[0].mxu0 %v4122
      %v4247 = vpop.f32.mrb[0].mxu0
      %v4248 = vadd.f32 %v4102, %v4247
      %v4249 = vpop.f32.mrb[0].mxu0
      %4250 = vmatprep.mubr.f32.mxu0 0.0
      %4251 = vmatmul.mubr.f32.gmra.mrb[0].mxu0 %v4125
      %v4252 = vpop.f32.mrb[0].mxu0
      %v4253 = vadd.f32 %v4102, %v4252
      %v4254 = vpop.f32.mrb[0].mxu0
      %4255 = vmatprep.mubr.f32.mxu0 0.0
      %4256 = vmatmul.mubr.f32.gmra.mrb[0].mxu0 %v4128
      %v4257 = vpop.f32.mrb[0].mxu0
      %v4258 = vadd.f32 %v4102, %v4257
      %v4259 = vpop.f32.mrb[0].mxu0
      %4260 = vmatprep.mubr.f32.mxu0 0.0
      %4261 = vmatmul.mubr.f32.gmra.mrb[0].mxu0 %v4131
      %v4262 = vpop.f32.mrb[0].mxu0
      %v4263 = vadd.f32 %v4102, %v4262
      %v4264 = vpop.f32.mrb[0].mxu0
      %4265 = vmatprep.mubr.f32.mxu0 0.0
      %4266 = vmatmul.mubr.f32.gmra.mrb[0].mxu0 %v4134
      %v4267 = vpop.f32.mrb[0].mxu0
      %v4268 = vadd.f32 %v4102, %v4267
      %v4269 = vpop.f32.mrb[0].mxu0
      %4270 = vmatprep.mubr.f32.mxu0 0.0
      %4271 = vmatmul.mubr.f32.gmra.mrb[0].mxu0 %v4137
      %v4272 = vpop.f32.mrb[0].mxu0
      %v4273 = vadd.f32 %v4102, %v4272
      %v4274 = vpop.f32.mrb[0].mxu0
      %4275 = vmatprep.mubr.f32.mxu0 0.0
      %4276 = vmatmul.mubr.f32.gmra.mrb[0].mxu0 %v4140
      %v4277 = vpop.f32.mrb[0].mxu0
      %v4278 = vadd.f32 %v4102, %v4277
      %v4279 = vpop.f32.mrb[0].mxu0
      %4280 = vmatprep.mubr.f32.mxu0 0.0
      %4281 = vmatmul.mubr.f32.gmra.mrb[0].mxu0 %v4143
      %v4282 = vpop.f32.mrb[0].mxu0
      %v4283 = vadd.f32 %v4102, %v4282
      %v4284 = vpop.f32.mrb[0].mxu0
      %4285 = vmatprep.mubr.f32.mxu0 0.0
      %4286 = vmatmul.mubr.f32.gmra.mrb[0].mxu0 %v4146
      %v4287 = vpop.f32.mrb[0].mxu0
      %v4288 = vadd.f32 %v4102, %v4287
      %v4289 = vpop.f32.mrb[0].mxu0
      %4290 = vmatprep.mubr.f32.mxu0 0.0
      %4291 = vmatmul.mubr.f32.gmra.mrb[0].mxu0 %v4149
      %v4292 = vpop.f32.mrb[0].mxu0
      %v4293 = vadd.f32 %v4102, %v4292
      %v4294 = vpop.f32.mrb[0].mxu0
      %4295 = vdwg.mxu0
      %v4296 = vadd.f32 %v365, %v4218
      %v4297 = vadd.f32 %v366, %v4223
      %v4298 = vadd.f32 %v367, %v4228
      %v4299 = vadd.f32 %v368, %v4233
      %v4300 = vadd.f32 %v369, %v4238
      %v4301 = vadd.f32 %v370, %v4243
      %v4302 = vadd.f32 %v371, %v4248
      %v4303 = vadd.f32 %v372, %v4253
      %v4304 = vadd.f32 %v373, %v4258
      %v4305 = vadd.f32 %v374, %v4263
      %v4306 = vadd.f32 %v375, %v4268
      %v4307 = vadd.f32 %v376, %v4273
      %v4308 = vadd.f32 %v377, %v4278
      %v4309 = vadd.f32 %v378, %v4283
      %v4310 = vadd.f32 %v379, %v4288
      %v4311 = vadd.f32 %v380, %v4293
      %v4312 = vsel %vm392, %v4296, 0.0
      %4313 = vadd.xlane.f32.xlu0 %v4312
      %v4314 = vpop.xlane.xlu0 %4313
      %v4315 = vsel %vm392, %v4297, 0.0
      %4316 = vadd.xlane.f32.xlu0 %v4315
      %v4317 = vpop.xlane.xlu0 %4316
      %v4318 = vsel %vm392, %v4298, 0.0
      %4319 = vadd.xlane.f32.xlu0 %v4318
      %v4320 = vpop.xlane.xlu0 %4319
      %v4321 = vsel %vm392, %v4299, 0.0
      %4322 = vadd.xlane.f32.xlu0 %v4321
      %v4323 = vpop.xlane.xlu0 %4322
      %v4324 = vsel %vm392, %v4300, 0.0
      %4325 = vadd.xlane.f32.xlu0 %v4324
      %v4326 = vpop.xlane.xlu0 %4325
      %v4327 = vsel %vm392, %v4301, 0.0
      %4328 = vadd.xlane.f32.xlu0 %v4327
      %v4329 = vpop.xlane.xlu0 %4328
      %v4330 = vsel %vm392, %v4302, 0.0
      %4331 = vadd.xlane.f32.xlu0 %v4330
      %v4332 = vpop.xlane.xlu0 %4331
      %v4333 = vsel %vm392, %v4303, 0.0
      %4334 = vadd.xlane.f32.xlu0 %v4333
      %v4335 = vpop.xlane.xlu0 %4334
      %v4336 = vsel %vm392, %v4304, 0.0
      %4337 = vadd.xlane.f32.xlu0 %v4336
      %v4338 = vpop.xlane.xlu0 %4337
      %v4339 = vsel %vm392, %v4305, 0.0
      %4340 = vadd.xlane.f32.xlu0 %v4339
      %v4341 = vpop.xlane.xlu0 %4340
      %v4342 = vsel %vm392, %v4306, 0.0
      %4343 = vadd.xlane.f32.xlu0 %v4342
      %v4344 = vpop.xlane.xlu0 %4343
      %v4345 = vsel %vm392, %v4307, 0.0
      %4346 = vadd.xlane.f32.xlu0 %v4345
      %v4347 = vpop.xlane.xlu0 %4346
      %v4348 = vsel %vm392, %v4308, 0.0
      %4349 = vadd.xlane.f32.xlu0 %v4348
      %v4350 = vpop.xlane.xlu0 %4349
      %v4351 = vsel %vm392, %v4309, 0.0
      %4352 = vadd.xlane.f32.xlu0 %v4351
      %v4353 = vpop.xlane.xlu0 %4352
      %v4354 = vsel %vm392, %v4310, 0.0
      %4355 = vadd.xlane.f32.xlu0 %v4354
      %v4356 = vpop.xlane.xlu0 %4355
      %v4357 = vsel %vm392, %v4311, 0.0
      %4358 = vadd.xlane.f32.xlu0 %v4357
      %v4359 = vpop.xlane.xlu0 %4358
      %v4360 = vrcp.pop 32.0
      %v4361 = vmul.f32 %v4314, %v4360
      %v4362 = vmul.f32 %v4317, %v4360
      %v4363 = vmul.f32 %v4320, %v4360
      %v4364 = vmul.f32 %v4323, %v4360
      %v4365 = vmul.f32 %v4326, %v4360
      %v4366 = vmul.f32 %v4329, %v4360
      %v4367 = vmul.f32 %v4332, %v4360
      %v4368 = vmul.f32 %v4335, %v4360
      %v4369 = vmul.f32 %v4338, %v4360
      %v4370 = vmul.f32 %v4341, %v4360
      %v4371 = vmul.f32 %v4344, %v4360
      %v4372 = vmul.f32 %v4347, %v4360
      %v4373 = vmul.f32 %v4350, %v4360
      %v4374 = vmul.f32 %v4353, %v4360
      %v4375 = vmul.f32 %v4356, %v4360
      %v4376 = vmul.f32 %v4359, %v4360
      %v4377 = vsub.f32 %v4296, %v4361
      %v4378 = vsub.f32 %v4297, %v4362
      %v4379 = vsub.f32 %v4298, %v4363
      %v4380 = vsub.f32 %v4299, %v4364
      %v4381 = vsub.f32 %v4300, %v4365
      %v4382 = vsub.f32 %v4301, %v4366
      %v4383 = vsub.f32 %v4302, %v4367
      %v4384 = vsub.f32 %v4303, %v4368
      %v4385 = vsub.f32 %v4304, %v4369
      %v4386 = vsub.f32 %v4305, %v4370
      %v4387 = vsub.f32 %v4306, %v4371
      %v4388 = vsub.f32 %v4307, %v4372
      %v4389 = vsub.f32 %v4308, %v4373
      %v4390 = vsub.f32 %v4309, %v4374
      %v4391 = vsub.f32 %v4310, %v4375
      %v4392 = vsub.f32 %v4311, %v4376
      %v4393 = vmul.f32 %v4377, %v4377
      %v4394 = vmul.f32 %v4378, %v4378
      %v4395 = vmul.f32 %v4379, %v4379
      %v4396 = vmul.f32 %v4380, %v4380
      %v4397 = vmul.f32 %v4381, %v4381
      %v4398 = vmul.f32 %v4382, %v4382
      %v4399 = vmul.f32 %v4383, %v4383
      %v4400 = vmul.f32 %v4384, %v4384
      %v4401 = vmul.f32 %v4385, %v4385
      %v4402 = vmul.f32 %v4386, %v4386
      %v4403 = vmul.f32 %v4387, %v4387
      %v4404 = vmul.f32 %v4388, %v4388
      %v4405 = vmul.f32 %v4389, %v4389
      %v4406 = vmul.f32 %v4390, %v4390
      %v4407 = vmul.f32 %v4391, %v4391
      %v4408 = vmul.f32 %v4392, %v4392
      %v4409 = vsel %vm392, %v4393, 0.0
      %4410 = vadd.xlane.f32.xlu0 %v4409
      %v4411 = vpop.xlane.xlu0 %4410
      %v4412 = vsel %vm392, %v4394, 0.0
      %4413 = vadd.xlane.f32.xlu0 %v4412
      %v4414 = vpop.xlane.xlu0 %4413
      %v4415 = vsel %vm392, %v4395, 0.0
      %4416 = vadd.xlane.f32.xlu0 %v4415
      %v4417 = vpop.xlane.xlu0 %4416
      %v4418 = vsel %vm392, %v4396, 0.0
      %4419 = vadd.xlane.f32.xlu0 %v4418
      %v4420 = vpop.xlane.xlu0 %4419
      %v4421 = vsel %vm392, %v4397, 0.0
      %4422 = vadd.xlane.f32.xlu0 %v4421
      %v4423 = vpop.xlane.xlu0 %4422
      %v4424 = vsel %vm392, %v4398, 0.0
      %4425 = vadd.xlane.f32.xlu0 %v4424
      %v4426 = vpop.xlane.xlu0 %4425
      %v4427 = vsel %vm392, %v4399, 0.0
      %4428 = vadd.xlane.f32.xlu0 %v4427
      %v4429 = vpop.xlane.xlu0 %4428
      %v4430 = vsel %vm392, %v4400, 0.0
      %4431 = vadd.xlane.f32.xlu0 %v4430
      %v4432 = vpop.xlane.xlu0 %4431
      %v4433 = vsel %vm392, %v4401, 0.0
      %4434 = vadd.xlane.f32.xlu0 %v4433
      %v4435 = vpop.xlane.xlu0 %4434
      %v4436 = vsel %vm392, %v4402, 0.0
      %4437 = vadd.xlane.f32.xlu0 %v4436
      %v4438 = vpop.xlane.xlu0 %4437
      %v4439 = vsel %vm392, %v4403, 0.0
      %4440 = vadd.xlane.f32.xlu0 %v4439
      %v4441 = vpop.xlane.xlu0 %4440
      %v4442 = vsel %vm392, %v4404, 0.0
      %4443 = vadd.xlane.f32.xlu0 %v4442
      %v4444 = vpop.xlane.xlu0 %4443
      %v4445 = vsel %vm392, %v4405, 0.0
      %4446 = vadd.xlane.f32.xlu0 %v4445
      %v4447 = vpop.xlane.xlu0 %4446
      %v4448 = vsel %vm392, %v4406, 0.0
      %4449 = vadd.xlane.f32.xlu0 %v4448
      %v4450 = vpop.xlane.xlu0 %4449
      %v4451 = vsel %vm392, %v4407, 0.0
      %4452 = vadd.xlane.f32.xlu0 %v4451
      %v4453 = vpop.xlane.xlu0 %4452
      %v4454 = vsel %vm392, %v4408, 0.0
      %4455 = vadd.xlane.f32.xlu0 %v4454
      %v4456 = vpop.xlane.xlu0 %4455
      %v4457 = vmul.f32 %v4411, %v4360
      %v4458 = vmul.f32 %v4414, %v4360
      %v4459 = vmul.f32 %v4417, %v4360
      %v4460 = vmul.f32 %v4420, %v4360
      %v4461 = vmul.f32 %v4423, %v4360
      %v4462 = vmul.f32 %v4426, %v4360
      %v4463 = vmul.f32 %v4429, %v4360
      %v4464 = vmul.f32 %v4432, %v4360
      %v4465 = vmul.f32 %v4435, %v4360
      %v4466 = vmul.f32 %v4438, %v4360
      %v4467 = vmul.f32 %v4441, %v4360
      %v4468 = vmul.f32 %v4444, %v4360
      %v4469 = vmul.f32 %v4447, %v4360
      %v4470 = vmul.f32 %v4450, %v4360
      %v4471 = vmul.f32 %v4453, %v4360
      %v4472 = vmul.f32 %v4456, %v4360
      %v4473 = vadd.f32 %v4457, 1e-05
      %v4474 = vadd.f32 %v4458, 1e-05
      %v4475 = vadd.f32 %v4459, 1e-05
      %v4476 = vadd.f32 %v4460, 1e-05
      %v4477 = vadd.f32 %v4461, 1e-05
      %v4478 = vadd.f32 %v4462, 1e-05
      %v4479 = vadd.f32 %v4463, 1e-05
      %v4480 = vadd.f32 %v4464, 1e-05
      %v4481 = vadd.f32 %v4465, 1e-05
      %v4482 = vadd.f32 %v4466, 1e-05
      %v4483 = vadd.f32 %v4467, 1e-05
      %v4484 = vadd.f32 %v4468, 1e-05
      %v4485 = vadd.f32 %v4469, 1e-05
      %v4486 = vadd.f32 %v4470, 1e-05
      %v4487 = vadd.f32 %v4471, 1e-05
      %v4488 = vadd.f32 %v4472, 1e-05
      %v4489 = vrsqrt.pop %v4473
      %v4490 = vrsqrt.pop %v4474
      %v4491 = vrsqrt.pop %v4475
      %v4492 = vrsqrt.pop %v4476
      %v4493 = vrsqrt.pop %v4477
      %v4494 = vrsqrt.pop %v4478
      %v4495 = vrsqrt.pop %v4479
      %v4496 = vrsqrt.pop %v4480
      %v4497 = vrsqrt.pop %v4481
      %v4498 = vrsqrt.pop %v4482
      %v4499 = vrsqrt.pop %v4483
      %v4500 = vrsqrt.pop %v4484
      %v4501 = vrsqrt.pop %v4485
      %v4502 = vrsqrt.pop %v4486
      %v4503 = vrsqrt.pop %v4487
      %v4504 = vrsqrt.pop %v4488
      %v4505 = vmul.f32 %v4377, %v4489
      %v4506 = vmul.f32 %v4378, %v4490
      %v4507 = vmul.f32 %v4379, %v4491
      %v4508 = vmul.f32 %v4380, %v4492
      %v4509 = vmul.f32 %v4381, %v4493
      %v4510 = vmul.f32 %v4382, %v4494
      %v4511 = vmul.f32 %v4383, %v4495
      %v4512 = vmul.f32 %v4384, %v4496
      %v4513 = vmul.f32 %v4385, %v4497
      %v4514 = vmul.f32 %v4386, %v4498
      %v4515 = vmul.f32 %v4387, %v4499
      %v4516 = vmul.f32 %v4388, %v4500
      %v4517 = vmul.f32 %v4389, %v4501
      %v4518 = vmul.f32 %v4390, %v4502
      %v4519 = vmul.f32 %v4391, %v4503
      %v4520 = vmul.f32 %v4392, %v4504
      %v4521 = vlaneseq
      %v4522 = vshrl.u32 %v4521, 7
      %v4523 = vsub.s32 1, %v4522
      %v4524 = vrot.slane %v586, %v4523
      %v4525 = vmul.f32 %v4505, %v4524
      %v4526 = vmul.f32 %v4506, %v4524
      %v4527 = vmul.f32 %v4507, %v4524
      %v4528 = vmul.f32 %v4508, %v4524
      %v4529 = vmul.f32 %v4509, %v4524
      %v4530 = vmul.f32 %v4510, %v4524
      %v4531 = vmul.f32 %v4511, %v4524
      %v4532 = vmul.f32 %v4512, %v4524
      %v4533 = vmul.f32 %v4513, %v4524
      %v4534 = vmul.f32 %v4514, %v4524
      %v4535 = vmul.f32 %v4515, %v4524
      %v4536 = vmul.f32 %v4516, %v4524
      %v4537 = vmul.f32 %v4517, %v4524
      %v4538 = vmul.f32 %v4518, %v4524
      %v4539 = vmul.f32 %v4519, %v4524
      %v4540 = vmul.f32 %v4520, %v4524
      %v4541 = vlaneseq
      %v4542 = vshrl.u32 %v4541, 7
      %v4543 = vsub.s32 2, %v4542
      %v4544 = vrot.slane %v586, %v4543
      %v4545 = vadd.f32 %v4525, %v4544
      %v4546 = vadd.f32 %v4526, %v4544
      %v4547 = vadd.f32 %v4527, %v4544
      %v4548 = vadd.f32 %v4528, %v4544
      %v4549 = vadd.f32 %v4529, %v4544
      %v4550 = vadd.f32 %v4530, %v4544
      %v4551 = vadd.f32 %v4531, %v4544
      %v4552 = vadd.f32 %v4532, %v4544
      %v4553 = vadd.f32 %v4533, %v4544
      %v4554 = vadd.f32 %v4534, %v4544
      %v4555 = vadd.f32 %v4535, %v4544
      %v4556 = vadd.f32 %v4536, %v4544
      %v4557 = vadd.f32 %v4537, %v4544
      %v4558 = vadd.f32 %v4538, %v4544
      %v4559 = vadd.f32 %v4539, %v4544
      %v4560 = vadd.f32 %v4540, %v4544
      %v4561 = vld [vmem:[%s5] sm:$0xff]
      %v4562 = vld [vmem:[%s5 + $0x8] sm:$0xff]
      %v4563 = vld [vmem:[%s5 + $0x10] sm:$0xff]
      %v4564 = vld [vmem:[%s5 + $0x18] sm:$0xff]
      %v4565 = vld [vmem:[%s6] sm:$0x1]
      %v4567 = vlaneseq
      %v4568 = vshrl.u32 %v4567, 7
      %v4569 = vsub.s32 0, %v4568
      %v4570 = vrot.slane %v4565, %v4569
      %v4573 = vsel %vm392, %v4545, 0
      %v4576 = vsel %vm392, %v4546, 0
      %v4579 = vsel %vm392, %v4547, 0
      %v4582 = vsel %vm392, %v4548, 0
      %v4585 = vsel %vm392, %v4549, 0
      %v4588 = vsel %vm392, %v4550, 0
      %v4591 = vsel %vm392, %v4551, 0
      %v4594 = vsel %vm392, %v4552, 0
      %v4597 = vsel %vm392, %v4553, 0
      %v4600 = vsel %vm392, %v4554, 0
      %v4603 = vsel %vm392, %v4555, 0
      %v4606 = vsel %vm392, %v4556, 0
      %v4609 = vsel %vm392, %v4557, 0
      %v4612 = vsel %vm392, %v4558, 0
      %v4615 = vsel %vm392, %v4559, 0
      %v4618 = vsel %vm392, %v4560, 0
      %4620 = vmatprep.subr.mxu0 0.0
      %4621 = vmatpush1.msra.mxu0 %v4561
      %4622 = vmatprep.subr.mxu0 0.0
      %4623 = vmatpush1.msra.mxu0 %v4562
      %4624 = vmatprep.subr.mxu0 0.0
      %4625 = vmatpush1.msra.mxu0 %v4563
      %4626 = vmatprep.subr.mxu0 0.0
      %4627 = vmatpush1.msra.mxu0 %v4564
      %4628 = vmatprep.subr.mxu0 0.0
      %4629 = vmatpush1.msra.mxu0 0.0
      %4630 = vmatprep.subr.mxu0 0.0
      %4631 = vmatpush1.msra.mxu0 0.0
      %4632 = vmatprep.subr.mxu0 0.0
      %4633 = vmatpush1.msra.mxu0 0.0
      %4634 = vmatprep.subr.mxu0 0.0
      %4635 = vmatpush1.msra.mxu0 0.0
      %4636 = vmatprep.subr.mxu0 0.0
      %4637 = vmatpush1.msra.mxu0 0.0
      %4638 = vmatprep.subr.mxu0 0.0
      %4639 = vmatpush1.msra.mxu0 0.0
      %4640 = vmatprep.subr.mxu0 0.0
      %4641 = vmatpush1.msra.mxu0 0.0
      %4642 = vmatprep.subr.mxu0 0.0
      %4643 = vmatpush1.msra.mxu0 0.0
      %4644 = vmatprep.subr.mxu0 0.0
      %4645 = vmatpush1.msra.mxu0 0.0
      %4646 = vmatprep.subr.mxu0 0.0
      %4647 = vmatpush1.msra.mxu0 0.0
      %4648 = vmatprep.subr.mxu0 0.0
      %4649 = vmatpush1.msra.mxu0 0.0
      %4650 = vmatprep.subr.mxu0 0.0
      %4651 = vmatpush1.msra.mxu0 0.0
      %4652 = vmatprep.subr.mxu0 0.0
      %4653 = vmatpush1.msra.mxu0 0.0
      %4654 = vmatprep.subr.mxu0 0.0
      %4655 = vmatpush1.msra.mxu0 0.0
      %4656 = vmatprep.subr.mxu0 0.0
      %4657 = vmatpush1.msra.mxu0 0.0
      %4658 = vmatprep.subr.mxu0 0.0
      %4659 = vmatpush1.msra.mxu0 0.0
      %4660 = vmatprep.subr.mxu0 0.0
      %4661 = vmatpush1.msra.mxu0 0.0
      %4662 = vmatprep.subr.mxu0 0.0
      %4663 = vmatpush1.msra.mxu0 0.0
      %4664 = vmatprep.subr.mxu0 0.0
      %4665 = vmatpush1.msra.mxu0 0.0
      %4666 = vmatprep.subr.mxu0 0.0
      %4667 = vmatpush1.msra.mxu0 0.0
      %4668 = vmatprep.subr.mxu0 0.0
      %4669 = vmatpush1.msra.mxu0 0.0
      %4670 = vmatprep.subr.mxu0 0.0
      %4671 = vmatpush1.msra.mxu0 0.0
      %4672 = vmatprep.subr.mxu0 0.0
      %4673 = vmatpush1.msra.mxu0 0.0
      %4674 = vmatprep.subr.mxu0 0.0
      %4675 = vmatpush1.msra.mxu0 0.0
      %4676 = vmatprep.subr.mxu0 0.0
      %4677 = vmatpush1.msra.mxu0 0.0
      %4678 = vmatprep.subr.mxu0 0.0
      %4679 = vmatpush1.msra.mxu0 0.0
      %4680 = vmatprep.subr.mxu0 0.0
      %4681 = vmatpush1.msra.mxu0 0.0
      %4682 = vmatprep.subr.mxu0 0.0
      %4683 = vmatpush1.msra.mxu0 0.0
      %4684 = vmatprep.mubr.f32.mxu0 0.0
      %4685 = vmatmul.mubr.f32.gmra.mrb[0].mxu0 %v4573
      %v4686 = vpop.f32.mrb[0].mxu0
      %v4687 = vadd.f32 %v4570, %v4686
      %v4688 = vpop.f32.mrb[0].mxu0
      %4689 = vmatprep.mubr.f32.mxu0 0.0
      %4690 = vmatmul.mubr.f32.gmra.mrb[0].mxu0 %v4576
      %v4691 = vpop.f32.mrb[0].mxu0
      %v4692 = vadd.f32 %v4570, %v4691
      %v4693 = vpop.f32.mrb[0].mxu0
      %4694 = vmatprep.mubr.f32.mxu0 0.0
      %4695 = vmatmul.mubr.f32.gmra.mrb[0].mxu0 %v4579
      %v4696 = vpop.f32.mrb[0].mxu0
      %v4697 = vadd.f32 %v4570, %v4696
      %v4698 = vpop.f32.mrb[0].mxu0
      %4699 = vmatprep.mubr.f32.mxu0 0.0
      %4700 = vmatmul.mubr.f32.gmra.mrb[0].mxu0 %v4582
      %v4701 = vpop.f32.mrb[0].mxu0
      %v4702 = vadd.f32 %v4570, %v4701
      %v4703 = vpop.f32.mrb[0].mxu0
      %4704 = vmatprep.mubr.f32.mxu0 0.0
      %4705 = vmatmul.mubr.f32.gmra.mrb[0].mxu0 %v4585
      %v4706 = vpop.f32.mrb[0].mxu0
      %v4707 = vadd.f32 %v4570, %v4706
      %v4708 = vpop.f32.mrb[0].mxu0
      %4709 = vmatprep.mubr.f32.mxu0 0.0
      %4710 = vmatmul.mubr.f32.gmra.mrb[0].mxu0 %v4588
      %v4711 = vpop.f32.mrb[0].mxu0
      %v4712 = vadd.f32 %v4570, %v4711
      %v4713 = vpop.f32.mrb[0].mxu0
      %4714 = vmatprep.mubr.f32.mxu0 0.0
      %4715 = vmatmul.mubr.f32.gmra.mrb[0].mxu0 %v4591
      %v4716 = vpop.f32.mrb[0].mxu0
      %v4717 = vadd.f32 %v4570, %v4716
      %v4718 = vpop.f32.mrb[0].mxu0
      %4719 = vmatprep.mubr.f32.mxu0 0.0
      %4720 = vmatmul.mubr.f32.gmra.mrb[0].mxu0 %v4594
      %v4721 = vpop.f32.mrb[0].mxu0
      %v4722 = vadd.f32 %v4570, %v4721
      %v4723 = vpop.f32.mrb[0].mxu0
      %4724 = vmatprep.mubr.f32.mxu0 0.0
      %4725 = vmatmul.mubr.f32.gmra.mrb[0].mxu0 %v4597
      %v4726 = vpop.f32.mrb[0].mxu0
      %v4727 = vadd.f32 %v4570, %v4726
      %v4728 = vpop.f32.mrb[0].mxu0
      %4729 = vmatprep.mubr.f32.mxu0 0.0
      %4730 = vmatmul.mubr.f32.gmra.mrb[0].mxu0 %v4600
      %v4731 = vpop.f32.mrb[0].mxu0
      %v4732 = vadd.f32 %v4570, %v4731
      %v4733 = vpop.f32.mrb[0].mxu0
      %4734 = vmatprep.mubr.f32.mxu0 0.0
      %4735 = vmatmul.mubr.f32.gmra.mrb[0].mxu0 %v4603
      %v4736 = vpop.f32.mrb[0].mxu0
      %v4737 = vadd.f32 %v4570, %v4736
      %v4738 = vpop.f32.mrb[0].mxu0
      %4739 = vmatprep.mubr.f32.mxu0 0.0
      %4740 = vmatmul.mubr.f32.gmra.mrb[0].mxu0 %v4606
      %v4741 = vpop.f32.mrb[0].mxu0
      %v4742 = vadd.f32 %v4570, %v4741
      %v4743 = vpop.f32.mrb[0].mxu0
      %4744 = vmatprep.mubr.f32.mxu0 0.0
      %4745 = vmatmul.mubr.f32.gmra.mrb[0].mxu0 %v4609
      %v4746 = vpop.f32.mrb[0].mxu0
      %v4747 = vadd.f32 %v4570, %v4746
      %v4748 = vpop.f32.mrb[0].mxu0
      %4749 = vmatprep.mubr.f32.mxu0 0.0
      %4750 = vmatmul.mubr.f32.gmra.mrb[0].mxu0 %v4612
      %v4751 = vpop.f32.mrb[0].mxu0
      %v4752 = vadd.f32 %v4570, %v4751
      %v4753 = vpop.f32.mrb[0].mxu0
      %4754 = vmatprep.mubr.f32.mxu0 0.0
      %4755 = vmatmul.mubr.f32.gmra.mrb[0].mxu0 %v4615
      %v4756 = vpop.f32.mrb[0].mxu0
      %v4757 = vadd.f32 %v4570, %v4756
      %v4758 = vpop.f32.mrb[0].mxu0
      %4759 = vmatprep.mubr.f32.mxu0 0.0
      %4760 = vmatmul.mubr.f32.gmra.mrb[0].mxu0 %v4618
      %v4761 = vpop.f32.mrb[0].mxu0
      %v4762 = vadd.f32 %v4570, %v4761
      %v4763 = vpop.f32.mrb[0].mxu0
      %4764 = vdwg.mxu0
      %v4765 = vmax.f32 %v4687, 0.0
      %v4766 = vmax.f32 %v4692, 0.0
      %v4767 = vmax.f32 %v4697, 0.0
      %v4768 = vmax.f32 %v4702, 0.0
      %v4769 = vmax.f32 %v4707, 0.0
      %v4770 = vmax.f32 %v4712, 0.0
      %v4771 = vmax.f32 %v4717, 0.0
      %v4772 = vmax.f32 %v4722, 0.0
      %v4773 = vmax.f32 %v4727, 0.0
      %v4774 = vmax.f32 %v4732, 0.0
      %v4775 = vmax.f32 %v4737, 0.0
      %v4776 = vmax.f32 %v4742, 0.0
      %v4777 = vmax.f32 %v4747, 0.0
      %v4778 = vmax.f32 %v4752, 0.0
      %v4779 = vmax.f32 %v4757, 0.0
      %v4780 = vmax.f32 %v4762, 0.0
      %v4781 = vld [vmem:[%s7] sm:$0xff]
      %v4782 = vld [vmem:[%s7 + $0x8] sm:$0xff]
      %v4783 = vld [vmem:[%s7 + $0x10] sm:$0xff]
      %v4784 = vld [vmem:[%s7 + $0x18] sm:$0xff]
      %v4785 = vld [vmem:[%s7 + $0x20] sm:$0xff]
      %v4786 = vld [vmem:[%s7 + $0x28] sm:$0xff]
      %v4787 = vld [vmem:[%s7 + $0x30] sm:$0xff]
      %v4788 = vld [vmem:[%s7 + $0x38] sm:$0xff]
      %v4789 = vlaneseq
      %v4790 = vshrl.u32 %v4789, 7
      %v4791 = vsub.s32 3, %v4790
      %v4792 = vrot.slane %v586, %v4791
      %v4794 = vsel %vm910, %v4765, 0
      %v4797 = vsel %vm910, %v4766, 0
      %v4800 = vsel %vm910, %v4767, 0
      %v4803 = vsel %vm910, %v4768, 0
      %v4806 = vsel %vm910, %v4769, 0
      %v4809 = vsel %vm910, %v4770, 0
      %v4812 = vsel %vm910, %v4771, 0
      %v4815 = vsel %vm910, %v4772, 0
      %v4818 = vsel %vm910, %v4773, 0
      %v4821 = vsel %vm910, %v4774, 0
      %v4824 = vsel %vm910, %v4775, 0
      %v4827 = vsel %vm910, %v4776, 0
      %v4830 = vsel %vm910, %v4777, 0
      %v4833 = vsel %vm910, %v4778, 0
      %v4836 = vsel %vm910, %v4779, 0
      %v4839 = vsel %vm910, %v4780, 0
      %4841 = vmatprep.subr.mxu0 0.0
      %4842 = vmatpush1.msra.mxu0 %v4781
      %4843 = vmatprep.subr.mxu0 0.0
      %4844 = vmatpush1.msra.mxu0 %v4782
      %4845 = vmatprep.subr.mxu0 0.0
      %4846 = vmatpush1.msra.mxu0 %v4783
      %4847 = vmatprep.subr.mxu0 0.0
      %4848 = vmatpush1.msra.mxu0 %v4784
      %4849 = vmatprep.subr.mxu0 0.0
      %4850 = vmatpush1.msra.mxu0 %v4785
      %4851 = vmatprep.subr.mxu0 0.0
      %4852 = vmatpush1.msra.mxu0 %v4786
      %4853 = vmatprep.subr.mxu0 0.0
      %4854 = vmatpush1.msra.mxu0 %v4787
      %4855 = vmatprep.subr.mxu0 0.0
      %4856 = vmatpush1.msra.mxu0 %v4788
      %4857 = vmatprep.subr.mxu0 0.0
      %4858 = vmatpush1.msra.mxu0 0.0
      %4859 = vmatprep.subr.mxu0 0.0
      %4860 = vmatpush1.msra.mxu0 0.0
      %4861 = vmatprep.subr.mxu0 0.0
      %4862 = vmatpush1.msra.mxu0 0.0
      %4863 = vmatprep.subr.mxu0 0.0
      %4864 = vmatpush1.msra.mxu0 0.0
      %4865 = vmatprep.subr.mxu0 0.0
      %4866 = vmatpush1.msra.mxu0 0.0
      %4867 = vmatprep.subr.mxu0 0.0
      %4868 = vmatpush1.msra.mxu0 0.0
      %4869 = vmatprep.subr.mxu0 0.0
      %4870 = vmatpush1.msra.mxu0 0.0
      %4871 = vmatprep.subr.mxu0 0.0
      %4872 = vmatpush1.msra.mxu0 0.0
      %4873 = vmatprep.subr.mxu0 0.0
      %4874 = vmatpush1.msra.mxu0 0.0
      %4875 = vmatprep.subr.mxu0 0.0
      %4876 = vmatpush1.msra.mxu0 0.0
      %4877 = vmatprep.subr.mxu0 0.0
      %4878 = vmatpush1.msra.mxu0 0.0
      %4879 = vmatprep.subr.mxu0 0.0
      %4880 = vmatpush1.msra.mxu0 0.0
      %4881 = vmatprep.subr.mxu0 0.0
      %4882 = vmatpush1.msra.mxu0 0.0
      %4883 = vmatprep.subr.mxu0 0.0
      %4884 = vmatpush1.msra.mxu0 0.0
      %4885 = vmatprep.subr.mxu0 0.0
      %4886 = vmatpush1.msra.mxu0 0.0
      %4887 = vmatprep.subr.mxu0 0.0
      %4888 = vmatpush1.msra.mxu0 0.0
      %4889 = vmatprep.subr.mxu0 0.0
      %4890 = vmatpush1.msra.mxu0 0.0
      %4891 = vmatprep.subr.mxu0 0.0
      %4892 = vmatpush1.msra.mxu0 0.0
      %4893 = vmatprep.subr.mxu0 0.0
      %4894 = vmatpush1.msra.mxu0 0.0
      %4895 = vmatprep.subr.mxu0 0.0
      %4896 = vmatpush1.msra.mxu0 0.0
      %4897 = vmatprep.subr.mxu0 0.0
      %4898 = vmatpush1.msra.mxu0 0.0
      %4899 = vmatprep.subr.mxu0 0.0
      %4900 = vmatpush1.msra.mxu0 0.0
      %4901 = vmatprep.subr.mxu0 0.0
      %4902 = vmatpush1.msra.mxu0 0.0
      %4903 = vmatprep.subr.mxu0 0.0
      %4904 = vmatpush1.msra.mxu0 0.0
      %4905 = vmatprep.mubr.f32.mxu0 0.0
      %4906 = vmatmul.mubr.f32.gmra.mrb[0].mxu0 %v4794
      %v4907 = vpop.f32.mrb[0].mxu0
      %v4908 = vadd.f32 %v4792, %v4907
      %v4909 = vpop.f32.mrb[0].mxu0
      %4910 = vmatprep.mubr.f32.mxu0 0.0
      %4911 = vmatmul.mubr.f32.gmra.mrb[0].mxu0 %v4797
      %v4912 = vpop.f32.mrb[0].mxu0
      %v4913 = vadd.f32 %v4792, %v4912
      %v4914 = vpop.f32.mrb[0].mxu0
      %4915 = vmatprep.mubr.f32.mxu0 0.0
      %4916 = vmatmul.mubr.f32.gmra.mrb[0].mxu0 %v4800
      %v4917 = vpop.f32.mrb[0].mxu0
      %v4918 = vadd.f32 %v4792, %v4917
      %v4919 = vpop.f32.mrb[0].mxu0
      %4920 = vmatprep.mubr.f32.mxu0 0.0
      %4921 = vmatmul.mubr.f32.gmra.mrb[0].mxu0 %v4803
      %v4922 = vpop.f32.mrb[0].mxu0
      %v4923 = vadd.f32 %v4792, %v4922
      %v4924 = vpop.f32.mrb[0].mxu0
      %4925 = vmatprep.mubr.f32.mxu0 0.0
      %4926 = vmatmul.mubr.f32.gmra.mrb[0].mxu0 %v4806
      %v4927 = vpop.f32.mrb[0].mxu0
      %v4928 = vadd.f32 %v4792, %v4927
      %v4929 = vpop.f32.mrb[0].mxu0
      %4930 = vmatprep.mubr.f32.mxu0 0.0
      %4931 = vmatmul.mubr.f32.gmra.mrb[0].mxu0 %v4809
      %v4932 = vpop.f32.mrb[0].mxu0
      %v4933 = vadd.f32 %v4792, %v4932
      %v4934 = vpop.f32.mrb[0].mxu0
      %4935 = vmatprep.mubr.f32.mxu0 0.0
      %4936 = vmatmul.mubr.f32.gmra.mrb[0].mxu0 %v4812
      %v4937 = vpop.f32.mrb[0].mxu0
      %v4938 = vadd.f32 %v4792, %v4937
      %v4939 = vpop.f32.mrb[0].mxu0
      %4940 = vmatprep.mubr.f32.mxu0 0.0
      %4941 = vmatmul.mubr.f32.gmra.mrb[0].mxu0 %v4815
      %v4942 = vpop.f32.mrb[0].mxu0
      %v4943 = vadd.f32 %v4792, %v4942
      %v4944 = vpop.f32.mrb[0].mxu0
      %4945 = vmatprep.mubr.f32.mxu0 0.0
      %4946 = vmatmul.mubr.f32.gmra.mrb[0].mxu0 %v4818
      %v4947 = vpop.f32.mrb[0].mxu0
      %v4948 = vadd.f32 %v4792, %v4947
      %v4949 = vpop.f32.mrb[0].mxu0
      %4950 = vmatprep.mubr.f32.mxu0 0.0
      %4951 = vmatmul.mubr.f32.gmra.mrb[0].mxu0 %v4821
      %v4952 = vpop.f32.mrb[0].mxu0
      %v4953 = vadd.f32 %v4792, %v4952
      %v4954 = vpop.f32.mrb[0].mxu0
      %4955 = vmatprep.mubr.f32.mxu0 0.0
      %4956 = vmatmul.mubr.f32.gmra.mrb[0].mxu0 %v4824
      %v4957 = vpop.f32.mrb[0].mxu0
      %v4958 = vadd.f32 %v4792, %v4957
      %v4959 = vpop.f32.mrb[0].mxu0
      %4960 = vmatprep.mubr.f32.mxu0 0.0
      %4961 = vmatmul.mubr.f32.gmra.mrb[0].mxu0 %v4827
      %v4962 = vpop.f32.mrb[0].mxu0
      %v4963 = vadd.f32 %v4792, %v4962
      %v4964 = vpop.f32.mrb[0].mxu0
      %4965 = vmatprep.mubr.f32.mxu0 0.0
      %4966 = vmatmul.mubr.f32.gmra.mrb[0].mxu0 %v4830
      %v4967 = vpop.f32.mrb[0].mxu0
      %v4968 = vadd.f32 %v4792, %v4967
      %v4969 = vpop.f32.mrb[0].mxu0
      %4970 = vmatprep.mubr.f32.mxu0 0.0
      %4971 = vmatmul.mubr.f32.gmra.mrb[0].mxu0 %v4833
      %v4972 = vpop.f32.mrb[0].mxu0
      %v4973 = vadd.f32 %v4792, %v4972
      %v4974 = vpop.f32.mrb[0].mxu0
      %4975 = vmatprep.mubr.f32.mxu0 0.0
      %4976 = vmatmul.mubr.f32.gmra.mrb[0].mxu0 %v4836
      %v4977 = vpop.f32.mrb[0].mxu0
      %v4978 = vadd.f32 %v4792, %v4977
      %v4979 = vpop.f32.mrb[0].mxu0
      %4980 = vmatprep.mubr.f32.mxu0 0.0
      %4981 = vmatmul.mubr.f32.gmra.mrb[0].mxu0 %v4839
      %v4982 = vpop.f32.mrb[0].mxu0
      %v4983 = vadd.f32 %v4792, %v4982
      %v4984 = vpop.f32.mrb[0].mxu0
      %4985 = vdwg.mxu0
      %v4986 = vadd.f32 %v4545, %v4908
      %v4987 = vadd.f32 %v4546, %v4913
      %v4988 = vadd.f32 %v4547, %v4918
      %v4989 = vadd.f32 %v4548, %v4923
      %v4990 = vadd.f32 %v4549, %v4928
      %v4991 = vadd.f32 %v4550, %v4933
      %v4992 = vadd.f32 %v4551, %v4938
      %v4993 = vadd.f32 %v4552, %v4943
      %v4994 = vadd.f32 %v4553, %v4948
      %v4995 = vadd.f32 %v4554, %v4953
      %v4996 = vadd.f32 %v4555, %v4958
      %v4997 = vadd.f32 %v4556, %v4963
      %v4998 = vadd.f32 %v4557, %v4968
      %v4999 = vadd.f32 %v4558, %v4973
      %v5000 = vadd.f32 %v4559, %v4978
      %v5001 = vadd.f32 %v4560, %v4983
      %v5002 = vsel %vm392, %v4986, 0.0
      %5003 = vadd.xlane.f32.xlu0 %v5002
      %v5004 = vpop.xlane.xlu0 %5003
      %v5005 = vsel %vm392, %v4987, 0.0
      %5006 = vadd.xlane.f32.xlu0 %v5005
      %v5007 = vpop.xlane.xlu0 %5006
      %v5008 = vsel %vm392, %v4988, 0.0
      %5009 = vadd.xlane.f32.xlu0 %v5008
      %v5010 = vpop.xlane.xlu0 %5009
      %v5011 = vsel %vm392, %v4989, 0.0
      %5012 = vadd.xlane.f32.xlu0 %v5011
      %v5013 = vpop.xlane.xlu0 %5012
      %v5014 = vsel %vm392, %v4990, 0.0
      %5015 = vadd.xlane.f32.xlu0 %v5014
      %v5016 = vpop.xlane.xlu0 %5015
      %v5017 = vsel %vm392, %v4991, 0.0
      %5018 = vadd.xlane.f32.xlu0 %v5017
      %v5019 = vpop.xlane.xlu0 %5018
      %v5020 = vsel %vm392, %v4992, 0.0
      %5021 = vadd.xlane.f32.xlu0 %v5020
      %v5022 = vpop.xlane.xlu0 %5021
      %v5023 = vsel %vm392, %v4993, 0.0
      %5024 = vadd.xlane.f32.xlu0 %v5023
      %v5025 = vpop.xlane.xlu0 %5024
      %v5026 = vsel %vm392, %v4994, 0.0
      %5027 = vadd.xlane.f32.xlu0 %v5026
      %v5028 = vpop.xlane.xlu0 %5027
      %v5029 = vsel %vm392, %v4995, 0.0
      %5030 = vadd.xlane.f32.xlu0 %v5029
      %v5031 = vpop.xlane.xlu0 %5030
      %v5032 = vsel %vm392, %v4996, 0.0
      %5033 = vadd.xlane.f32.xlu0 %v5032
      %v5034 = vpop.xlane.xlu0 %5033
      %v5035 = vsel %vm392, %v4997, 0.0
      %5036 = vadd.xlane.f32.xlu0 %v5035
      %v5037 = vpop.xlane.xlu0 %5036
      %v5038 = vsel %vm392, %v4998, 0.0
      %5039 = vadd.xlane.f32.xlu0 %v5038
      %v5040 = vpop.xlane.xlu0 %5039
      %v5041 = vsel %vm392, %v4999, 0.0
      %5042 = vadd.xlane.f32.xlu0 %v5041
      %v5043 = vpop.xlane.xlu0 %5042
      %v5044 = vsel %vm392, %v5000, 0.0
      %5045 = vadd.xlane.f32.xlu0 %v5044
      %v5046 = vpop.xlane.xlu0 %5045
      %v5047 = vsel %vm392, %v5001, 0.0
      %5048 = vadd.xlane.f32.xlu0 %v5047
      %v5049 = vpop.xlane.xlu0 %5048
      %v5050 = vmul.f32 %v5004, %v4360
      %v5051 = vmul.f32 %v5007, %v4360
      %v5052 = vmul.f32 %v5010, %v4360
      %v5053 = vmul.f32 %v5013, %v4360
      %v5054 = vmul.f32 %v5016, %v4360
      %v5055 = vmul.f32 %v5019, %v4360
      %v5056 = vmul.f32 %v5022, %v4360
      %v5057 = vmul.f32 %v5025, %v4360
      %v5058 = vmul.f32 %v5028, %v4360
      %v5059 = vmul.f32 %v5031, %v4360
      %v5060 = vmul.f32 %v5034, %v4360
      %v5061 = vmul.f32 %v5037, %v4360
      %v5062 = vmul.f32 %v5040, %v4360
      %v5063 = vmul.f32 %v5043, %v4360
      %v5064 = vmul.f32 %v5046, %v4360
      %v5065 = vmul.f32 %v5049, %v4360
      %v5066 = vsub.f32 %v4986, %v5050
      %v5067 = vsub.f32 %v4987, %v5051
      %v5068 = vsub.f32 %v4988, %v5052
      %v5069 = vsub.f32 %v4989, %v5053
      %v5070 = vsub.f32 %v4990, %v5054
      %v5071 = vsub.f32 %v4991, %v5055
      %v5072 = vsub.f32 %v4992, %v5056
      %v5073 = vsub.f32 %v4993, %v5057
      %v5074 = vsub.f32 %v4994, %v5058
      %v5075 = vsub.f32 %v4995, %v5059
      %v5076 = vsub.f32 %v4996, %v5060
      %v5077 = vsub.f32 %v4997, %v5061
      %v5078 = vsub.f32 %v4998, %v5062
      %v5079 = vsub.f32 %v4999, %v5063
      %v5080 = vsub.f32 %v5000, %v5064
      %v5081 = vsub.f32 %v5001, %v5065
      %v5082 = vmul.f32 %v5066, %v5066
      %v5083 = vmul.f32 %v5067, %v5067
      %v5084 = vmul.f32 %v5068, %v5068
      %v5085 = vmul.f32 %v5069, %v5069
      %v5086 = vmul.f32 %v5070, %v5070
      %v5087 = vmul.f32 %v5071, %v5071
      %v5088 = vmul.f32 %v5072, %v5072
      %v5089 = vmul.f32 %v5073, %v5073
      %v5090 = vmul.f32 %v5074, %v5074
      %v5091 = vmul.f32 %v5075, %v5075
      %v5092 = vmul.f32 %v5076, %v5076
      %v5093 = vmul.f32 %v5077, %v5077
      %v5094 = vmul.f32 %v5078, %v5078
      %v5095 = vmul.f32 %v5079, %v5079
      %v5096 = vmul.f32 %v5080, %v5080
      %v5097 = vmul.f32 %v5081, %v5081
      %v5098 = vsel %vm392, %v5082, 0.0
      %5099 = vadd.xlane.f32.xlu0 %v5098
      %v5100 = vpop.xlane.xlu0 %5099
      %v5101 = vsel %vm392, %v5083, 0.0
      %5102 = vadd.xlane.f32.xlu0 %v5101
      %v5103 = vpop.xlane.xlu0 %5102
      %v5104 = vsel %vm392, %v5084, 0.0
      %5105 = vadd.xlane.f32.xlu0 %v5104
      %v5106 = vpop.xlane.xlu0 %5105
      %v5107 = vsel %vm392, %v5085, 0.0
      %5108 = vadd.xlane.f32.xlu0 %v5107
      %v5109 = vpop.xlane.xlu0 %5108
      %v5110 = vsel %vm392, %v5086, 0.0
      %5111 = vadd.xlane.f32.xlu0 %v5110
      %v5112 = vpop.xlane.xlu0 %5111
      %v5113 = vsel %vm392, %v5087, 0.0
      %5114 = vadd.xlane.f32.xlu0 %v5113
      %v5115 = vpop.xlane.xlu0 %5114
      %v5116 = vsel %vm392, %v5088, 0.0
      %5117 = vadd.xlane.f32.xlu0 %v5116
      %v5118 = vpop.xlane.xlu0 %5117
      %v5119 = vsel %vm392, %v5089, 0.0
      %5120 = vadd.xlane.f32.xlu0 %v5119
      %v5121 = vpop.xlane.xlu0 %5120
      %v5122 = vsel %vm392, %v5090, 0.0
      %5123 = vadd.xlane.f32.xlu0 %v5122
      %v5124 = vpop.xlane.xlu0 %5123
      %v5125 = vsel %vm392, %v5091, 0.0
      %5126 = vadd.xlane.f32.xlu0 %v5125
      %v5127 = vpop.xlane.xlu0 %5126
      %v5128 = vsel %vm392, %v5092, 0.0
      %5129 = vadd.xlane.f32.xlu0 %v5128
      %v5130 = vpop.xlane.xlu0 %5129
      %v5131 = vsel %vm392, %v5093, 0.0
      %5132 = vadd.xlane.f32.xlu0 %v5131
      %v5133 = vpop.xlane.xlu0 %5132
      %v5134 = vsel %vm392, %v5094, 0.0
      %5135 = vadd.xlane.f32.xlu0 %v5134
      %v5136 = vpop.xlane.xlu0 %5135
      %v5137 = vsel %vm392, %v5095, 0.0
      %5138 = vadd.xlane.f32.xlu0 %v5137
      %v5139 = vpop.xlane.xlu0 %5138
      %v5140 = vsel %vm392, %v5096, 0.0
      %5141 = vadd.xlane.f32.xlu0 %v5140
      %v5142 = vpop.xlane.xlu0 %5141
      %v5143 = vsel %vm392, %v5097, 0.0
      %5144 = vadd.xlane.f32.xlu0 %v5143
      %v5145 = vpop.xlane.xlu0 %5144
      %v5146 = vmul.f32 %v5100, %v4360
      %v5147 = vmul.f32 %v5103, %v4360
      %v5148 = vmul.f32 %v5106, %v4360
      %v5149 = vmul.f32 %v5109, %v4360
      %v5150 = vmul.f32 %v5112, %v4360
      %v5151 = vmul.f32 %v5115, %v4360
      %v5152 = vmul.f32 %v5118, %v4360
      %v5153 = vmul.f32 %v5121, %v4360
      %v5154 = vmul.f32 %v5124, %v4360
      %v5155 = vmul.f32 %v5127, %v4360
      %v5156 = vmul.f32 %v5130, %v4360
      %v5157 = vmul.f32 %v5133, %v4360
      %v5158 = vmul.f32 %v5136, %v4360
      %v5159 = vmul.f32 %v5139, %v4360
      %v5160 = vmul.f32 %v5142, %v4360
      %v5161 = vmul.f32 %v5145, %v4360
      %v5162 = vadd.f32 %v5146, 1e-05
      %v5163 = vadd.f32 %v5147, 1e-05
      %v5164 = vadd.f32 %v5148, 1e-05
      %v5165 = vadd.f32 %v5149, 1e-05
      %v5166 = vadd.f32 %v5150, 1e-05
      %v5167 = vadd.f32 %v5151, 1e-05
      %v5168 = vadd.f32 %v5152, 1e-05
      %v5169 = vadd.f32 %v5153, 1e-05
      %v5170 = vadd.f32 %v5154, 1e-05
      %v5171 = vadd.f32 %v5155, 1e-05
      %v5172 = vadd.f32 %v5156, 1e-05
      %v5173 = vadd.f32 %v5157, 1e-05
      %v5174 = vadd.f32 %v5158, 1e-05
      %v5175 = vadd.f32 %v5159, 1e-05
      %v5176 = vadd.f32 %v5160, 1e-05
      %v5177 = vadd.f32 %v5161, 1e-05
      %v5178 = vrsqrt.pop %v5162
      %v5179 = vrsqrt.pop %v5163
      %v5180 = vrsqrt.pop %v5164
      %v5181 = vrsqrt.pop %v5165
      %v5182 = vrsqrt.pop %v5166
      %v5183 = vrsqrt.pop %v5167
      %v5184 = vrsqrt.pop %v5168
      %v5185 = vrsqrt.pop %v5169
      %v5186 = vrsqrt.pop %v5170
      %v5187 = vrsqrt.pop %v5171
      %v5188 = vrsqrt.pop %v5172
      %v5189 = vrsqrt.pop %v5173
      %v5190 = vrsqrt.pop %v5174
      %v5191 = vrsqrt.pop %v5175
      %v5192 = vrsqrt.pop %v5176
      %v5193 = vrsqrt.pop %v5177
      %v5194 = vmul.f32 %v5066, %v5178
      %v5195 = vmul.f32 %v5067, %v5179
      %v5196 = vmul.f32 %v5068, %v5180
      %v5197 = vmul.f32 %v5069, %v5181
      %v5198 = vmul.f32 %v5070, %v5182
      %v5199 = vmul.f32 %v5071, %v5183
      %v5200 = vmul.f32 %v5072, %v5184
      %v5201 = vmul.f32 %v5073, %v5185
      %v5202 = vmul.f32 %v5074, %v5186
      %v5203 = vmul.f32 %v5075, %v5187
      %v5204 = vmul.f32 %v5076, %v5188
      %v5205 = vmul.f32 %v5077, %v5189
      %v5206 = vmul.f32 %v5078, %v5190
      %v5207 = vmul.f32 %v5079, %v5191
      %v5208 = vmul.f32 %v5080, %v5192
      %v5209 = vmul.f32 %v5081, %v5193
      %v5210 = vlaneseq
      %v5211 = vshrl.u32 %v5210, 7
      %v5212 = vsub.s32 4, %v5211
      %v5213 = vrot.slane %v586, %v5212
      %v5214 = vmul.f32 %v5194, %v5213
      %v5215 = vmul.f32 %v5195, %v5213
      %v5216 = vmul.f32 %v5196, %v5213
      %v5217 = vmul.f32 %v5197, %v5213
      %v5218 = vmul.f32 %v5198, %v5213
      %v5219 = vmul.f32 %v5199, %v5213
      %v5220 = vmul.f32 %v5200, %v5213
      %v5221 = vmul.f32 %v5201, %v5213
      %v5222 = vmul.f32 %v5202, %v5213
      %v5223 = vmul.f32 %v5203, %v5213
      %v5224 = vmul.f32 %v5204, %v5213
      %v5225 = vmul.f32 %v5205, %v5213
      %v5226 = vmul.f32 %v5206, %v5213
      %v5227 = vmul.f32 %v5207, %v5213
      %v5228 = vmul.f32 %v5208, %v5213
      %v5229 = vmul.f32 %v5209, %v5213
      %v5230 = vlaneseq
      %v5231 = vshrl.u32 %v5230, 7
      %v5232 = vsub.s32 5, %v5231
      %v5233 = vrot.slane %v586, %v5232
      %v5234 = vadd.f32 %v5214, %v5233
      %v5235 = vadd.f32 %v5215, %v5233
      %v5236 = vadd.f32 %v5216, %v5233
      %v5237 = vadd.f32 %v5217, %v5233
      %v5238 = vadd.f32 %v5218, %v5233
      %v5239 = vadd.f32 %v5219, %v5233
      %v5240 = vadd.f32 %v5220, %v5233
      %v5241 = vadd.f32 %v5221, %v5233
      %v5242 = vadd.f32 %v5222, %v5233
      %v5243 = vadd.f32 %v5223, %v5233
      %v5244 = vadd.f32 %v5224, %v5233
      %v5245 = vadd.f32 %v5225, %v5233
      %v5246 = vadd.f32 %v5226, %v5233
      %v5247 = vadd.f32 %v5227, %v5233
      %v5248 = vadd.f32 %v5228, %v5233
      %v5249 = vadd.f32 %v5229, %v5233
      %5250 = vst.msk [vmem:[%s339] sm:$0xff] %vm392, %v5234
      %5251 = vst.msk [vmem:[%s339 + $0x8] sm:$0xff] %vm392, %v5235
      %5252 = vst.msk [vmem:[%s339 + $0x10] sm:$0xff] %vm392, %v5236
      %5253 = vst.msk [vmem:[%s339 + $0x18] sm:$0xff] %vm392, %v5237
      %5254 = vst.msk [vmem:[%s339 + $0x20] sm:$0xff] %vm392, %v5238
      %5255 = vst.msk [vmem:[%s339 + $0x28] sm:$0xff] %vm392, %v5239
      %5256 = vst.msk [vmem:[%s339 + $0x30] sm:$0xff] %vm392, %v5240
      %5257 = vst.msk [vmem:[%s339 + $0x38] sm:$0xff] %vm392, %v5241
      %5258 = vst.msk [vmem:[%s339 + $0x40] sm:$0xff] %vm392, %v5242
      %5259 = vst.msk [vmem:[%s339 + $0x48] sm:$0xff] %vm392, %v5243
      %5260 = vst.msk [vmem:[%s339 + $0x50] sm:$0xff] %vm392, %v5244
      %5261 = vst.msk [vmem:[%s339 + $0x58] sm:$0xff] %vm392, %v5245
      %5262 = vst.msk [vmem:[%s339 + $0x60] sm:$0xff] %vm392, %v5246
      %5263 = vst.msk [vmem:[%s339 + $0x68] sm:$0xff] %vm392, %v5247
      %5264 = vst.msk [vmem:[%s339 + $0x70] sm:$0xff] %vm392, %v5248
      %5265 = vst.msk [vmem:[%s339 + $0x78] sm:$0xff] %vm392, %v5249
      %s5266 = smul.u32 2, %s20
      %p5267 = scmp.lt.s32.totalorder %s5266, 3
      %s5268 = scalar_select %p5267, %s5266, 3
      %s5269 = smul.addr %s5268, 8
      %s5270 = smul.addr %s5269, 8
      %s5271 = scalar_lea.vmem %s9, %s5270
      // Predicated region
      $region57: #{tpu_custom_call.1} parent=55 // pred_check
        %p5272 = pneg %p232
      $region58: #{tpu_custom_call.1} parent=55 // pred_check_branch
        %5274 = sbr.rel (%p5272) target = $region60
      $region59: #{tpu_custom_call.1} parent=55 // pred_region
        %s5275 = smul.u32 2, %s20
      $region60: #{tpu_custom_call.1} parent=55 // pred_fallthru
        _
    $region56: #{tpu_custom_call.1} parent=5 // pred_fallthru
      _
    %p5276 = scmp.le.s32.totalorder 2, %s15
    // Predicated region
    $region61: #{tpu_custom_call.1} parent=5 // pred_check
      %p5277 = pneg %p5276
    $region62: #{tpu_custom_call.1} parent=5 // pred_check_branch
      %5279 = sbr.rel (%p5277) target = $region64
    $region63: #{tpu_custom_call.1} parent=5 // pred_region
      %s5280 = ssub.s32 %s15, 2
      // Predicated region
      $region65: #{tpu_custom_call.1} parent=63 // pred_check
        %p5281 = pneg %p238
      $region66: #{tpu_custom_call.1} parent=63 // pred_check_branch
        %5283 = sbr.rel (%p5281) target = $region68
      $region67: #{tpu_custom_call.1} parent=63 // pred_region
        %s5284 = smul.u32 2, %s21
        %p5285 = scmp.lt.s32.totalorder %s5284, 3
        %s5286 = scalar_select %p5285, %s5284, 3
        %s5287 = smul.addr %s5286, 8
        %s5288 = smul.addr %s5287, 8
        %s5289 = scalar_lea.vmem %s9, %s5288
      $region68: #{tpu_custom_call.1} parent=63 // pred_fallthru
        _
    $region64: #{tpu_custom_call.1} parent=5 // pred_fallthru
      _
  $region6: #{tpu_custom_call.1} parent=0 // loop_footer
    %s19 = sadd.s32 1, %s15
  $region7: #{tpu_custom_call.1} parent=0 // loop_footer_branch
    %14 = sbr.rel target = $region3
  $region8: #{tpu_custom_call.1} parent=0 // loop_exit
    _

</llo_original>
